<compile_context>
chip_gen: v7x
topology: tpu7x:2x2x1
jax: 0.10.0
libtpu: 0.0.40
codegen_flags: <defaults>
</compile_context>

<pallas_src>
import numpy as np

import jax
import jax.numpy as jnp
from jax.experimental import pallas as pl
from jax.experimental.pallas import tpu as pltpu


# ----------------------------------------------------------------------------- 
# Parameter packing: one [R, L] f32 buffer, transposed weights, static offsets.
# ----------------------------------------------------------------------------- 
def pack_params_transposed(params, num_encoding_functions, hidden_features,
                           num_linear_layers):
    """Pack FCBlock params into a single buffer for the transposed kernel.

    params = [w0, b0, w1, b1, ..., wL, bL], w: [in, out], b: [1, out].
    W0 row order (matching the reference mlp_in): [y x z | sin/cos interleaved
    per frequency | e0 e1 e2].

    Returns (P [R, L] f32, offsets dict of static row offsets).
    """
    M = num_encoding_functions
    H = hidden_features
    nl = num_linear_layers

    def ceil8(n):
        return ((n + 7) // 8) * 8

    lane = max(8, 8 * M, H, nl)

    offs = {}
    off = 0

    def alloc(name, rows):
        nonlocal off
        offs[name] = off
        off += ceil8(rows)

    alloc("w0o", H)            # [H, 8]  cols: y x z e0 e1 e2 0 0
    alloc("w0s", H)            # [H, 8M] cols 8i+j (j<3) = sin weights, rest 0
    alloc("w0c", H)            # [H, 8M] cols 8i+j (j<3) = cos weights, rest 0
    for l in range(1, nl - 1):
        alloc(f"w{l}", H)      # [H, H]
    alloc("wlast", 1)          # [1, H]
    alloc("bias", H)           # [H, nl] column l = bias of layer l (padded)
    R = off

    P = jnp.zeros((R, lane), jnp.float32)
    w0 = params[0]

    # non-trig features (exact-VPU path in the kernel)
    P = P.at[offs["w0o"]:offs["w0o"] + H, 0:3].set(w0[0:3, :].T)
    P = P.at[offs["w0o"]:offs["w0o"] + H, 3:6].set(w0[3 + 6 * M:6 + 6 * M, :].T)

    # trig weights, one 8-wide slot per frequency (only 3 columns used per slot)
    for i in range(M):
        P = P.at[offs["w0s"]:offs["w0s"] + H, 8 * i:8 * i + 3].set(
            w0[3 + 6 * i:6 + 6 * i, :].T)
        P = P.at[offs["w0c"]:offs["w0c"] + H, 8 * i:8 * i + 3].set(
            w0[6 + 6 * i:9 + 6 * i, :].T)

    for l in range(1, nl - 1):
        P = P.at[offs[f"w{l}"]:offs[f"w{l}"] + H, 0:H].set(params[2 * l].T)
    P = P.at[offs["wlast"]:offs["wlast"] + 1, 0:H].set(params[2 * (nl - 1)].T)

    for l in range(nl):
        b = params[2 * l + 1].reshape(-1)
        P = P.at[offs["bias"]:offs["bias"] + b.shape[0], l].set(b)

    return P, offs


# ----------------------------------------------------------------------------- 
# Kernel
# ----------------------------------------------------------------------------- 
def make_implicit_depth_kernel(num_encoding_functions, hidden_features,
                               num_linear_layers, offs):
    M = num_encoding_functions
    H = hidden_features
    nl = num_linear_layers

    def kernel(inp_ref, p_ref, out_ref):
        inp = inp_ref[...]                                  # [8, TN] f32

        # ---- positional encoding (VPU args, EUP sin/cos) ---------------------
        # Scale the whole 8-row tile per frequency: pieces are one sublane tile
        # tall, so the concat is tile-aligned.  Rows 3..7 of each slot are junk
        # for the PE, but their W0 columns are zero so they never contribute.
        arg = jnp.concatenate([inp * (2.0 ** i) for i in range(M)], axis=0)  # [8M, TN]
        s = jnp.sin(arg)
        c = jnp.cos(arg)

        # ---- layer 0 ---------------------------------------------------------
        w0s = p_ref[offs["w0s"]:offs["w0s"] + H, 0:8 * M]
        w0c = p_ref[offs["w0c"]:offs["w0c"] + H, 0:8 * M]
        h = jnp.dot(w0s, s, preferred_element_type=jnp.float32)
        h = h + jnp.dot(w0c, c, preferred_element_type=jnp.float32)

        # Un-normalized / large-magnitude features stay on the exact f32 VPU.
        w0o = p_ref[offs["w0o"]:offs["w0o"] + H, 0:8]
        for j in range(6):                                  # y_n, x_n, z, e0, e1, e2
            h = h + w0o[:, j:j + 1] * inp[j:j + 1, :]
        b0 = p_ref[offs["bias"]:offs["bias"] + H, 0:1]
        h = jnp.maximum(h + b0, 0.0)

        # ---- hidden layers ---------------------------------------------------
        for l in range(1, nl - 1):
            w = p_ref[offs[f"w{l}"]:offs[f"w{l}"] + H, 0:H]
            b = p_ref[offs["bias"]:offs["bias"] + H, l:l + 1]
            h = jnp.maximum(jnp.dot(w, h, preferred_element_type=jnp.float32) + b,
                            0.0)

        # ---- outermost linear + depth update (no ReLU on the last layer) -----
        wl = p_ref[offs["wlast"]:offs["wlast"] + 1, 0:H]            # [1, H]
        bl = p_ref[offs["bias"]:offs["bias"] + 1, nl - 1:nl]        # [1, 1]
        z_out = jnp.dot(wl, h, preferred_element_type=jnp.float32) + bl  # [1, TN]

        z = inp[2:3, :]
        conf = inp[6:7, :]
        z_new = z + jnp.maximum(conf, 0.0) * z_out
        out_ref[...] = jnp.maximum(z_new, 0.05)             # lane-dense [1, TN] store

    return kernel


# ----------------------------------------------------------------------------- 
# Wrapper
# ----------------------------------------------------------------------------- 
def implicit_depth_forward(rays, confidence, params, *, args, noise, tile_n=2048):
    """JAX wrapper reproducing ImplicitDepthNet.forward. Returns mlp_rays [N, C]."""
    N, C = rays.shape
    M = args["num_encoding_functions"]
    H = args["hidden_features"]
    nl = args["num_hidden_layers"] + 2
    Mp = args["patch_size"] ** 2
    Np_ = (Mp - 1) // 2
    c0, c1, c2 = 4 + Np_, 4 + Np_ + Mp, 4 + Np_ + 2 * Mp
    dim_y = float(args["height"] - 1)
    dim_x = float(args["width"] - 1)
    f32 = rays.dtype

    # Single packed [8, N] input stream: only the columns the net reads.
    conf = confidence.reshape(-1).astype(f32)
    yn = (rays[:, 0] + noise[:, 0].astype(f32)) / dim_y
    xn = (rays[:, 1] + noise[:, 1].astype(f32)) / dim_x
    zc = rays[:, 2]
    inp = jnp.stack([yn, xn, zc, rays[:, c0], rays[:, c1], rays[:, c2],
                     conf, jnp.zeros_like(zc)], axis=0)             # [8, N]

    # One packed parameter buffer (one small operand / DMA stream).
    pbuf, offs = pack_params_transposed(params, M, H, nl)

    # Tile the ray/lane axis.  >=2 parallel steps keeps both v7x TCs busy; a
    # single step minimizes per-step overhead on v5e/v6e for small N.
    if N <= tile_n:
        TN = ((N + 127) // 128) * 128
    else:
        assert tile_n % 128 == 0, "tile_n must be a multiple of 128"
        TN = tile_n
    n_tiles = pl.cdiv(N, TN)
    Npad = n_tiles * TN
    if Npad != N:
        inp = jnp.pad(inp, ((0, 0), (0, Npad - N)))

    kernel = make_implicit_depth_kernel(M, H, nl, offs)

    depth = pl.pallas_call(
        kernel,
        out_shape=jax.ShapeDtypeStruct((1, Npad), f32),
        grid=(n_tiles,),
        in_specs=[pl.BlockSpec((8, TN), lambda i: (0, i)),
                  pl.BlockSpec(pbuf.shape, lambda i: (0, 0))],
        out_specs=pl.BlockSpec((1, TN), lambda i: (0, i)),
        compiler_params=pltpu.CompilerParams(
            dimension_semantics=("parallel",)),
    )(inp, pbuf)

    # TODO(synk): with a donated `rays` buffer (jit donate_argnums) this column
    # update is fully in-place; here the caller still needs the original rays.
    return rays.at[:, 2].set(depth[0, :N])


# ----------------------------------------------------------------------------- 
# Synthetic init + pure-JAX reference (correctness check)
# ----------------------------------------------------------------------------- 
def init_fcblock_params(key, in_features, hidden_features, out_features,
                        num_hidden_layers, dtype=jnp.float32):
    """Flat list [w0, b0, ..., wL, bL]; weights [in, out], biases [1, out]."""
    dims = [in_features] + [hidden_features] * (num_hidden_layers + 1) + [out_features]
    params = []
    for i in range(len(dims) - 1):
        key, kw, kb = jax.random.split(key, 3)
        fan_in, fan_out = dims[i], dims[i + 1]
        bound = 1.0 / jnp.sqrt(jnp.float32(fan_in))
        w = jax.random.uniform(kw, (fan_in, fan_out), dtype, -bound, bound)
        b = jax.random.uniform(kb, (1, fan_out), dtype, -bound, bound)
        params += [w, b]
    return params


def reference_forward(rays, confidence, params, noise, args):
    """Pure-JAX reference matching the PyTorch module."""
    M = args["num_encoding_functions"]
    dims = jnp.array([args["height"] - 1, args["width"] - 1], rays.dtype)
    yx = rays[:, :3]
    yx = yx.at[:, :2].set((yx[:, :2] + noise) / dims)
    feats = [yx]
    for i in range(M):
        feats.append(jnp.sin((2.0 ** i) * yx))
        feats.append(jnp.cos((2.0 ** i) * yx))
    pe = jnp.concatenate(feats, axis=-1)
    Mp = args["patch_size"] ** 2
    Np_ = (Mp - 1) // 2
    cols = jnp.array([4 + Np_, 4 + Np_ + Mp, 4 + Np_ + 2 * Mp])
    h = jnp.concatenate([pe, rays[:, cols]], axis=-1)
    nl = args["num_hidden_layers"] + 2
    for l in range(nl):
        h = h @ params[2 * l] + params[2 * l + 1]
        if l < nl - 1:
            h = jnp.maximum(h, 0.0)
    z = rays[:, 2:3] + jnp.maximum(confidence.reshape(-1, 1), 0.0) * h
    z = jnp.where(z < 0.05, 0.05, z)
    return rays.at[:, 2:3].set(z)


if __name__ == "__main__":
    args = dict(
        num_encoding_functions=4,   # M -> 24 trig features, in_features = 30
        num_hidden_layers=2,
        hidden_features=32,
        patch_size=3,               # patch M=9, N=4 -> extra cols [8, 17, 26]
        height=16,
        width=16,
    )
    N_RAYS = 2048                   # 2 parallel grid steps at TN=1024
    C_RAYS = 4 + 3 * (args["patch_size"] ** 2)     # 31 channels per ray

    key = jax.random.PRNGKey(0)
    k_rays, k_conf, k_noise, k_params = jax.random.split(key, 4)

    rays = jax.random.uniform(k_rays, (N_RAYS, C_RAYS), jnp.float32, 0.0, 15.0)
    confidence = jax.random.normal(k_conf, (N_RAYS, 1), jnp.float32)
    noise = 0.05 * jax.random.normal(k_noise, (N_RAYS, 2), jnp.float32)

    in_features = (2 * args["num_encoding_functions"] + 1) * 3 + 3
    params = init_fcblock_params(
        k_params, in_features, args["hidden_features"], 1, args["num_hidden_layers"])

    out = implicit_depth_forward(rays, confidence, params, args=args,
                                 noise=noise, tile_n=1024)
    out = jax.block_until_ready(out)

    ref = reference_forward(rays, confidence, params, noise, args)

    assert out.shape == (N_RAYS, C_RAYS)
    assert bool(jnp.all(out[:, 2] >= 0.05 - 1e-6))
    untouched = np.delete(np.arange(C_RAYS), 2)
    assert bool(jnp.allclose(out[:, untouched], rays[:, untouched]))
    assert bool(jnp.allclose(out, ref, rtol=2e-3, atol=2e-3)), \
        float(jnp.max(jnp.abs(out - ref)))

    print("KERNEL_OK")
</pallas_src>

<mosaic_0001>
module attributes {stable_mosaic.version = 11 : i64} {
  func.func @kernel(%arg0: i32, %arg1: memref<8x1024xf32, #tpu.memory_space<vmem>>, %arg2: memref<200x32xf32, #tpu.memory_space<vmem>>, %arg3: memref<1x1024xf32, #tpu.memory_space<vmem>>) attributes {dimension_semantics = [#tpu.dimension_semantics<parallel>], iteration_bounds = array<i64: 2>, scalar_prefetch = 0 : i64, scratch_operands = 0 : i64, tpu.core_type = #tpu.core_type<tc>, window_params = [{transform_indices = @transform_0, window_bounds = array<i64: 8, 1024>}, {pipeline_mode = #tpu.pipeline_mode<synchronous>, transform_indices = @transform_1, window_bounds = array<i64: 200, 32>}, {transform_indices = @transform_2, window_bounds = array<i64: 1, 1024>}]} {
    %c0 = arith.constant 0 : index
    %c0_0 = arith.constant 0 : index
    %0 = vector.load %arg1[%c0, %c0_0] : memref<8x1024xf32, #tpu.memory_space<vmem>>, vector<8x1024xf32>
    %cst = arith.constant 1.000000e+00 : f32
    %1 = vector.broadcast %cst : f32 to vector<8x1024xf32>
    %2 = arith.mulf %0, %1 : vector<8x1024xf32>
    %cst_1 = arith.constant 2.000000e+00 : f32
    %3 = vector.broadcast %cst_1 : f32 to vector<8x1024xf32>
    %4 = arith.mulf %0, %3 : vector<8x1024xf32>
    %cst_2 = arith.constant 4.000000e+00 : f32
    %5 = vector.broadcast %cst_2 : f32 to vector<8x1024xf32>
    %6 = arith.mulf %0, %5 : vector<8x1024xf32>
    %cst_3 = arith.constant 8.000000e+00 : f32
    %7 = vector.broadcast %cst_3 : f32 to vector<8x1024xf32>
    %8 = arith.mulf %0, %7 : vector<8x1024xf32>
    %9 = tpu.concatenate %2, %4, %6, %8 in 0 : vector<8x1024xf32>, vector<8x1024xf32>, vector<8x1024xf32>, vector<8x1024xf32> -> vector<32x1024xf32>
    %10 = math.sin %9 : vector<32x1024xf32>
    %11 = math.cos %9 : vector<32x1024xf32>
    %c32 = arith.constant 32 : index
    %c0_4 = arith.constant 0 : index
    %12 = vector.load %arg2[%c32, %c0_4] : memref<200x32xf32, #tpu.memory_space<vmem>>, vector<32x32xf32>
    %c64 = arith.constant 64 : index
    %c0_5 = arith.constant 0 : index
    %13 = vector.load %arg2[%c64, %c0_5] : memref<200x32xf32, #tpu.memory_space<vmem>>, vector<32x32xf32>
    %cst_6 = arith.constant dense<0.000000e+00> : vector<32x1024xf32>
    %14 = tpu.matmul %12, %10, %cst_6 {dimension_numbers = #tpu.dot_dimension_numbers<[1], [0], [0], [1], [0, 0, 1, 1], [], []>} : vector<32x32xf32>, vector<32x1024xf32>, vector<32x1024xf32> -> vector<32x1024xf32>
    %cst_7 = arith.constant dense<0.000000e+00> : vector<32x1024xf32>
    %15 = tpu.matmul %13, %11, %cst_7 {dimension_numbers = #tpu.dot_dimension_numbers<[1], [0], [0], [1], [0, 0, 1, 1], [], []>} : vector<32x32xf32>, vector<32x1024xf32>, vector<32x1024xf32> -> vector<32x1024xf32>
    %16 = arith.addf %14, %15 : vector<32x1024xf32>
    %c0_8 = arith.constant 0 : index
    %c0_9 = arith.constant 0 : index
    %17 = vector.load %arg2[%c0_8, %c0_9] : memref<200x32xf32, #tpu.memory_space<vmem>>, vector<32x8xf32>
    %18 = vector.extract_strided_slice %17 {offsets = [0, 0], sizes = [32, 1], strides = [1, 1]} : vector<32x8xf32> to vector<32x1xf32>
    %19 = vector.extract_strided_slice %0 {offsets = [0, 0], sizes = [1, 1024], strides = [1, 1]} : vector<8x1024xf32> to vector<1x1024xf32>
    %20 = vector.broadcast %18 : vector<32x1xf32> to vector<32x1024xf32>
    %21 = vector.broadcast %19 : vector<1x1024xf32> to vector<32x1024xf32>
    %22 = arith.mulf %20, %21 : vector<32x1024xf32>
    %23 = arith.addf %16, %22 : vector<32x1024xf32>
    %24 = vector.extract_strided_slice %17 {offsets = [0, 1], sizes = [32, 1], strides = [1, 1]} : vector<32x8xf32> to vector<32x1xf32>
    %25 = vector.extract_strided_slice %0 {offsets = [1, 0], sizes = [1, 1024], strides = [1, 1]} : vector<8x1024xf32> to vector<1x1024xf32>
    %26 = vector.broadcast %24 : vector<32x1xf32> to vector<32x1024xf32>
    %27 = vector.broadcast %25 : vector<1x1024xf32> to vector<32x1024xf32>
    %28 = arith.mulf %26, %27 : vector<32x1024xf32>
    %29 = arith.addf %23, %28 : vector<32x1024xf32>
    %30 = vector.extract_strided_slice %17 {offsets = [0, 2], sizes = [32, 1], strides = [1, 1]} : vector<32x8xf32> to vector<32x1xf32>
    %31 = vector.extract_strided_slice %0 {offsets = [2, 0], sizes = [1, 1024], strides = [1, 1]} : vector<8x1024xf32> to vector<1x1024xf32>
    %32 = vector.broadcast %30 : vector<32x1xf32> to vector<32x1024xf32>
    %33 = vector.broadcast %31 : vector<1x1024xf32> to vector<32x1024xf32>
    %34 = arith.mulf %32, %33 : vector<32x1024xf32>
    %35 = arith.addf %29, %34 : vector<32x1024xf32>
    %36 = vector.extract_strided_slice %17 {offsets = [0, 3], sizes = [32, 1], strides = [1, 1]} : vector<32x8xf32> to vector<32x1xf32>
    %37 = vector.extract_strided_slice %0 {offsets = [3, 0], sizes = [1, 1024], strides = [1, 1]} : vector<8x1024xf32> to vector<1x1024xf32>
    %38 = vector.broadcast %36 : vector<32x1xf32> to vector<32x1024xf32>
    %39 = vector.broadcast %37 : vector<1x1024xf32> to vector<32x1024xf32>
    %40 = arith.mulf %38, %39 : vector<32x1024xf32>
    %41 = arith.addf %35, %40 : vector<32x1024xf32>
    %42 = vector.extract_strided_slice %17 {offsets = [0, 4], sizes = [32, 1], strides = [1, 1]} : vector<32x8xf32> to vector<32x1xf32>
    %43 = vector.extract_strided_slice %0 {offsets = [4, 0], sizes = [1, 1024], strides = [1, 1]} : vector<8x1024xf32> to vector<1x1024xf32>
    %44 = vector.broadcast %42 : vector<32x1xf32> to vector<32x1024xf32>
    %45 = vector.broadcast %43 : vector<1x1024xf32> to vector<32x1024xf32>
    %46 = arith.mulf %44, %45 : vector<32x1024xf32>
    %47 = arith.addf %41, %46 : vector<32x1024xf32>
    %48 = vector.extract_strided_slice %17 {offsets = [0, 5], sizes = [32, 1], strides = [1, 1]} : vector<32x8xf32> to vector<32x1xf32>
    %49 = vector.extract_strided_slice %0 {offsets = [5, 0], sizes = [1, 1024], strides = [1, 1]} : vector<8x1024xf32> to vector<1x1024xf32>
    %50 = vector.broadcast %48 : vector<32x1xf32> to vector<32x1024xf32>
    %51 = vector.broadcast %49 : vector<1x1024xf32> to vector<32x1024xf32>
    %52 = arith.mulf %50, %51 : vector<32x1024xf32>
    %53 = arith.addf %47, %52 : vector<32x1024xf32>
    %c168 = arith.constant 168 : index
    %c0_10 = arith.constant 0 : index
    %54 = vector.load %arg2[%c168, %c0_10] : memref<200x32xf32, #tpu.memory_space<vmem>>, vector<32x1xf32>
    %55 = vector.broadcast %54 : vector<32x1xf32> to vector<32x1024xf32>
    %56 = arith.addf %53, %55 : vector<32x1024xf32>
    %cst_11 = arith.constant 0.000000e+00 : f32
    %57 = vector.broadcast %cst_11 : f32 to vector<32x1024xf32>
    %58 = arith.maximumf %56, %57 : vector<32x1024xf32>
    %c96 = arith.constant 96 : index
    %c0_12 = arith.constant 0 : index
    %59 = vector.load %arg2[%c96, %c0_12] : memref<200x32xf32, #tpu.memory_space<vmem>>, vector<32x32xf32>
    %c168_13 = arith.constant 168 : index
    %c1 = arith.constant 1 : index
    %60 = vector.load %arg2[%c168_13, %c1] : memref<200x32xf32, #tpu.memory_space<vmem>>, vector<32x1xf32>
    %cst_14 = arith.constant dense<0.000000e+00> : vector<32x1024xf32>
    %61 = tpu.matmul %59, %58, %cst_14 {dimension_numbers = #tpu.dot_dimension_numbers<[1], [0], [0], [1], [0, 0, 1, 1], [], []>} : vector<32x32xf32>, vector<32x1024xf32>, vector<32x1024xf32> -> vector<32x1024xf32>
    %62 = vector.broadcast %60 : vector<32x1xf32> to vector<32x1024xf32>
    %63 = arith.addf %61, %62 : vector<32x1024xf32>
    %cst_15 = arith.constant 0.000000e+00 : f32
    %64 = vector.broadcast %cst_15 : f32 to vector<32x1024xf32>
    %65 = arith.maximumf %63, %64 : vector<32x1024xf32>
    %c128 = arith.constant 128 : index
    %c0_16 = arith.constant 0 : index
    %66 = vector.load %arg2[%c128, %c0_16] : memref<200x32xf32, #tpu.memory_space<vmem>>, vector<32x32xf32>
    %c168_17 = arith.constant 168 : index
    %c2 = arith.constant 2 : index
    %67 = vector.load %arg2[%c168_17, %c2] : memref<200x32xf32, #tpu.memory_space<vmem>>, vector<32x1xf32>
    %cst_18 = arith.constant dense<0.000000e+00> : vector<32x1024xf32>
    %68 = tpu.matmul %66, %65, %cst_18 {dimension_numbers = #tpu.dot_dimension_numbers<[1], [0], [0], [1], [0, 0, 1, 1], [], []>} : vector<32x32xf32>, vector<32x1024xf32>, vector<32x1024xf32> -> vector<32x1024xf32>
    %69 = vector.broadcast %67 : vector<32x1xf32> to vector<32x1024xf32>
    %70 = arith.addf %68, %69 : vector<32x1024xf32>
    %cst_19 = arith.constant 0.000000e+00 : f32
    %71 = vector.broadcast %cst_19 : f32 to vector<32x1024xf32>
    %72 = arith.maximumf %70, %71 : vector<32x1024xf32>
    %c160 = arith.constant 160 : index
    %c0_20 = arith.constant 0 : index
    %73 = vector.load %arg2[%c160, %c0_20] : memref<200x32xf32, #tpu.memory_space<vmem>>, vector<1x32xf32>
    %c168_21 = arith.constant 168 : index
    %c3 = arith.constant 3 : index
    %74 = vector.load %arg2[%c168_21, %c3] : memref<200x32xf32, #tpu.memory_space<vmem>>, vector<1x1xf32>
    %cst_22 = arith.constant dense<0.000000e+00> : vector<1x1024xf32>
    %75 = tpu.matmul %73, %72, %cst_22 {dimension_numbers = #tpu.dot_dimension_numbers<[1], [0], [0], [1], [0, 0, 1, 1], [], []>} : vector<1x32xf32>, vector<32x1024xf32>, vector<1x1024xf32> -> vector<1x1024xf32>
    %76 = vector.broadcast %74 : vector<1x1xf32> to vector<1x1024xf32>
    %77 = arith.addf %75, %76 : vector<1x1024xf32>
    %78 = vector.extract_strided_slice %0 {offsets = [2, 0], sizes = [1, 1024], strides = [1, 1]} : vector<8x1024xf32> to vector<1x1024xf32>
    %79 = vector.extract_strided_slice %0 {offsets = [6, 0], sizes = [1, 1024], strides = [1, 1]} : vector<8x1024xf32> to vector<1x1024xf32>
    %cst_23 = arith.constant 0.000000e+00 : f32
    %80 = vector.broadcast %cst_23 : f32 to vector<1x1024xf32>
    %81 = arith.maximumf %79, %80 : vector<1x1024xf32>
    %82 = arith.mulf %81, %77 : vector<1x1024xf32>
    %83 = arith.addf %78, %82 : vector<1x1024xf32>
    %cst_24 = arith.constant 5.000000e-02 : f32
    %84 = vector.broadcast %cst_24 : f32 to vector<1x1024xf32>
    %85 = arith.maximumf %83, %84 : vector<1x1024xf32>
    %c0_25 = arith.constant 0 : index
    %c0_26 = arith.constant 0 : index
    %86 = vector.load %arg3[%c0_25, %c0_26] : memref<1x1024xf32, #tpu.memory_space<vmem>>, vector<1x1024xf32>
    tpu.vector_store %arg3[%c0_25, %c0_26], %85 {strides = array<i32>} : memref<1x1024xf32, #tpu.memory_space<vmem>>, vector<1x1024xf32>,
    return
  }
  func.func @transform_0(%arg0: i32) -> (i32, i32) {
    %c0_i32 = arith.constant 0 : i32
    %c0_i32_0 = arith.constant 0 : i32
    return %c0_i32, %arg0 : i32, i32
  }
  func.func @transform_1(%arg0: i32) -> (i32, i32) {
    %c0_i32 = arith.constant 0 : i32
    %c0_i32_0 = arith.constant 0 : i32
    %c0_i32_1 = arith.constant 0 : i32
    return %c0_i32, %c0_i32_0 : i32, i32
  }
  func.func @transform_2(%arg0: i32) -> (i32, i32) {
    %c0_i32 = arith.constant 0 : i32
    %c0_i32_0 = arith.constant 0 : i32
    return %c0_i32, %arg0 : i32, i32
  }
}

</mosaic_0001>

<llo_original>
// kernel: tpu_custom_call.1
$region0: #{tpu_custom_call.1}
  #allocation0 [shape = 'u32[]', space=smem, size = 0x4, offset = 0x4, fixed_abs, tag = 'smem constant byte address 0x4 - core index']
  #allocation1 [shape = 'u32[144,128]{1,0:T(1,128)}', space=vmem, size = 0x12000, scoped, tag = 'internal scratch']
  %s0 = inlined_call_operand.vmem [shape: f32[8,2048], index: 0, kind: input, shape index: {}]
  %s1 = inlined_call_operand.vmem [shape: f32[200,32], index: 1, kind: input, shape index: {}]
  %s2 = inlined_call_operand.hbm [shape: f32[1,2048], index: 2, kind: output, shape index: {}]
  %s3 = sld [smem:[#allocation0]]
  $region41: #{tpu_custom_call.1} parent=0
    _
  %s5 = ssub.s32 1, %s3
  %s6 = scalar_select 0, %s5, %s3
  $region1: #{tpu_custom_call.1} parent=0
    #allocation2 [shape = 'u8[8192]{0}', space=vmem, size = 0x2000, scoped, tag = 'output window, operand 0']
    #allocation3 [shape = 's32[2]{0}', space=sflag, size = 0x8, scoped, tag = 'scoped memory for tpu_custom_call.1']
    %7 = vsyncpa [#allocation3], 0
    %s8 = scalar_lea.sflag [#allocation3], 1
    %9 = vsyncpa %s8, 0
    loop: start=0, step=1, limit=4
    $region2: #{tpu_custom_call.1} parent=1 // loop_pre_header
      _
    $region3: #{tpu_custom_call.1} parent=1 // loop_header
      %s11 = sphi 0, %s15
      %p12 = scmp.ge.s32.totalorder %s11, 4
      %s21 = sphi 0, %s23
      %s24 = sphi 0, %s21
      %s25 = sphi 0, %s24
      %s41 = sphi 0, %s25
      %s45 = sphi 0, %s45
      %s47 = sphi 0, %s45
      %s48 = sphi 0, %s47
      %s62 = sphi 0, %s48
      %s68 = sphi 0, %s70
      %s71 = sphi 0, %s68
      %s72 = sphi 0, %s71
      %s88 = sphi 0, %s72
    $region4: #{tpu_custom_call.1} parent=1 // loop_header_branch
      %14 = sbr.rel (%p12) target = $region8
    $region5: #{tpu_custom_call.1} parent=1 // loop_body
      %s16 = ssub.s32 %s11, 1
      %s17 = ssub.s32 %s11, 2
      %s18 = sadd.s32 %s11, 1
      %s19 = ssub.s32 %s11, %s18
      %p20 = scmp.eq.s32.totalorder %s19, 0
      %s22 = sadd.s32 %s21, 1
      %s23 = scalar_select %p20, %s21, %s22
      %p26 = pneg %p20
      %p27 = scmp.eq.s32.totalorder %s11, 1
      %p28 = por %p26, %p27
      %p29 = scmp.ne.s32.totalorder %s21, %s24
      %p30 = scmp.eq.s32.totalorder %s11, 0
      %p31 = por %p29, %p30
      %p32 = scmp.ne.s32.totalorder %s21, %s24
      %p33 = scmp.eq.s32.totalorder %s16, 1
      %p34 = por %p32, %p33
      %p35 = scmp.ne.s32.totalorder %s24, %s25
      %p36 = scmp.eq.s32.totalorder %s16, 0
      %p37 = por %p35, %p36
      %p38 = scmp.ne.s32.totalorder %s24, %s25
      %p39 = scmp.eq.s32.totalorder %s17, 1
      %p40 = por %p38, %p39
      %p42 = scmp.ne.s32.totalorder %s25, %s41
      %p43 = scmp.eq.s32.totalorder %s17, 0
      %p44 = por %p42, %p43
      %s46 = sadd.s32 %s45, 1
      %p49 = scmp.eq.s32.totalorder %s11, 1
      %p50 = scmp.ne.s32.totalorder %s45, %s47
      %p51 = scmp.eq.s32.totalorder %s11, 0
      %p52 = por %p50, %p51
      %p53 = scmp.ne.s32.totalorder %s45, %s47
      %p54 = scmp.eq.s32.totalorder %s16, 1
      %p55 = por %p53, %p54
      %p56 = scmp.ne.s32.totalorder %s47, %s48
      %p57 = scmp.eq.s32.totalorder %s16, 0
      %p58 = por %p56, %p57
      %p59 = scmp.ne.s32.totalorder %s47, %s48
      %p60 = scmp.eq.s32.totalorder %s17, 1
      %p61 = por %p59, %p60
      %p63 = scmp.ne.s32.totalorder %s48, %s62
      %p64 = scmp.eq.s32.totalorder %s17, 0
      %p65 = por %p63, %p64
      %s66 = ssub.s32 %s11, %s18
      %p67 = scmp.eq.s32.totalorder %s66, 0
      %s69 = sadd.s32 %s68, 1
      %s70 = scalar_select %p67, %s68, %s69
      %p73 = pneg %p67
      %p74 = scmp.eq.s32.totalorder %s11, 1
      %p75 = por %p73, %p74
      %p76 = scmp.ne.s32.totalorder %s68, %s71
      %p77 = scmp.eq.s32.totalorder %s11, 0
      %p78 = por %p76, %p77
      %p79 = scmp.ne.s32.totalorder %s68, %s71
      %p80 = scmp.eq.s32.totalorder %s16, 1
      %p81 = por %p79, %p80
      %p82 = scmp.ne.s32.totalorder %s71, %s72
      %p83 = scmp.eq.s32.totalorder %s16, 0
      %p84 = por %p82, %p83
      %p85 = scmp.ne.s32.totalorder %s71, %s72
      %p86 = scmp.eq.s32.totalorder %s17, 1
      %p87 = por %p85, %p86
      %p89 = scmp.ne.s32.totalorder %s72, %s88
      %p90 = scmp.eq.s32.totalorder %s17, 0
      %p91 = por %p89, %p90
      %p92 = scmp.le.s32.totalorder 1, %s11
      %p93 = scmp.lt.s32.totalorder %s11, 3
      %p94 = pnand %p92, %p93
      %p95 = pneg %p94
      // Predicated region
      $region9: #{tpu_custom_call.1} parent=5 // pred_check
        _
      $region10: #{tpu_custom_call.1} parent=5 // pred_check_branch
        %97 = sbr.rel (%p94) target = $region12
      $region11: #{tpu_custom_call.1} parent=5 // pred_region
        %s98 = ssub.s32 %s11, 1
        // Predicated region
        $region13: #{tpu_custom_call.1} parent=11 // pred_check
          %p99 = pneg %p58
        $region14: #{tpu_custom_call.1} parent=11 // pred_check_branch
          %101 = sbr.rel (%p99) target = $region16
        $region15: #{tpu_custom_call.1} parent=11 // pred_region
          _
        $region16: #{tpu_custom_call.1} parent=11 // pred_fallthru
          _
      $region12: #{tpu_custom_call.1} parent=5 // pred_fallthru
        _
      %p102 = scmp.lt.s32.totalorder %s11, 2
      // Predicated region
      $region17: #{tpu_custom_call.1} parent=5 // pred_check
        %p103 = pneg %p102
      $region18: #{tpu_custom_call.1} parent=5 // pred_check_branch
        %105 = sbr.rel (%p103) target = $region20
      $region19: #{tpu_custom_call.1} parent=5 // pred_region
        // Predicated region
        $region21: #{tpu_custom_call.1} parent=19 // pred_check
          %p106 = pneg %p31
        $region22: #{tpu_custom_call.1} parent=19 // pred_check_branch
          %108 = sbr.rel (%p106) target = $region24
        $region23: #{tpu_custom_call.1} parent=19 // pred_region
          %s109 = smul.u32 8, %s11
          %p110 = scmp.lt.s32.totalorder %s109, 15
          %s111 = scalar_select %p110, %s109, 15
          %s112 = smul.addr %s111, 8
          %s113 = scalar_lea.vmem %s0, %s112
          %s114 = smul.u32 8, %s11
        $region24: #{tpu_custom_call.1} parent=19 // pred_fallthru
          _
      $region20: #{tpu_custom_call.1} parent=5 // pred_fallthru
        _
      %p115 = scmp.le.s32.totalorder 1, %s11
      %p116 = scmp.lt.s32.totalorder %s11, 3
      %p117 = pnand %p115, %p116
      %p118 = pneg %p117
      // Predicated region
      $region25: #{tpu_custom_call.1} parent=5 // pred_check
        _
      $region26: #{tpu_custom_call.1} parent=5 // pred_check_branch
        %120 = sbr.rel (%p117) target = $region28
      $region27: #{tpu_custom_call.1} parent=5 // pred_region
        %s121 = ssub.s32 %s11, 1
        %s122 = smul.u32 8, %s16
        %p123 = scmp.lt.s32.totalorder %s122, 15
        %s124 = scalar_select %p123, %s122, 15
        %s125 = smul.addr %s124, 8
        %s126 = scalar_lea.vmem %s0, %s125
        %p127 = pneg %p37
        %p128 = pneg %p34
        %p129 = pneg %p58
        %p130 = pneg %p55
        %p131 = pneg %p84
        %p132 = pneg %p81
        %s133 = sand.u32 %s71, 1
        %s134 = scalar_lea.sflag [#allocation3], %s133
        %s135 = sand.u32 %s71, 1
        %s136 = smul.addr %s135, 8
        %s137 = scalar_lea.vmem [#allocation2], %s136
        %s138 = smul.u32 8, %s16
        %p139 = scmp.lt.s32.totalorder %s138, 15
        %s140 = scalar_select %p139, %s138, 15
        %s141 = smul.addr %s140, 8
        %s142 = scalar_lea.vmem %s0, %s141
        %s143 = smul.u32 8, %s16
        %s144 = smul.u32 8, %s16
        %v145 = vld [vmem:[%s142] sm:$0xff]
        %v146 = vld [vmem:[%s142 + $0x8] sm:$0xff]
        %v147 = vld [vmem:[%s142 + $0x10] sm:$0xff]
        %v148 = vld [vmem:[%s142 + $0x18] sm:$0xff]
        %v149 = vld [vmem:[%s142 + $0x20] sm:$0xff]
        %v150 = vld [vmem:[%s142 + $0x28] sm:$0xff]
        %v151 = vld [vmem:[%s142 + $0x30] sm:$0xff]
        %v152 = vld [vmem:[%s142 + $0x38] sm:$0xff]
        %v153 = vmul.f32 %v145, 2.0
        %v154 = vmul.f32 %v146, 2.0
        %v155 = vmul.f32 %v147, 2.0
        %v156 = vmul.f32 %v148, 2.0
        %v157 = vmul.f32 %v149, 2.0
        %v158 = vmul.f32 %v150, 2.0
        %v159 = vmul.f32 %v151, 2.0
        %v160 = vmul.f32 %v152, 2.0
        %v161 = vmul.f32 %v145, 4.0
        %v162 = vmul.f32 %v146, 4.0
        %v163 = vmul.f32 %v147, 4.0
        %v164 = vmul.f32 %v148, 4.0
        %v165 = vmul.f32 %v149, 4.0
        %v166 = vmul.f32 %v150, 4.0
        %v167 = vmul.f32 %v151, 4.0
        %v168 = vmul.f32 %v152, 4.0
        %v169 = vmul.f32 %v145, 8.0
        %v170 = vmul.f32 %v146, 8.0
        %v171 = vmul.f32 %v147, 8.0
        %v172 = vmul.f32 %v148, 8.0
        %v173 = vmul.f32 %v149, 8.0
        %v174 = vmul.f32 %v150, 8.0
        %v175 = vmul.f32 %v151, 8.0
        %v176 = vmul.f32 %v152, 8.0
        %v177 = vand.u32 2147483647, %v145
        %vm178 = vcmp.le.f32.partialorder %v177, 0.7853982
        %vm179 = vcmp.lt.s32.totalorder %v145, 0
        %v180 = vand.u32 %v145, 2139095040
        %v181 = vshrl.u32 %v180, 23
        %v182 = vsub.s32 %v181, 127
        %v183 = vand.u32 2147483647, %v145
        %v184 = vand.u32 %v183, 8388607
        %v185 = vor.u32 %v184, 8388608
        %v186 = vsub.s32 0, %v185
        %v187 = vadd.s32 %v182, 1
        %vm188 = vcmp.gt.s32.totalorder %v187, 0
        %v189 = vsel %vm188, %v187, 0
        %v190 = vshrl.u32 %v189, 5
        %v191 = vand.u32 %v189, 31
        %v192 = vsub.s32 32, %v191
        %v193 = vshrl.u32 683565275, %v192
        %v194 = vshll.u32 683565275, %v191
        %v195 = vshrl.u32 2475754826, %v192
        %v196 = vor.u32 %v194, %v195
        %v197 = vshll.u32 2475754826, %v191
        %v198 = vshrl.u32 2131351028, %v192
        %v199 = vor.u32 %v197, %v198
        %v200 = vshll.u32 2131351028, %v191
        %v201 = vshrl.u32 2102212464, %v192
        %v202 = vor.u32 %v200, %v201
        %v203 = vshll.u32 2102212464, %v191
        %v204 = vshrl.u32 920167782, %v192
        %v205 = vor.u32 %v203, %v204
        %v206 = vshll.u32 920167782, %v191
        %v207 = vshrl.u32 1326507024, %v192
        %v208 = vor.u32 %v206, %v207
        %vm209 = vcmp.lt.s32.totalorder %v190, 1
        %vm210 = vcmp.lt.s32.totalorder %v190, 2
        %vm211 = vcmp.lt.s32.totalorder %v190, 3
        %vm212 = vcmp.lt.s32.totalorder %v190, 4
        %v213 = vsel %vm209, %v193, %v196
        %v214 = vsel %vm212, %v202, 2102212464
        %v215 = vsel %vm211, %v199, %v214
        %v216 = vsel %vm210, %v213, %v215
        %v217 = vsel %vm209, %v196, %v199
        %v218 = vsel %vm212, %v205, 920167782
        %v219 = vsel %vm211, %v202, %v218
        %v220 = vsel %vm210, %v217, %v219
        %v221 = vsel %vm209, %v199, %v202
        %v222 = vsel %vm212, %v208, 1326507024
        %v223 = vsel %vm211, %v205, %v222
        %v224 = vsel %vm210, %v221, %v223
        %v225 = vshll.u32 %v185, 8
        %v226 = vmul.u32.u64.compose %v225, %v224
        %v227 = vextract.low.u32 %v226
        %v228 = vextract.high.u32 %v226
        %v229 = vmul.u32.u64.compose %v225, %v220
        %v230 = vextract.low.u32 %v229
        %v231 = vextract.high.u32 %v229
        %v232 = vmul.u32 %v225, %v216
        %v233 = vadd.s32 %v228, %v230
        %vm234 = vc.u32 %v228, %v230
        %v235 = vadd.s32 %v231, 1
        %v236 = vsel %vm234, %v235, %v231
        %v237 = vadd.s32 %v232, %v236
        %v238 = vadd.s32 %v237, 536870912
        %v239 = vshrl.u32 %v238, 30
        %v240 = vshll.u32 %v239, 30
        %v241 = vsub.s32 %v237, %v240
        %vm242 = vcmp.lt.s32.totalorder %v241, 0
        %v243 = vsub.s32 0, %v241
        %v244 = vsel %vm242, %v243, %v241
        %v245 = vclz %v244
        %v246 = vsub.s32 %v245, 2
        %vm247 = vcmp.gt.s32.totalorder 0, %v246
        %v248 = vsel %vm247, 0, %v246
        %v249 = vsub.s32 32, %v248
        %v250 = vshll.u32 %v241, %v248
        %v251 = vshrl.u32 %v233, %v249
        %v252 = vor.u32 %v250, %v251
        %v253 = vsub.s32 4294967266, %v248
        %v254 = vadd.s32 %v253, 127
        %v255 = vshll.u32 %v254, 23
        %v256 = vor.u32 4788187, %v255
        %v257 = vand.u32 2147483647, %v256
        %v259 = vcvt.s32.f32 %v252
        %v260 = vmul.f32 %v259, %v257
        %v261 = vxor.u32 %v260, 2147483648
        %v262 = vsel %vm179, %v261, %v260
        %v263 = vsub.s32 4, %v239
        %v264 = vsel %vm179, %v263, %v239
        %v265 = vsel %vm178, %v145, %v262
        %v266 = vsel %vm178, 0, %v264
        %v267 = vcosq.f32.pop %v265
        %v268 = vsinq.f32.pop %v265
        %vm269 = vweird.f32 %v145
        %v270 = vadd.s32 %v266, 3
        %v271 = vand.u32 %v270, 3
        %vm272 = vcmp.lt.s32.totalorder %v271, 2
        %vm273 = vcmp.eq.s32.totalorder %v271, 0
        %v274 = vxor.u32 %v268, 2147483648
        %v275 = vsel %vm273, %v267, %v274
        %vm276 = vcmp.eq.s32.totalorder %v271, 2
        %v277 = vxor.u32 %v267, 2147483648
        %v278 = vsel %vm276, %v277, %v268
        %v279 = vsel %vm272, %v275, %v278
        %v280 = vsel %vm269, nan, %v279
        %v281 = vand.u32 2147483647, %v146
        %vm282 = vcmp.le.f32.partialorder %v281, 0.7853982
        %vm283 = vcmp.lt.s32.totalorder %v146, 0
        %v284 = vand.u32 %v146, 2139095040
        %v285 = vshrl.u32 %v284, 23
        %v286 = vsub.s32 %v285, 127
        %v287 = vand.u32 2147483647, %v146
        %v288 = vand.u32 %v287, 8388607
        %v289 = vor.u32 %v288, 8388608
        %v290 = vsub.s32 0, %v289
        %v291 = vadd.s32 %v286, 1
        %vm292 = vcmp.gt.s32.totalorder %v291, 0
        %v293 = vsel %vm292, %v291, 0
        %v294 = vshrl.u32 %v293, 5
        %v295 = vand.u32 %v293, 31
        %v296 = vsub.s32 32, %v295
        %v297 = vshrl.u32 683565275, %v296
        %v298 = vshll.u32 683565275, %v295
        %v299 = vshrl.u32 2475754826, %v296
        %v300 = vor.u32 %v298, %v299
        %v301 = vshll.u32 2475754826, %v295
        %v302 = vshrl.u32 2131351028, %v296
        %v303 = vor.u32 %v301, %v302
        %v304 = vshll.u32 2131351028, %v295
        %v305 = vshrl.u32 2102212464, %v296
        %v306 = vor.u32 %v304, %v305
        %v307 = vshll.u32 2102212464, %v295
        %v308 = vshrl.u32 920167782, %v296
        %v309 = vor.u32 %v307, %v308
        %v310 = vshll.u32 920167782, %v295
        %v311 = vshrl.u32 1326507024, %v296
        %v312 = vor.u32 %v310, %v311
        %vm313 = vcmp.lt.s32.totalorder %v294, 1
        %vm314 = vcmp.lt.s32.totalorder %v294, 2
        %vm315 = vcmp.lt.s32.totalorder %v294, 3
        %vm316 = vcmp.lt.s32.totalorder %v294, 4
        %v317 = vsel %vm313, %v297, %v300
        %v318 = vsel %vm316, %v306, 2102212464
        %v319 = vsel %vm315, %v303, %v318
        %v320 = vsel %vm314, %v317, %v319
        %v321 = vsel %vm313, %v300, %v303
        %v322 = vsel %vm316, %v309, 920167782
        %v323 = vsel %vm315, %v306, %v322
        %v324 = vsel %vm314, %v321, %v323
        %v325 = vsel %vm313, %v303, %v306
        %v326 = vsel %vm316, %v312, 1326507024
        %v327 = vsel %vm315, %v309, %v326
        %v328 = vsel %vm314, %v325, %v327
        %v329 = vshll.u32 %v289, 8
        %v330 = vmul.u32.u64.compose %v329, %v328
        %v331 = vextract.low.u32 %v330
        %v332 = vextract.high.u32 %v330
        %v333 = vmul.u32.u64.compose %v329, %v324
        %v334 = vextract.low.u32 %v333
        %v335 = vextract.high.u32 %v333
        %v336 = vmul.u32 %v329, %v320
        %v337 = vadd.s32 %v332, %v334
        %vm338 = vc.u32 %v332, %v334
        %v339 = vadd.s32 %v335, 1
        %v340 = vsel %vm338, %v339, %v335
        %v341 = vadd.s32 %v336, %v340
        %v342 = vadd.s32 %v341, 536870912
        %v343 = vshrl.u32 %v342, 30
        %v344 = vshll.u32 %v343, 30
        %v345 = vsub.s32 %v341, %v344
        %vm346 = vcmp.lt.s32.totalorder %v345, 0
        %v347 = vsub.s32 0, %v345
        %v348 = vsel %vm346, %v347, %v345
        %v349 = vclz %v348
        %v350 = vsub.s32 %v349, 2
        %vm351 = vcmp.gt.s32.totalorder 0, %v350
        %v352 = vsel %vm351, 0, %v350
        %v353 = vsub.s32 32, %v352
        %v354 = vshll.u32 %v345, %v352
        %v355 = vshrl.u32 %v337, %v353
        %v356 = vor.u32 %v354, %v355
        %v357 = vsub.s32 4294967266, %v352
        %v358 = vadd.s32 %v357, 127
        %v359 = vshll.u32 %v358, 23
        %v360 = vor.u32 4788187, %v359
        %v361 = vand.u32 2147483647, %v360
        %v363 = vcvt.s32.f32 %v356
        %v364 = vmul.f32 %v363, %v361
        %v365 = vxor.u32 %v364, 2147483648
        %v366 = vsel %vm283, %v365, %v364
        %v367 = vsub.s32 4, %v343
        %v368 = vsel %vm283, %v367, %v343
        %v369 = vsel %vm282, %v146, %v366
        %v370 = vsel %vm282, 0, %v368
        %v371 = vcosq.f32.pop %v369
        %v372 = vsinq.f32.pop %v369
        %vm373 = vweird.f32 %v146
        %v374 = vadd.s32 %v370, 3
        %v375 = vand.u32 %v374, 3
        %vm376 = vcmp.lt.s32.totalorder %v375, 2
        %vm377 = vcmp.eq.s32.totalorder %v375, 0
        %v378 = vxor.u32 %v372, 2147483648
        %v379 = vsel %vm377, %v371, %v378
        %vm380 = vcmp.eq.s32.totalorder %v375, 2
        %v381 = vxor.u32 %v371, 2147483648
        %v382 = vsel %vm380, %v381, %v372
        %v383 = vsel %vm376, %v379, %v382
        %v384 = vsel %vm373, nan, %v383
        %v385 = vand.u32 2147483647, %v147
        %vm386 = vcmp.le.f32.partialorder %v385, 0.7853982
        %vm387 = vcmp.lt.s32.totalorder %v147, 0
        %v388 = vand.u32 %v147, 2139095040
        %v389 = vshrl.u32 %v388, 23
        %v390 = vsub.s32 %v389, 127
        %v391 = vand.u32 2147483647, %v147
        %v392 = vand.u32 %v391, 8388607
        %v393 = vor.u32 %v392, 8388608
        %v394 = vsub.s32 0, %v393
        %v395 = vadd.s32 %v390, 1
        %vm396 = vcmp.gt.s32.totalorder %v395, 0
        %v397 = vsel %vm396, %v395, 0
        %v398 = vshrl.u32 %v397, 5
        %v399 = vand.u32 %v397, 31
        %v400 = vsub.s32 32, %v399
        %v401 = vshrl.u32 683565275, %v400
        %v402 = vshll.u32 683565275, %v399
        %v403 = vshrl.u32 2475754826, %v400
        %v404 = vor.u32 %v402, %v403
        %v405 = vshll.u32 2475754826, %v399
        %v406 = vshrl.u32 2131351028, %v400
        %v407 = vor.u32 %v405, %v406
        %v408 = vshll.u32 2131351028, %v399
        %v409 = vshrl.u32 2102212464, %v400
        %v410 = vor.u32 %v408, %v409
        %v411 = vshll.u32 2102212464, %v399
        %v412 = vshrl.u32 920167782, %v400
        %v413 = vor.u32 %v411, %v412
        %v414 = vshll.u32 920167782, %v399
        %v415 = vshrl.u32 1326507024, %v400
        %v416 = vor.u32 %v414, %v415
        %vm417 = vcmp.lt.s32.totalorder %v398, 1
        %vm418 = vcmp.lt.s32.totalorder %v398, 2
        %vm419 = vcmp.lt.s32.totalorder %v398, 3
        %vm420 = vcmp.lt.s32.totalorder %v398, 4
        %v421 = vsel %vm417, %v401, %v404
        %v422 = vsel %vm420, %v410, 2102212464
        %v423 = vsel %vm419, %v407, %v422
        %v424 = vsel %vm418, %v421, %v423
        %v425 = vsel %vm417, %v404, %v407
        %v426 = vsel %vm420, %v413, 920167782
        %v427 = vsel %vm419, %v410, %v426
        %v428 = vsel %vm418, %v425, %v427
        %v429 = vsel %vm417, %v407, %v410
        %v430 = vsel %vm420, %v416, 1326507024
        %v431 = vsel %vm419, %v413, %v430
        %v432 = vsel %vm418, %v429, %v431
        %v433 = vshll.u32 %v393, 8
        %v434 = vmul.u32.u64.compose %v433, %v432
        %v435 = vextract.low.u32 %v434
        %v436 = vextract.high.u32 %v434
        %v437 = vmul.u32.u64.compose %v433, %v428
        %v438 = vextract.low.u32 %v437
        %v439 = vextract.high.u32 %v437
        %v440 = vmul.u32 %v433, %v424
        %v441 = vadd.s32 %v436, %v438
        %vm442 = vc.u32 %v436, %v438
        %v443 = vadd.s32 %v439, 1
        %v444 = vsel %vm442, %v443, %v439
        %v445 = vadd.s32 %v440, %v444
        %v446 = vadd.s32 %v445, 536870912
        %v447 = vshrl.u32 %v446, 30
        %v448 = vshll.u32 %v447, 30
        %v449 = vsub.s32 %v445, %v448
        %vm450 = vcmp.lt.s32.totalorder %v449, 0
        %v451 = vsub.s32 0, %v449
        %v452 = vsel %vm450, %v451, %v449
        %v453 = vclz %v452
        %v454 = vsub.s32 %v453, 2
        %vm455 = vcmp.gt.s32.totalorder 0, %v454
        %v456 = vsel %vm455, 0, %v454
        %v457 = vsub.s32 32, %v456
        %v458 = vshll.u32 %v449, %v456
        %v459 = vshrl.u32 %v441, %v457
        %v460 = vor.u32 %v458, %v459
        %v461 = vsub.s32 4294967266, %v456
        %v462 = vadd.s32 %v461, 127
        %v463 = vshll.u32 %v462, 23
        %v464 = vor.u32 4788187, %v463
        %v465 = vand.u32 2147483647, %v464
        %v467 = vcvt.s32.f32 %v460
        %v468 = vmul.f32 %v467, %v465
        %v469 = vxor.u32 %v468, 2147483648
        %v470 = vsel %vm387, %v469, %v468
        %v471 = vsub.s32 4, %v447
        %v472 = vsel %vm387, %v471, %v447
        %v473 = vsel %vm386, %v147, %v470
        %v474 = vsel %vm386, 0, %v472
        %v475 = vcosq.f32.pop %v473
        %v476 = vsinq.f32.pop %v473
        %vm477 = vweird.f32 %v147
        %v478 = vadd.s32 %v474, 3
        %v479 = vand.u32 %v478, 3
        %vm480 = vcmp.lt.s32.totalorder %v479, 2
        %vm481 = vcmp.eq.s32.totalorder %v479, 0
        %v482 = vxor.u32 %v476, 2147483648
        %v483 = vsel %vm481, %v475, %v482
        %vm484 = vcmp.eq.s32.totalorder %v479, 2
        %v485 = vxor.u32 %v475, 2147483648
        %v486 = vsel %vm484, %v485, %v476
        %v487 = vsel %vm480, %v483, %v486
        %v488 = vsel %vm477, nan, %v487
        %v489 = vand.u32 2147483647, %v148
        %vm490 = vcmp.le.f32.partialorder %v489, 0.7853982
        %vm491 = vcmp.lt.s32.totalorder %v148, 0
        %v492 = vand.u32 %v148, 2139095040
        %v493 = vshrl.u32 %v492, 23
        %v494 = vsub.s32 %v493, 127
        %v495 = vand.u32 2147483647, %v148
        %v496 = vand.u32 %v495, 8388607
        %v497 = vor.u32 %v496, 8388608
        %v498 = vsub.s32 0, %v497
        %v499 = vadd.s32 %v494, 1
        %vm500 = vcmp.gt.s32.totalorder %v499, 0
        %v501 = vsel %vm500, %v499, 0
        %v502 = vshrl.u32 %v501, 5
        %v503 = vand.u32 %v501, 31
        %v504 = vsub.s32 32, %v503
        %v505 = vshrl.u32 683565275, %v504
        %v506 = vshll.u32 683565275, %v503
        %v507 = vshrl.u32 2475754826, %v504
        %v508 = vor.u32 %v506, %v507
        %v509 = vshll.u32 2475754826, %v503
        %v510 = vshrl.u32 2131351028, %v504
        %v511 = vor.u32 %v509, %v510
        %v512 = vshll.u32 2131351028, %v503
        %v513 = vshrl.u32 2102212464, %v504
        %v514 = vor.u32 %v512, %v513
        %v515 = vshll.u32 2102212464, %v503
        %v516 = vshrl.u32 920167782, %v504
        %v517 = vor.u32 %v515, %v516
        %v518 = vshll.u32 920167782, %v503
        %v519 = vshrl.u32 1326507024, %v504
        %v520 = vor.u32 %v518, %v519
        %vm521 = vcmp.lt.s32.totalorder %v502, 1
        %vm522 = vcmp.lt.s32.totalorder %v502, 2
        %vm523 = vcmp.lt.s32.totalorder %v502, 3
        %vm524 = vcmp.lt.s32.totalorder %v502, 4
        %v525 = vsel %vm521, %v505, %v508
        %v526 = vsel %vm524, %v514, 2102212464
        %v527 = vsel %vm523, %v511, %v526
        %v528 = vsel %vm522, %v525, %v527
        %v529 = vsel %vm521, %v508, %v511
        %v530 = vsel %vm524, %v517, 920167782
        %v531 = vsel %vm523, %v514, %v530
        %v532 = vsel %vm522, %v529, %v531
        %v533 = vsel %vm521, %v511, %v514
        %v534 = vsel %vm524, %v520, 1326507024
        %v535 = vsel %vm523, %v517, %v534
        %v536 = vsel %vm522, %v533, %v535
        %v537 = vshll.u32 %v497, 8
        %v538 = vmul.u32.u64.compose %v537, %v536
        %v539 = vextract.low.u32 %v538
        %v540 = vextract.high.u32 %v538
        %v541 = vmul.u32.u64.compose %v537, %v532
        %v542 = vextract.low.u32 %v541
        %v543 = vextract.high.u32 %v541
        %v544 = vmul.u32 %v537, %v528
        %v545 = vadd.s32 %v540, %v542
        %vm546 = vc.u32 %v540, %v542
        %v547 = vadd.s32 %v543, 1
        %v548 = vsel %vm546, %v547, %v543
        %v549 = vadd.s32 %v544, %v548
        %v550 = vadd.s32 %v549, 536870912
        %v551 = vshrl.u32 %v550, 30
        %v552 = vshll.u32 %v551, 30
        %v553 = vsub.s32 %v549, %v552
        %vm554 = vcmp.lt.s32.totalorder %v553, 0
        %v555 = vsub.s32 0, %v553
        %v556 = vsel %vm554, %v555, %v553
        %v557 = vclz %v556
        %v558 = vsub.s32 %v557, 2
        %vm559 = vcmp.gt.s32.totalorder 0, %v558
        %v560 = vsel %vm559, 0, %v558
        %v561 = vsub.s32 32, %v560
        %v562 = vshll.u32 %v553, %v560
        %v563 = vshrl.u32 %v545, %v561
        %v564 = vor.u32 %v562, %v563
        %v565 = vsub.s32 4294967266, %v560
        %v566 = vadd.s32 %v565, 127
        %v567 = vshll.u32 %v566, 23
        %v568 = vor.u32 4788187, %v567
        %v569 = vand.u32 2147483647, %v568
        %v571 = vcvt.s32.f32 %v564
        %v572 = vmul.f32 %v571, %v569
        %v573 = vxor.u32 %v572, 2147483648
        %v574 = vsel %vm491, %v573, %v572
        %v575 = vsub.s32 4, %v551
        %v576 = vsel %vm491, %v575, %v551
        %v577 = vsel %vm490, %v148, %v574
        %v578 = vsel %vm490, 0, %v576
        %v579 = vcosq.f32.pop %v577
        %v580 = vsinq.f32.pop %v577
        %vm581 = vweird.f32 %v148
        %v582 = vadd.s32 %v578, 3
        %v583 = vand.u32 %v582, 3
        %vm584 = vcmp.lt.s32.totalorder %v583, 2
        %vm585 = vcmp.eq.s32.totalorder %v583, 0
        %v586 = vxor.u32 %v580, 2147483648
        %v587 = vsel %vm585, %v579, %v586
        %vm588 = vcmp.eq.s32.totalorder %v583, 2
        %v589 = vxor.u32 %v579, 2147483648
        %v590 = vsel %vm588, %v589, %v580
        %v591 = vsel %vm584, %v587, %v590
        %v592 = vsel %vm581, nan, %v591
        %v593 = vand.u32 2147483647, %v149
        %vm594 = vcmp.le.f32.partialorder %v593, 0.7853982
        %vm595 = vcmp.lt.s32.totalorder %v149, 0
        %v596 = vand.u32 %v149, 2139095040
        %v597 = vshrl.u32 %v596, 23
        %v598 = vsub.s32 %v597, 127
        %v599 = vand.u32 2147483647, %v149
        %v600 = vand.u32 %v599, 8388607
        %v601 = vor.u32 %v600, 8388608
        %v602 = vsub.s32 0, %v601
        %v603 = vadd.s32 %v598, 1
        %vm604 = vcmp.gt.s32.totalorder %v603, 0
        %v605 = vsel %vm604, %v603, 0
        %v606 = vshrl.u32 %v605, 5
        %v607 = vand.u32 %v605, 31
        %v608 = vsub.s32 32, %v607
        %v609 = vshrl.u32 683565275, %v608
        %v610 = vshll.u32 683565275, %v607
        %v611 = vshrl.u32 2475754826, %v608
        %v612 = vor.u32 %v610, %v611
        %v613 = vshll.u32 2475754826, %v607
        %v614 = vshrl.u32 2131351028, %v608
        %v615 = vor.u32 %v613, %v614
        %v616 = vshll.u32 2131351028, %v607
        %v617 = vshrl.u32 2102212464, %v608
        %v618 = vor.u32 %v616, %v617
        %v619 = vshll.u32 2102212464, %v607
        %v620 = vshrl.u32 920167782, %v608
        %v621 = vor.u32 %v619, %v620
        %v622 = vshll.u32 920167782, %v607
        %v623 = vshrl.u32 1326507024, %v608
        %v624 = vor.u32 %v622, %v623
        %vm625 = vcmp.lt.s32.totalorder %v606, 1
        %vm626 = vcmp.lt.s32.totalorder %v606, 2
        %vm627 = vcmp.lt.s32.totalorder %v606, 3
        %vm628 = vcmp.lt.s32.totalorder %v606, 4
        %v629 = vsel %vm625, %v609, %v612
        %v630 = vsel %vm628, %v618, 2102212464
        %v631 = vsel %vm627, %v615, %v630
        %v632 = vsel %vm626, %v629, %v631
        %v633 = vsel %vm625, %v612, %v615
        %v634 = vsel %vm628, %v621, 920167782
        %v635 = vsel %vm627, %v618, %v634
        %v636 = vsel %vm626, %v633, %v635
        %v637 = vsel %vm625, %v615, %v618
        %v638 = vsel %vm628, %v624, 1326507024
        %v639 = vsel %vm627, %v621, %v638
        %v640 = vsel %vm626, %v637, %v639
        %v641 = vshll.u32 %v601, 8
        %v642 = vmul.u32.u64.compose %v641, %v640
        %v643 = vextract.low.u32 %v642
        %v644 = vextract.high.u32 %v642
        %v645 = vmul.u32.u64.compose %v641, %v636
        %v646 = vextract.low.u32 %v645
        %v647 = vextract.high.u32 %v645
        %v648 = vmul.u32 %v641, %v632
        %v649 = vadd.s32 %v644, %v646
        %vm650 = vc.u32 %v644, %v646
        %v651 = vadd.s32 %v647, 1
        %v652 = vsel %vm650, %v651, %v647
        %v653 = vadd.s32 %v648, %v652
        %v654 = vadd.s32 %v653, 536870912
        %v655 = vshrl.u32 %v654, 30
        %v656 = vshll.u32 %v655, 30
        %v657 = vsub.s32 %v653, %v656
        %vm658 = vcmp.lt.s32.totalorder %v657, 0
        %v659 = vsub.s32 0, %v657
        %v660 = vsel %vm658, %v659, %v657
        %v661 = vclz %v660
        %v662 = vsub.s32 %v661, 2
        %vm663 = vcmp.gt.s32.totalorder 0, %v662
        %v664 = vsel %vm663, 0, %v662
        %v665 = vsub.s32 32, %v664
        %v666 = vshll.u32 %v657, %v664
        %v667 = vshrl.u32 %v649, %v665
        %v668 = vor.u32 %v666, %v667
        %v669 = vsub.s32 4294967266, %v664
        %v670 = vadd.s32 %v669, 127
        %v671 = vshll.u32 %v670, 23
        %v672 = vor.u32 4788187, %v671
        %v673 = vand.u32 2147483647, %v672
        %v675 = vcvt.s32.f32 %v668
        %v676 = vmul.f32 %v675, %v673
        %v677 = vxor.u32 %v676, 2147483648
        %v678 = vsel %vm595, %v677, %v676
        %v679 = vsub.s32 4, %v655
        %v680 = vsel %vm595, %v679, %v655
        %v681 = vsel %vm594, %v149, %v678
        %v682 = vsel %vm594, 0, %v680
        %v683 = vcosq.f32.pop %v681
        %v684 = vsinq.f32.pop %v681
        %vm685 = vweird.f32 %v149
        %v686 = vadd.s32 %v682, 3
        %v687 = vand.u32 %v686, 3
        %vm688 = vcmp.lt.s32.totalorder %v687, 2
        %vm689 = vcmp.eq.s32.totalorder %v687, 0
        %v690 = vxor.u32 %v684, 2147483648
        %v691 = vsel %vm689, %v683, %v690
        %vm692 = vcmp.eq.s32.totalorder %v687, 2
        %v693 = vxor.u32 %v683, 2147483648
        %v694 = vsel %vm692, %v693, %v684
        %v695 = vsel %vm688, %v691, %v694
        %v696 = vsel %vm685, nan, %v695
        %v697 = vand.u32 2147483647, %v150
        %vm698 = vcmp.le.f32.partialorder %v697, 0.7853982
        %vm699 = vcmp.lt.s32.totalorder %v150, 0
        %v700 = vand.u32 %v150, 2139095040
        %v701 = vshrl.u32 %v700, 23
        %v702 = vsub.s32 %v701, 127
        %v703 = vand.u32 2147483647, %v150
        %v704 = vand.u32 %v703, 8388607
        %v705 = vor.u32 %v704, 8388608
        %v706 = vsub.s32 0, %v705
        %v707 = vadd.s32 %v702, 1
        %vm708 = vcmp.gt.s32.totalorder %v707, 0
        %v709 = vsel %vm708, %v707, 0
        %v710 = vshrl.u32 %v709, 5
        %v711 = vand.u32 %v709, 31
        %v712 = vsub.s32 32, %v711
        %v713 = vshrl.u32 683565275, %v712
        %v714 = vshll.u32 683565275, %v711
        %v715 = vshrl.u32 2475754826, %v712
        %v716 = vor.u32 %v714, %v715
        %v717 = vshll.u32 2475754826, %v711
        %v718 = vshrl.u32 2131351028, %v712
        %v719 = vor.u32 %v717, %v718
        %v720 = vshll.u32 2131351028, %v711
        %v721 = vshrl.u32 2102212464, %v712
        %v722 = vor.u32 %v720, %v721
        %v723 = vshll.u32 2102212464, %v711
        %v724 = vshrl.u32 920167782, %v712
        %v725 = vor.u32 %v723, %v724
        %v726 = vshll.u32 920167782, %v711
        %v727 = vshrl.u32 1326507024, %v712
        %v728 = vor.u32 %v726, %v727
        %vm729 = vcmp.lt.s32.totalorder %v710, 1
        %vm730 = vcmp.lt.s32.totalorder %v710, 2
        %vm731 = vcmp.lt.s32.totalorder %v710, 3
        %vm732 = vcmp.lt.s32.totalorder %v710, 4
        %v733 = vsel %vm729, %v713, %v716
        %v734 = vsel %vm732, %v722, 2102212464
        %v735 = vsel %vm731, %v719, %v734
        %v736 = vsel %vm730, %v733, %v735
        %v737 = vsel %vm729, %v716, %v719
        %v738 = vsel %vm732, %v725, 920167782
        %v739 = vsel %vm731, %v722, %v738
        %v740 = vsel %vm730, %v737, %v739
        %v741 = vsel %vm729, %v719, %v722
        %v742 = vsel %vm732, %v728, 1326507024
        %v743 = vsel %vm731, %v725, %v742
        %v744 = vsel %vm730, %v741, %v743
        %v745 = vshll.u32 %v705, 8
        %v746 = vmul.u32.u64.compose %v745, %v744
        %v747 = vextract.low.u32 %v746
        %v748 = vextract.high.u32 %v746
        %v749 = vmul.u32.u64.compose %v745, %v740
        %v750 = vextract.low.u32 %v749
        %v751 = vextract.high.u32 %v749
        %v752 = vmul.u32 %v745, %v736
        %v753 = vadd.s32 %v748, %v750
        %vm754 = vc.u32 %v748, %v750
        %v755 = vadd.s32 %v751, 1
        %v756 = vsel %vm754, %v755, %v751
        %v757 = vadd.s32 %v752, %v756
        %v758 = vadd.s32 %v757, 536870912
        %v759 = vshrl.u32 %v758, 30
        %v760 = vshll.u32 %v759, 30
        %v761 = vsub.s32 %v757, %v760
        %vm762 = vcmp.lt.s32.totalorder %v761, 0
        %v763 = vsub.s32 0, %v761
        %v764 = vsel %vm762, %v763, %v761
        %v765 = vclz %v764
        %v766 = vsub.s32 %v765, 2
        %vm767 = vcmp.gt.s32.totalorder 0, %v766
        %v768 = vsel %vm767, 0, %v766
        %v769 = vsub.s32 32, %v768
        %v770 = vshll.u32 %v761, %v768
        %v771 = vshrl.u32 %v753, %v769
        %v772 = vor.u32 %v770, %v771
        %v773 = vsub.s32 4294967266, %v768
        %v774 = vadd.s32 %v773, 127
        %v775 = vshll.u32 %v774, 23
        %v776 = vor.u32 4788187, %v775
        %v777 = vand.u32 2147483647, %v776
        %v779 = vcvt.s32.f32 %v772
        %v780 = vmul.f32 %v779, %v777
        %v781 = vxor.u32 %v780, 2147483648
        %v782 = vsel %vm699, %v781, %v780
        %v783 = vsub.s32 4, %v759
        %v784 = vsel %vm699, %v783, %v759
        %v785 = vsel %vm698, %v150, %v782
        %v786 = vsel %vm698, 0, %v784
        %v787 = vcosq.f32.pop %v785
        %v788 = vsinq.f32.pop %v785
        %vm789 = vweird.f32 %v150
        %v790 = vadd.s32 %v786, 3
        %v791 = vand.u32 %v790, 3
        %vm792 = vcmp.lt.s32.totalorder %v791, 2
        %vm793 = vcmp.eq.s32.totalorder %v791, 0
        %v794 = vxor.u32 %v788, 2147483648
        %v795 = vsel %vm793, %v787, %v794
        %vm796 = vcmp.eq.s32.totalorder %v791, 2
        %v797 = vxor.u32 %v787, 2147483648
        %v798 = vsel %vm796, %v797, %v788
        %v799 = vsel %vm792, %v795, %v798
        %v800 = vsel %vm789, nan, %v799
        %v801 = vand.u32 2147483647, %v151
        %vm802 = vcmp.le.f32.partialorder %v801, 0.7853982
        %vm803 = vcmp.lt.s32.totalorder %v151, 0
        %v804 = vand.u32 %v151, 2139095040
        %v805 = vshrl.u32 %v804, 23
        %v806 = vsub.s32 %v805, 127
        %v807 = vand.u32 2147483647, %v151
        %v808 = vand.u32 %v807, 8388607
        %v809 = vor.u32 %v808, 8388608
        %v810 = vsub.s32 0, %v809
        %v811 = vadd.s32 %v806, 1
        %vm812 = vcmp.gt.s32.totalorder %v811, 0
        %v813 = vsel %vm812, %v811, 0
        %v814 = vshrl.u32 %v813, 5
        %v815 = vand.u32 %v813, 31
        %v816 = vsub.s32 32, %v815
        %v817 = vshrl.u32 683565275, %v816
        %v818 = vshll.u32 683565275, %v815
        %v819 = vshrl.u32 2475754826, %v816
        %v820 = vor.u32 %v818, %v819
        %v821 = vshll.u32 2475754826, %v815
        %v822 = vshrl.u32 2131351028, %v816
        %v823 = vor.u32 %v821, %v822
        %v824 = vshll.u32 2131351028, %v815
        %v825 = vshrl.u32 2102212464, %v816
        %v826 = vor.u32 %v824, %v825
        %v827 = vshll.u32 2102212464, %v815
        %v828 = vshrl.u32 920167782, %v816
        %v829 = vor.u32 %v827, %v828
        %v830 = vshll.u32 920167782, %v815
        %v831 = vshrl.u32 1326507024, %v816
        %v832 = vor.u32 %v830, %v831
        %vm833 = vcmp.lt.s32.totalorder %v814, 1
        %vm834 = vcmp.lt.s32.totalorder %v814, 2
        %vm835 = vcmp.lt.s32.totalorder %v814, 3
        %vm836 = vcmp.lt.s32.totalorder %v814, 4
        %v837 = vsel %vm833, %v817, %v820
        %v838 = vsel %vm836, %v826, 2102212464
        %v839 = vsel %vm835, %v823, %v838
        %v840 = vsel %vm834, %v837, %v839
        %v841 = vsel %vm833, %v820, %v823
        %v842 = vsel %vm836, %v829, 920167782
        %v843 = vsel %vm835, %v826, %v842
        %v844 = vsel %vm834, %v841, %v843
        %v845 = vsel %vm833, %v823, %v826
        %v846 = vsel %vm836, %v832, 1326507024
        %v847 = vsel %vm835, %v829, %v846
        %v848 = vsel %vm834, %v845, %v847
        %v849 = vshll.u32 %v809, 8
        %v850 = vmul.u32.u64.compose %v849, %v848
        %v851 = vextract.low.u32 %v850
        %v852 = vextract.high.u32 %v850
        %v853 = vmul.u32.u64.compose %v849, %v844
        %v854 = vextract.low.u32 %v853
        %v855 = vextract.high.u32 %v853
        %v856 = vmul.u32 %v849, %v840
        %v857 = vadd.s32 %v852, %v854
        %vm858 = vc.u32 %v852, %v854
        %v859 = vadd.s32 %v855, 1
        %v860 = vsel %vm858, %v859, %v855
        %v861 = vadd.s32 %v856, %v860
        %v862 = vadd.s32 %v861, 536870912
        %v863 = vshrl.u32 %v862, 30
        %v864 = vshll.u32 %v863, 30
        %v865 = vsub.s32 %v861, %v864
        %vm866 = vcmp.lt.s32.totalorder %v865, 0
        %v867 = vsub.s32 0, %v865
        %v868 = vsel %vm866, %v867, %v865
        %v869 = vclz %v868
        %v870 = vsub.s32 %v869, 2
        %vm871 = vcmp.gt.s32.totalorder 0, %v870
        %v872 = vsel %vm871, 0, %v870
        %v873 = vsub.s32 32, %v872
        %v874 = vshll.u32 %v865, %v872
        %v875 = vshrl.u32 %v857, %v873
        %v876 = vor.u32 %v874, %v875
        %v877 = vsub.s32 4294967266, %v872
        %v878 = vadd.s32 %v877, 127
        %v879 = vshll.u32 %v878, 23
        %v880 = vor.u32 4788187, %v879
        %v881 = vand.u32 2147483647, %v880
        %v883 = vcvt.s32.f32 %v876
        %v884 = vmul.f32 %v883, %v881
        %v885 = vxor.u32 %v884, 2147483648
        %v886 = vsel %vm803, %v885, %v884
        %v887 = vsub.s32 4, %v863
        %v888 = vsel %vm803, %v887, %v863
        %v889 = vsel %vm802, %v151, %v886
        %v890 = vsel %vm802, 0, %v888
        %v891 = vcosq.f32.pop %v889
        %v892 = vsinq.f32.pop %v889
        %vm893 = vweird.f32 %v151
        %v894 = vadd.s32 %v890, 3
        %v895 = vand.u32 %v894, 3
        %vm896 = vcmp.lt.s32.totalorder %v895, 2
        %vm897 = vcmp.eq.s32.totalorder %v895, 0
        %v898 = vxor.u32 %v892, 2147483648
        %v899 = vsel %vm897, %v891, %v898
        %vm900 = vcmp.eq.s32.totalorder %v895, 2
        %v901 = vxor.u32 %v891, 2147483648
        %v902 = vsel %vm900, %v901, %v892
        %v903 = vsel %vm896, %v899, %v902
        %v904 = vsel %vm893, nan, %v903
        %v905 = vand.u32 2147483647, %v152
        %vm906 = vcmp.le.f32.partialorder %v905, 0.7853982
        %vm907 = vcmp.lt.s32.totalorder %v152, 0
        %v908 = vand.u32 %v152, 2139095040
        %v909 = vshrl.u32 %v908, 23
        %v910 = vsub.s32 %v909, 127
        %v911 = vand.u32 2147483647, %v152
        %v912 = vand.u32 %v911, 8388607
        %v913 = vor.u32 %v912, 8388608
        %v914 = vsub.s32 0, %v913
        %v915 = vadd.s32 %v910, 1
        %vm916 = vcmp.gt.s32.totalorder %v915, 0
        %v917 = vsel %vm916, %v915, 0
        %v918 = vshrl.u32 %v917, 5
        %v919 = vand.u32 %v917, 31
        %v920 = vsub.s32 32, %v919
        %v921 = vshrl.u32 683565275, %v920
        %v922 = vshll.u32 683565275, %v919
        %v923 = vshrl.u32 2475754826, %v920
        %v924 = vor.u32 %v922, %v923
        %v925 = vshll.u32 2475754826, %v919
        %v926 = vshrl.u32 2131351028, %v920
        %v927 = vor.u32 %v925, %v926
        %v928 = vshll.u32 2131351028, %v919
        %v929 = vshrl.u32 2102212464, %v920
        %v930 = vor.u32 %v928, %v929
        %v931 = vshll.u32 2102212464, %v919
        %v932 = vshrl.u32 920167782, %v920
        %v933 = vor.u32 %v931, %v932
        %v934 = vshll.u32 920167782, %v919
        %v935 = vshrl.u32 1326507024, %v920
        %v936 = vor.u32 %v934, %v935
        %vm937 = vcmp.lt.s32.totalorder %v918, 1
        %vm938 = vcmp.lt.s32.totalorder %v918, 2
        %vm939 = vcmp.lt.s32.totalorder %v918, 3
        %vm940 = vcmp.lt.s32.totalorder %v918, 4
        %v941 = vsel %vm937, %v921, %v924
        %v942 = vsel %vm940, %v930, 2102212464
        %v943 = vsel %vm939, %v927, %v942
        %v944 = vsel %vm938, %v941, %v943
        %v945 = vsel %vm937, %v924, %v927
        %v946 = vsel %vm940, %v933, 920167782
        %v947 = vsel %vm939, %v930, %v946
        %v948 = vsel %vm938, %v945, %v947
        %v949 = vsel %vm937, %v927, %v930
        %v950 = vsel %vm940, %v936, 1326507024
        %v951 = vsel %vm939, %v933, %v950
        %v952 = vsel %vm938, %v949, %v951
        %v953 = vshll.u32 %v913, 8
        %v954 = vmul.u32.u64.compose %v953, %v952
        %v955 = vextract.low.u32 %v954
        %v956 = vextract.high.u32 %v954
        %v957 = vmul.u32.u64.compose %v953, %v948
        %v958 = vextract.low.u32 %v957
        %v959 = vextract.high.u32 %v957
        %v960 = vmul.u32 %v953, %v944
        %v961 = vadd.s32 %v956, %v958
        %vm962 = vc.u32 %v956, %v958
        %v963 = vadd.s32 %v959, 1
        %v964 = vsel %vm962, %v963, %v959
        %v965 = vadd.s32 %v960, %v964
        %v966 = vadd.s32 %v965, 536870912
        %v967 = vshrl.u32 %v966, 30
        %v968 = vshll.u32 %v967, 30
        %v969 = vsub.s32 %v965, %v968
        %vm970 = vcmp.lt.s32.totalorder %v969, 0
        %v971 = vsub.s32 0, %v969
        %v972 = vsel %vm970, %v971, %v969
        %v973 = vclz %v972
        %v974 = vsub.s32 %v973, 2
        %vm975 = vcmp.gt.s32.totalorder 0, %v974
        %v976 = vsel %vm975, 0, %v974
        %v977 = vsub.s32 32, %v976
        %v978 = vshll.u32 %v969, %v976
        %v979 = vshrl.u32 %v961, %v977
        %v980 = vor.u32 %v978, %v979
        %v981 = vsub.s32 4294967266, %v976
        %v982 = vadd.s32 %v981, 127
        %v983 = vshll.u32 %v982, 23
        %v984 = vor.u32 4788187, %v983
        %v985 = vand.u32 2147483647, %v984
        %v987 = vcvt.s32.f32 %v980
        %v988 = vmul.f32 %v987, %v985
        %v989 = vxor.u32 %v988, 2147483648
        %v990 = vsel %vm907, %v989, %v988
        %v991 = vsub.s32 4, %v967
        %v992 = vsel %vm907, %v991, %v967
        %v993 = vsel %vm906, %v152, %v990
        %v994 = vsel %vm906, 0, %v992
        %v995 = vcosq.f32.pop %v993
        %v996 = vsinq.f32.pop %v993
        %vm997 = vweird.f32 %v152
        %v998 = vadd.s32 %v994, 3
        %v999 = vand.u32 %v998, 3
        %vm1000 = vcmp.lt.s32.totalorder %v999, 2
        %vm1001 = vcmp.eq.s32.totalorder %v999, 0
        %v1002 = vxor.u32 %v996, 2147483648
        %v1003 = vsel %vm1001, %v995, %v1002
        %vm1004 = vcmp.eq.s32.totalorder %v999, 2
        %v1005 = vxor.u32 %v995, 2147483648
        %v1006 = vsel %vm1004, %v1005, %v996
        %v1007 = vsel %vm1000, %v1003, %v1006
        %v1008 = vsel %vm997, nan, %v1007
        %v1009 = vand.u32 2147483647, %v153
        %vm1010 = vcmp.le.f32.partialorder %v1009, 0.7853982
        %vm1011 = vcmp.lt.s32.totalorder %v153, 0
        %v1012 = vand.u32 %v153, 2139095040
        %v1013 = vshrl.u32 %v1012, 23
        %v1014 = vsub.s32 %v1013, 127
        %v1015 = vand.u32 2147483647, %v153
        %v1016 = vand.u32 %v1015, 8388607
        %v1017 = vor.u32 %v1016, 8388608
        %v1018 = vsub.s32 0, %v1017
        %v1019 = vadd.s32 %v1014, 1
        %vm1020 = vcmp.gt.s32.totalorder %v1019, 0
        %v1021 = vsel %vm1020, %v1019, 0
        %v1022 = vshrl.u32 %v1021, 5
        %v1023 = vand.u32 %v1021, 31
        %v1024 = vsub.s32 32, %v1023
        %v1025 = vshrl.u32 683565275, %v1024
        %v1026 = vshll.u32 683565275, %v1023
        %v1027 = vshrl.u32 2475754826, %v1024
        %v1028 = vor.u32 %v1026, %v1027
        %v1029 = vshll.u32 2475754826, %v1023
        %v1030 = vshrl.u32 2131351028, %v1024
        %v1031 = vor.u32 %v1029, %v1030
        %v1032 = vshll.u32 2131351028, %v1023
        %v1033 = vshrl.u32 2102212464, %v1024
        %v1034 = vor.u32 %v1032, %v1033
        %v1035 = vshll.u32 2102212464, %v1023
        %v1036 = vshrl.u32 920167782, %v1024
        %v1037 = vor.u32 %v1035, %v1036
        %v1038 = vshll.u32 920167782, %v1023
        %v1039 = vshrl.u32 1326507024, %v1024
        %v1040 = vor.u32 %v1038, %v1039
        %vm1041 = vcmp.lt.s32.totalorder %v1022, 1
        %vm1042 = vcmp.lt.s32.totalorder %v1022, 2
        %vm1043 = vcmp.lt.s32.totalorder %v1022, 3
        %vm1044 = vcmp.lt.s32.totalorder %v1022, 4
        %v1045 = vsel %vm1041, %v1025, %v1028
        %v1046 = vsel %vm1044, %v1034, 2102212464
        %v1047 = vsel %vm1043, %v1031, %v1046
        %v1048 = vsel %vm1042, %v1045, %v1047
        %v1049 = vsel %vm1041, %v1028, %v1031
        %v1050 = vsel %vm1044, %v1037, 920167782
        %v1051 = vsel %vm1043, %v1034, %v1050
        %v1052 = vsel %vm1042, %v1049, %v1051
        %v1053 = vsel %vm1041, %v1031, %v1034
        %v1054 = vsel %vm1044, %v1040, 1326507024
        %v1055 = vsel %vm1043, %v1037, %v1054
        %v1056 = vsel %vm1042, %v1053, %v1055
        %v1057 = vshll.u32 %v1017, 8
        %v1058 = vmul.u32.u64.compose %v1057, %v1056
        %v1059 = vextract.low.u32 %v1058
        %v1060 = vextract.high.u32 %v1058
        %v1061 = vmul.u32.u64.compose %v1057, %v1052
        %v1062 = vextract.low.u32 %v1061
        %v1063 = vextract.high.u32 %v1061
        %v1064 = vmul.u32 %v1057, %v1048
        %v1065 = vadd.s32 %v1060, %v1062
        %vm1066 = vc.u32 %v1060, %v1062
        %v1067 = vadd.s32 %v1063, 1
        %v1068 = vsel %vm1066, %v1067, %v1063
        %v1069 = vadd.s32 %v1064, %v1068
        %v1070 = vadd.s32 %v1069, 536870912
        %v1071 = vshrl.u32 %v1070, 30
        %v1072 = vshll.u32 %v1071, 30
        %v1073 = vsub.s32 %v1069, %v1072
        %vm1074 = vcmp.lt.s32.totalorder %v1073, 0
        %v1075 = vsub.s32 0, %v1073
        %v1076 = vsel %vm1074, %v1075, %v1073
        %v1077 = vclz %v1076
        %v1078 = vsub.s32 %v1077, 2
        %vm1079 = vcmp.gt.s32.totalorder 0, %v1078
        %v1080 = vsel %vm1079, 0, %v1078
        %v1081 = vsub.s32 32, %v1080
        %v1082 = vshll.u32 %v1073, %v1080
        %v1083 = vshrl.u32 %v1065, %v1081
        %v1084 = vor.u32 %v1082, %v1083
        %v1085 = vsub.s32 4294967266, %v1080
        %v1086 = vadd.s32 %v1085, 127
        %v1087 = vshll.u32 %v1086, 23
        %v1088 = vor.u32 4788187, %v1087
        %v1089 = vand.u32 2147483647, %v1088
        %v1091 = vcvt.s32.f32 %v1084
        %v1092 = vmul.f32 %v1091, %v1089
        %v1093 = vxor.u32 %v1092, 2147483648
        %v1094 = vsel %vm1011, %v1093, %v1092
        %v1095 = vsub.s32 4, %v1071
        %v1096 = vsel %vm1011, %v1095, %v1071
        %v1097 = vsel %vm1010, %v153, %v1094
        %v1098 = vsel %vm1010, 0, %v1096
        %v1099 = vcosq.f32.pop %v1097
        %v1100 = vsinq.f32.pop %v1097
        %vm1101 = vweird.f32 %v153
        %v1102 = vadd.s32 %v1098, 3
        %v1103 = vand.u32 %v1102, 3
        %vm1104 = vcmp.lt.s32.totalorder %v1103, 2
        %vm1105 = vcmp.eq.s32.totalorder %v1103, 0
        %v1106 = vxor.u32 %v1100, 2147483648
        %v1107 = vsel %vm1105, %v1099, %v1106
        %vm1108 = vcmp.eq.s32.totalorder %v1103, 2
        %v1109 = vxor.u32 %v1099, 2147483648
        %v1110 = vsel %vm1108, %v1109, %v1100
        %v1111 = vsel %vm1104, %v1107, %v1110
        %v1112 = vsel %vm1101, nan, %v1111
        %v1113 = vand.u32 2147483647, %v154
        %vm1114 = vcmp.le.f32.partialorder %v1113, 0.7853982
        %vm1115 = vcmp.lt.s32.totalorder %v154, 0
        %v1116 = vand.u32 %v154, 2139095040
        %v1117 = vshrl.u32 %v1116, 23
        %v1118 = vsub.s32 %v1117, 127
        %v1119 = vand.u32 2147483647, %v154
        %v1120 = vand.u32 %v1119, 8388607
        %v1121 = vor.u32 %v1120, 8388608
        %v1122 = vsub.s32 0, %v1121
        %v1123 = vadd.s32 %v1118, 1
        %vm1124 = vcmp.gt.s32.totalorder %v1123, 0
        %v1125 = vsel %vm1124, %v1123, 0
        %v1126 = vshrl.u32 %v1125, 5
        %v1127 = vand.u32 %v1125, 31
        %v1128 = vsub.s32 32, %v1127
        %v1129 = vshrl.u32 683565275, %v1128
        %v1130 = vshll.u32 683565275, %v1127
        %v1131 = vshrl.u32 2475754826, %v1128
        %v1132 = vor.u32 %v1130, %v1131
        %v1133 = vshll.u32 2475754826, %v1127
        %v1134 = vshrl.u32 2131351028, %v1128
        %v1135 = vor.u32 %v1133, %v1134
        %v1136 = vshll.u32 2131351028, %v1127
        %v1137 = vshrl.u32 2102212464, %v1128
        %v1138 = vor.u32 %v1136, %v1137
        %v1139 = vshll.u32 2102212464, %v1127
        %v1140 = vshrl.u32 920167782, %v1128
        %v1141 = vor.u32 %v1139, %v1140
        %v1142 = vshll.u32 920167782, %v1127
        %v1143 = vshrl.u32 1326507024, %v1128
        %v1144 = vor.u32 %v1142, %v1143
        %vm1145 = vcmp.lt.s32.totalorder %v1126, 1
        %vm1146 = vcmp.lt.s32.totalorder %v1126, 2
        %vm1147 = vcmp.lt.s32.totalorder %v1126, 3
        %vm1148 = vcmp.lt.s32.totalorder %v1126, 4
        %v1149 = vsel %vm1145, %v1129, %v1132
        %v1150 = vsel %vm1148, %v1138, 2102212464
        %v1151 = vsel %vm1147, %v1135, %v1150
        %v1152 = vsel %vm1146, %v1149, %v1151
        %v1153 = vsel %vm1145, %v1132, %v1135
        %v1154 = vsel %vm1148, %v1141, 920167782
        %v1155 = vsel %vm1147, %v1138, %v1154
        %v1156 = vsel %vm1146, %v1153, %v1155
        %v1157 = vsel %vm1145, %v1135, %v1138
        %v1158 = vsel %vm1148, %v1144, 1326507024
        %v1159 = vsel %vm1147, %v1141, %v1158
        %v1160 = vsel %vm1146, %v1157, %v1159
        %v1161 = vshll.u32 %v1121, 8
        %v1162 = vmul.u32.u64.compose %v1161, %v1160
        %v1163 = vextract.low.u32 %v1162
        %v1164 = vextract.high.u32 %v1162
        %v1165 = vmul.u32.u64.compose %v1161, %v1156
        %v1166 = vextract.low.u32 %v1165
        %v1167 = vextract.high.u32 %v1165
        %v1168 = vmul.u32 %v1161, %v1152
        %v1169 = vadd.s32 %v1164, %v1166
        %vm1170 = vc.u32 %v1164, %v1166
        %v1171 = vadd.s32 %v1167, 1
        %v1172 = vsel %vm1170, %v1171, %v1167
        %v1173 = vadd.s32 %v1168, %v1172
        %v1174 = vadd.s32 %v1173, 536870912
        %v1175 = vshrl.u32 %v1174, 30
        %v1176 = vshll.u32 %v1175, 30
        %v1177 = vsub.s32 %v1173, %v1176
        %vm1178 = vcmp.lt.s32.totalorder %v1177, 0
        %v1179 = vsub.s32 0, %v1177
        %v1180 = vsel %vm1178, %v1179, %v1177
        %v1181 = vclz %v1180
        %v1182 = vsub.s32 %v1181, 2
        %vm1183 = vcmp.gt.s32.totalorder 0, %v1182
        %v1184 = vsel %vm1183, 0, %v1182
        %v1185 = vsub.s32 32, %v1184
        %v1186 = vshll.u32 %v1177, %v1184
        %v1187 = vshrl.u32 %v1169, %v1185
        %v1188 = vor.u32 %v1186, %v1187
        %v1189 = vsub.s32 4294967266, %v1184
        %v1190 = vadd.s32 %v1189, 127
        %v1191 = vshll.u32 %v1190, 23
        %v1192 = vor.u32 4788187, %v1191
        %v1193 = vand.u32 2147483647, %v1192
        %v1195 = vcvt.s32.f32 %v1188
        %v1196 = vmul.f32 %v1195, %v1193
        %v1197 = vxor.u32 %v1196, 2147483648
        %v1198 = vsel %vm1115, %v1197, %v1196
        %v1199 = vsub.s32 4, %v1175
        %v1200 = vsel %vm1115, %v1199, %v1175
        %v1201 = vsel %vm1114, %v154, %v1198
        %v1202 = vsel %vm1114, 0, %v1200
        %v1203 = vcosq.f32.pop %v1201
        %v1204 = vsinq.f32.pop %v1201
        %vm1205 = vweird.f32 %v154
        %v1206 = vadd.s32 %v1202, 3
        %v1207 = vand.u32 %v1206, 3
        %vm1208 = vcmp.lt.s32.totalorder %v1207, 2
        %vm1209 = vcmp.eq.s32.totalorder %v1207, 0
        %v1210 = vxor.u32 %v1204, 2147483648
        %v1211 = vsel %vm1209, %v1203, %v1210
        %vm1212 = vcmp.eq.s32.totalorder %v1207, 2
        %v1213 = vxor.u32 %v1203, 2147483648
        %v1214 = vsel %vm1212, %v1213, %v1204
        %v1215 = vsel %vm1208, %v1211, %v1214
        %v1216 = vsel %vm1205, nan, %v1215
        %v1217 = vand.u32 2147483647, %v155
        %vm1218 = vcmp.le.f32.partialorder %v1217, 0.7853982
        %vm1219 = vcmp.lt.s32.totalorder %v155, 0
        %v1220 = vand.u32 %v155, 2139095040
        %v1221 = vshrl.u32 %v1220, 23
        %v1222 = vsub.s32 %v1221, 127
        %v1223 = vand.u32 2147483647, %v155
        %v1224 = vand.u32 %v1223, 8388607
        %v1225 = vor.u32 %v1224, 8388608
        %v1226 = vsub.s32 0, %v1225
        %v1227 = vadd.s32 %v1222, 1
        %vm1228 = vcmp.gt.s32.totalorder %v1227, 0
        %v1229 = vsel %vm1228, %v1227, 0
        %v1230 = vshrl.u32 %v1229, 5
        %v1231 = vand.u32 %v1229, 31
        %v1232 = vsub.s32 32, %v1231
        %v1233 = vshrl.u32 683565275, %v1232
        %v1234 = vshll.u32 683565275, %v1231
        %v1235 = vshrl.u32 2475754826, %v1232
        %v1236 = vor.u32 %v1234, %v1235
        %v1237 = vshll.u32 2475754826, %v1231
        %v1238 = vshrl.u32 2131351028, %v1232
        %v1239 = vor.u32 %v1237, %v1238
        %v1240 = vshll.u32 2131351028, %v1231
        %v1241 = vshrl.u32 2102212464, %v1232
        %v1242 = vor.u32 %v1240, %v1241
        %v1243 = vshll.u32 2102212464, %v1231
        %v1244 = vshrl.u32 920167782, %v1232
        %v1245 = vor.u32 %v1243, %v1244
        %v1246 = vshll.u32 920167782, %v1231
        %v1247 = vshrl.u32 1326507024, %v1232
        %v1248 = vor.u32 %v1246, %v1247
        %vm1249 = vcmp.lt.s32.totalorder %v1230, 1
        %vm1250 = vcmp.lt.s32.totalorder %v1230, 2
        %vm1251 = vcmp.lt.s32.totalorder %v1230, 3
        %vm1252 = vcmp.lt.s32.totalorder %v1230, 4
        %v1253 = vsel %vm1249, %v1233, %v1236
        %v1254 = vsel %vm1252, %v1242, 2102212464
        %v1255 = vsel %vm1251, %v1239, %v1254
        %v1256 = vsel %vm1250, %v1253, %v1255
        %v1257 = vsel %vm1249, %v1236, %v1239
        %v1258 = vsel %vm1252, %v1245, 920167782
        %v1259 = vsel %vm1251, %v1242, %v1258
        %v1260 = vsel %vm1250, %v1257, %v1259
        %v1261 = vsel %vm1249, %v1239, %v1242
        %v1262 = vsel %vm1252, %v1248, 1326507024
        %v1263 = vsel %vm1251, %v1245, %v1262
        %v1264 = vsel %vm1250, %v1261, %v1263
        %v1265 = vshll.u32 %v1225, 8
        %v1266 = vmul.u32.u64.compose %v1265, %v1264
        %v1267 = vextract.low.u32 %v1266
        %v1268 = vextract.high.u32 %v1266
        %v1269 = vmul.u32.u64.compose %v1265, %v1260
        %v1270 = vextract.low.u32 %v1269
        %v1271 = vextract.high.u32 %v1269
        %v1272 = vmul.u32 %v1265, %v1256
        %v1273 = vadd.s32 %v1268, %v1270
        %vm1274 = vc.u32 %v1268, %v1270
        %v1275 = vadd.s32 %v1271, 1
        %v1276 = vsel %vm1274, %v1275, %v1271
        %v1277 = vadd.s32 %v1272, %v1276
        %v1278 = vadd.s32 %v1277, 536870912
        %v1279 = vshrl.u32 %v1278, 30
        %v1280 = vshll.u32 %v1279, 30
        %v1281 = vsub.s32 %v1277, %v1280
        %vm1282 = vcmp.lt.s32.totalorder %v1281, 0
        %v1283 = vsub.s32 0, %v1281
        %v1284 = vsel %vm1282, %v1283, %v1281
        %v1285 = vclz %v1284
        %v1286 = vsub.s32 %v1285, 2
        %vm1287 = vcmp.gt.s32.totalorder 0, %v1286
        %v1288 = vsel %vm1287, 0, %v1286
        %v1289 = vsub.s32 32, %v1288
        %v1290 = vshll.u32 %v1281, %v1288
        %v1291 = vshrl.u32 %v1273, %v1289
        %v1292 = vor.u32 %v1290, %v1291
        %v1293 = vsub.s32 4294967266, %v1288
        %v1294 = vadd.s32 %v1293, 127
        %v1295 = vshll.u32 %v1294, 23
        %v1296 = vor.u32 4788187, %v1295
        %v1297 = vand.u32 2147483647, %v1296
        %v1299 = vcvt.s32.f32 %v1292
        %v1300 = vmul.f32 %v1299, %v1297
        %v1301 = vxor.u32 %v1300, 2147483648
        %v1302 = vsel %vm1219, %v1301, %v1300
        %v1303 = vsub.s32 4, %v1279
        %v1304 = vsel %vm1219, %v1303, %v1279
        %v1305 = vsel %vm1218, %v155, %v1302
        %v1306 = vsel %vm1218, 0, %v1304
        %v1307 = vcosq.f32.pop %v1305
        %v1308 = vsinq.f32.pop %v1305
        %vm1309 = vweird.f32 %v155
        %v1310 = vadd.s32 %v1306, 3
        %v1311 = vand.u32 %v1310, 3
        %vm1312 = vcmp.lt.s32.totalorder %v1311, 2
        %vm1313 = vcmp.eq.s32.totalorder %v1311, 0
        %v1314 = vxor.u32 %v1308, 2147483648
        %v1315 = vsel %vm1313, %v1307, %v1314
        %vm1316 = vcmp.eq.s32.totalorder %v1311, 2
        %v1317 = vxor.u32 %v1307, 2147483648
        %v1318 = vsel %vm1316, %v1317, %v1308
        %v1319 = vsel %vm1312, %v1315, %v1318
        %v1320 = vsel %vm1309, nan, %v1319
        %v1321 = vand.u32 2147483647, %v156
        %vm1322 = vcmp.le.f32.partialorder %v1321, 0.7853982
        %vm1323 = vcmp.lt.s32.totalorder %v156, 0
        %v1324 = vand.u32 %v156, 2139095040
        %v1325 = vshrl.u32 %v1324, 23
        %v1326 = vsub.s32 %v1325, 127
        %v1327 = vand.u32 2147483647, %v156
        %v1328 = vand.u32 %v1327, 8388607
        %v1329 = vor.u32 %v1328, 8388608
        %v1330 = vsub.s32 0, %v1329
        %v1331 = vadd.s32 %v1326, 1
        %vm1332 = vcmp.gt.s32.totalorder %v1331, 0
        %v1333 = vsel %vm1332, %v1331, 0
        %v1334 = vshrl.u32 %v1333, 5
        %v1335 = vand.u32 %v1333, 31
        %v1336 = vsub.s32 32, %v1335
        %v1337 = vshrl.u32 683565275, %v1336
        %v1338 = vshll.u32 683565275, %v1335
        %v1339 = vshrl.u32 2475754826, %v1336
        %v1340 = vor.u32 %v1338, %v1339
        %v1341 = vshll.u32 2475754826, %v1335
        %v1342 = vshrl.u32 2131351028, %v1336
        %v1343 = vor.u32 %v1341, %v1342
        %v1344 = vshll.u32 2131351028, %v1335
        %v1345 = vshrl.u32 2102212464, %v1336
        %v1346 = vor.u32 %v1344, %v1345
        %v1347 = vshll.u32 2102212464, %v1335
        %v1348 = vshrl.u32 920167782, %v1336
        %v1349 = vor.u32 %v1347, %v1348
        %v1350 = vshll.u32 920167782, %v1335
        %v1351 = vshrl.u32 1326507024, %v1336
        %v1352 = vor.u32 %v1350, %v1351
        %vm1353 = vcmp.lt.s32.totalorder %v1334, 1
        %vm1354 = vcmp.lt.s32.totalorder %v1334, 2
        %vm1355 = vcmp.lt.s32.totalorder %v1334, 3
        %vm1356 = vcmp.lt.s32.totalorder %v1334, 4
        %v1357 = vsel %vm1353, %v1337, %v1340
        %v1358 = vsel %vm1356, %v1346, 2102212464
        %v1359 = vsel %vm1355, %v1343, %v1358
        %v1360 = vsel %vm1354, %v1357, %v1359
        %v1361 = vsel %vm1353, %v1340, %v1343
        %v1362 = vsel %vm1356, %v1349, 920167782
        %v1363 = vsel %vm1355, %v1346, %v1362
        %v1364 = vsel %vm1354, %v1361, %v1363
        %v1365 = vsel %vm1353, %v1343, %v1346
        %v1366 = vsel %vm1356, %v1352, 1326507024
        %v1367 = vsel %vm1355, %v1349, %v1366
        %v1368 = vsel %vm1354, %v1365, %v1367
        %v1369 = vshll.u32 %v1329, 8
        %v1370 = vmul.u32.u64.compose %v1369, %v1368
        %v1371 = vextract.low.u32 %v1370
        %v1372 = vextract.high.u32 %v1370
        %v1373 = vmul.u32.u64.compose %v1369, %v1364
        %v1374 = vextract.low.u32 %v1373
        %v1375 = vextract.high.u32 %v1373
        %v1376 = vmul.u32 %v1369, %v1360
        %v1377 = vadd.s32 %v1372, %v1374
        %vm1378 = vc.u32 %v1372, %v1374
        %v1379 = vadd.s32 %v1375, 1
        %v1380 = vsel %vm1378, %v1379, %v1375
        %v1381 = vadd.s32 %v1376, %v1380
        %v1382 = vadd.s32 %v1381, 536870912
        %v1383 = vshrl.u32 %v1382, 30
        %v1384 = vshll.u32 %v1383, 30
        %v1385 = vsub.s32 %v1381, %v1384
        %vm1386 = vcmp.lt.s32.totalorder %v1385, 0
        %v1387 = vsub.s32 0, %v1385
        %v1388 = vsel %vm1386, %v1387, %v1385
        %v1389 = vclz %v1388
        %v1390 = vsub.s32 %v1389, 2
        %vm1391 = vcmp.gt.s32.totalorder 0, %v1390
        %v1392 = vsel %vm1391, 0, %v1390
        %v1393 = vsub.s32 32, %v1392
        %v1394 = vshll.u32 %v1385, %v1392
        %v1395 = vshrl.u32 %v1377, %v1393
        %v1396 = vor.u32 %v1394, %v1395
        %v1397 = vsub.s32 4294967266, %v1392
        %v1398 = vadd.s32 %v1397, 127
        %v1399 = vshll.u32 %v1398, 23
        %v1400 = vor.u32 4788187, %v1399
        %v1401 = vand.u32 2147483647, %v1400
        %v1403 = vcvt.s32.f32 %v1396
        %v1404 = vmul.f32 %v1403, %v1401
        %v1405 = vxor.u32 %v1404, 2147483648
        %v1406 = vsel %vm1323, %v1405, %v1404
        %v1407 = vsub.s32 4, %v1383
        %v1408 = vsel %vm1323, %v1407, %v1383
        %v1409 = vsel %vm1322, %v156, %v1406
        %v1410 = vsel %vm1322, 0, %v1408
        %v1411 = vcosq.f32.pop %v1409
        %v1412 = vsinq.f32.pop %v1409
        %vm1413 = vweird.f32 %v156
        %v1414 = vadd.s32 %v1410, 3
        %v1415 = vand.u32 %v1414, 3
        %vm1416 = vcmp.lt.s32.totalorder %v1415, 2
        %vm1417 = vcmp.eq.s32.totalorder %v1415, 0
        %v1418 = vxor.u32 %v1412, 2147483648
        %v1419 = vsel %vm1417, %v1411, %v1418
        %vm1420 = vcmp.eq.s32.totalorder %v1415, 2
        %v1421 = vxor.u32 %v1411, 2147483648
        %v1422 = vsel %vm1420, %v1421, %v1412
        %v1423 = vsel %vm1416, %v1419, %v1422
        %v1424 = vsel %vm1413, nan, %v1423
        %v1425 = vand.u32 2147483647, %v157
        %vm1426 = vcmp.le.f32.partialorder %v1425, 0.7853982
        %vm1427 = vcmp.lt.s32.totalorder %v157, 0
        %v1428 = vand.u32 %v157, 2139095040
        %v1429 = vshrl.u32 %v1428, 23
        %v1430 = vsub.s32 %v1429, 127
        %v1431 = vand.u32 2147483647, %v157
        %v1432 = vand.u32 %v1431, 8388607
        %v1433 = vor.u32 %v1432, 8388608
        %v1434 = vsub.s32 0, %v1433
        %v1435 = vadd.s32 %v1430, 1
        %vm1436 = vcmp.gt.s32.totalorder %v1435, 0
        %v1437 = vsel %vm1436, %v1435, 0
        %v1438 = vshrl.u32 %v1437, 5
        %v1439 = vand.u32 %v1437, 31
        %v1440 = vsub.s32 32, %v1439
        %v1441 = vshrl.u32 683565275, %v1440
        %v1442 = vshll.u32 683565275, %v1439
        %v1443 = vshrl.u32 2475754826, %v1440
        %v1444 = vor.u32 %v1442, %v1443
        %v1445 = vshll.u32 2475754826, %v1439
        %v1446 = vshrl.u32 2131351028, %v1440
        %v1447 = vor.u32 %v1445, %v1446
        %v1448 = vshll.u32 2131351028, %v1439
        %v1449 = vshrl.u32 2102212464, %v1440
        %v1450 = vor.u32 %v1448, %v1449
        %v1451 = vshll.u32 2102212464, %v1439
        %v1452 = vshrl.u32 920167782, %v1440
        %v1453 = vor.u32 %v1451, %v1452
        %v1454 = vshll.u32 920167782, %v1439
        %v1455 = vshrl.u32 1326507024, %v1440
        %v1456 = vor.u32 %v1454, %v1455
        %vm1457 = vcmp.lt.s32.totalorder %v1438, 1
        %vm1458 = vcmp.lt.s32.totalorder %v1438, 2
        %vm1459 = vcmp.lt.s32.totalorder %v1438, 3
        %vm1460 = vcmp.lt.s32.totalorder %v1438, 4
        %v1461 = vsel %vm1457, %v1441, %v1444
        %v1462 = vsel %vm1460, %v1450, 2102212464
        %v1463 = vsel %vm1459, %v1447, %v1462
        %v1464 = vsel %vm1458, %v1461, %v1463
        %v1465 = vsel %vm1457, %v1444, %v1447
        %v1466 = vsel %vm1460, %v1453, 920167782
        %v1467 = vsel %vm1459, %v1450, %v1466
        %v1468 = vsel %vm1458, %v1465, %v1467
        %v1469 = vsel %vm1457, %v1447, %v1450
        %v1470 = vsel %vm1460, %v1456, 1326507024
        %v1471 = vsel %vm1459, %v1453, %v1470
        %v1472 = vsel %vm1458, %v1469, %v1471
        %v1473 = vshll.u32 %v1433, 8
        %v1474 = vmul.u32.u64.compose %v1473, %v1472
        %v1475 = vextract.low.u32 %v1474
        %v1476 = vextract.high.u32 %v1474
        %v1477 = vmul.u32.u64.compose %v1473, %v1468
        %v1478 = vextract.low.u32 %v1477
        %v1479 = vextract.high.u32 %v1477
        %v1480 = vmul.u32 %v1473, %v1464
        %v1481 = vadd.s32 %v1476, %v1478
        %vm1482 = vc.u32 %v1476, %v1478
        %v1483 = vadd.s32 %v1479, 1
        %v1484 = vsel %vm1482, %v1483, %v1479
        %v1485 = vadd.s32 %v1480, %v1484
        %v1486 = vadd.s32 %v1485, 536870912
        %v1487 = vshrl.u32 %v1486, 30
        %v1488 = vshll.u32 %v1487, 30
        %v1489 = vsub.s32 %v1485, %v1488
        %vm1490 = vcmp.lt.s32.totalorder %v1489, 0
        %v1491 = vsub.s32 0, %v1489
        %v1492 = vsel %vm1490, %v1491, %v1489
        %v1493 = vclz %v1492
        %v1494 = vsub.s32 %v1493, 2
        %vm1495 = vcmp.gt.s32.totalorder 0, %v1494
        %v1496 = vsel %vm1495, 0, %v1494
        %v1497 = vsub.s32 32, %v1496
        %v1498 = vshll.u32 %v1489, %v1496
        %v1499 = vshrl.u32 %v1481, %v1497
        %v1500 = vor.u32 %v1498, %v1499
        %v1501 = vsub.s32 4294967266, %v1496
        %v1502 = vadd.s32 %v1501, 127
        %v1503 = vshll.u32 %v1502, 23
        %v1504 = vor.u32 4788187, %v1503
        %v1505 = vand.u32 2147483647, %v1504
        %v1507 = vcvt.s32.f32 %v1500
        %v1508 = vmul.f32 %v1507, %v1505
        %v1509 = vxor.u32 %v1508, 2147483648
        %v1510 = vsel %vm1427, %v1509, %v1508
        %v1511 = vsub.s32 4, %v1487
        %v1512 = vsel %vm1427, %v1511, %v1487
        %v1513 = vsel %vm1426, %v157, %v1510
        %v1514 = vsel %vm1426, 0, %v1512
        %v1515 = vcosq.f32.pop %v1513
        %v1516 = vsinq.f32.pop %v1513
        %vm1517 = vweird.f32 %v157
        %v1518 = vadd.s32 %v1514, 3
        %v1519 = vand.u32 %v1518, 3
        %vm1520 = vcmp.lt.s32.totalorder %v1519, 2
        %vm1521 = vcmp.eq.s32.totalorder %v1519, 0
        %v1522 = vxor.u32 %v1516, 2147483648
        %v1523 = vsel %vm1521, %v1515, %v1522
        %vm1524 = vcmp.eq.s32.totalorder %v1519, 2
        %v1525 = vxor.u32 %v1515, 2147483648
        %v1526 = vsel %vm1524, %v1525, %v1516
        %v1527 = vsel %vm1520, %v1523, %v1526
        %v1528 = vsel %vm1517, nan, %v1527
        %v1529 = vand.u32 2147483647, %v158
        %vm1530 = vcmp.le.f32.partialorder %v1529, 0.7853982
        %vm1531 = vcmp.lt.s32.totalorder %v158, 0
        %v1532 = vand.u32 %v158, 2139095040
        %v1533 = vshrl.u32 %v1532, 23
        %v1534 = vsub.s32 %v1533, 127
        %v1535 = vand.u32 2147483647, %v158
        %v1536 = vand.u32 %v1535, 8388607
        %v1537 = vor.u32 %v1536, 8388608
        %v1538 = vsub.s32 0, %v1537
        %v1539 = vadd.s32 %v1534, 1
        %vm1540 = vcmp.gt.s32.totalorder %v1539, 0
        %v1541 = vsel %vm1540, %v1539, 0
        %v1542 = vshrl.u32 %v1541, 5
        %v1543 = vand.u32 %v1541, 31
        %v1544 = vsub.s32 32, %v1543
        %v1545 = vshrl.u32 683565275, %v1544
        %v1546 = vshll.u32 683565275, %v1543
        %v1547 = vshrl.u32 2475754826, %v1544
        %v1548 = vor.u32 %v1546, %v1547
        %v1549 = vshll.u32 2475754826, %v1543
        %v1550 = vshrl.u32 2131351028, %v1544
        %v1551 = vor.u32 %v1549, %v1550
        %v1552 = vshll.u32 2131351028, %v1543
        %v1553 = vshrl.u32 2102212464, %v1544
        %v1554 = vor.u32 %v1552, %v1553
        %v1555 = vshll.u32 2102212464, %v1543
        %v1556 = vshrl.u32 920167782, %v1544
        %v1557 = vor.u32 %v1555, %v1556
        %v1558 = vshll.u32 920167782, %v1543
        %v1559 = vshrl.u32 1326507024, %v1544
        %v1560 = vor.u32 %v1558, %v1559
        %vm1561 = vcmp.lt.s32.totalorder %v1542, 1
        %vm1562 = vcmp.lt.s32.totalorder %v1542, 2
        %vm1563 = vcmp.lt.s32.totalorder %v1542, 3
        %vm1564 = vcmp.lt.s32.totalorder %v1542, 4
        %v1565 = vsel %vm1561, %v1545, %v1548
        %v1566 = vsel %vm1564, %v1554, 2102212464
        %v1567 = vsel %vm1563, %v1551, %v1566
        %v1568 = vsel %vm1562, %v1565, %v1567
        %v1569 = vsel %vm1561, %v1548, %v1551
        %v1570 = vsel %vm1564, %v1557, 920167782
        %v1571 = vsel %vm1563, %v1554, %v1570
        %v1572 = vsel %vm1562, %v1569, %v1571
        %v1573 = vsel %vm1561, %v1551, %v1554
        %v1574 = vsel %vm1564, %v1560, 1326507024
        %v1575 = vsel %vm1563, %v1557, %v1574
        %v1576 = vsel %vm1562, %v1573, %v1575
        %v1577 = vshll.u32 %v1537, 8
        %v1578 = vmul.u32.u64.compose %v1577, %v1576
        %v1579 = vextract.low.u32 %v1578
        %v1580 = vextract.high.u32 %v1578
        %v1581 = vmul.u32.u64.compose %v1577, %v1572
        %v1582 = vextract.low.u32 %v1581
        %v1583 = vextract.high.u32 %v1581
        %v1584 = vmul.u32 %v1577, %v1568
        %v1585 = vadd.s32 %v1580, %v1582
        %vm1586 = vc.u32 %v1580, %v1582
        %v1587 = vadd.s32 %v1583, 1
        %v1588 = vsel %vm1586, %v1587, %v1583
        %v1589 = vadd.s32 %v1584, %v1588
        %v1590 = vadd.s32 %v1589, 536870912
        %v1591 = vshrl.u32 %v1590, 30
        %v1592 = vshll.u32 %v1591, 30
        %v1593 = vsub.s32 %v1589, %v1592
        %vm1594 = vcmp.lt.s32.totalorder %v1593, 0
        %v1595 = vsub.s32 0, %v1593
        %v1596 = vsel %vm1594, %v1595, %v1593
        %v1597 = vclz %v1596
        %v1598 = vsub.s32 %v1597, 2
        %vm1599 = vcmp.gt.s32.totalorder 0, %v1598
        %v1600 = vsel %vm1599, 0, %v1598
        %v1601 = vsub.s32 32, %v1600
        %v1602 = vshll.u32 %v1593, %v1600
        %v1603 = vshrl.u32 %v1585, %v1601
        %v1604 = vor.u32 %v1602, %v1603
        %v1605 = vsub.s32 4294967266, %v1600
        %v1606 = vadd.s32 %v1605, 127
        %v1607 = vshll.u32 %v1606, 23
        %v1608 = vor.u32 4788187, %v1607
        %v1609 = vand.u32 2147483647, %v1608
        %v1611 = vcvt.s32.f32 %v1604
        %v1612 = vmul.f32 %v1611, %v1609
        %v1613 = vxor.u32 %v1612, 2147483648
        %v1614 = vsel %vm1531, %v1613, %v1612
        %v1615 = vsub.s32 4, %v1591
        %v1616 = vsel %vm1531, %v1615, %v1591
        %v1617 = vsel %vm1530, %v158, %v1614
        %v1618 = vsel %vm1530, 0, %v1616
        %v1619 = vcosq.f32.pop %v1617
        %v1620 = vsinq.f32.pop %v1617
        %vm1621 = vweird.f32 %v158
        %v1622 = vadd.s32 %v1618, 3
        %v1623 = vand.u32 %v1622, 3
        %vm1624 = vcmp.lt.s32.totalorder %v1623, 2
        %vm1625 = vcmp.eq.s32.totalorder %v1623, 0
        %v1626 = vxor.u32 %v1620, 2147483648
        %v1627 = vsel %vm1625, %v1619, %v1626
        %vm1628 = vcmp.eq.s32.totalorder %v1623, 2
        %v1629 = vxor.u32 %v1619, 2147483648
        %v1630 = vsel %vm1628, %v1629, %v1620
        %v1631 = vsel %vm1624, %v1627, %v1630
        %v1632 = vsel %vm1621, nan, %v1631
        %v1633 = vand.u32 2147483647, %v159
        %vm1634 = vcmp.le.f32.partialorder %v1633, 0.7853982
        %vm1635 = vcmp.lt.s32.totalorder %v159, 0
        %v1636 = vand.u32 %v159, 2139095040
        %v1637 = vshrl.u32 %v1636, 23
        %v1638 = vsub.s32 %v1637, 127
        %v1639 = vand.u32 2147483647, %v159
        %v1640 = vand.u32 %v1639, 8388607
        %v1641 = vor.u32 %v1640, 8388608
        %v1642 = vsub.s32 0, %v1641
        %v1643 = vadd.s32 %v1638, 1
        %vm1644 = vcmp.gt.s32.totalorder %v1643, 0
        %v1645 = vsel %vm1644, %v1643, 0
        %v1646 = vshrl.u32 %v1645, 5
        %v1647 = vand.u32 %v1645, 31
        %v1648 = vsub.s32 32, %v1647
        %v1649 = vshrl.u32 683565275, %v1648
        %v1650 = vshll.u32 683565275, %v1647
        %v1651 = vshrl.u32 2475754826, %v1648
        %v1652 = vor.u32 %v1650, %v1651
        %v1653 = vshll.u32 2475754826, %v1647
        %v1654 = vshrl.u32 2131351028, %v1648
        %v1655 = vor.u32 %v1653, %v1654
        %v1656 = vshll.u32 2131351028, %v1647
        %v1657 = vshrl.u32 2102212464, %v1648
        %v1658 = vor.u32 %v1656, %v1657
        %v1659 = vshll.u32 2102212464, %v1647
        %v1660 = vshrl.u32 920167782, %v1648
        %v1661 = vor.u32 %v1659, %v1660
        %v1662 = vshll.u32 920167782, %v1647
        %v1663 = vshrl.u32 1326507024, %v1648
        %v1664 = vor.u32 %v1662, %v1663
        %vm1665 = vcmp.lt.s32.totalorder %v1646, 1
        %vm1666 = vcmp.lt.s32.totalorder %v1646, 2
        %vm1667 = vcmp.lt.s32.totalorder %v1646, 3
        %vm1668 = vcmp.lt.s32.totalorder %v1646, 4
        %v1669 = vsel %vm1665, %v1649, %v1652
        %v1670 = vsel %vm1668, %v1658, 2102212464
        %v1671 = vsel %vm1667, %v1655, %v1670
        %v1672 = vsel %vm1666, %v1669, %v1671
        %v1673 = vsel %vm1665, %v1652, %v1655
        %v1674 = vsel %vm1668, %v1661, 920167782
        %v1675 = vsel %vm1667, %v1658, %v1674
        %v1676 = vsel %vm1666, %v1673, %v1675
        %v1677 = vsel %vm1665, %v1655, %v1658
        %v1678 = vsel %vm1668, %v1664, 1326507024
        %v1679 = vsel %vm1667, %v1661, %v1678
        %v1680 = vsel %vm1666, %v1677, %v1679
        %v1681 = vshll.u32 %v1641, 8
        %v1682 = vmul.u32.u64.compose %v1681, %v1680
        %v1683 = vextract.low.u32 %v1682
        %v1684 = vextract.high.u32 %v1682
        %v1685 = vmul.u32.u64.compose %v1681, %v1676
        %v1686 = vextract.low.u32 %v1685
        %v1687 = vextract.high.u32 %v1685
        %v1688 = vmul.u32 %v1681, %v1672
        %v1689 = vadd.s32 %v1684, %v1686
        %vm1690 = vc.u32 %v1684, %v1686
        %v1691 = vadd.s32 %v1687, 1
        %v1692 = vsel %vm1690, %v1691, %v1687
        %v1693 = vadd.s32 %v1688, %v1692
        %v1694 = vadd.s32 %v1693, 536870912
        %v1695 = vshrl.u32 %v1694, 30
        %v1696 = vshll.u32 %v1695, 30
        %v1697 = vsub.s32 %v1693, %v1696
        %vm1698 = vcmp.lt.s32.totalorder %v1697, 0
        %v1699 = vsub.s32 0, %v1697
        %v1700 = vsel %vm1698, %v1699, %v1697
        %v1701 = vclz %v1700
        %v1702 = vsub.s32 %v1701, 2
        %vm1703 = vcmp.gt.s32.totalorder 0, %v1702
        %v1704 = vsel %vm1703, 0, %v1702
        %v1705 = vsub.s32 32, %v1704
        %v1706 = vshll.u32 %v1697, %v1704
        %v1707 = vshrl.u32 %v1689, %v1705
        %v1708 = vor.u32 %v1706, %v1707
        %v1709 = vsub.s32 4294967266, %v1704
        %v1710 = vadd.s32 %v1709, 127
        %v1711 = vshll.u32 %v1710, 23
        %v1712 = vor.u32 4788187, %v1711
        %v1713 = vand.u32 2147483647, %v1712
        %v1715 = vcvt.s32.f32 %v1708
        %v1716 = vmul.f32 %v1715, %v1713
        %v1717 = vxor.u32 %v1716, 2147483648
        %v1718 = vsel %vm1635, %v1717, %v1716
        %v1719 = vsub.s32 4, %v1695
        %v1720 = vsel %vm1635, %v1719, %v1695
        %v1721 = vsel %vm1634, %v159, %v1718
        %v1722 = vsel %vm1634, 0, %v1720
        %v1723 = vcosq.f32.pop %v1721
        %v1724 = vsinq.f32.pop %v1721
        %vm1725 = vweird.f32 %v159
        %v1726 = vadd.s32 %v1722, 3
        %v1727 = vand.u32 %v1726, 3
        %vm1728 = vcmp.lt.s32.totalorder %v1727, 2
        %vm1729 = vcmp.eq.s32.totalorder %v1727, 0
        %v1730 = vxor.u32 %v1724, 2147483648
        %v1731 = vsel %vm1729, %v1723, %v1730
        %vm1732 = vcmp.eq.s32.totalorder %v1727, 2
        %v1733 = vxor.u32 %v1723, 2147483648
        %v1734 = vsel %vm1732, %v1733, %v1724
        %v1735 = vsel %vm1728, %v1731, %v1734
        %v1736 = vsel %vm1725, nan, %v1735
        %v1737 = vand.u32 2147483647, %v160
        %vm1738 = vcmp.le.f32.partialorder %v1737, 0.7853982
        %vm1739 = vcmp.lt.s32.totalorder %v160, 0
        %v1740 = vand.u32 %v160, 2139095040
        %v1741 = vshrl.u32 %v1740, 23
        %v1742 = vsub.s32 %v1741, 127
        %v1743 = vand.u32 2147483647, %v160
        %v1744 = vand.u32 %v1743, 8388607
        %v1745 = vor.u32 %v1744, 8388608
        %v1746 = vsub.s32 0, %v1745
        %v1747 = vadd.s32 %v1742, 1
        %vm1748 = vcmp.gt.s32.totalorder %v1747, 0
        %v1749 = vsel %vm1748, %v1747, 0
        %v1750 = vshrl.u32 %v1749, 5
        %v1751 = vand.u32 %v1749, 31
        %v1752 = vsub.s32 32, %v1751
        %v1753 = vshrl.u32 683565275, %v1752
        %v1754 = vshll.u32 683565275, %v1751
        %v1755 = vshrl.u32 2475754826, %v1752
        %v1756 = vor.u32 %v1754, %v1755
        %v1757 = vshll.u32 2475754826, %v1751
        %v1758 = vshrl.u32 2131351028, %v1752
        %v1759 = vor.u32 %v1757, %v1758
        %v1760 = vshll.u32 2131351028, %v1751
        %v1761 = vshrl.u32 2102212464, %v1752
        %v1762 = vor.u32 %v1760, %v1761
        %v1763 = vshll.u32 2102212464, %v1751
        %v1764 = vshrl.u32 920167782, %v1752
        %v1765 = vor.u32 %v1763, %v1764
        %v1766 = vshll.u32 920167782, %v1751
        %v1767 = vshrl.u32 1326507024, %v1752
        %v1768 = vor.u32 %v1766, %v1767
        %vm1769 = vcmp.lt.s32.totalorder %v1750, 1
        %vm1770 = vcmp.lt.s32.totalorder %v1750, 2
        %vm1771 = vcmp.lt.s32.totalorder %v1750, 3
        %vm1772 = vcmp.lt.s32.totalorder %v1750, 4
        %v1773 = vsel %vm1769, %v1753, %v1756
        %v1774 = vsel %vm1772, %v1762, 2102212464
        %v1775 = vsel %vm1771, %v1759, %v1774
        %v1776 = vsel %vm1770, %v1773, %v1775
        %v1777 = vsel %vm1769, %v1756, %v1759
        %v1778 = vsel %vm1772, %v1765, 920167782
        %v1779 = vsel %vm1771, %v1762, %v1778
        %v1780 = vsel %vm1770, %v1777, %v1779
        %v1781 = vsel %vm1769, %v1759, %v1762
        %v1782 = vsel %vm1772, %v1768, 1326507024
        %v1783 = vsel %vm1771, %v1765, %v1782
        %v1784 = vsel %vm1770, %v1781, %v1783
        %v1785 = vshll.u32 %v1745, 8
        %v1786 = vmul.u32.u64.compose %v1785, %v1784
        %v1787 = vextract.low.u32 %v1786
        %v1788 = vextract.high.u32 %v1786
        %v1789 = vmul.u32.u64.compose %v1785, %v1780
        %v1790 = vextract.low.u32 %v1789
        %v1791 = vextract.high.u32 %v1789
        %v1792 = vmul.u32 %v1785, %v1776
        %v1793 = vadd.s32 %v1788, %v1790
        %vm1794 = vc.u32 %v1788, %v1790
        %v1795 = vadd.s32 %v1791, 1
        %v1796 = vsel %vm1794, %v1795, %v1791
        %v1797 = vadd.s32 %v1792, %v1796
        %v1798 = vadd.s32 %v1797, 536870912
        %v1799 = vshrl.u32 %v1798, 30
        %v1800 = vshll.u32 %v1799, 30
        %v1801 = vsub.s32 %v1797, %v1800
        %vm1802 = vcmp.lt.s32.totalorder %v1801, 0
        %v1803 = vsub.s32 0, %v1801
        %v1804 = vsel %vm1802, %v1803, %v1801
        %v1805 = vclz %v1804
        %v1806 = vsub.s32 %v1805, 2
        %vm1807 = vcmp.gt.s32.totalorder 0, %v1806
        %v1808 = vsel %vm1807, 0, %v1806
        %v1809 = vsub.s32 32, %v1808
        %v1810 = vshll.u32 %v1801, %v1808
        %v1811 = vshrl.u32 %v1793, %v1809
        %v1812 = vor.u32 %v1810, %v1811
        %v1813 = vsub.s32 4294967266, %v1808
        %v1814 = vadd.s32 %v1813, 127
        %v1815 = vshll.u32 %v1814, 23
        %v1816 = vor.u32 4788187, %v1815
        %v1817 = vand.u32 2147483647, %v1816
        %v1819 = vcvt.s32.f32 %v1812
        %v1820 = vmul.f32 %v1819, %v1817
        %v1821 = vxor.u32 %v1820, 2147483648
        %v1822 = vsel %vm1739, %v1821, %v1820
        %v1823 = vsub.s32 4, %v1799
        %v1824 = vsel %vm1739, %v1823, %v1799
        %v1825 = vsel %vm1738, %v160, %v1822
        %v1826 = vsel %vm1738, 0, %v1824
        %v1827 = vcosq.f32.pop %v1825
        %v1828 = vsinq.f32.pop %v1825
        %vm1829 = vweird.f32 %v160
        %v1830 = vadd.s32 %v1826, 3
        %v1831 = vand.u32 %v1830, 3
        %vm1832 = vcmp.lt.s32.totalorder %v1831, 2
        %vm1833 = vcmp.eq.s32.totalorder %v1831, 0
        %v1834 = vxor.u32 %v1828, 2147483648
        %v1835 = vsel %vm1833, %v1827, %v1834
        %vm1836 = vcmp.eq.s32.totalorder %v1831, 2
        %v1837 = vxor.u32 %v1827, 2147483648
        %v1838 = vsel %vm1836, %v1837, %v1828
        %v1839 = vsel %vm1832, %v1835, %v1838
        %v1840 = vsel %vm1829, nan, %v1839
        %v1841 = vand.u32 2147483647, %v161
        %vm1842 = vcmp.le.f32.partialorder %v1841, 0.7853982
        %vm1843 = vcmp.lt.s32.totalorder %v161, 0
        %v1844 = vand.u32 %v161, 2139095040
        %v1845 = vshrl.u32 %v1844, 23
        %v1846 = vsub.s32 %v1845, 127
        %v1847 = vand.u32 2147483647, %v161
        %v1848 = vand.u32 %v1847, 8388607
        %v1849 = vor.u32 %v1848, 8388608
        %v1850 = vsub.s32 0, %v1849
        %v1851 = vadd.s32 %v1846, 1
        %vm1852 = vcmp.gt.s32.totalorder %v1851, 0
        %v1853 = vsel %vm1852, %v1851, 0
        %v1854 = vshrl.u32 %v1853, 5
        %v1855 = vand.u32 %v1853, 31
        %v1856 = vsub.s32 32, %v1855
        %v1857 = vshrl.u32 683565275, %v1856
        %v1858 = vshll.u32 683565275, %v1855
        %v1859 = vshrl.u32 2475754826, %v1856
        %v1860 = vor.u32 %v1858, %v1859
        %v1861 = vshll.u32 2475754826, %v1855
        %v1862 = vshrl.u32 2131351028, %v1856
        %v1863 = vor.u32 %v1861, %v1862
        %v1864 = vshll.u32 2131351028, %v1855
        %v1865 = vshrl.u32 2102212464, %v1856
        %v1866 = vor.u32 %v1864, %v1865
        %v1867 = vshll.u32 2102212464, %v1855
        %v1868 = vshrl.u32 920167782, %v1856
        %v1869 = vor.u32 %v1867, %v1868
        %v1870 = vshll.u32 920167782, %v1855
        %v1871 = vshrl.u32 1326507024, %v1856
        %v1872 = vor.u32 %v1870, %v1871
        %vm1873 = vcmp.lt.s32.totalorder %v1854, 1
        %vm1874 = vcmp.lt.s32.totalorder %v1854, 2
        %vm1875 = vcmp.lt.s32.totalorder %v1854, 3
        %vm1876 = vcmp.lt.s32.totalorder %v1854, 4
        %v1877 = vsel %vm1873, %v1857, %v1860
        %v1878 = vsel %vm1876, %v1866, 2102212464
        %v1879 = vsel %vm1875, %v1863, %v1878
        %v1880 = vsel %vm1874, %v1877, %v1879
        %v1881 = vsel %vm1873, %v1860, %v1863
        %v1882 = vsel %vm1876, %v1869, 920167782
        %v1883 = vsel %vm1875, %v1866, %v1882
        %v1884 = vsel %vm1874, %v1881, %v1883
        %v1885 = vsel %vm1873, %v1863, %v1866
        %v1886 = vsel %vm1876, %v1872, 1326507024
        %v1887 = vsel %vm1875, %v1869, %v1886
        %v1888 = vsel %vm1874, %v1885, %v1887
        %v1889 = vshll.u32 %v1849, 8
        %v1890 = vmul.u32.u64.compose %v1889, %v1888
        %v1891 = vextract.low.u32 %v1890
        %v1892 = vextract.high.u32 %v1890
        %v1893 = vmul.u32.u64.compose %v1889, %v1884
        %v1894 = vextract.low.u32 %v1893
        %v1895 = vextract.high.u32 %v1893
        %v1896 = vmul.u32 %v1889, %v1880
        %v1897 = vadd.s32 %v1892, %v1894
        %vm1898 = vc.u32 %v1892, %v1894
        %v1899 = vadd.s32 %v1895, 1
        %v1900 = vsel %vm1898, %v1899, %v1895
        %v1901 = vadd.s32 %v1896, %v1900
        %v1902 = vadd.s32 %v1901, 536870912
        %v1903 = vshrl.u32 %v1902, 30
        %v1904 = vshll.u32 %v1903, 30
        %v1905 = vsub.s32 %v1901, %v1904
        %vm1906 = vcmp.lt.s32.totalorder %v1905, 0
        %v1907 = vsub.s32 0, %v1905
        %v1908 = vsel %vm1906, %v1907, %v1905
        %v1909 = vclz %v1908
        %v1910 = vsub.s32 %v1909, 2
        %vm1911 = vcmp.gt.s32.totalorder 0, %v1910
        %v1912 = vsel %vm1911, 0, %v1910
        %v1913 = vsub.s32 32, %v1912
        %v1914 = vshll.u32 %v1905, %v1912
        %v1915 = vshrl.u32 %v1897, %v1913
        %v1916 = vor.u32 %v1914, %v1915
        %v1917 = vsub.s32 4294967266, %v1912
        %v1918 = vadd.s32 %v1917, 127
        %v1919 = vshll.u32 %v1918, 23
        %v1920 = vor.u32 4788187, %v1919
        %v1921 = vand.u32 2147483647, %v1920
        %v1923 = vcvt.s32.f32 %v1916
        %v1924 = vmul.f32 %v1923, %v1921
        %v1925 = vxor.u32 %v1924, 2147483648
        %v1926 = vsel %vm1843, %v1925, %v1924
        %v1927 = vsub.s32 4, %v1903
        %v1928 = vsel %vm1843, %v1927, %v1903
        %v1929 = vsel %vm1842, %v161, %v1926
        %v1930 = vsel %vm1842, 0, %v1928
        %v1931 = vcosq.f32.pop %v1929
        %v1932 = vsinq.f32.pop %v1929
        %vm1933 = vweird.f32 %v161
        %v1934 = vadd.s32 %v1930, 3
        %v1935 = vand.u32 %v1934, 3
        %vm1936 = vcmp.lt.s32.totalorder %v1935, 2
        %vm1937 = vcmp.eq.s32.totalorder %v1935, 0
        %v1938 = vxor.u32 %v1932, 2147483648
        %v1939 = vsel %vm1937, %v1931, %v1938
        %vm1940 = vcmp.eq.s32.totalorder %v1935, 2
        %v1941 = vxor.u32 %v1931, 2147483648
        %v1942 = vsel %vm1940, %v1941, %v1932
        %v1943 = vsel %vm1936, %v1939, %v1942
        %v1944 = vsel %vm1933, nan, %v1943
        %v1945 = vand.u32 2147483647, %v162
        %vm1946 = vcmp.le.f32.partialorder %v1945, 0.7853982
        %vm1947 = vcmp.lt.s32.totalorder %v162, 0
        %v1948 = vand.u32 %v162, 2139095040
        %v1949 = vshrl.u32 %v1948, 23
        %v1950 = vsub.s32 %v1949, 127
        %v1951 = vand.u32 2147483647, %v162
        %v1952 = vand.u32 %v1951, 8388607
        %v1953 = vor.u32 %v1952, 8388608
        %v1954 = vsub.s32 0, %v1953
        %v1955 = vadd.s32 %v1950, 1
        %vm1956 = vcmp.gt.s32.totalorder %v1955, 0
        %v1957 = vsel %vm1956, %v1955, 0
        %v1958 = vshrl.u32 %v1957, 5
        %v1959 = vand.u32 %v1957, 31
        %v1960 = vsub.s32 32, %v1959
        %v1961 = vshrl.u32 683565275, %v1960
        %v1962 = vshll.u32 683565275, %v1959
        %v1963 = vshrl.u32 2475754826, %v1960
        %v1964 = vor.u32 %v1962, %v1963
        %v1965 = vshll.u32 2475754826, %v1959
        %v1966 = vshrl.u32 2131351028, %v1960
        %v1967 = vor.u32 %v1965, %v1966
        %v1968 = vshll.u32 2131351028, %v1959
        %v1969 = vshrl.u32 2102212464, %v1960
        %v1970 = vor.u32 %v1968, %v1969
        %v1971 = vshll.u32 2102212464, %v1959
        %v1972 = vshrl.u32 920167782, %v1960
        %v1973 = vor.u32 %v1971, %v1972
        %v1974 = vshll.u32 920167782, %v1959
        %v1975 = vshrl.u32 1326507024, %v1960
        %v1976 = vor.u32 %v1974, %v1975
        %vm1977 = vcmp.lt.s32.totalorder %v1958, 1
        %vm1978 = vcmp.lt.s32.totalorder %v1958, 2
        %vm1979 = vcmp.lt.s32.totalorder %v1958, 3
        %vm1980 = vcmp.lt.s32.totalorder %v1958, 4
        %v1981 = vsel %vm1977, %v1961, %v1964
        %v1982 = vsel %vm1980, %v1970, 2102212464
        %v1983 = vsel %vm1979, %v1967, %v1982
        %v1984 = vsel %vm1978, %v1981, %v1983
        %v1985 = vsel %vm1977, %v1964, %v1967
        %v1986 = vsel %vm1980, %v1973, 920167782
        %v1987 = vsel %vm1979, %v1970, %v1986
        %v1988 = vsel %vm1978, %v1985, %v1987
        %v1989 = vsel %vm1977, %v1967, %v1970
        %v1990 = vsel %vm1980, %v1976, 1326507024
        %v1991 = vsel %vm1979, %v1973, %v1990
        %v1992 = vsel %vm1978, %v1989, %v1991
        %v1993 = vshll.u32 %v1953, 8
        %v1994 = vmul.u32.u64.compose %v1993, %v1992
        %v1995 = vextract.low.u32 %v1994
        %v1996 = vextract.high.u32 %v1994
        %v1997 = vmul.u32.u64.compose %v1993, %v1988
        %v1998 = vextract.low.u32 %v1997
        %v1999 = vextract.high.u32 %v1997
        %v2000 = vmul.u32 %v1993, %v1984
        %v2001 = vadd.s32 %v1996, %v1998
        %vm2002 = vc.u32 %v1996, %v1998
        %v2003 = vadd.s32 %v1999, 1
        %v2004 = vsel %vm2002, %v2003, %v1999
        %v2005 = vadd.s32 %v2000, %v2004
        %v2006 = vadd.s32 %v2005, 536870912
        %v2007 = vshrl.u32 %v2006, 30
        %v2008 = vshll.u32 %v2007, 30
        %v2009 = vsub.s32 %v2005, %v2008
        %vm2010 = vcmp.lt.s32.totalorder %v2009, 0
        %v2011 = vsub.s32 0, %v2009
        %v2012 = vsel %vm2010, %v2011, %v2009
        %v2013 = vclz %v2012
        %v2014 = vsub.s32 %v2013, 2
        %vm2015 = vcmp.gt.s32.totalorder 0, %v2014
        %v2016 = vsel %vm2015, 0, %v2014
        %v2017 = vsub.s32 32, %v2016
        %v2018 = vshll.u32 %v2009, %v2016
        %v2019 = vshrl.u32 %v2001, %v2017
        %v2020 = vor.u32 %v2018, %v2019
        %v2021 = vsub.s32 4294967266, %v2016
        %v2022 = vadd.s32 %v2021, 127
        %v2023 = vshll.u32 %v2022, 23
        %v2024 = vor.u32 4788187, %v2023
        %v2025 = vand.u32 2147483647, %v2024
        %v2027 = vcvt.s32.f32 %v2020
        %v2028 = vmul.f32 %v2027, %v2025
        %v2029 = vxor.u32 %v2028, 2147483648
        %v2030 = vsel %vm1947, %v2029, %v2028
        %v2031 = vsub.s32 4, %v2007
        %v2032 = vsel %vm1947, %v2031, %v2007
        %v2033 = vsel %vm1946, %v162, %v2030
        %v2034 = vsel %vm1946, 0, %v2032
        %v2035 = vcosq.f32.pop %v2033
        %v2036 = vsinq.f32.pop %v2033
        %vm2037 = vweird.f32 %v162
        %v2038 = vadd.s32 %v2034, 3
        %v2039 = vand.u32 %v2038, 3
        %vm2040 = vcmp.lt.s32.totalorder %v2039, 2
        %vm2041 = vcmp.eq.s32.totalorder %v2039, 0
        %v2042 = vxor.u32 %v2036, 2147483648
        %v2043 = vsel %vm2041, %v2035, %v2042
        %vm2044 = vcmp.eq.s32.totalorder %v2039, 2
        %v2045 = vxor.u32 %v2035, 2147483648
        %v2046 = vsel %vm2044, %v2045, %v2036
        %v2047 = vsel %vm2040, %v2043, %v2046
        %v2048 = vsel %vm2037, nan, %v2047
        %v2049 = vand.u32 2147483647, %v163
        %vm2050 = vcmp.le.f32.partialorder %v2049, 0.7853982
        %vm2051 = vcmp.lt.s32.totalorder %v163, 0
        %v2052 = vand.u32 %v163, 2139095040
        %v2053 = vshrl.u32 %v2052, 23
        %v2054 = vsub.s32 %v2053, 127
        %v2055 = vand.u32 2147483647, %v163
        %v2056 = vand.u32 %v2055, 8388607
        %v2057 = vor.u32 %v2056, 8388608
        %v2058 = vsub.s32 0, %v2057
        %v2059 = vadd.s32 %v2054, 1
        %vm2060 = vcmp.gt.s32.totalorder %v2059, 0
        %v2061 = vsel %vm2060, %v2059, 0
        %v2062 = vshrl.u32 %v2061, 5
        %v2063 = vand.u32 %v2061, 31
        %v2064 = vsub.s32 32, %v2063
        %v2065 = vshrl.u32 683565275, %v2064
        %v2066 = vshll.u32 683565275, %v2063
        %v2067 = vshrl.u32 2475754826, %v2064
        %v2068 = vor.u32 %v2066, %v2067
        %v2069 = vshll.u32 2475754826, %v2063
        %v2070 = vshrl.u32 2131351028, %v2064
        %v2071 = vor.u32 %v2069, %v2070
        %v2072 = vshll.u32 2131351028, %v2063
        %v2073 = vshrl.u32 2102212464, %v2064
        %v2074 = vor.u32 %v2072, %v2073
        %v2075 = vshll.u32 2102212464, %v2063
        %v2076 = vshrl.u32 920167782, %v2064
        %v2077 = vor.u32 %v2075, %v2076
        %v2078 = vshll.u32 920167782, %v2063
        %v2079 = vshrl.u32 1326507024, %v2064
        %v2080 = vor.u32 %v2078, %v2079
        %vm2081 = vcmp.lt.s32.totalorder %v2062, 1
        %vm2082 = vcmp.lt.s32.totalorder %v2062, 2
        %vm2083 = vcmp.lt.s32.totalorder %v2062, 3
        %vm2084 = vcmp.lt.s32.totalorder %v2062, 4
        %v2085 = vsel %vm2081, %v2065, %v2068
        %v2086 = vsel %vm2084, %v2074, 2102212464
        %v2087 = vsel %vm2083, %v2071, %v2086
        %v2088 = vsel %vm2082, %v2085, %v2087
        %v2089 = vsel %vm2081, %v2068, %v2071
        %v2090 = vsel %vm2084, %v2077, 920167782
        %v2091 = vsel %vm2083, %v2074, %v2090
        %v2092 = vsel %vm2082, %v2089, %v2091
        %v2093 = vsel %vm2081, %v2071, %v2074
        %v2094 = vsel %vm2084, %v2080, 1326507024
        %v2095 = vsel %vm2083, %v2077, %v2094
        %v2096 = vsel %vm2082, %v2093, %v2095
        %v2097 = vshll.u32 %v2057, 8
        %v2098 = vmul.u32.u64.compose %v2097, %v2096
        %v2099 = vextract.low.u32 %v2098
        %v2100 = vextract.high.u32 %v2098
        %v2101 = vmul.u32.u64.compose %v2097, %v2092
        %v2102 = vextract.low.u32 %v2101
        %v2103 = vextract.high.u32 %v2101
        %v2104 = vmul.u32 %v2097, %v2088
        %v2105 = vadd.s32 %v2100, %v2102
        %vm2106 = vc.u32 %v2100, %v2102
        %v2107 = vadd.s32 %v2103, 1
        %v2108 = vsel %vm2106, %v2107, %v2103
        %v2109 = vadd.s32 %v2104, %v2108
        %v2110 = vadd.s32 %v2109, 536870912
        %v2111 = vshrl.u32 %v2110, 30
        %v2112 = vshll.u32 %v2111, 30
        %v2113 = vsub.s32 %v2109, %v2112
        %vm2114 = vcmp.lt.s32.totalorder %v2113, 0
        %v2115 = vsub.s32 0, %v2113
        %v2116 = vsel %vm2114, %v2115, %v2113
        %v2117 = vclz %v2116
        %v2118 = vsub.s32 %v2117, 2
        %vm2119 = vcmp.gt.s32.totalorder 0, %v2118
        %v2120 = vsel %vm2119, 0, %v2118
        %v2121 = vsub.s32 32, %v2120
        %v2122 = vshll.u32 %v2113, %v2120
        %v2123 = vshrl.u32 %v2105, %v2121
        %v2124 = vor.u32 %v2122, %v2123
        %v2125 = vsub.s32 4294967266, %v2120
        %v2126 = vadd.s32 %v2125, 127
        %v2127 = vshll.u32 %v2126, 23
        %v2128 = vor.u32 4788187, %v2127
        %v2129 = vand.u32 2147483647, %v2128
        %v2131 = vcvt.s32.f32 %v2124
        %v2132 = vmul.f32 %v2131, %v2129
        %v2133 = vxor.u32 %v2132, 2147483648
        %v2134 = vsel %vm2051, %v2133, %v2132
        %v2135 = vsub.s32 4, %v2111
        %v2136 = vsel %vm2051, %v2135, %v2111
        %v2137 = vsel %vm2050, %v163, %v2134
        %v2138 = vsel %vm2050, 0, %v2136
        %v2139 = vcosq.f32.pop %v2137
        %v2140 = vsinq.f32.pop %v2137
        %vm2141 = vweird.f32 %v163
        %v2142 = vadd.s32 %v2138, 3
        %v2143 = vand.u32 %v2142, 3
        %vm2144 = vcmp.lt.s32.totalorder %v2143, 2
        %vm2145 = vcmp.eq.s32.totalorder %v2143, 0
        %v2146 = vxor.u32 %v2140, 2147483648
        %v2147 = vsel %vm2145, %v2139, %v2146
        %vm2148 = vcmp.eq.s32.totalorder %v2143, 2
        %v2149 = vxor.u32 %v2139, 2147483648
        %v2150 = vsel %vm2148, %v2149, %v2140
        %v2151 = vsel %vm2144, %v2147, %v2150
        %v2152 = vsel %vm2141, nan, %v2151
        %v2153 = vand.u32 2147483647, %v164
        %vm2154 = vcmp.le.f32.partialorder %v2153, 0.7853982
        %vm2155 = vcmp.lt.s32.totalorder %v164, 0
        %v2156 = vand.u32 %v164, 2139095040
        %v2157 = vshrl.u32 %v2156, 23
        %v2158 = vsub.s32 %v2157, 127
        %v2159 = vand.u32 2147483647, %v164
        %v2160 = vand.u32 %v2159, 8388607
        %v2161 = vor.u32 %v2160, 8388608
        %v2162 = vsub.s32 0, %v2161
        %v2163 = vadd.s32 %v2158, 1
        %vm2164 = vcmp.gt.s32.totalorder %v2163, 0
        %v2165 = vsel %vm2164, %v2163, 0
        %v2166 = vshrl.u32 %v2165, 5
        %v2167 = vand.u32 %v2165, 31
        %v2168 = vsub.s32 32, %v2167
        %v2169 = vshrl.u32 683565275, %v2168
        %v2170 = vshll.u32 683565275, %v2167
        %v2171 = vshrl.u32 2475754826, %v2168
        %v2172 = vor.u32 %v2170, %v2171
        %v2173 = vshll.u32 2475754826, %v2167
        %v2174 = vshrl.u32 2131351028, %v2168
        %v2175 = vor.u32 %v2173, %v2174
        %v2176 = vshll.u32 2131351028, %v2167
        %v2177 = vshrl.u32 2102212464, %v2168
        %v2178 = vor.u32 %v2176, %v2177
        %v2179 = vshll.u32 2102212464, %v2167
        %v2180 = vshrl.u32 920167782, %v2168
        %v2181 = vor.u32 %v2179, %v2180
        %v2182 = vshll.u32 920167782, %v2167
        %v2183 = vshrl.u32 1326507024, %v2168
        %v2184 = vor.u32 %v2182, %v2183
        %vm2185 = vcmp.lt.s32.totalorder %v2166, 1
        %vm2186 = vcmp.lt.s32.totalorder %v2166, 2
        %vm2187 = vcmp.lt.s32.totalorder %v2166, 3
        %vm2188 = vcmp.lt.s32.totalorder %v2166, 4
        %v2189 = vsel %vm2185, %v2169, %v2172
        %v2190 = vsel %vm2188, %v2178, 2102212464
        %v2191 = vsel %vm2187, %v2175, %v2190
        %v2192 = vsel %vm2186, %v2189, %v2191
        %v2193 = vsel %vm2185, %v2172, %v2175
        %v2194 = vsel %vm2188, %v2181, 920167782
        %v2195 = vsel %vm2187, %v2178, %v2194
        %v2196 = vsel %vm2186, %v2193, %v2195
        %v2197 = vsel %vm2185, %v2175, %v2178
        %v2198 = vsel %vm2188, %v2184, 1326507024
        %v2199 = vsel %vm2187, %v2181, %v2198
        %v2200 = vsel %vm2186, %v2197, %v2199
        %v2201 = vshll.u32 %v2161, 8
        %v2202 = vmul.u32.u64.compose %v2201, %v2200
        %v2203 = vextract.low.u32 %v2202
        %v2204 = vextract.high.u32 %v2202
        %v2205 = vmul.u32.u64.compose %v2201, %v2196
        %v2206 = vextract.low.u32 %v2205
        %v2207 = vextract.high.u32 %v2205
        %v2208 = vmul.u32 %v2201, %v2192
        %v2209 = vadd.s32 %v2204, %v2206
        %vm2210 = vc.u32 %v2204, %v2206
        %v2211 = vadd.s32 %v2207, 1
        %v2212 = vsel %vm2210, %v2211, %v2207
        %v2213 = vadd.s32 %v2208, %v2212
        %v2214 = vadd.s32 %v2213, 536870912
        %v2215 = vshrl.u32 %v2214, 30
        %v2216 = vshll.u32 %v2215, 30
        %v2217 = vsub.s32 %v2213, %v2216
        %vm2218 = vcmp.lt.s32.totalorder %v2217, 0
        %v2219 = vsub.s32 0, %v2217
        %v2220 = vsel %vm2218, %v2219, %v2217
        %v2221 = vclz %v2220
        %v2222 = vsub.s32 %v2221, 2
        %vm2223 = vcmp.gt.s32.totalorder 0, %v2222
        %v2224 = vsel %vm2223, 0, %v2222
        %v2225 = vsub.s32 32, %v2224
        %v2226 = vshll.u32 %v2217, %v2224
        %v2227 = vshrl.u32 %v2209, %v2225
        %v2228 = vor.u32 %v2226, %v2227
        %v2229 = vsub.s32 4294967266, %v2224
        %v2230 = vadd.s32 %v2229, 127
        %v2231 = vshll.u32 %v2230, 23
        %v2232 = vor.u32 4788187, %v2231
        %v2233 = vand.u32 2147483647, %v2232
        %v2235 = vcvt.s32.f32 %v2228
        %v2236 = vmul.f32 %v2235, %v2233
        %v2237 = vxor.u32 %v2236, 2147483648
        %v2238 = vsel %vm2155, %v2237, %v2236
        %v2239 = vsub.s32 4, %v2215
        %v2240 = vsel %vm2155, %v2239, %v2215
        %v2241 = vsel %vm2154, %v164, %v2238
        %v2242 = vsel %vm2154, 0, %v2240
        %v2243 = vcosq.f32.pop %v2241
        %v2244 = vsinq.f32.pop %v2241
        %vm2245 = vweird.f32 %v164
        %v2246 = vadd.s32 %v2242, 3
        %v2247 = vand.u32 %v2246, 3
        %vm2248 = vcmp.lt.s32.totalorder %v2247, 2
        %vm2249 = vcmp.eq.s32.totalorder %v2247, 0
        %v2250 = vxor.u32 %v2244, 2147483648
        %v2251 = vsel %vm2249, %v2243, %v2250
        %vm2252 = vcmp.eq.s32.totalorder %v2247, 2
        %v2253 = vxor.u32 %v2243, 2147483648
        %v2254 = vsel %vm2252, %v2253, %v2244
        %v2255 = vsel %vm2248, %v2251, %v2254
        %v2256 = vsel %vm2245, nan, %v2255
        %v2257 = vand.u32 2147483647, %v165
        %vm2258 = vcmp.le.f32.partialorder %v2257, 0.7853982
        %vm2259 = vcmp.lt.s32.totalorder %v165, 0
        %v2260 = vand.u32 %v165, 2139095040
        %v2261 = vshrl.u32 %v2260, 23
        %v2262 = vsub.s32 %v2261, 127
        %v2263 = vand.u32 2147483647, %v165
        %v2264 = vand.u32 %v2263, 8388607
        %v2265 = vor.u32 %v2264, 8388608
        %v2266 = vsub.s32 0, %v2265
        %v2267 = vadd.s32 %v2262, 1
        %vm2268 = vcmp.gt.s32.totalorder %v2267, 0
        %v2269 = vsel %vm2268, %v2267, 0
        %v2270 = vshrl.u32 %v2269, 5
        %v2271 = vand.u32 %v2269, 31
        %v2272 = vsub.s32 32, %v2271
        %v2273 = vshrl.u32 683565275, %v2272
        %v2274 = vshll.u32 683565275, %v2271
        %v2275 = vshrl.u32 2475754826, %v2272
        %v2276 = vor.u32 %v2274, %v2275
        %v2277 = vshll.u32 2475754826, %v2271
        %v2278 = vshrl.u32 2131351028, %v2272
        %v2279 = vor.u32 %v2277, %v2278
        %v2280 = vshll.u32 2131351028, %v2271
        %v2281 = vshrl.u32 2102212464, %v2272
        %v2282 = vor.u32 %v2280, %v2281
        %v2283 = vshll.u32 2102212464, %v2271
        %v2284 = vshrl.u32 920167782, %v2272
        %v2285 = vor.u32 %v2283, %v2284
        %v2286 = vshll.u32 920167782, %v2271
        %v2287 = vshrl.u32 1326507024, %v2272
        %v2288 = vor.u32 %v2286, %v2287
        %vm2289 = vcmp.lt.s32.totalorder %v2270, 1
        %vm2290 = vcmp.lt.s32.totalorder %v2270, 2
        %vm2291 = vcmp.lt.s32.totalorder %v2270, 3
        %vm2292 = vcmp.lt.s32.totalorder %v2270, 4
        %v2293 = vsel %vm2289, %v2273, %v2276
        %v2294 = vsel %vm2292, %v2282, 2102212464
        %v2295 = vsel %vm2291, %v2279, %v2294
        %v2296 = vsel %vm2290, %v2293, %v2295
        %v2297 = vsel %vm2289, %v2276, %v2279
        %v2298 = vsel %vm2292, %v2285, 920167782
        %v2299 = vsel %vm2291, %v2282, %v2298
        %v2300 = vsel %vm2290, %v2297, %v2299
        %v2301 = vsel %vm2289, %v2279, %v2282
        %v2302 = vsel %vm2292, %v2288, 1326507024
        %v2303 = vsel %vm2291, %v2285, %v2302
        %v2304 = vsel %vm2290, %v2301, %v2303
        %v2305 = vshll.u32 %v2265, 8
        %v2306 = vmul.u32.u64.compose %v2305, %v2304
        %v2307 = vextract.low.u32 %v2306
        %v2308 = vextract.high.u32 %v2306
        %v2309 = vmul.u32.u64.compose %v2305, %v2300
        %v2310 = vextract.low.u32 %v2309
        %v2311 = vextract.high.u32 %v2309
        %v2312 = vmul.u32 %v2305, %v2296
        %v2313 = vadd.s32 %v2308, %v2310
        %vm2314 = vc.u32 %v2308, %v2310
        %v2315 = vadd.s32 %v2311, 1
        %v2316 = vsel %vm2314, %v2315, %v2311
        %v2317 = vadd.s32 %v2312, %v2316
        %v2318 = vadd.s32 %v2317, 536870912
        %v2319 = vshrl.u32 %v2318, 30
        %v2320 = vshll.u32 %v2319, 30
        %v2321 = vsub.s32 %v2317, %v2320
        %vm2322 = vcmp.lt.s32.totalorder %v2321, 0
        %v2323 = vsub.s32 0, %v2321
        %v2324 = vsel %vm2322, %v2323, %v2321
        %v2325 = vclz %v2324
        %v2326 = vsub.s32 %v2325, 2
        %vm2327 = vcmp.gt.s32.totalorder 0, %v2326
        %v2328 = vsel %vm2327, 0, %v2326
        %v2329 = vsub.s32 32, %v2328
        %v2330 = vshll.u32 %v2321, %v2328
        %v2331 = vshrl.u32 %v2313, %v2329
        %v2332 = vor.u32 %v2330, %v2331
        %v2333 = vsub.s32 4294967266, %v2328
        %v2334 = vadd.s32 %v2333, 127
        %v2335 = vshll.u32 %v2334, 23
        %v2336 = vor.u32 4788187, %v2335
        %v2337 = vand.u32 2147483647, %v2336
        %v2339 = vcvt.s32.f32 %v2332
        %v2340 = vmul.f32 %v2339, %v2337
        %v2341 = vxor.u32 %v2340, 2147483648
        %v2342 = vsel %vm2259, %v2341, %v2340
        %v2343 = vsub.s32 4, %v2319
        %v2344 = vsel %vm2259, %v2343, %v2319
        %v2345 = vsel %vm2258, %v165, %v2342
        %v2346 = vsel %vm2258, 0, %v2344
        %v2347 = vcosq.f32.pop %v2345
        %v2348 = vsinq.f32.pop %v2345
        %vm2349 = vweird.f32 %v165
        %v2350 = vadd.s32 %v2346, 3
        %v2351 = vand.u32 %v2350, 3
        %vm2352 = vcmp.lt.s32.totalorder %v2351, 2
        %vm2353 = vcmp.eq.s32.totalorder %v2351, 0
        %v2354 = vxor.u32 %v2348, 2147483648
        %v2355 = vsel %vm2353, %v2347, %v2354
        %vm2356 = vcmp.eq.s32.totalorder %v2351, 2
        %v2357 = vxor.u32 %v2347, 2147483648
        %v2358 = vsel %vm2356, %v2357, %v2348
        %v2359 = vsel %vm2352, %v2355, %v2358
        %v2360 = vsel %vm2349, nan, %v2359
        %v2361 = vand.u32 2147483647, %v166
        %vm2362 = vcmp.le.f32.partialorder %v2361, 0.7853982
        %vm2363 = vcmp.lt.s32.totalorder %v166, 0
        %v2364 = vand.u32 %v166, 2139095040
        %v2365 = vshrl.u32 %v2364, 23
        %v2366 = vsub.s32 %v2365, 127
        %v2367 = vand.u32 2147483647, %v166
        %v2368 = vand.u32 %v2367, 8388607
        %v2369 = vor.u32 %v2368, 8388608
        %v2370 = vsub.s32 0, %v2369
        %v2371 = vadd.s32 %v2366, 1
        %vm2372 = vcmp.gt.s32.totalorder %v2371, 0
        %v2373 = vsel %vm2372, %v2371, 0
        %v2374 = vshrl.u32 %v2373, 5
        %v2375 = vand.u32 %v2373, 31
        %v2376 = vsub.s32 32, %v2375
        %v2377 = vshrl.u32 683565275, %v2376
        %v2378 = vshll.u32 683565275, %v2375
        %v2379 = vshrl.u32 2475754826, %v2376
        %v2380 = vor.u32 %v2378, %v2379
        %v2381 = vshll.u32 2475754826, %v2375
        %v2382 = vshrl.u32 2131351028, %v2376
        %v2383 = vor.u32 %v2381, %v2382
        %v2384 = vshll.u32 2131351028, %v2375
        %v2385 = vshrl.u32 2102212464, %v2376
        %v2386 = vor.u32 %v2384, %v2385
        %v2387 = vshll.u32 2102212464, %v2375
        %v2388 = vshrl.u32 920167782, %v2376
        %v2389 = vor.u32 %v2387, %v2388
        %v2390 = vshll.u32 920167782, %v2375
        %v2391 = vshrl.u32 1326507024, %v2376
        %v2392 = vor.u32 %v2390, %v2391
        %vm2393 = vcmp.lt.s32.totalorder %v2374, 1
        %vm2394 = vcmp.lt.s32.totalorder %v2374, 2
        %vm2395 = vcmp.lt.s32.totalorder %v2374, 3
        %vm2396 = vcmp.lt.s32.totalorder %v2374, 4
        %v2397 = vsel %vm2393, %v2377, %v2380
        %v2398 = vsel %vm2396, %v2386, 2102212464
        %v2399 = vsel %vm2395, %v2383, %v2398
        %v2400 = vsel %vm2394, %v2397, %v2399
        %v2401 = vsel %vm2393, %v2380, %v2383
        %v2402 = vsel %vm2396, %v2389, 920167782
        %v2403 = vsel %vm2395, %v2386, %v2402
        %v2404 = vsel %vm2394, %v2401, %v2403
        %v2405 = vsel %vm2393, %v2383, %v2386
        %v2406 = vsel %vm2396, %v2392, 1326507024
        %v2407 = vsel %vm2395, %v2389, %v2406
        %v2408 = vsel %vm2394, %v2405, %v2407
        %v2409 = vshll.u32 %v2369, 8
        %v2410 = vmul.u32.u64.compose %v2409, %v2408
        %v2411 = vextract.low.u32 %v2410
        %v2412 = vextract.high.u32 %v2410
        %v2413 = vmul.u32.u64.compose %v2409, %v2404
        %v2414 = vextract.low.u32 %v2413
        %v2415 = vextract.high.u32 %v2413
        %v2416 = vmul.u32 %v2409, %v2400
        %v2417 = vadd.s32 %v2412, %v2414
        %vm2418 = vc.u32 %v2412, %v2414
        %v2419 = vadd.s32 %v2415, 1
        %v2420 = vsel %vm2418, %v2419, %v2415
        %v2421 = vadd.s32 %v2416, %v2420
        %v2422 = vadd.s32 %v2421, 536870912
        %v2423 = vshrl.u32 %v2422, 30
        %v2424 = vshll.u32 %v2423, 30
        %v2425 = vsub.s32 %v2421, %v2424
        %vm2426 = vcmp.lt.s32.totalorder %v2425, 0
        %v2427 = vsub.s32 0, %v2425
        %v2428 = vsel %vm2426, %v2427, %v2425
        %v2429 = vclz %v2428
        %v2430 = vsub.s32 %v2429, 2
        %vm2431 = vcmp.gt.s32.totalorder 0, %v2430
        %v2432 = vsel %vm2431, 0, %v2430
        %v2433 = vsub.s32 32, %v2432
        %v2434 = vshll.u32 %v2425, %v2432
        %v2435 = vshrl.u32 %v2417, %v2433
        %v2436 = vor.u32 %v2434, %v2435
        %v2437 = vsub.s32 4294967266, %v2432
        %v2438 = vadd.s32 %v2437, 127
        %v2439 = vshll.u32 %v2438, 23
        %v2440 = vor.u32 4788187, %v2439
        %v2441 = vand.u32 2147483647, %v2440
        %v2443 = vcvt.s32.f32 %v2436
        %v2444 = vmul.f32 %v2443, %v2441
        %v2445 = vxor.u32 %v2444, 2147483648
        %v2446 = vsel %vm2363, %v2445, %v2444
        %v2447 = vsub.s32 4, %v2423
        %v2448 = vsel %vm2363, %v2447, %v2423
        %v2449 = vsel %vm2362, %v166, %v2446
        %v2450 = vsel %vm2362, 0, %v2448
        %v2451 = vcosq.f32.pop %v2449
        %v2452 = vsinq.f32.pop %v2449
        %vm2453 = vweird.f32 %v166
        %v2454 = vadd.s32 %v2450, 3
        %v2455 = vand.u32 %v2454, 3
        %vm2456 = vcmp.lt.s32.totalorder %v2455, 2
        %vm2457 = vcmp.eq.s32.totalorder %v2455, 0
        %v2458 = vxor.u32 %v2452, 2147483648
        %v2459 = vsel %vm2457, %v2451, %v2458
        %vm2460 = vcmp.eq.s32.totalorder %v2455, 2
        %v2461 = vxor.u32 %v2451, 2147483648
        %v2462 = vsel %vm2460, %v2461, %v2452
        %v2463 = vsel %vm2456, %v2459, %v2462
        %v2464 = vsel %vm2453, nan, %v2463
        %v2465 = vand.u32 2147483647, %v167
        %vm2466 = vcmp.le.f32.partialorder %v2465, 0.7853982
        %vm2467 = vcmp.lt.s32.totalorder %v167, 0
        %v2468 = vand.u32 %v167, 2139095040
        %v2469 = vshrl.u32 %v2468, 23
        %v2470 = vsub.s32 %v2469, 127
        %v2471 = vand.u32 2147483647, %v167
        %v2472 = vand.u32 %v2471, 8388607
        %v2473 = vor.u32 %v2472, 8388608
        %v2474 = vsub.s32 0, %v2473
        %v2475 = vadd.s32 %v2470, 1
        %vm2476 = vcmp.gt.s32.totalorder %v2475, 0
        %v2477 = vsel %vm2476, %v2475, 0
        %v2478 = vshrl.u32 %v2477, 5
        %v2479 = vand.u32 %v2477, 31
        %v2480 = vsub.s32 32, %v2479
        %v2481 = vshrl.u32 683565275, %v2480
        %v2482 = vshll.u32 683565275, %v2479
        %v2483 = vshrl.u32 2475754826, %v2480
        %v2484 = vor.u32 %v2482, %v2483
        %v2485 = vshll.u32 2475754826, %v2479
        %v2486 = vshrl.u32 2131351028, %v2480
        %v2487 = vor.u32 %v2485, %v2486
        %v2488 = vshll.u32 2131351028, %v2479
        %v2489 = vshrl.u32 2102212464, %v2480
        %v2490 = vor.u32 %v2488, %v2489
        %v2491 = vshll.u32 2102212464, %v2479
        %v2492 = vshrl.u32 920167782, %v2480
        %v2493 = vor.u32 %v2491, %v2492
        %v2494 = vshll.u32 920167782, %v2479
        %v2495 = vshrl.u32 1326507024, %v2480
        %v2496 = vor.u32 %v2494, %v2495
        %vm2497 = vcmp.lt.s32.totalorder %v2478, 1
        %vm2498 = vcmp.lt.s32.totalorder %v2478, 2
        %vm2499 = vcmp.lt.s32.totalorder %v2478, 3
        %vm2500 = vcmp.lt.s32.totalorder %v2478, 4
        %v2501 = vsel %vm2497, %v2481, %v2484
        %v2502 = vsel %vm2500, %v2490, 2102212464
        %v2503 = vsel %vm2499, %v2487, %v2502
        %v2504 = vsel %vm2498, %v2501, %v2503
        %v2505 = vsel %vm2497, %v2484, %v2487
        %v2506 = vsel %vm2500, %v2493, 920167782
        %v2507 = vsel %vm2499, %v2490, %v2506
        %v2508 = vsel %vm2498, %v2505, %v2507
        %v2509 = vsel %vm2497, %v2487, %v2490
        %v2510 = vsel %vm2500, %v2496, 1326507024
        %v2511 = vsel %vm2499, %v2493, %v2510
        %v2512 = vsel %vm2498, %v2509, %v2511
        %v2513 = vshll.u32 %v2473, 8
        %v2514 = vmul.u32.u64.compose %v2513, %v2512
        %v2515 = vextract.low.u32 %v2514
        %v2516 = vextract.high.u32 %v2514
        %v2517 = vmul.u32.u64.compose %v2513, %v2508
        %v2518 = vextract.low.u32 %v2517
        %v2519 = vextract.high.u32 %v2517
        %v2520 = vmul.u32 %v2513, %v2504
        %v2521 = vadd.s32 %v2516, %v2518
        %vm2522 = vc.u32 %v2516, %v2518
        %v2523 = vadd.s32 %v2519, 1
        %v2524 = vsel %vm2522, %v2523, %v2519
        %v2525 = vadd.s32 %v2520, %v2524
        %v2526 = vadd.s32 %v2525, 536870912
        %v2527 = vshrl.u32 %v2526, 30
        %v2528 = vshll.u32 %v2527, 30
        %v2529 = vsub.s32 %v2525, %v2528
        %vm2530 = vcmp.lt.s32.totalorder %v2529, 0
        %v2531 = vsub.s32 0, %v2529
        %v2532 = vsel %vm2530, %v2531, %v2529
        %v2533 = vclz %v2532
        %v2534 = vsub.s32 %v2533, 2
        %vm2535 = vcmp.gt.s32.totalorder 0, %v2534
        %v2536 = vsel %vm2535, 0, %v2534
        %v2537 = vsub.s32 32, %v2536
        %v2538 = vshll.u32 %v2529, %v2536
        %v2539 = vshrl.u32 %v2521, %v2537
        %v2540 = vor.u32 %v2538, %v2539
        %v2541 = vsub.s32 4294967266, %v2536
        %v2542 = vadd.s32 %v2541, 127
        %v2543 = vshll.u32 %v2542, 23
        %v2544 = vor.u32 4788187, %v2543
        %v2545 = vand.u32 2147483647, %v2544
        %v2547 = vcvt.s32.f32 %v2540
        %v2548 = vmul.f32 %v2547, %v2545
        %v2549 = vxor.u32 %v2548, 2147483648
        %v2550 = vsel %vm2467, %v2549, %v2548
        %v2551 = vsub.s32 4, %v2527
        %v2552 = vsel %vm2467, %v2551, %v2527
        %v2553 = vsel %vm2466, %v167, %v2550
        %v2554 = vsel %vm2466, 0, %v2552
        %v2555 = vcosq.f32.pop %v2553
        %v2556 = vsinq.f32.pop %v2553
        %vm2557 = vweird.f32 %v167
        %v2558 = vadd.s32 %v2554, 3
        %v2559 = vand.u32 %v2558, 3
        %vm2560 = vcmp.lt.s32.totalorder %v2559, 2
        %vm2561 = vcmp.eq.s32.totalorder %v2559, 0
        %v2562 = vxor.u32 %v2556, 2147483648
        %v2563 = vsel %vm2561, %v2555, %v2562
        %vm2564 = vcmp.eq.s32.totalorder %v2559, 2
        %v2565 = vxor.u32 %v2555, 2147483648
        %v2566 = vsel %vm2564, %v2565, %v2556
        %v2567 = vsel %vm2560, %v2563, %v2566
        %v2568 = vsel %vm2557, nan, %v2567
        %v2569 = vand.u32 2147483647, %v168
        %vm2570 = vcmp.le.f32.partialorder %v2569, 0.7853982
        %vm2571 = vcmp.lt.s32.totalorder %v168, 0
        %v2572 = vand.u32 %v168, 2139095040
        %v2573 = vshrl.u32 %v2572, 23
        %v2574 = vsub.s32 %v2573, 127
        %v2575 = vand.u32 2147483647, %v168
        %v2576 = vand.u32 %v2575, 8388607
        %v2577 = vor.u32 %v2576, 8388608
        %v2578 = vsub.s32 0, %v2577
        %v2579 = vadd.s32 %v2574, 1
        %vm2580 = vcmp.gt.s32.totalorder %v2579, 0
        %v2581 = vsel %vm2580, %v2579, 0
        %v2582 = vshrl.u32 %v2581, 5
        %v2583 = vand.u32 %v2581, 31
        %v2584 = vsub.s32 32, %v2583
        %v2585 = vshrl.u32 683565275, %v2584
        %v2586 = vshll.u32 683565275, %v2583
        %v2587 = vshrl.u32 2475754826, %v2584
        %v2588 = vor.u32 %v2586, %v2587
        %v2589 = vshll.u32 2475754826, %v2583
        %v2590 = vshrl.u32 2131351028, %v2584
        %v2591 = vor.u32 %v2589, %v2590
        %v2592 = vshll.u32 2131351028, %v2583
        %v2593 = vshrl.u32 2102212464, %v2584
        %v2594 = vor.u32 %v2592, %v2593
        %v2595 = vshll.u32 2102212464, %v2583
        %v2596 = vshrl.u32 920167782, %v2584
        %v2597 = vor.u32 %v2595, %v2596
        %v2598 = vshll.u32 920167782, %v2583
        %v2599 = vshrl.u32 1326507024, %v2584
        %v2600 = vor.u32 %v2598, %v2599
        %vm2601 = vcmp.lt.s32.totalorder %v2582, 1
        %vm2602 = vcmp.lt.s32.totalorder %v2582, 2
        %vm2603 = vcmp.lt.s32.totalorder %v2582, 3
        %vm2604 = vcmp.lt.s32.totalorder %v2582, 4
        %v2605 = vsel %vm2601, %v2585, %v2588
        %v2606 = vsel %vm2604, %v2594, 2102212464
        %v2607 = vsel %vm2603, %v2591, %v2606
        %v2608 = vsel %vm2602, %v2605, %v2607
        %v2609 = vsel %vm2601, %v2588, %v2591
        %v2610 = vsel %vm2604, %v2597, 920167782
        %v2611 = vsel %vm2603, %v2594, %v2610
        %v2612 = vsel %vm2602, %v2609, %v2611
        %v2613 = vsel %vm2601, %v2591, %v2594
        %v2614 = vsel %vm2604, %v2600, 1326507024
        %v2615 = vsel %vm2603, %v2597, %v2614
        %v2616 = vsel %vm2602, %v2613, %v2615
        %v2617 = vshll.u32 %v2577, 8
        %v2618 = vmul.u32.u64.compose %v2617, %v2616
        %v2619 = vextract.low.u32 %v2618
        %v2620 = vextract.high.u32 %v2618
        %v2621 = vmul.u32.u64.compose %v2617, %v2612
        %v2622 = vextract.low.u32 %v2621
        %v2623 = vextract.high.u32 %v2621
        %v2624 = vmul.u32 %v2617, %v2608
        %v2625 = vadd.s32 %v2620, %v2622
        %vm2626 = vc.u32 %v2620, %v2622
        %v2627 = vadd.s32 %v2623, 1
        %v2628 = vsel %vm2626, %v2627, %v2623
        %v2629 = vadd.s32 %v2624, %v2628
        %v2630 = vadd.s32 %v2629, 536870912
        %v2631 = vshrl.u32 %v2630, 30
        %v2632 = vshll.u32 %v2631, 30
        %v2633 = vsub.s32 %v2629, %v2632
        %vm2634 = vcmp.lt.s32.totalorder %v2633, 0
        %v2635 = vsub.s32 0, %v2633
        %v2636 = vsel %vm2634, %v2635, %v2633
        %v2637 = vclz %v2636
        %v2638 = vsub.s32 %v2637, 2
        %vm2639 = vcmp.gt.s32.totalorder 0, %v2638
        %v2640 = vsel %vm2639, 0, %v2638
        %v2641 = vsub.s32 32, %v2640
        %v2642 = vshll.u32 %v2633, %v2640
        %v2643 = vshrl.u32 %v2625, %v2641
        %v2644 = vor.u32 %v2642, %v2643
        %v2645 = vsub.s32 4294967266, %v2640
        %v2646 = vadd.s32 %v2645, 127
        %v2647 = vshll.u32 %v2646, 23
        %v2648 = vor.u32 4788187, %v2647
        %v2649 = vand.u32 2147483647, %v2648
        %v2651 = vcvt.s32.f32 %v2644
        %v2652 = vmul.f32 %v2651, %v2649
        %v2653 = vxor.u32 %v2652, 2147483648
        %v2654 = vsel %vm2571, %v2653, %v2652
        %v2655 = vsub.s32 4, %v2631
        %v2656 = vsel %vm2571, %v2655, %v2631
        %v2657 = vsel %vm2570, %v168, %v2654
        %v2658 = vsel %vm2570, 0, %v2656
        %v2659 = vcosq.f32.pop %v2657
        %v2660 = vsinq.f32.pop %v2657
        %vm2661 = vweird.f32 %v168
        %v2662 = vadd.s32 %v2658, 3
        %v2663 = vand.u32 %v2662, 3
        %vm2664 = vcmp.lt.s32.totalorder %v2663, 2
        %vm2665 = vcmp.eq.s32.totalorder %v2663, 0
        %v2666 = vxor.u32 %v2660, 2147483648
        %v2667 = vsel %vm2665, %v2659, %v2666
        %vm2668 = vcmp.eq.s32.totalorder %v2663, 2
        %v2669 = vxor.u32 %v2659, 2147483648
        %v2670 = vsel %vm2668, %v2669, %v2660
        %v2671 = vsel %vm2664, %v2667, %v2670
        %v2672 = vsel %vm2661, nan, %v2671
        %v2673 = vand.u32 2147483647, %v169
        %vm2674 = vcmp.le.f32.partialorder %v2673, 0.7853982
        %vm2675 = vcmp.lt.s32.totalorder %v169, 0
        %v2676 = vand.u32 %v169, 2139095040
        %v2677 = vshrl.u32 %v2676, 23
        %v2678 = vsub.s32 %v2677, 127
        %v2679 = vand.u32 2147483647, %v169
        %v2680 = vand.u32 %v2679, 8388607
        %v2681 = vor.u32 %v2680, 8388608
        %v2682 = vsub.s32 0, %v2681
        %v2683 = vadd.s32 %v2678, 1
        %vm2684 = vcmp.gt.s32.totalorder %v2683, 0
        %v2685 = vsel %vm2684, %v2683, 0
        %v2686 = vshrl.u32 %v2685, 5
        %v2687 = vand.u32 %v2685, 31
        %v2688 = vsub.s32 32, %v2687
        %v2689 = vshrl.u32 683565275, %v2688
        %v2690 = vshll.u32 683565275, %v2687
        %v2691 = vshrl.u32 2475754826, %v2688
        %v2692 = vor.u32 %v2690, %v2691
        %v2693 = vshll.u32 2475754826, %v2687
        %v2694 = vshrl.u32 2131351028, %v2688
        %v2695 = vor.u32 %v2693, %v2694
        %v2696 = vshll.u32 2131351028, %v2687
        %v2697 = vshrl.u32 2102212464, %v2688
        %v2698 = vor.u32 %v2696, %v2697
        %v2699 = vshll.u32 2102212464, %v2687
        %v2700 = vshrl.u32 920167782, %v2688
        %v2701 = vor.u32 %v2699, %v2700
        %v2702 = vshll.u32 920167782, %v2687
        %v2703 = vshrl.u32 1326507024, %v2688
        %v2704 = vor.u32 %v2702, %v2703
        %vm2705 = vcmp.lt.s32.totalorder %v2686, 1
        %vm2706 = vcmp.lt.s32.totalorder %v2686, 2
        %vm2707 = vcmp.lt.s32.totalorder %v2686, 3
        %vm2708 = vcmp.lt.s32.totalorder %v2686, 4
        %v2709 = vsel %vm2705, %v2689, %v2692
        %v2710 = vsel %vm2708, %v2698, 2102212464
        %v2711 = vsel %vm2707, %v2695, %v2710
        %v2712 = vsel %vm2706, %v2709, %v2711
        %v2713 = vsel %vm2705, %v2692, %v2695
        %v2714 = vsel %vm2708, %v2701, 920167782
        %v2715 = vsel %vm2707, %v2698, %v2714
        %v2716 = vsel %vm2706, %v2713, %v2715
        %v2717 = vsel %vm2705, %v2695, %v2698
        %v2718 = vsel %vm2708, %v2704, 1326507024
        %v2719 = vsel %vm2707, %v2701, %v2718
        %v2720 = vsel %vm2706, %v2717, %v2719
        %v2721 = vshll.u32 %v2681, 8
        %v2722 = vmul.u32.u64.compose %v2721, %v2720
        %v2723 = vextract.low.u32 %v2722
        %v2724 = vextract.high.u32 %v2722
        %v2725 = vmul.u32.u64.compose %v2721, %v2716
        %v2726 = vextract.low.u32 %v2725
        %v2727 = vextract.high.u32 %v2725
        %v2728 = vmul.u32 %v2721, %v2712
        %v2729 = vadd.s32 %v2724, %v2726
        %vm2730 = vc.u32 %v2724, %v2726
        %v2731 = vadd.s32 %v2727, 1
        %v2732 = vsel %vm2730, %v2731, %v2727
        %v2733 = vadd.s32 %v2728, %v2732
        %v2734 = vadd.s32 %v2733, 536870912
        %v2735 = vshrl.u32 %v2734, 30
        %v2736 = vshll.u32 %v2735, 30
        %v2737 = vsub.s32 %v2733, %v2736
        %vm2738 = vcmp.lt.s32.totalorder %v2737, 0
        %v2739 = vsub.s32 0, %v2737
        %v2740 = vsel %vm2738, %v2739, %v2737
        %v2741 = vclz %v2740
        %v2742 = vsub.s32 %v2741, 2
        %vm2743 = vcmp.gt.s32.totalorder 0, %v2742
        %v2744 = vsel %vm2743, 0, %v2742
        %v2745 = vsub.s32 32, %v2744
        %v2746 = vshll.u32 %v2737, %v2744
        %v2747 = vshrl.u32 %v2729, %v2745
        %v2748 = vor.u32 %v2746, %v2747
        %v2749 = vsub.s32 4294967266, %v2744
        %v2750 = vadd.s32 %v2749, 127
        %v2751 = vshll.u32 %v2750, 23
        %v2752 = vor.u32 4788187, %v2751
        %v2753 = vand.u32 2147483647, %v2752
        %v2755 = vcvt.s32.f32 %v2748
        %v2756 = vmul.f32 %v2755, %v2753
        %v2757 = vxor.u32 %v2756, 2147483648
        %v2758 = vsel %vm2675, %v2757, %v2756
        %v2759 = vsub.s32 4, %v2735
        %v2760 = vsel %vm2675, %v2759, %v2735
        %v2761 = vsel %vm2674, %v169, %v2758
        %v2762 = vsel %vm2674, 0, %v2760
        %v2763 = vcosq.f32.pop %v2761
        %v2764 = vsinq.f32.pop %v2761
        %vm2765 = vweird.f32 %v169
        %v2766 = vadd.s32 %v2762, 3
        %v2767 = vand.u32 %v2766, 3
        %vm2768 = vcmp.lt.s32.totalorder %v2767, 2
        %vm2769 = vcmp.eq.s32.totalorder %v2767, 0
        %v2770 = vxor.u32 %v2764, 2147483648
        %v2771 = vsel %vm2769, %v2763, %v2770
        %vm2772 = vcmp.eq.s32.totalorder %v2767, 2
        %v2773 = vxor.u32 %v2763, 2147483648
        %v2774 = vsel %vm2772, %v2773, %v2764
        %v2775 = vsel %vm2768, %v2771, %v2774
        %v2776 = vsel %vm2765, nan, %v2775
        %v2777 = vand.u32 2147483647, %v170
        %vm2778 = vcmp.le.f32.partialorder %v2777, 0.7853982
        %vm2779 = vcmp.lt.s32.totalorder %v170, 0
        %v2780 = vand.u32 %v170, 2139095040
        %v2781 = vshrl.u32 %v2780, 23
        %v2782 = vsub.s32 %v2781, 127
        %v2783 = vand.u32 2147483647, %v170
        %v2784 = vand.u32 %v2783, 8388607
        %v2785 = vor.u32 %v2784, 8388608
        %v2786 = vsub.s32 0, %v2785
        %v2787 = vadd.s32 %v2782, 1
        %vm2788 = vcmp.gt.s32.totalorder %v2787, 0
        %v2789 = vsel %vm2788, %v2787, 0
        %v2790 = vshrl.u32 %v2789, 5
        %v2791 = vand.u32 %v2789, 31
        %v2792 = vsub.s32 32, %v2791
        %v2793 = vshrl.u32 683565275, %v2792
        %v2794 = vshll.u32 683565275, %v2791
        %v2795 = vshrl.u32 2475754826, %v2792
        %v2796 = vor.u32 %v2794, %v2795
        %v2797 = vshll.u32 2475754826, %v2791
        %v2798 = vshrl.u32 2131351028, %v2792
        %v2799 = vor.u32 %v2797, %v2798
        %v2800 = vshll.u32 2131351028, %v2791
        %v2801 = vshrl.u32 2102212464, %v2792
        %v2802 = vor.u32 %v2800, %v2801
        %v2803 = vshll.u32 2102212464, %v2791
        %v2804 = vshrl.u32 920167782, %v2792
        %v2805 = vor.u32 %v2803, %v2804
        %v2806 = vshll.u32 920167782, %v2791
        %v2807 = vshrl.u32 1326507024, %v2792
        %v2808 = vor.u32 %v2806, %v2807
        %vm2809 = vcmp.lt.s32.totalorder %v2790, 1
        %vm2810 = vcmp.lt.s32.totalorder %v2790, 2
        %vm2811 = vcmp.lt.s32.totalorder %v2790, 3
        %vm2812 = vcmp.lt.s32.totalorder %v2790, 4
        %v2813 = vsel %vm2809, %v2793, %v2796
        %v2814 = vsel %vm2812, %v2802, 2102212464
        %v2815 = vsel %vm2811, %v2799, %v2814
        %v2816 = vsel %vm2810, %v2813, %v2815
        %v2817 = vsel %vm2809, %v2796, %v2799
        %v2818 = vsel %vm2812, %v2805, 920167782
        %v2819 = vsel %vm2811, %v2802, %v2818
        %v2820 = vsel %vm2810, %v2817, %v2819
        %v2821 = vsel %vm2809, %v2799, %v2802
        %v2822 = vsel %vm2812, %v2808, 1326507024
        %v2823 = vsel %vm2811, %v2805, %v2822
        %v2824 = vsel %vm2810, %v2821, %v2823
        %v2825 = vshll.u32 %v2785, 8
        %v2826 = vmul.u32.u64.compose %v2825, %v2824
        %v2827 = vextract.low.u32 %v2826
        %v2828 = vextract.high.u32 %v2826
        %v2829 = vmul.u32.u64.compose %v2825, %v2820
        %v2830 = vextract.low.u32 %v2829
        %v2831 = vextract.high.u32 %v2829
        %v2832 = vmul.u32 %v2825, %v2816
        %v2833 = vadd.s32 %v2828, %v2830
        %vm2834 = vc.u32 %v2828, %v2830
        %v2835 = vadd.s32 %v2831, 1
        %v2836 = vsel %vm2834, %v2835, %v2831
        %v2837 = vadd.s32 %v2832, %v2836
        %v2838 = vadd.s32 %v2837, 536870912
        %v2839 = vshrl.u32 %v2838, 30
        %v2840 = vshll.u32 %v2839, 30
        %v2841 = vsub.s32 %v2837, %v2840
        %vm2842 = vcmp.lt.s32.totalorder %v2841, 0
        %v2843 = vsub.s32 0, %v2841
        %v2844 = vsel %vm2842, %v2843, %v2841
        %v2845 = vclz %v2844
        %v2846 = vsub.s32 %v2845, 2
        %vm2847 = vcmp.gt.s32.totalorder 0, %v2846
        %v2848 = vsel %vm2847, 0, %v2846
        %v2849 = vsub.s32 32, %v2848
        %v2850 = vshll.u32 %v2841, %v2848
        %v2851 = vshrl.u32 %v2833, %v2849
        %v2852 = vor.u32 %v2850, %v2851
        %v2853 = vsub.s32 4294967266, %v2848
        %v2854 = vadd.s32 %v2853, 127
        %v2855 = vshll.u32 %v2854, 23
        %v2856 = vor.u32 4788187, %v2855
        %v2857 = vand.u32 2147483647, %v2856
        %v2859 = vcvt.s32.f32 %v2852
        %v2860 = vmul.f32 %v2859, %v2857
        %v2861 = vxor.u32 %v2860, 2147483648
        %v2862 = vsel %vm2779, %v2861, %v2860
        %v2863 = vsub.s32 4, %v2839
        %v2864 = vsel %vm2779, %v2863, %v2839
        %v2865 = vsel %vm2778, %v170, %v2862
        %v2866 = vsel %vm2778, 0, %v2864
        %v2867 = vcosq.f32.pop %v2865
        %v2868 = vsinq.f32.pop %v2865
        %vm2869 = vweird.f32 %v170
        %v2870 = vadd.s32 %v2866, 3
        %v2871 = vand.u32 %v2870, 3
        %vm2872 = vcmp.lt.s32.totalorder %v2871, 2
        %vm2873 = vcmp.eq.s32.totalorder %v2871, 0
        %v2874 = vxor.u32 %v2868, 2147483648
        %v2875 = vsel %vm2873, %v2867, %v2874
        %vm2876 = vcmp.eq.s32.totalorder %v2871, 2
        %v2877 = vxor.u32 %v2867, 2147483648
        %v2878 = vsel %vm2876, %v2877, %v2868
        %v2879 = vsel %vm2872, %v2875, %v2878
        %v2880 = vsel %vm2869, nan, %v2879
        %v2881 = vand.u32 2147483647, %v171
        %vm2882 = vcmp.le.f32.partialorder %v2881, 0.7853982
        %vm2883 = vcmp.lt.s32.totalorder %v171, 0
        %v2884 = vand.u32 %v171, 2139095040
        %v2885 = vshrl.u32 %v2884, 23
        %v2886 = vsub.s32 %v2885, 127
        %v2887 = vand.u32 2147483647, %v171
        %v2888 = vand.u32 %v2887, 8388607
        %v2889 = vor.u32 %v2888, 8388608
        %v2890 = vsub.s32 0, %v2889
        %v2891 = vadd.s32 %v2886, 1
        %vm2892 = vcmp.gt.s32.totalorder %v2891, 0
        %v2893 = vsel %vm2892, %v2891, 0
        %v2894 = vshrl.u32 %v2893, 5
        %v2895 = vand.u32 %v2893, 31
        %v2896 = vsub.s32 32, %v2895
        %v2897 = vshrl.u32 683565275, %v2896
        %v2898 = vshll.u32 683565275, %v2895
        %v2899 = vshrl.u32 2475754826, %v2896
        %v2900 = vor.u32 %v2898, %v2899
        %v2901 = vshll.u32 2475754826, %v2895
        %v2902 = vshrl.u32 2131351028, %v2896
        %v2903 = vor.u32 %v2901, %v2902
        %v2904 = vshll.u32 2131351028, %v2895
        %v2905 = vshrl.u32 2102212464, %v2896
        %v2906 = vor.u32 %v2904, %v2905
        %v2907 = vshll.u32 2102212464, %v2895
        %v2908 = vshrl.u32 920167782, %v2896
        %v2909 = vor.u32 %v2907, %v2908
        %v2910 = vshll.u32 920167782, %v2895
        %v2911 = vshrl.u32 1326507024, %v2896
        %v2912 = vor.u32 %v2910, %v2911
        %vm2913 = vcmp.lt.s32.totalorder %v2894, 1
        %vm2914 = vcmp.lt.s32.totalorder %v2894, 2
        %vm2915 = vcmp.lt.s32.totalorder %v2894, 3
        %vm2916 = vcmp.lt.s32.totalorder %v2894, 4
        %v2917 = vsel %vm2913, %v2897, %v2900
        %v2918 = vsel %vm2916, %v2906, 2102212464
        %v2919 = vsel %vm2915, %v2903, %v2918
        %v2920 = vsel %vm2914, %v2917, %v2919
        %v2921 = vsel %vm2913, %v2900, %v2903
        %v2922 = vsel %vm2916, %v2909, 920167782
        %v2923 = vsel %vm2915, %v2906, %v2922
        %v2924 = vsel %vm2914, %v2921, %v2923
        %v2925 = vsel %vm2913, %v2903, %v2906
        %v2926 = vsel %vm2916, %v2912, 1326507024
        %v2927 = vsel %vm2915, %v2909, %v2926
        %v2928 = vsel %vm2914, %v2925, %v2927
        %v2929 = vshll.u32 %v2889, 8
        %v2930 = vmul.u32.u64.compose %v2929, %v2928
        %v2931 = vextract.low.u32 %v2930
        %v2932 = vextract.high.u32 %v2930
        %v2933 = vmul.u32.u64.compose %v2929, %v2924
        %v2934 = vextract.low.u32 %v2933
        %v2935 = vextract.high.u32 %v2933
        %v2936 = vmul.u32 %v2929, %v2920
        %v2937 = vadd.s32 %v2932, %v2934
        %vm2938 = vc.u32 %v2932, %v2934
        %v2939 = vadd.s32 %v2935, 1
        %v2940 = vsel %vm2938, %v2939, %v2935
        %v2941 = vadd.s32 %v2936, %v2940
        %v2942 = vadd.s32 %v2941, 536870912
        %v2943 = vshrl.u32 %v2942, 30
        %v2944 = vshll.u32 %v2943, 30
        %v2945 = vsub.s32 %v2941, %v2944
        %vm2946 = vcmp.lt.s32.totalorder %v2945, 0
        %v2947 = vsub.s32 0, %v2945
        %v2948 = vsel %vm2946, %v2947, %v2945
        %v2949 = vclz %v2948
        %v2950 = vsub.s32 %v2949, 2
        %vm2951 = vcmp.gt.s32.totalorder 0, %v2950
        %v2952 = vsel %vm2951, 0, %v2950
        %v2953 = vsub.s32 32, %v2952
        %v2954 = vshll.u32 %v2945, %v2952
        %v2955 = vshrl.u32 %v2937, %v2953
        %v2956 = vor.u32 %v2954, %v2955
        %v2957 = vsub.s32 4294967266, %v2952
        %v2958 = vadd.s32 %v2957, 127
        %v2959 = vshll.u32 %v2958, 23
        %v2960 = vor.u32 4788187, %v2959
        %v2961 = vand.u32 2147483647, %v2960
        %v2963 = vcvt.s32.f32 %v2956
        %v2964 = vmul.f32 %v2963, %v2961
        %v2965 = vxor.u32 %v2964, 2147483648
        %v2966 = vsel %vm2883, %v2965, %v2964
        %v2967 = vsub.s32 4, %v2943
        %v2968 = vsel %vm2883, %v2967, %v2943
        %v2969 = vsel %vm2882, %v171, %v2966
        %v2970 = vsel %vm2882, 0, %v2968
        %v2971 = vcosq.f32.pop %v2969
        %v2972 = vsinq.f32.pop %v2969
        %vm2973 = vweird.f32 %v171
        %v2974 = vadd.s32 %v2970, 3
        %v2975 = vand.u32 %v2974, 3
        %vm2976 = vcmp.lt.s32.totalorder %v2975, 2
        %vm2977 = vcmp.eq.s32.totalorder %v2975, 0
        %v2978 = vxor.u32 %v2972, 2147483648
        %v2979 = vsel %vm2977, %v2971, %v2978
        %vm2980 = vcmp.eq.s32.totalorder %v2975, 2
        %v2981 = vxor.u32 %v2971, 2147483648
        %v2982 = vsel %vm2980, %v2981, %v2972
        %v2983 = vsel %vm2976, %v2979, %v2982
        %v2984 = vsel %vm2973, nan, %v2983
        %v2985 = vand.u32 2147483647, %v172
        %vm2986 = vcmp.le.f32.partialorder %v2985, 0.7853982
        %vm2987 = vcmp.lt.s32.totalorder %v172, 0
        %v2988 = vand.u32 %v172, 2139095040
        %v2989 = vshrl.u32 %v2988, 23
        %v2990 = vsub.s32 %v2989, 127
        %v2991 = vand.u32 2147483647, %v172
        %v2992 = vand.u32 %v2991, 8388607
        %v2993 = vor.u32 %v2992, 8388608
        %v2994 = vsub.s32 0, %v2993
        %v2995 = vadd.s32 %v2990, 1
        %vm2996 = vcmp.gt.s32.totalorder %v2995, 0
        %v2997 = vsel %vm2996, %v2995, 0
        %v2998 = vshrl.u32 %v2997, 5
        %v2999 = vand.u32 %v2997, 31
        %v3000 = vsub.s32 32, %v2999
        %v3001 = vshrl.u32 683565275, %v3000
        %v3002 = vshll.u32 683565275, %v2999
        %v3003 = vshrl.u32 2475754826, %v3000
        %v3004 = vor.u32 %v3002, %v3003
        %v3005 = vshll.u32 2475754826, %v2999
        %v3006 = vshrl.u32 2131351028, %v3000
        %v3007 = vor.u32 %v3005, %v3006
        %v3008 = vshll.u32 2131351028, %v2999
        %v3009 = vshrl.u32 2102212464, %v3000
        %v3010 = vor.u32 %v3008, %v3009
        %v3011 = vshll.u32 2102212464, %v2999
        %v3012 = vshrl.u32 920167782, %v3000
        %v3013 = vor.u32 %v3011, %v3012
        %v3014 = vshll.u32 920167782, %v2999
        %v3015 = vshrl.u32 1326507024, %v3000
        %v3016 = vor.u32 %v3014, %v3015
        %vm3017 = vcmp.lt.s32.totalorder %v2998, 1
        %vm3018 = vcmp.lt.s32.totalorder %v2998, 2
        %vm3019 = vcmp.lt.s32.totalorder %v2998, 3
        %vm3020 = vcmp.lt.s32.totalorder %v2998, 4
        %v3021 = vsel %vm3017, %v3001, %v3004
        %v3022 = vsel %vm3020, %v3010, 2102212464
        %v3023 = vsel %vm3019, %v3007, %v3022
        %v3024 = vsel %vm3018, %v3021, %v3023
        %v3025 = vsel %vm3017, %v3004, %v3007
        %v3026 = vsel %vm3020, %v3013, 920167782
        %v3027 = vsel %vm3019, %v3010, %v3026
        %v3028 = vsel %vm3018, %v3025, %v3027
        %v3029 = vsel %vm3017, %v3007, %v3010
        %v3030 = vsel %vm3020, %v3016, 1326507024
        %v3031 = vsel %vm3019, %v3013, %v3030
        %v3032 = vsel %vm3018, %v3029, %v3031
        %v3033 = vshll.u32 %v2993, 8
        %v3034 = vmul.u32.u64.compose %v3033, %v3032
        %v3035 = vextract.low.u32 %v3034
        %v3036 = vextract.high.u32 %v3034
        %v3037 = vmul.u32.u64.compose %v3033, %v3028
        %v3038 = vextract.low.u32 %v3037
        %v3039 = vextract.high.u32 %v3037
        %v3040 = vmul.u32 %v3033, %v3024
        %v3041 = vadd.s32 %v3036, %v3038
        %vm3042 = vc.u32 %v3036, %v3038
        %v3043 = vadd.s32 %v3039, 1
        %v3044 = vsel %vm3042, %v3043, %v3039
        %v3045 = vadd.s32 %v3040, %v3044
        %v3046 = vadd.s32 %v3045, 536870912
        %v3047 = vshrl.u32 %v3046, 30
        %v3048 = vshll.u32 %v3047, 30
        %v3049 = vsub.s32 %v3045, %v3048
        %vm3050 = vcmp.lt.s32.totalorder %v3049, 0
        %v3051 = vsub.s32 0, %v3049
        %v3052 = vsel %vm3050, %v3051, %v3049
        %v3053 = vclz %v3052
        %v3054 = vsub.s32 %v3053, 2
        %vm3055 = vcmp.gt.s32.totalorder 0, %v3054
        %v3056 = vsel %vm3055, 0, %v3054
        %v3057 = vsub.s32 32, %v3056
        %v3058 = vshll.u32 %v3049, %v3056
        %v3059 = vshrl.u32 %v3041, %v3057
        %v3060 = vor.u32 %v3058, %v3059
        %v3061 = vsub.s32 4294967266, %v3056
        %v3062 = vadd.s32 %v3061, 127
        %v3063 = vshll.u32 %v3062, 23
        %v3064 = vor.u32 4788187, %v3063
        %v3065 = vand.u32 2147483647, %v3064
        %v3067 = vcvt.s32.f32 %v3060
        %v3068 = vmul.f32 %v3067, %v3065
        %v3069 = vxor.u32 %v3068, 2147483648
        %v3070 = vsel %vm2987, %v3069, %v3068
        %v3071 = vsub.s32 4, %v3047
        %v3072 = vsel %vm2987, %v3071, %v3047
        %v3073 = vsel %vm2986, %v172, %v3070
        %v3074 = vsel %vm2986, 0, %v3072
        %v3075 = vcosq.f32.pop %v3073
        %v3076 = vsinq.f32.pop %v3073
        %vm3077 = vweird.f32 %v172
        %v3078 = vadd.s32 %v3074, 3
        %v3079 = vand.u32 %v3078, 3
        %vm3080 = vcmp.lt.s32.totalorder %v3079, 2
        %vm3081 = vcmp.eq.s32.totalorder %v3079, 0
        %v3082 = vxor.u32 %v3076, 2147483648
        %v3083 = vsel %vm3081, %v3075, %v3082
        %vm3084 = vcmp.eq.s32.totalorder %v3079, 2
        %v3085 = vxor.u32 %v3075, 2147483648
        %v3086 = vsel %vm3084, %v3085, %v3076
        %v3087 = vsel %vm3080, %v3083, %v3086
        %v3088 = vsel %vm3077, nan, %v3087
        %v3089 = vand.u32 2147483647, %v173
        %vm3090 = vcmp.le.f32.partialorder %v3089, 0.7853982
        %vm3091 = vcmp.lt.s32.totalorder %v173, 0
        %v3092 = vand.u32 %v173, 2139095040
        %v3093 = vshrl.u32 %v3092, 23
        %v3094 = vsub.s32 %v3093, 127
        %v3095 = vand.u32 2147483647, %v173
        %v3096 = vand.u32 %v3095, 8388607
        %v3097 = vor.u32 %v3096, 8388608
        %v3098 = vsub.s32 0, %v3097
        %v3099 = vadd.s32 %v3094, 1
        %vm3100 = vcmp.gt.s32.totalorder %v3099, 0
        %v3101 = vsel %vm3100, %v3099, 0
        %v3102 = vshrl.u32 %v3101, 5
        %v3103 = vand.u32 %v3101, 31
        %v3104 = vsub.s32 32, %v3103
        %v3105 = vshrl.u32 683565275, %v3104
        %v3106 = vshll.u32 683565275, %v3103
        %v3107 = vshrl.u32 2475754826, %v3104
        %v3108 = vor.u32 %v3106, %v3107
        %v3109 = vshll.u32 2475754826, %v3103
        %v3110 = vshrl.u32 2131351028, %v3104
        %v3111 = vor.u32 %v3109, %v3110
        %v3112 = vshll.u32 2131351028, %v3103
        %v3113 = vshrl.u32 2102212464, %v3104
        %v3114 = vor.u32 %v3112, %v3113
        %v3115 = vshll.u32 2102212464, %v3103
        %v3116 = vshrl.u32 920167782, %v3104
        %v3117 = vor.u32 %v3115, %v3116
        %v3118 = vshll.u32 920167782, %v3103
        %v3119 = vshrl.u32 1326507024, %v3104
        %v3120 = vor.u32 %v3118, %v3119
        %vm3121 = vcmp.lt.s32.totalorder %v3102, 1
        %vm3122 = vcmp.lt.s32.totalorder %v3102, 2
        %vm3123 = vcmp.lt.s32.totalorder %v3102, 3
        %vm3124 = vcmp.lt.s32.totalorder %v3102, 4
        %v3125 = vsel %vm3121, %v3105, %v3108
        %v3126 = vsel %vm3124, %v3114, 2102212464
        %v3127 = vsel %vm3123, %v3111, %v3126
        %v3128 = vsel %vm3122, %v3125, %v3127
        %v3129 = vsel %vm3121, %v3108, %v3111
        %v3130 = vsel %vm3124, %v3117, 920167782
        %v3131 = vsel %vm3123, %v3114, %v3130
        %v3132 = vsel %vm3122, %v3129, %v3131
        %v3133 = vsel %vm3121, %v3111, %v3114
        %v3134 = vsel %vm3124, %v3120, 1326507024
        %v3135 = vsel %vm3123, %v3117, %v3134
        %v3136 = vsel %vm3122, %v3133, %v3135
        %v3137 = vshll.u32 %v3097, 8
        %v3138 = vmul.u32.u64.compose %v3137, %v3136
        %v3139 = vextract.low.u32 %v3138
        %v3140 = vextract.high.u32 %v3138
        %v3141 = vmul.u32.u64.compose %v3137, %v3132
        %v3142 = vextract.low.u32 %v3141
        %v3143 = vextract.high.u32 %v3141
        %v3144 = vmul.u32 %v3137, %v3128
        %v3145 = vadd.s32 %v3140, %v3142
        %vm3146 = vc.u32 %v3140, %v3142
        %v3147 = vadd.s32 %v3143, 1
        %v3148 = vsel %vm3146, %v3147, %v3143
        %v3149 = vadd.s32 %v3144, %v3148
        %v3150 = vadd.s32 %v3149, 536870912
        %v3151 = vshrl.u32 %v3150, 30
        %v3152 = vshll.u32 %v3151, 30
        %v3153 = vsub.s32 %v3149, %v3152
        %vm3154 = vcmp.lt.s32.totalorder %v3153, 0
        %v3155 = vsub.s32 0, %v3153
        %v3156 = vsel %vm3154, %v3155, %v3153
        %v3157 = vclz %v3156
        %v3158 = vsub.s32 %v3157, 2
        %vm3159 = vcmp.gt.s32.totalorder 0, %v3158
        %v3160 = vsel %vm3159, 0, %v3158
        %v3161 = vsub.s32 32, %v3160
        %v3162 = vshll.u32 %v3153, %v3160
        %v3163 = vshrl.u32 %v3145, %v3161
        %v3164 = vor.u32 %v3162, %v3163
        %v3165 = vsub.s32 4294967266, %v3160
        %v3166 = vadd.s32 %v3165, 127
        %v3167 = vshll.u32 %v3166, 23
        %v3168 = vor.u32 4788187, %v3167
        %v3169 = vand.u32 2147483647, %v3168
        %v3171 = vcvt.s32.f32 %v3164
        %v3172 = vmul.f32 %v3171, %v3169
        %v3173 = vxor.u32 %v3172, 2147483648
        %v3174 = vsel %vm3091, %v3173, %v3172
        %v3175 = vsub.s32 4, %v3151
        %v3176 = vsel %vm3091, %v3175, %v3151
        %v3177 = vsel %vm3090, %v173, %v3174
        %v3178 = vsel %vm3090, 0, %v3176
        %v3179 = vcosq.f32.pop %v3177
        %v3180 = vsinq.f32.pop %v3177
        %vm3181 = vweird.f32 %v173
        %v3182 = vadd.s32 %v3178, 3
        %v3183 = vand.u32 %v3182, 3
        %vm3184 = vcmp.lt.s32.totalorder %v3183, 2
        %vm3185 = vcmp.eq.s32.totalorder %v3183, 0
        %v3186 = vxor.u32 %v3180, 2147483648
        %v3187 = vsel %vm3185, %v3179, %v3186
        %vm3188 = vcmp.eq.s32.totalorder %v3183, 2
        %v3189 = vxor.u32 %v3179, 2147483648
        %v3190 = vsel %vm3188, %v3189, %v3180
        %v3191 = vsel %vm3184, %v3187, %v3190
        %v3192 = vsel %vm3181, nan, %v3191
        %v3193 = vand.u32 2147483647, %v174
        %vm3194 = vcmp.le.f32.partialorder %v3193, 0.7853982
        %vm3195 = vcmp.lt.s32.totalorder %v174, 0
        %v3196 = vand.u32 %v174, 2139095040
        %v3197 = vshrl.u32 %v3196, 23
        %v3198 = vsub.s32 %v3197, 127
        %v3199 = vand.u32 2147483647, %v174
        %v3200 = vand.u32 %v3199, 8388607
        %v3201 = vor.u32 %v3200, 8388608
        %v3202 = vsub.s32 0, %v3201
        %v3203 = vadd.s32 %v3198, 1
        %vm3204 = vcmp.gt.s32.totalorder %v3203, 0
        %v3205 = vsel %vm3204, %v3203, 0
        %v3206 = vshrl.u32 %v3205, 5
        %v3207 = vand.u32 %v3205, 31
        %v3208 = vsub.s32 32, %v3207
        %v3209 = vshrl.u32 683565275, %v3208
        %v3210 = vshll.u32 683565275, %v3207
        %v3211 = vshrl.u32 2475754826, %v3208
        %v3212 = vor.u32 %v3210, %v3211
        %v3213 = vshll.u32 2475754826, %v3207
        %v3214 = vshrl.u32 2131351028, %v3208
        %v3215 = vor.u32 %v3213, %v3214
        %v3216 = vshll.u32 2131351028, %v3207
        %v3217 = vshrl.u32 2102212464, %v3208
        %v3218 = vor.u32 %v3216, %v3217
        %v3219 = vshll.u32 2102212464, %v3207
        %v3220 = vshrl.u32 920167782, %v3208
        %v3221 = vor.u32 %v3219, %v3220
        %v3222 = vshll.u32 920167782, %v3207
        %v3223 = vshrl.u32 1326507024, %v3208
        %v3224 = vor.u32 %v3222, %v3223
        %vm3225 = vcmp.lt.s32.totalorder %v3206, 1
        %vm3226 = vcmp.lt.s32.totalorder %v3206, 2
        %vm3227 = vcmp.lt.s32.totalorder %v3206, 3
        %vm3228 = vcmp.lt.s32.totalorder %v3206, 4
        %v3229 = vsel %vm3225, %v3209, %v3212
        %v3230 = vsel %vm3228, %v3218, 2102212464
        %v3231 = vsel %vm3227, %v3215, %v3230
        %v3232 = vsel %vm3226, %v3229, %v3231
        %v3233 = vsel %vm3225, %v3212, %v3215
        %v3234 = vsel %vm3228, %v3221, 920167782
        %v3235 = vsel %vm3227, %v3218, %v3234
        %v3236 = vsel %vm3226, %v3233, %v3235
        %v3237 = vsel %vm3225, %v3215, %v3218
        %v3238 = vsel %vm3228, %v3224, 1326507024
        %v3239 = vsel %vm3227, %v3221, %v3238
        %v3240 = vsel %vm3226, %v3237, %v3239
        %v3241 = vshll.u32 %v3201, 8
        %v3242 = vmul.u32.u64.compose %v3241, %v3240
        %v3243 = vextract.low.u32 %v3242
        %v3244 = vextract.high.u32 %v3242
        %v3245 = vmul.u32.u64.compose %v3241, %v3236
        %v3246 = vextract.low.u32 %v3245
        %v3247 = vextract.high.u32 %v3245
        %v3248 = vmul.u32 %v3241, %v3232
        %v3249 = vadd.s32 %v3244, %v3246
        %vm3250 = vc.u32 %v3244, %v3246
        %v3251 = vadd.s32 %v3247, 1
        %v3252 = vsel %vm3250, %v3251, %v3247
        %v3253 = vadd.s32 %v3248, %v3252
        %v3254 = vadd.s32 %v3253, 536870912
        %v3255 = vshrl.u32 %v3254, 30
        %v3256 = vshll.u32 %v3255, 30
        %v3257 = vsub.s32 %v3253, %v3256
        %vm3258 = vcmp.lt.s32.totalorder %v3257, 0
        %v3259 = vsub.s32 0, %v3257
        %v3260 = vsel %vm3258, %v3259, %v3257
        %v3261 = vclz %v3260
        %v3262 = vsub.s32 %v3261, 2
        %vm3263 = vcmp.gt.s32.totalorder 0, %v3262
        %v3264 = vsel %vm3263, 0, %v3262
        %v3265 = vsub.s32 32, %v3264
        %v3266 = vshll.u32 %v3257, %v3264
        %v3267 = vshrl.u32 %v3249, %v3265
        %v3268 = vor.u32 %v3266, %v3267
        %v3269 = vsub.s32 4294967266, %v3264
        %v3270 = vadd.s32 %v3269, 127
        %v3271 = vshll.u32 %v3270, 23
        %v3272 = vor.u32 4788187, %v3271
        %v3273 = vand.u32 2147483647, %v3272
        %v3275 = vcvt.s32.f32 %v3268
        %v3276 = vmul.f32 %v3275, %v3273
        %v3277 = vxor.u32 %v3276, 2147483648
        %v3278 = vsel %vm3195, %v3277, %v3276
        %v3279 = vsub.s32 4, %v3255
        %v3280 = vsel %vm3195, %v3279, %v3255
        %v3281 = vsel %vm3194, %v174, %v3278
        %v3282 = vsel %vm3194, 0, %v3280
        %v3283 = vcosq.f32.pop %v3281
        %v3284 = vsinq.f32.pop %v3281
        %vm3285 = vweird.f32 %v174
        %v3286 = vadd.s32 %v3282, 3
        %v3287 = vand.u32 %v3286, 3
        %vm3288 = vcmp.lt.s32.totalorder %v3287, 2
        %vm3289 = vcmp.eq.s32.totalorder %v3287, 0
        %v3290 = vxor.u32 %v3284, 2147483648
        %v3291 = vsel %vm3289, %v3283, %v3290
        %vm3292 = vcmp.eq.s32.totalorder %v3287, 2
        %v3293 = vxor.u32 %v3283, 2147483648
        %v3294 = vsel %vm3292, %v3293, %v3284
        %v3295 = vsel %vm3288, %v3291, %v3294
        %v3296 = vsel %vm3285, nan, %v3295
        %v3297 = vand.u32 2147483647, %v175
        %vm3298 = vcmp.le.f32.partialorder %v3297, 0.7853982
        %vm3299 = vcmp.lt.s32.totalorder %v175, 0
        %v3300 = vand.u32 %v175, 2139095040
        %v3301 = vshrl.u32 %v3300, 23
        %v3302 = vsub.s32 %v3301, 127
        %v3303 = vand.u32 2147483647, %v175
        %v3304 = vand.u32 %v3303, 8388607
        %v3305 = vor.u32 %v3304, 8388608
        %v3306 = vsub.s32 0, %v3305
        %v3307 = vadd.s32 %v3302, 1
        %vm3308 = vcmp.gt.s32.totalorder %v3307, 0
        %v3309 = vsel %vm3308, %v3307, 0
        %v3310 = vshrl.u32 %v3309, 5
        %v3311 = vand.u32 %v3309, 31
        %v3312 = vsub.s32 32, %v3311
        %v3313 = vshrl.u32 683565275, %v3312
        %v3314 = vshll.u32 683565275, %v3311
        %v3315 = vshrl.u32 2475754826, %v3312
        %v3316 = vor.u32 %v3314, %v3315
        %v3317 = vshll.u32 2475754826, %v3311
        %v3318 = vshrl.u32 2131351028, %v3312
        %v3319 = vor.u32 %v3317, %v3318
        %v3320 = vshll.u32 2131351028, %v3311
        %v3321 = vshrl.u32 2102212464, %v3312
        %v3322 = vor.u32 %v3320, %v3321
        %v3323 = vshll.u32 2102212464, %v3311
        %v3324 = vshrl.u32 920167782, %v3312
        %v3325 = vor.u32 %v3323, %v3324
        %v3326 = vshll.u32 920167782, %v3311
        %v3327 = vshrl.u32 1326507024, %v3312
        %v3328 = vor.u32 %v3326, %v3327
        %vm3329 = vcmp.lt.s32.totalorder %v3310, 1
        %vm3330 = vcmp.lt.s32.totalorder %v3310, 2
        %vm3331 = vcmp.lt.s32.totalorder %v3310, 3
        %vm3332 = vcmp.lt.s32.totalorder %v3310, 4
        %v3333 = vsel %vm3329, %v3313, %v3316
        %v3334 = vsel %vm3332, %v3322, 2102212464
        %v3335 = vsel %vm3331, %v3319, %v3334
        %v3336 = vsel %vm3330, %v3333, %v3335
        %v3337 = vsel %vm3329, %v3316, %v3319
        %v3338 = vsel %vm3332, %v3325, 920167782
        %v3339 = vsel %vm3331, %v3322, %v3338
        %v3340 = vsel %vm3330, %v3337, %v3339
        %v3341 = vsel %vm3329, %v3319, %v3322
        %v3342 = vsel %vm3332, %v3328, 1326507024
        %v3343 = vsel %vm3331, %v3325, %v3342
        %v3344 = vsel %vm3330, %v3341, %v3343
        %v3345 = vshll.u32 %v3305, 8
        %v3346 = vmul.u32.u64.compose %v3345, %v3344
        %v3347 = vextract.low.u32 %v3346
        %v3348 = vextract.high.u32 %v3346
        %v3349 = vmul.u32.u64.compose %v3345, %v3340
        %v3350 = vextract.low.u32 %v3349
        %v3351 = vextract.high.u32 %v3349
        %v3352 = vmul.u32 %v3345, %v3336
        %v3353 = vadd.s32 %v3348, %v3350
        %vm3354 = vc.u32 %v3348, %v3350
        %v3355 = vadd.s32 %v3351, 1
        %v3356 = vsel %vm3354, %v3355, %v3351
        %v3357 = vadd.s32 %v3352, %v3356
        %v3358 = vadd.s32 %v3357, 536870912
        %v3359 = vshrl.u32 %v3358, 30
        %v3360 = vshll.u32 %v3359, 30
        %v3361 = vsub.s32 %v3357, %v3360
        %vm3362 = vcmp.lt.s32.totalorder %v3361, 0
        %v3363 = vsub.s32 0, %v3361
        %v3364 = vsel %vm3362, %v3363, %v3361
        %v3365 = vclz %v3364
        %v3366 = vsub.s32 %v3365, 2
        %vm3367 = vcmp.gt.s32.totalorder 0, %v3366
        %v3368 = vsel %vm3367, 0, %v3366
        %v3369 = vsub.s32 32, %v3368
        %v3370 = vshll.u32 %v3361, %v3368
        %v3371 = vshrl.u32 %v3353, %v3369
        %v3372 = vor.u32 %v3370, %v3371
        %v3373 = vsub.s32 4294967266, %v3368
        %v3374 = vadd.s32 %v3373, 127
        %v3375 = vshll.u32 %v3374, 23
        %v3376 = vor.u32 4788187, %v3375
        %v3377 = vand.u32 2147483647, %v3376
        %v3379 = vcvt.s32.f32 %v3372
        %v3380 = vmul.f32 %v3379, %v3377
        %v3381 = vxor.u32 %v3380, 2147483648
        %v3382 = vsel %vm3299, %v3381, %v3380
        %v3383 = vsub.s32 4, %v3359
        %v3384 = vsel %vm3299, %v3383, %v3359
        %v3385 = vsel %vm3298, %v175, %v3382
        %v3386 = vsel %vm3298, 0, %v3384
        %v3387 = vcosq.f32.pop %v3385
        %v3388 = vsinq.f32.pop %v3385
        %vm3389 = vweird.f32 %v175
        %v3390 = vadd.s32 %v3386, 3
        %v3391 = vand.u32 %v3390, 3
        %vm3392 = vcmp.lt.s32.totalorder %v3391, 2
        %vm3393 = vcmp.eq.s32.totalorder %v3391, 0
        %v3394 = vxor.u32 %v3388, 2147483648
        %v3395 = vsel %vm3393, %v3387, %v3394
        %vm3396 = vcmp.eq.s32.totalorder %v3391, 2
        %v3397 = vxor.u32 %v3387, 2147483648
        %v3398 = vsel %vm3396, %v3397, %v3388
        %v3399 = vsel %vm3392, %v3395, %v3398
        %v3400 = vsel %vm3389, nan, %v3399
        %v3401 = vand.u32 2147483647, %v176
        %vm3402 = vcmp.le.f32.partialorder %v3401, 0.7853982
        %vm3403 = vcmp.lt.s32.totalorder %v176, 0
        %v3404 = vand.u32 %v176, 2139095040
        %v3405 = vshrl.u32 %v3404, 23
        %v3406 = vsub.s32 %v3405, 127
        %v3407 = vand.u32 2147483647, %v176
        %v3408 = vand.u32 %v3407, 8388607
        %v3409 = vor.u32 %v3408, 8388608
        %v3410 = vsub.s32 0, %v3409
        %v3411 = vadd.s32 %v3406, 1
        %vm3412 = vcmp.gt.s32.totalorder %v3411, 0
        %v3413 = vsel %vm3412, %v3411, 0
        %v3414 = vshrl.u32 %v3413, 5
        %v3415 = vand.u32 %v3413, 31
        %v3416 = vsub.s32 32, %v3415
        %v3417 = vshrl.u32 683565275, %v3416
        %v3418 = vshll.u32 683565275, %v3415
        %v3419 = vshrl.u32 2475754826, %v3416
        %v3420 = vor.u32 %v3418, %v3419
        %v3421 = vshll.u32 2475754826, %v3415
        %v3422 = vshrl.u32 2131351028, %v3416
        %v3423 = vor.u32 %v3421, %v3422
        %v3424 = vshll.u32 2131351028, %v3415
        %v3425 = vshrl.u32 2102212464, %v3416
        %v3426 = vor.u32 %v3424, %v3425
        %v3427 = vshll.u32 2102212464, %v3415
        %v3428 = vshrl.u32 920167782, %v3416
        %v3429 = vor.u32 %v3427, %v3428
        %v3430 = vshll.u32 920167782, %v3415
        %v3431 = vshrl.u32 1326507024, %v3416
        %v3432 = vor.u32 %v3430, %v3431
        %vm3433 = vcmp.lt.s32.totalorder %v3414, 1
        %vm3434 = vcmp.lt.s32.totalorder %v3414, 2
        %vm3435 = vcmp.lt.s32.totalorder %v3414, 3
        %vm3436 = vcmp.lt.s32.totalorder %v3414, 4
        %v3437 = vsel %vm3433, %v3417, %v3420
        %v3438 = vsel %vm3436, %v3426, 2102212464
        %v3439 = vsel %vm3435, %v3423, %v3438
        %v3440 = vsel %vm3434, %v3437, %v3439
        %v3441 = vsel %vm3433, %v3420, %v3423
        %v3442 = vsel %vm3436, %v3429, 920167782
        %v3443 = vsel %vm3435, %v3426, %v3442
        %v3444 = vsel %vm3434, %v3441, %v3443
        %v3445 = vsel %vm3433, %v3423, %v3426
        %v3446 = vsel %vm3436, %v3432, 1326507024
        %v3447 = vsel %vm3435, %v3429, %v3446
        %v3448 = vsel %vm3434, %v3445, %v3447
        %v3449 = vshll.u32 %v3409, 8
        %v3450 = vmul.u32.u64.compose %v3449, %v3448
        %v3451 = vextract.low.u32 %v3450
        %v3452 = vextract.high.u32 %v3450
        %v3453 = vmul.u32.u64.compose %v3449, %v3444
        %v3454 = vextract.low.u32 %v3453
        %v3455 = vextract.high.u32 %v3453
        %v3456 = vmul.u32 %v3449, %v3440
        %v3457 = vadd.s32 %v3452, %v3454
        %vm3458 = vc.u32 %v3452, %v3454
        %v3459 = vadd.s32 %v3455, 1
        %v3460 = vsel %vm3458, %v3459, %v3455
        %v3461 = vadd.s32 %v3456, %v3460
        %v3462 = vadd.s32 %v3461, 536870912
        %v3463 = vshrl.u32 %v3462, 30
        %v3464 = vshll.u32 %v3463, 30
        %v3465 = vsub.s32 %v3461, %v3464
        %vm3466 = vcmp.lt.s32.totalorder %v3465, 0
        %v3467 = vsub.s32 0, %v3465
        %v3468 = vsel %vm3466, %v3467, %v3465
        %v3469 = vclz %v3468
        %v3470 = vsub.s32 %v3469, 2
        %vm3471 = vcmp.gt.s32.totalorder 0, %v3470
        %v3472 = vsel %vm3471, 0, %v3470
        %v3473 = vsub.s32 32, %v3472
        %v3474 = vshll.u32 %v3465, %v3472
        %v3475 = vshrl.u32 %v3457, %v3473
        %v3476 = vor.u32 %v3474, %v3475
        %v3477 = vsub.s32 4294967266, %v3472
        %v3478 = vadd.s32 %v3477, 127
        %v3479 = vshll.u32 %v3478, 23
        %v3480 = vor.u32 4788187, %v3479
        %v3481 = vand.u32 2147483647, %v3480
        %v3483 = vcvt.s32.f32 %v3476
        %v3484 = vmul.f32 %v3483, %v3481
        %v3485 = vxor.u32 %v3484, 2147483648
        %v3486 = vsel %vm3403, %v3485, %v3484
        %v3487 = vsub.s32 4, %v3463
        %v3488 = vsel %vm3403, %v3487, %v3463
        %v3489 = vsel %vm3402, %v176, %v3486
        %v3490 = vsel %vm3402, 0, %v3488
        %v3491 = vcosq.f32.pop %v3489
        %v3492 = vsinq.f32.pop %v3489
        %vm3493 = vweird.f32 %v176
        %v3494 = vadd.s32 %v3490, 3
        %v3495 = vand.u32 %v3494, 3
        %vm3496 = vcmp.lt.s32.totalorder %v3495, 2
        %vm3497 = vcmp.eq.s32.totalorder %v3495, 0
        %v3498 = vxor.u32 %v3492, 2147483648
        %v3499 = vsel %vm3497, %v3491, %v3498
        %vm3500 = vcmp.eq.s32.totalorder %v3495, 2
        %v3501 = vxor.u32 %v3491, 2147483648
        %v3502 = vsel %vm3500, %v3501, %v3492
        %v3503 = vsel %vm3496, %v3499, %v3502
        %v3504 = vsel %vm3493, nan, %v3503
        %v3505 = vand.u32 2147483647, %v145
        %vm3506 = vcmp.le.f32.partialorder %v3505, 0.7853982
        %vm3507 = vcmp.lt.s32.totalorder %v145, 0
        %v3508 = vand.u32 %v145, 2139095040
        %v3509 = vshrl.u32 %v3508, 23
        %v3510 = vsub.s32 %v3509, 127
        %v3511 = vand.u32 2147483647, %v145
        %v3512 = vand.u32 %v3511, 8388607
        %v3513 = vor.u32 %v3512, 8388608
        %v3514 = vsub.s32 0, %v3513
        %v3515 = vadd.s32 %v3510, 1
        %vm3516 = vcmp.gt.s32.totalorder %v3515, 0
        %v3517 = vsel %vm3516, %v3515, 0
        %v3518 = vshrl.u32 %v3517, 5
        %v3519 = vand.u32 %v3517, 31
        %v3520 = vsub.s32 32, %v3519
        %v3521 = vshrl.u32 683565275, %v3520
        %v3522 = vshll.u32 683565275, %v3519
        %v3523 = vshrl.u32 2475754826, %v3520
        %v3524 = vor.u32 %v3522, %v3523
        %v3525 = vshll.u32 2475754826, %v3519
        %v3526 = vshrl.u32 2131351028, %v3520
        %v3527 = vor.u32 %v3525, %v3526
        %v3528 = vshll.u32 2131351028, %v3519
        %v3529 = vshrl.u32 2102212464, %v3520
        %v3530 = vor.u32 %v3528, %v3529
        %v3531 = vshll.u32 2102212464, %v3519
        %v3532 = vshrl.u32 920167782, %v3520
        %v3533 = vor.u32 %v3531, %v3532
        %v3534 = vshll.u32 920167782, %v3519
        %v3535 = vshrl.u32 1326507024, %v3520
        %v3536 = vor.u32 %v3534, %v3535
        %vm3537 = vcmp.lt.s32.totalorder %v3518, 1
        %vm3538 = vcmp.lt.s32.totalorder %v3518, 2
        %vm3539 = vcmp.lt.s32.totalorder %v3518, 3
        %vm3540 = vcmp.lt.s32.totalorder %v3518, 4
        %v3541 = vsel %vm3537, %v3521, %v3524
        %v3542 = vsel %vm3540, %v3530, 2102212464
        %v3543 = vsel %vm3539, %v3527, %v3542
        %v3544 = vsel %vm3538, %v3541, %v3543
        %v3545 = vsel %vm3537, %v3524, %v3527
        %v3546 = vsel %vm3540, %v3533, 920167782
        %v3547 = vsel %vm3539, %v3530, %v3546
        %v3548 = vsel %vm3538, %v3545, %v3547
        %v3549 = vsel %vm3537, %v3527, %v3530
        %v3550 = vsel %vm3540, %v3536, 1326507024
        %v3551 = vsel %vm3539, %v3533, %v3550
        %v3552 = vsel %vm3538, %v3549, %v3551
        %v3553 = vshll.u32 %v3513, 8
        %v3554 = vmul.u32.u64.compose %v3553, %v3552
        %v3555 = vextract.low.u32 %v3554
        %v3556 = vextract.high.u32 %v3554
        %v3557 = vmul.u32.u64.compose %v3553, %v3548
        %v3558 = vextract.low.u32 %v3557
        %v3559 = vextract.high.u32 %v3557
        %v3560 = vmul.u32 %v3553, %v3544
        %v3561 = vadd.s32 %v3556, %v3558
        %vm3562 = vc.u32 %v3556, %v3558
        %v3563 = vadd.s32 %v3559, 1
        %v3564 = vsel %vm3562, %v3563, %v3559
        %v3565 = vadd.s32 %v3560, %v3564
        %v3566 = vadd.s32 %v3565, 536870912
        %v3567 = vshrl.u32 %v3566, 30
        %v3568 = vshll.u32 %v3567, 30
        %v3569 = vsub.s32 %v3565, %v3568
        %vm3570 = vcmp.lt.s32.totalorder %v3569, 0
        %v3571 = vsub.s32 0, %v3569
        %v3572 = vsel %vm3570, %v3571, %v3569
        %v3573 = vclz %v3572
        %v3574 = vsub.s32 %v3573, 2
        %vm3575 = vcmp.gt.s32.totalorder 0, %v3574
        %v3576 = vsel %vm3575, 0, %v3574
        %v3577 = vsub.s32 32, %v3576
        %v3578 = vshll.u32 %v3569, %v3576
        %v3579 = vshrl.u32 %v3561, %v3577
        %v3580 = vor.u32 %v3578, %v3579
        %v3581 = vsub.s32 4294967266, %v3576
        %v3582 = vadd.s32 %v3581, 127
        %v3583 = vshll.u32 %v3582, 23
        %v3584 = vor.u32 4788187, %v3583
        %v3585 = vand.u32 2147483647, %v3584
        %v3587 = vcvt.s32.f32 %v3580
        %v3588 = vmul.f32 %v3587, %v3585
        %v3589 = vxor.u32 %v3588, 2147483648
        %v3590 = vsel %vm3507, %v3589, %v3588
        %v3591 = vsub.s32 4, %v3567
        %v3592 = vsel %vm3507, %v3591, %v3567
        %v3593 = vsel %vm3506, %v145, %v3590
        %v3594 = vsel %vm3506, 0, %v3592
        %v3595 = vcosq.f32.pop %v3593
        %v3596 = vsinq.f32.pop %v3593
        %vm3597 = vweird.f32 %v145
        %v3598 = vand.u32 %v3594, 3
        %vm3599 = vcmp.lt.s32.totalorder %v3598, 2
        %vm3600 = vcmp.eq.s32.totalorder %v3598, 0
        %v3601 = vxor.u32 %v3596, 2147483648
        %v3602 = vsel %vm3600, %v3595, %v3601
        %vm3603 = vcmp.eq.s32.totalorder %v3598, 2
        %v3604 = vxor.u32 %v3595, 2147483648
        %v3605 = vsel %vm3603, %v3604, %v3596
        %v3606 = vsel %vm3599, %v3602, %v3605
        %v3607 = vsel %vm3597, nan, %v3606
        %v3608 = vand.u32 2147483647, %v146
        %vm3609 = vcmp.le.f32.partialorder %v3608, 0.7853982
        %vm3610 = vcmp.lt.s32.totalorder %v146, 0
        %v3611 = vand.u32 %v146, 2139095040
        %v3612 = vshrl.u32 %v3611, 23
        %v3613 = vsub.s32 %v3612, 127
        %v3614 = vand.u32 2147483647, %v146
        %v3615 = vand.u32 %v3614, 8388607
        %v3616 = vor.u32 %v3615, 8388608
        %v3617 = vsub.s32 0, %v3616
        %v3618 = vadd.s32 %v3613, 1
        %vm3619 = vcmp.gt.s32.totalorder %v3618, 0
        %v3620 = vsel %vm3619, %v3618, 0
        %v3621 = vshrl.u32 %v3620, 5
        %v3622 = vand.u32 %v3620, 31
        %v3623 = vsub.s32 32, %v3622
        %v3624 = vshrl.u32 683565275, %v3623
        %v3625 = vshll.u32 683565275, %v3622
        %v3626 = vshrl.u32 2475754826, %v3623
        %v3627 = vor.u32 %v3625, %v3626
        %v3628 = vshll.u32 2475754826, %v3622
        %v3629 = vshrl.u32 2131351028, %v3623
        %v3630 = vor.u32 %v3628, %v3629
        %v3631 = vshll.u32 2131351028, %v3622
        %v3632 = vshrl.u32 2102212464, %v3623
        %v3633 = vor.u32 %v3631, %v3632
        %v3634 = vshll.u32 2102212464, %v3622
        %v3635 = vshrl.u32 920167782, %v3623
        %v3636 = vor.u32 %v3634, %v3635
        %v3637 = vshll.u32 920167782, %v3622
        %v3638 = vshrl.u32 1326507024, %v3623
        %v3639 = vor.u32 %v3637, %v3638
        %vm3640 = vcmp.lt.s32.totalorder %v3621, 1
        %vm3641 = vcmp.lt.s32.totalorder %v3621, 2
        %vm3642 = vcmp.lt.s32.totalorder %v3621, 3
        %vm3643 = vcmp.lt.s32.totalorder %v3621, 4
        %v3644 = vsel %vm3640, %v3624, %v3627
        %v3645 = vsel %vm3643, %v3633, 2102212464
        %v3646 = vsel %vm3642, %v3630, %v3645
        %v3647 = vsel %vm3641, %v3644, %v3646
        %v3648 = vsel %vm3640, %v3627, %v3630
        %v3649 = vsel %vm3643, %v3636, 920167782
        %v3650 = vsel %vm3642, %v3633, %v3649
        %v3651 = vsel %vm3641, %v3648, %v3650
        %v3652 = vsel %vm3640, %v3630, %v3633
        %v3653 = vsel %vm3643, %v3639, 1326507024
        %v3654 = vsel %vm3642, %v3636, %v3653
        %v3655 = vsel %vm3641, %v3652, %v3654
        %v3656 = vshll.u32 %v3616, 8
        %v3657 = vmul.u32.u64.compose %v3656, %v3655
        %v3658 = vextract.low.u32 %v3657
        %v3659 = vextract.high.u32 %v3657
        %v3660 = vmul.u32.u64.compose %v3656, %v3651
        %v3661 = vextract.low.u32 %v3660
        %v3662 = vextract.high.u32 %v3660
        %v3663 = vmul.u32 %v3656, %v3647
        %v3664 = vadd.s32 %v3659, %v3661
        %vm3665 = vc.u32 %v3659, %v3661
        %v3666 = vadd.s32 %v3662, 1
        %v3667 = vsel %vm3665, %v3666, %v3662
        %v3668 = vadd.s32 %v3663, %v3667
        %v3669 = vadd.s32 %v3668, 536870912
        %v3670 = vshrl.u32 %v3669, 30
        %v3671 = vshll.u32 %v3670, 30
        %v3672 = vsub.s32 %v3668, %v3671
        %vm3673 = vcmp.lt.s32.totalorder %v3672, 0
        %v3674 = vsub.s32 0, %v3672
        %v3675 = vsel %vm3673, %v3674, %v3672
        %v3676 = vclz %v3675
        %v3677 = vsub.s32 %v3676, 2
        %vm3678 = vcmp.gt.s32.totalorder 0, %v3677
        %v3679 = vsel %vm3678, 0, %v3677
        %v3680 = vsub.s32 32, %v3679
        %v3681 = vshll.u32 %v3672, %v3679
        %v3682 = vshrl.u32 %v3664, %v3680
        %v3683 = vor.u32 %v3681, %v3682
        %v3684 = vsub.s32 4294967266, %v3679
        %v3685 = vadd.s32 %v3684, 127
        %v3686 = vshll.u32 %v3685, 23
        %v3687 = vor.u32 4788187, %v3686
        %v3688 = vand.u32 2147483647, %v3687
        %v3690 = vcvt.s32.f32 %v3683
        %v3691 = vmul.f32 %v3690, %v3688
        %v3692 = vxor.u32 %v3691, 2147483648
        %v3693 = vsel %vm3610, %v3692, %v3691
        %v3694 = vsub.s32 4, %v3670
        %v3695 = vsel %vm3610, %v3694, %v3670
        %v3696 = vsel %vm3609, %v146, %v3693
        %v3697 = vsel %vm3609, 0, %v3695
        %v3698 = vcosq.f32.pop %v3696
        %v3699 = vsinq.f32.pop %v3696
        %vm3700 = vweird.f32 %v146
        %v3701 = vand.u32 %v3697, 3
        %vm3702 = vcmp.lt.s32.totalorder %v3701, 2
        %vm3703 = vcmp.eq.s32.totalorder %v3701, 0
        %v3704 = vxor.u32 %v3699, 2147483648
        %v3705 = vsel %vm3703, %v3698, %v3704
        %vm3706 = vcmp.eq.s32.totalorder %v3701, 2
        %v3707 = vxor.u32 %v3698, 2147483648
        %v3708 = vsel %vm3706, %v3707, %v3699
        %v3709 = vsel %vm3702, %v3705, %v3708
        %v3710 = vsel %vm3700, nan, %v3709
        %v3711 = vand.u32 2147483647, %v147
        %vm3712 = vcmp.le.f32.partialorder %v3711, 0.7853982
        %vm3713 = vcmp.lt.s32.totalorder %v147, 0
        %v3714 = vand.u32 %v147, 2139095040
        %v3715 = vshrl.u32 %v3714, 23
        %v3716 = vsub.s32 %v3715, 127
        %v3717 = vand.u32 2147483647, %v147
        %v3718 = vand.u32 %v3717, 8388607
        %v3719 = vor.u32 %v3718, 8388608
        %v3720 = vsub.s32 0, %v3719
        %v3721 = vadd.s32 %v3716, 1
        %vm3722 = vcmp.gt.s32.totalorder %v3721, 0
        %v3723 = vsel %vm3722, %v3721, 0
        %v3724 = vshrl.u32 %v3723, 5
        %v3725 = vand.u32 %v3723, 31
        %v3726 = vsub.s32 32, %v3725
        %v3727 = vshrl.u32 683565275, %v3726
        %v3728 = vshll.u32 683565275, %v3725
        %v3729 = vshrl.u32 2475754826, %v3726
        %v3730 = vor.u32 %v3728, %v3729
        %v3731 = vshll.u32 2475754826, %v3725
        %v3732 = vshrl.u32 2131351028, %v3726
        %v3733 = vor.u32 %v3731, %v3732
        %v3734 = vshll.u32 2131351028, %v3725
        %v3735 = vshrl.u32 2102212464, %v3726
        %v3736 = vor.u32 %v3734, %v3735
        %v3737 = vshll.u32 2102212464, %v3725
        %v3738 = vshrl.u32 920167782, %v3726
        %v3739 = vor.u32 %v3737, %v3738
        %v3740 = vshll.u32 920167782, %v3725
        %v3741 = vshrl.u32 1326507024, %v3726
        %v3742 = vor.u32 %v3740, %v3741
        %vm3743 = vcmp.lt.s32.totalorder %v3724, 1
        %vm3744 = vcmp.lt.s32.totalorder %v3724, 2
        %vm3745 = vcmp.lt.s32.totalorder %v3724, 3
        %vm3746 = vcmp.lt.s32.totalorder %v3724, 4
        %v3747 = vsel %vm3743, %v3727, %v3730
        %v3748 = vsel %vm3746, %v3736, 2102212464
        %v3749 = vsel %vm3745, %v3733, %v3748
        %v3750 = vsel %vm3744, %v3747, %v3749
        %v3751 = vsel %vm3743, %v3730, %v3733
        %v3752 = vsel %vm3746, %v3739, 920167782
        %v3753 = vsel %vm3745, %v3736, %v3752
        %v3754 = vsel %vm3744, %v3751, %v3753
        %v3755 = vsel %vm3743, %v3733, %v3736
        %v3756 = vsel %vm3746, %v3742, 1326507024
        %v3757 = vsel %vm3745, %v3739, %v3756
        %v3758 = vsel %vm3744, %v3755, %v3757
        %v3759 = vshll.u32 %v3719, 8
        %v3760 = vmul.u32.u64.compose %v3759, %v3758
        %v3761 = vextract.low.u32 %v3760
        %v3762 = vextract.high.u32 %v3760
        %v3763 = vmul.u32.u64.compose %v3759, %v3754
        %v3764 = vextract.low.u32 %v3763
        %v3765 = vextract.high.u32 %v3763
        %v3766 = vmul.u32 %v3759, %v3750
        %v3767 = vadd.s32 %v3762, %v3764
        %vm3768 = vc.u32 %v3762, %v3764
        %v3769 = vadd.s32 %v3765, 1
        %v3770 = vsel %vm3768, %v3769, %v3765
        %v3771 = vadd.s32 %v3766, %v3770
        %v3772 = vadd.s32 %v3771, 536870912
        %v3773 = vshrl.u32 %v3772, 30
        %v3774 = vshll.u32 %v3773, 30
        %v3775 = vsub.s32 %v3771, %v3774
        %vm3776 = vcmp.lt.s32.totalorder %v3775, 0
        %v3777 = vsub.s32 0, %v3775
        %v3778 = vsel %vm3776, %v3777, %v3775
        %v3779 = vclz %v3778
        %v3780 = vsub.s32 %v3779, 2
        %vm3781 = vcmp.gt.s32.totalorder 0, %v3780
        %v3782 = vsel %vm3781, 0, %v3780
        %v3783 = vsub.s32 32, %v3782
        %v3784 = vshll.u32 %v3775, %v3782
        %v3785 = vshrl.u32 %v3767, %v3783
        %v3786 = vor.u32 %v3784, %v3785
        %v3787 = vsub.s32 4294967266, %v3782
        %v3788 = vadd.s32 %v3787, 127
        %v3789 = vshll.u32 %v3788, 23
        %v3790 = vor.u32 4788187, %v3789
        %v3791 = vand.u32 2147483647, %v3790
        %v3793 = vcvt.s32.f32 %v3786
        %v3794 = vmul.f32 %v3793, %v3791
        %v3795 = vxor.u32 %v3794, 2147483648
        %v3796 = vsel %vm3713, %v3795, %v3794
        %v3797 = vsub.s32 4, %v3773
        %v3798 = vsel %vm3713, %v3797, %v3773
        %v3799 = vsel %vm3712, %v147, %v3796
        %v3800 = vsel %vm3712, 0, %v3798
        %v3801 = vcosq.f32.pop %v3799
        %v3802 = vsinq.f32.pop %v3799
        %vm3803 = vweird.f32 %v147
        %v3804 = vand.u32 %v3800, 3
        %vm3805 = vcmp.lt.s32.totalorder %v3804, 2
        %vm3806 = vcmp.eq.s32.totalorder %v3804, 0
        %v3807 = vxor.u32 %v3802, 2147483648
        %v3808 = vsel %vm3806, %v3801, %v3807
        %vm3809 = vcmp.eq.s32.totalorder %v3804, 2
        %v3810 = vxor.u32 %v3801, 2147483648
        %v3811 = vsel %vm3809, %v3810, %v3802
        %v3812 = vsel %vm3805, %v3808, %v3811
        %v3813 = vsel %vm3803, nan, %v3812
        %v3814 = vand.u32 2147483647, %v148
        %vm3815 = vcmp.le.f32.partialorder %v3814, 0.7853982
        %vm3816 = vcmp.lt.s32.totalorder %v148, 0
        %v3817 = vand.u32 %v148, 2139095040
        %v3818 = vshrl.u32 %v3817, 23
        %v3819 = vsub.s32 %v3818, 127
        %v3820 = vand.u32 2147483647, %v148
        %v3821 = vand.u32 %v3820, 8388607
        %v3822 = vor.u32 %v3821, 8388608
        %v3823 = vsub.s32 0, %v3822
        %v3824 = vadd.s32 %v3819, 1
        %vm3825 = vcmp.gt.s32.totalorder %v3824, 0
        %v3826 = vsel %vm3825, %v3824, 0
        %v3827 = vshrl.u32 %v3826, 5
        %v3828 = vand.u32 %v3826, 31
        %v3829 = vsub.s32 32, %v3828
        %v3830 = vshrl.u32 683565275, %v3829
        %v3831 = vshll.u32 683565275, %v3828
        %v3832 = vshrl.u32 2475754826, %v3829
        %v3833 = vor.u32 %v3831, %v3832
        %v3834 = vshll.u32 2475754826, %v3828
        %v3835 = vshrl.u32 2131351028, %v3829
        %v3836 = vor.u32 %v3834, %v3835
        %v3837 = vshll.u32 2131351028, %v3828
        %v3838 = vshrl.u32 2102212464, %v3829
        %v3839 = vor.u32 %v3837, %v3838
        %v3840 = vshll.u32 2102212464, %v3828
        %v3841 = vshrl.u32 920167782, %v3829
        %v3842 = vor.u32 %v3840, %v3841
        %v3843 = vshll.u32 920167782, %v3828
        %v3844 = vshrl.u32 1326507024, %v3829
        %v3845 = vor.u32 %v3843, %v3844
        %vm3846 = vcmp.lt.s32.totalorder %v3827, 1
        %vm3847 = vcmp.lt.s32.totalorder %v3827, 2
        %vm3848 = vcmp.lt.s32.totalorder %v3827, 3
        %vm3849 = vcmp.lt.s32.totalorder %v3827, 4
        %v3850 = vsel %vm3846, %v3830, %v3833
        %v3851 = vsel %vm3849, %v3839, 2102212464
        %v3852 = vsel %vm3848, %v3836, %v3851
        %v3853 = vsel %vm3847, %v3850, %v3852
        %v3854 = vsel %vm3846, %v3833, %v3836
        %v3855 = vsel %vm3849, %v3842, 920167782
        %v3856 = vsel %vm3848, %v3839, %v3855
        %v3857 = vsel %vm3847, %v3854, %v3856
        %v3858 = vsel %vm3846, %v3836, %v3839
        %v3859 = vsel %vm3849, %v3845, 1326507024
        %v3860 = vsel %vm3848, %v3842, %v3859
        %v3861 = vsel %vm3847, %v3858, %v3860
        %v3862 = vshll.u32 %v3822, 8
        %v3863 = vmul.u32.u64.compose %v3862, %v3861
        %v3864 = vextract.low.u32 %v3863
        %v3865 = vextract.high.u32 %v3863
        %v3866 = vmul.u32.u64.compose %v3862, %v3857
        %v3867 = vextract.low.u32 %v3866
        %v3868 = vextract.high.u32 %v3866
        %v3869 = vmul.u32 %v3862, %v3853
        %v3870 = vadd.s32 %v3865, %v3867
        %vm3871 = vc.u32 %v3865, %v3867
        %v3872 = vadd.s32 %v3868, 1
        %v3873 = vsel %vm3871, %v3872, %v3868
        %v3874 = vadd.s32 %v3869, %v3873
        %v3875 = vadd.s32 %v3874, 536870912
        %v3876 = vshrl.u32 %v3875, 30
        %v3877 = vshll.u32 %v3876, 30
        %v3878 = vsub.s32 %v3874, %v3877
        %vm3879 = vcmp.lt.s32.totalorder %v3878, 0
        %v3880 = vsub.s32 0, %v3878
        %v3881 = vsel %vm3879, %v3880, %v3878
        %v3882 = vclz %v3881
        %v3883 = vsub.s32 %v3882, 2
        %vm3884 = vcmp.gt.s32.totalorder 0, %v3883
        %v3885 = vsel %vm3884, 0, %v3883
        %v3886 = vsub.s32 32, %v3885
        %v3887 = vshll.u32 %v3878, %v3885
        %v3888 = vshrl.u32 %v3870, %v3886
        %v3889 = vor.u32 %v3887, %v3888
        %v3890 = vsub.s32 4294967266, %v3885
        %v3891 = vadd.s32 %v3890, 127
        %v3892 = vshll.u32 %v3891, 23
        %v3893 = vor.u32 4788187, %v3892
        %v3894 = vand.u32 2147483647, %v3893
        %v3896 = vcvt.s32.f32 %v3889
        %v3897 = vmul.f32 %v3896, %v3894
        %v3898 = vxor.u32 %v3897, 2147483648
        %v3899 = vsel %vm3816, %v3898, %v3897
        %v3900 = vsub.s32 4, %v3876
        %v3901 = vsel %vm3816, %v3900, %v3876
        %v3902 = vsel %vm3815, %v148, %v3899
        %v3903 = vsel %vm3815, 0, %v3901
        %v3904 = vcosq.f32.pop %v3902
        %v3905 = vsinq.f32.pop %v3902
        %vm3906 = vweird.f32 %v148
        %v3907 = vand.u32 %v3903, 3
        %vm3908 = vcmp.lt.s32.totalorder %v3907, 2
        %vm3909 = vcmp.eq.s32.totalorder %v3907, 0
        %v3910 = vxor.u32 %v3905, 2147483648
        %v3911 = vsel %vm3909, %v3904, %v3910
        %vm3912 = vcmp.eq.s32.totalorder %v3907, 2
        %v3913 = vxor.u32 %v3904, 2147483648
        %v3914 = vsel %vm3912, %v3913, %v3905
        %v3915 = vsel %vm3908, %v3911, %v3914
        %v3916 = vsel %vm3906, nan, %v3915
        %v3917 = vand.u32 2147483647, %v149
        %vm3918 = vcmp.le.f32.partialorder %v3917, 0.7853982
        %vm3919 = vcmp.lt.s32.totalorder %v149, 0
        %v3920 = vand.u32 %v149, 2139095040
        %v3921 = vshrl.u32 %v3920, 23
        %v3922 = vsub.s32 %v3921, 127
        %v3923 = vand.u32 2147483647, %v149
        %v3924 = vand.u32 %v3923, 8388607
        %v3925 = vor.u32 %v3924, 8388608
        %v3926 = vsub.s32 0, %v3925
        %v3927 = vadd.s32 %v3922, 1
        %vm3928 = vcmp.gt.s32.totalorder %v3927, 0
        %v3929 = vsel %vm3928, %v3927, 0
        %v3930 = vshrl.u32 %v3929, 5
        %v3931 = vand.u32 %v3929, 31
        %v3932 = vsub.s32 32, %v3931
        %v3933 = vshrl.u32 683565275, %v3932
        %v3934 = vshll.u32 683565275, %v3931
        %v3935 = vshrl.u32 2475754826, %v3932
        %v3936 = vor.u32 %v3934, %v3935
        %v3937 = vshll.u32 2475754826, %v3931
        %v3938 = vshrl.u32 2131351028, %v3932
        %v3939 = vor.u32 %v3937, %v3938
        %v3940 = vshll.u32 2131351028, %v3931
        %v3941 = vshrl.u32 2102212464, %v3932
        %v3942 = vor.u32 %v3940, %v3941
        %v3943 = vshll.u32 2102212464, %v3931
        %v3944 = vshrl.u32 920167782, %v3932
        %v3945 = vor.u32 %v3943, %v3944
        %v3946 = vshll.u32 920167782, %v3931
        %v3947 = vshrl.u32 1326507024, %v3932
        %v3948 = vor.u32 %v3946, %v3947
        %vm3949 = vcmp.lt.s32.totalorder %v3930, 1
        %vm3950 = vcmp.lt.s32.totalorder %v3930, 2
        %vm3951 = vcmp.lt.s32.totalorder %v3930, 3
        %vm3952 = vcmp.lt.s32.totalorder %v3930, 4
        %v3953 = vsel %vm3949, %v3933, %v3936
        %v3954 = vsel %vm3952, %v3942, 2102212464
        %v3955 = vsel %vm3951, %v3939, %v3954
        %v3956 = vsel %vm3950, %v3953, %v3955
        %v3957 = vsel %vm3949, %v3936, %v3939
        %v3958 = vsel %vm3952, %v3945, 920167782
        %v3959 = vsel %vm3951, %v3942, %v3958
        %v3960 = vsel %vm3950, %v3957, %v3959
        %v3961 = vsel %vm3949, %v3939, %v3942
        %v3962 = vsel %vm3952, %v3948, 1326507024
        %v3963 = vsel %vm3951, %v3945, %v3962
        %v3964 = vsel %vm3950, %v3961, %v3963
        %v3965 = vshll.u32 %v3925, 8
        %v3966 = vmul.u32.u64.compose %v3965, %v3964
        %v3967 = vextract.low.u32 %v3966
        %v3968 = vextract.high.u32 %v3966
        %v3969 = vmul.u32.u64.compose %v3965, %v3960
        %v3970 = vextract.low.u32 %v3969
        %v3971 = vextract.high.u32 %v3969
        %v3972 = vmul.u32 %v3965, %v3956
        %v3973 = vadd.s32 %v3968, %v3970
        %vm3974 = vc.u32 %v3968, %v3970
        %v3975 = vadd.s32 %v3971, 1
        %v3976 = vsel %vm3974, %v3975, %v3971
        %v3977 = vadd.s32 %v3972, %v3976
        %v3978 = vadd.s32 %v3977, 536870912
        %v3979 = vshrl.u32 %v3978, 30
        %v3980 = vshll.u32 %v3979, 30
        %v3981 = vsub.s32 %v3977, %v3980
        %vm3982 = vcmp.lt.s32.totalorder %v3981, 0
        %v3983 = vsub.s32 0, %v3981
        %v3984 = vsel %vm3982, %v3983, %v3981
        %v3985 = vclz %v3984
        %v3986 = vsub.s32 %v3985, 2
        %vm3987 = vcmp.gt.s32.totalorder 0, %v3986
        %v3988 = vsel %vm3987, 0, %v3986
        %v3989 = vsub.s32 32, %v3988
        %v3990 = vshll.u32 %v3981, %v3988
        %v3991 = vshrl.u32 %v3973, %v3989
        %v3992 = vor.u32 %v3990, %v3991
        %v3993 = vsub.s32 4294967266, %v3988
        %v3994 = vadd.s32 %v3993, 127
        %v3995 = vshll.u32 %v3994, 23
        %v3996 = vor.u32 4788187, %v3995
        %v3997 = vand.u32 2147483647, %v3996
        %v3999 = vcvt.s32.f32 %v3992
        %v4000 = vmul.f32 %v3999, %v3997
        %v4001 = vxor.u32 %v4000, 2147483648
        %v4002 = vsel %vm3919, %v4001, %v4000
        %v4003 = vsub.s32 4, %v3979
        %v4004 = vsel %vm3919, %v4003, %v3979
        %v4005 = vsel %vm3918, %v149, %v4002
        %v4006 = vsel %vm3918, 0, %v4004
        %v4007 = vcosq.f32.pop %v4005
        %v4008 = vsinq.f32.pop %v4005
        %vm4009 = vweird.f32 %v149
        %v4010 = vand.u32 %v4006, 3
        %vm4011 = vcmp.lt.s32.totalorder %v4010, 2
        %vm4012 = vcmp.eq.s32.totalorder %v4010, 0
        %v4013 = vxor.u32 %v4008, 2147483648
        %v4014 = vsel %vm4012, %v4007, %v4013
        %vm4015 = vcmp.eq.s32.totalorder %v4010, 2
        %v4016 = vxor.u32 %v4007, 2147483648
        %v4017 = vsel %vm4015, %v4016, %v4008
        %v4018 = vsel %vm4011, %v4014, %v4017
        %v4019 = vsel %vm4009, nan, %v4018
        %v4020 = vand.u32 2147483647, %v150
        %vm4021 = vcmp.le.f32.partialorder %v4020, 0.7853982
        %vm4022 = vcmp.lt.s32.totalorder %v150, 0
        %v4023 = vand.u32 %v150, 2139095040
        %v4024 = vshrl.u32 %v4023, 23
        %v4025 = vsub.s32 %v4024, 127
        %v4026 = vand.u32 2147483647, %v150
        %v4027 = vand.u32 %v4026, 8388607
        %v4028 = vor.u32 %v4027, 8388608
        %v4029 = vsub.s32 0, %v4028
        %v4030 = vadd.s32 %v4025, 1
        %vm4031 = vcmp.gt.s32.totalorder %v4030, 0
        %v4032 = vsel %vm4031, %v4030, 0
        %v4033 = vshrl.u32 %v4032, 5
        %v4034 = vand.u32 %v4032, 31
        %v4035 = vsub.s32 32, %v4034
        %v4036 = vshrl.u32 683565275, %v4035
        %v4037 = vshll.u32 683565275, %v4034
        %v4038 = vshrl.u32 2475754826, %v4035
        %v4039 = vor.u32 %v4037, %v4038
        %v4040 = vshll.u32 2475754826, %v4034
        %v4041 = vshrl.u32 2131351028, %v4035
        %v4042 = vor.u32 %v4040, %v4041
        %v4043 = vshll.u32 2131351028, %v4034
        %v4044 = vshrl.u32 2102212464, %v4035
        %v4045 = vor.u32 %v4043, %v4044
        %v4046 = vshll.u32 2102212464, %v4034
        %v4047 = vshrl.u32 920167782, %v4035
        %v4048 = vor.u32 %v4046, %v4047
        %v4049 = vshll.u32 920167782, %v4034
        %v4050 = vshrl.u32 1326507024, %v4035
        %v4051 = vor.u32 %v4049, %v4050
        %vm4052 = vcmp.lt.s32.totalorder %v4033, 1
        %vm4053 = vcmp.lt.s32.totalorder %v4033, 2
        %vm4054 = vcmp.lt.s32.totalorder %v4033, 3
        %vm4055 = vcmp.lt.s32.totalorder %v4033, 4
        %v4056 = vsel %vm4052, %v4036, %v4039
        %v4057 = vsel %vm4055, %v4045, 2102212464
        %v4058 = vsel %vm4054, %v4042, %v4057
        %v4059 = vsel %vm4053, %v4056, %v4058
        %v4060 = vsel %vm4052, %v4039, %v4042
        %v4061 = vsel %vm4055, %v4048, 920167782
        %v4062 = vsel %vm4054, %v4045, %v4061
        %v4063 = vsel %vm4053, %v4060, %v4062
        %v4064 = vsel %vm4052, %v4042, %v4045
        %v4065 = vsel %vm4055, %v4051, 1326507024
        %v4066 = vsel %vm4054, %v4048, %v4065
        %v4067 = vsel %vm4053, %v4064, %v4066
        %v4068 = vshll.u32 %v4028, 8
        %v4069 = vmul.u32.u64.compose %v4068, %v4067
        %v4070 = vextract.low.u32 %v4069
        %v4071 = vextract.high.u32 %v4069
        %v4072 = vmul.u32.u64.compose %v4068, %v4063
        %v4073 = vextract.low.u32 %v4072
        %v4074 = vextract.high.u32 %v4072
        %v4075 = vmul.u32 %v4068, %v4059
        %v4076 = vadd.s32 %v4071, %v4073
        %vm4077 = vc.u32 %v4071, %v4073
        %v4078 = vadd.s32 %v4074, 1
        %v4079 = vsel %vm4077, %v4078, %v4074
        %v4080 = vadd.s32 %v4075, %v4079
        %v4081 = vadd.s32 %v4080, 536870912
        %v4082 = vshrl.u32 %v4081, 30
        %v4083 = vshll.u32 %v4082, 30
        %v4084 = vsub.s32 %v4080, %v4083
        %vm4085 = vcmp.lt.s32.totalorder %v4084, 0
        %v4086 = vsub.s32 0, %v4084
        %v4087 = vsel %vm4085, %v4086, %v4084
        %v4088 = vclz %v4087
        %v4089 = vsub.s32 %v4088, 2
        %vm4090 = vcmp.gt.s32.totalorder 0, %v4089
        %v4091 = vsel %vm4090, 0, %v4089
        %v4092 = vsub.s32 32, %v4091
        %v4093 = vshll.u32 %v4084, %v4091
        %v4094 = vshrl.u32 %v4076, %v4092
        %v4095 = vor.u32 %v4093, %v4094
        %v4096 = vsub.s32 4294967266, %v4091
        %v4097 = vadd.s32 %v4096, 127
        %v4098 = vshll.u32 %v4097, 23
        %v4099 = vor.u32 4788187, %v4098
        %v4100 = vand.u32 2147483647, %v4099
        %v4102 = vcvt.s32.f32 %v4095
        %v4103 = vmul.f32 %v4102, %v4100
        %v4104 = vxor.u32 %v4103, 2147483648
        %v4105 = vsel %vm4022, %v4104, %v4103
        %v4106 = vsub.s32 4, %v4082
        %v4107 = vsel %vm4022, %v4106, %v4082
        %v4108 = vsel %vm4021, %v150, %v4105
        %v4109 = vsel %vm4021, 0, %v4107
        %v4110 = vcosq.f32.pop %v4108
        %v4111 = vsinq.f32.pop %v4108
        %vm4112 = vweird.f32 %v150
        %v4113 = vand.u32 %v4109, 3
        %vm4114 = vcmp.lt.s32.totalorder %v4113, 2
        %vm4115 = vcmp.eq.s32.totalorder %v4113, 0
        %v4116 = vxor.u32 %v4111, 2147483648
        %v4117 = vsel %vm4115, %v4110, %v4116
        %vm4118 = vcmp.eq.s32.totalorder %v4113, 2
        %v4119 = vxor.u32 %v4110, 2147483648
        %v4120 = vsel %vm4118, %v4119, %v4111
        %v4121 = vsel %vm4114, %v4117, %v4120
        %v4122 = vsel %vm4112, nan, %v4121
        %v4123 = vand.u32 2147483647, %v151
        %vm4124 = vcmp.le.f32.partialorder %v4123, 0.7853982
        %vm4125 = vcmp.lt.s32.totalorder %v151, 0
        %v4126 = vand.u32 %v151, 2139095040
        %v4127 = vshrl.u32 %v4126, 23
        %v4128 = vsub.s32 %v4127, 127
        %v4129 = vand.u32 2147483647, %v151
        %v4130 = vand.u32 %v4129, 8388607
        %v4131 = vor.u32 %v4130, 8388608
        %v4132 = vsub.s32 0, %v4131
        %v4133 = vadd.s32 %v4128, 1
        %vm4134 = vcmp.gt.s32.totalorder %v4133, 0
        %v4135 = vsel %vm4134, %v4133, 0
        %v4136 = vshrl.u32 %v4135, 5
        %v4137 = vand.u32 %v4135, 31
        %v4138 = vsub.s32 32, %v4137
        %v4139 = vshrl.u32 683565275, %v4138
        %v4140 = vshll.u32 683565275, %v4137
        %v4141 = vshrl.u32 2475754826, %v4138
        %v4142 = vor.u32 %v4140, %v4141
        %v4143 = vshll.u32 2475754826, %v4137
        %v4144 = vshrl.u32 2131351028, %v4138
        %v4145 = vor.u32 %v4143, %v4144
        %v4146 = vshll.u32 2131351028, %v4137
        %v4147 = vshrl.u32 2102212464, %v4138
        %v4148 = vor.u32 %v4146, %v4147
        %v4149 = vshll.u32 2102212464, %v4137
        %v4150 = vshrl.u32 920167782, %v4138
        %v4151 = vor.u32 %v4149, %v4150
        %v4152 = vshll.u32 920167782, %v4137
        %v4153 = vshrl.u32 1326507024, %v4138
        %v4154 = vor.u32 %v4152, %v4153
        %vm4155 = vcmp.lt.s32.totalorder %v4136, 1
        %vm4156 = vcmp.lt.s32.totalorder %v4136, 2
        %vm4157 = vcmp.lt.s32.totalorder %v4136, 3
        %vm4158 = vcmp.lt.s32.totalorder %v4136, 4
        %v4159 = vsel %vm4155, %v4139, %v4142
        %v4160 = vsel %vm4158, %v4148, 2102212464
        %v4161 = vsel %vm4157, %v4145, %v4160
        %v4162 = vsel %vm4156, %v4159, %v4161
        %v4163 = vsel %vm4155, %v4142, %v4145
        %v4164 = vsel %vm4158, %v4151, 920167782
        %v4165 = vsel %vm4157, %v4148, %v4164
        %v4166 = vsel %vm4156, %v4163, %v4165
        %v4167 = vsel %vm4155, %v4145, %v4148
        %v4168 = vsel %vm4158, %v4154, 1326507024
        %v4169 = vsel %vm4157, %v4151, %v4168
        %v4170 = vsel %vm4156, %v4167, %v4169
        %v4171 = vshll.u32 %v4131, 8
        %v4172 = vmul.u32.u64.compose %v4171, %v4170
        %v4173 = vextract.low.u32 %v4172
        %v4174 = vextract.high.u32 %v4172
        %v4175 = vmul.u32.u64.compose %v4171, %v4166
        %v4176 = vextract.low.u32 %v4175
        %v4177 = vextract.high.u32 %v4175
        %v4178 = vmul.u32 %v4171, %v4162
        %v4179 = vadd.s32 %v4174, %v4176
        %vm4180 = vc.u32 %v4174, %v4176
        %v4181 = vadd.s32 %v4177, 1
        %v4182 = vsel %vm4180, %v4181, %v4177
        %v4183 = vadd.s32 %v4178, %v4182
        %v4184 = vadd.s32 %v4183, 536870912
        %v4185 = vshrl.u32 %v4184, 30
        %v4186 = vshll.u32 %v4185, 30
        %v4187 = vsub.s32 %v4183, %v4186
        %vm4188 = vcmp.lt.s32.totalorder %v4187, 0
        %v4189 = vsub.s32 0, %v4187
        %v4190 = vsel %vm4188, %v4189, %v4187
        %v4191 = vclz %v4190
        %v4192 = vsub.s32 %v4191, 2
        %vm4193 = vcmp.gt.s32.totalorder 0, %v4192
        %v4194 = vsel %vm4193, 0, %v4192
        %v4195 = vsub.s32 32, %v4194
        %v4196 = vshll.u32 %v4187, %v4194
        %v4197 = vshrl.u32 %v4179, %v4195
        %v4198 = vor.u32 %v4196, %v4197
        %v4199 = vsub.s32 4294967266, %v4194
        %v4200 = vadd.s32 %v4199, 127
        %v4201 = vshll.u32 %v4200, 23
        %v4202 = vor.u32 4788187, %v4201
        %v4203 = vand.u32 2147483647, %v4202
        %v4205 = vcvt.s32.f32 %v4198
        %v4206 = vmul.f32 %v4205, %v4203
        %v4207 = vxor.u32 %v4206, 2147483648
        %v4208 = vsel %vm4125, %v4207, %v4206
        %v4209 = vsub.s32 4, %v4185
        %v4210 = vsel %vm4125, %v4209, %v4185
        %v4211 = vsel %vm4124, %v151, %v4208
        %v4212 = vsel %vm4124, 0, %v4210
        %v4213 = vcosq.f32.pop %v4211
        %v4214 = vsinq.f32.pop %v4211
        %vm4215 = vweird.f32 %v151
        %v4216 = vand.u32 %v4212, 3
        %vm4217 = vcmp.lt.s32.totalorder %v4216, 2
        %vm4218 = vcmp.eq.s32.totalorder %v4216, 0
        %v4219 = vxor.u32 %v4214, 2147483648
        %v4220 = vsel %vm4218, %v4213, %v4219
        %vm4221 = vcmp.eq.s32.totalorder %v4216, 2
        %v4222 = vxor.u32 %v4213, 2147483648
        %v4223 = vsel %vm4221, %v4222, %v4214
        %v4224 = vsel %vm4217, %v4220, %v4223
        %v4225 = vsel %vm4215, nan, %v4224
        %v4226 = vand.u32 2147483647, %v152
        %vm4227 = vcmp.le.f32.partialorder %v4226, 0.7853982
        %vm4228 = vcmp.lt.s32.totalorder %v152, 0
        %v4229 = vand.u32 %v152, 2139095040
        %v4230 = vshrl.u32 %v4229, 23
        %v4231 = vsub.s32 %v4230, 127
        %v4232 = vand.u32 2147483647, %v152
        %v4233 = vand.u32 %v4232, 8388607
        %v4234 = vor.u32 %v4233, 8388608
        %v4235 = vsub.s32 0, %v4234
        %v4236 = vadd.s32 %v4231, 1
        %vm4237 = vcmp.gt.s32.totalorder %v4236, 0
        %v4238 = vsel %vm4237, %v4236, 0
        %v4239 = vshrl.u32 %v4238, 5
        %v4240 = vand.u32 %v4238, 31
        %v4241 = vsub.s32 32, %v4240
        %v4242 = vshrl.u32 683565275, %v4241
        %v4243 = vshll.u32 683565275, %v4240
        %v4244 = vshrl.u32 2475754826, %v4241
        %v4245 = vor.u32 %v4243, %v4244
        %v4246 = vshll.u32 2475754826, %v4240
        %v4247 = vshrl.u32 2131351028, %v4241
        %v4248 = vor.u32 %v4246, %v4247
        %v4249 = vshll.u32 2131351028, %v4240
        %v4250 = vshrl.u32 2102212464, %v4241
        %v4251 = vor.u32 %v4249, %v4250
        %v4252 = vshll.u32 2102212464, %v4240
        %v4253 = vshrl.u32 920167782, %v4241
        %v4254 = vor.u32 %v4252, %v4253
        %v4255 = vshll.u32 920167782, %v4240
        %v4256 = vshrl.u32 1326507024, %v4241
        %v4257 = vor.u32 %v4255, %v4256
        %vm4258 = vcmp.lt.s32.totalorder %v4239, 1
        %vm4259 = vcmp.lt.s32.totalorder %v4239, 2
        %vm4260 = vcmp.lt.s32.totalorder %v4239, 3
        %vm4261 = vcmp.lt.s32.totalorder %v4239, 4
        %v4262 = vsel %vm4258, %v4242, %v4245
        %v4263 = vsel %vm4261, %v4251, 2102212464
        %v4264 = vsel %vm4260, %v4248, %v4263
        %v4265 = vsel %vm4259, %v4262, %v4264
        %v4266 = vsel %vm4258, %v4245, %v4248
        %v4267 = vsel %vm4261, %v4254, 920167782
        %v4268 = vsel %vm4260, %v4251, %v4267
        %v4269 = vsel %vm4259, %v4266, %v4268
        %v4270 = vsel %vm4258, %v4248, %v4251
        %v4271 = vsel %vm4261, %v4257, 1326507024
        %v4272 = vsel %vm4260, %v4254, %v4271
        %v4273 = vsel %vm4259, %v4270, %v4272
        %v4274 = vshll.u32 %v4234, 8
        %v4275 = vmul.u32.u64.compose %v4274, %v4273
        %v4276 = vextract.low.u32 %v4275
        %v4277 = vextract.high.u32 %v4275
        %v4278 = vmul.u32.u64.compose %v4274, %v4269
        %v4279 = vextract.low.u32 %v4278
        %v4280 = vextract.high.u32 %v4278
        %v4281 = vmul.u32 %v4274, %v4265
        %v4282 = vadd.s32 %v4277, %v4279
        %vm4283 = vc.u32 %v4277, %v4279
        %v4284 = vadd.s32 %v4280, 1
        %v4285 = vsel %vm4283, %v4284, %v4280
        %v4286 = vadd.s32 %v4281, %v4285
        %v4287 = vadd.s32 %v4286, 536870912
        %v4288 = vshrl.u32 %v4287, 30
        %v4289 = vshll.u32 %v4288, 30
        %v4290 = vsub.s32 %v4286, %v4289
        %vm4291 = vcmp.lt.s32.totalorder %v4290, 0
        %v4292 = vsub.s32 0, %v4290
        %v4293 = vsel %vm4291, %v4292, %v4290
        %v4294 = vclz %v4293
        %v4295 = vsub.s32 %v4294, 2
        %vm4296 = vcmp.gt.s32.totalorder 0, %v4295
        %v4297 = vsel %vm4296, 0, %v4295
        %v4298 = vsub.s32 32, %v4297
        %v4299 = vshll.u32 %v4290, %v4297
        %v4300 = vshrl.u32 %v4282, %v4298
        %v4301 = vor.u32 %v4299, %v4300
        %v4302 = vsub.s32 4294967266, %v4297
        %v4303 = vadd.s32 %v4302, 127
        %v4304 = vshll.u32 %v4303, 23
        %v4305 = vor.u32 4788187, %v4304
        %v4306 = vand.u32 2147483647, %v4305
        %v4308 = vcvt.s32.f32 %v4301
        %v4309 = vmul.f32 %v4308, %v4306
        %v4310 = vxor.u32 %v4309, 2147483648
        %v4311 = vsel %vm4228, %v4310, %v4309
        %v4312 = vsub.s32 4, %v4288
        %v4313 = vsel %vm4228, %v4312, %v4288
        %v4314 = vsel %vm4227, %v152, %v4311
        %v4315 = vsel %vm4227, 0, %v4313
        %v4316 = vcosq.f32.pop %v4314
        %v4317 = vsinq.f32.pop %v4314
        %vm4318 = vweird.f32 %v152
        %v4319 = vand.u32 %v4315, 3
        %vm4320 = vcmp.lt.s32.totalorder %v4319, 2
        %vm4321 = vcmp.eq.s32.totalorder %v4319, 0
        %v4322 = vxor.u32 %v4317, 2147483648
        %v4323 = vsel %vm4321, %v4316, %v4322
        %vm4324 = vcmp.eq.s32.totalorder %v4319, 2
        %v4325 = vxor.u32 %v4316, 2147483648
        %v4326 = vsel %vm4324, %v4325, %v4317
        %v4327 = vsel %vm4320, %v4323, %v4326
        %v4328 = vsel %vm4318, nan, %v4327
        %v4329 = vand.u32 2147483647, %v153
        %vm4330 = vcmp.le.f32.partialorder %v4329, 0.7853982
        %vm4331 = vcmp.lt.s32.totalorder %v153, 0
        %v4332 = vand.u32 %v153, 2139095040
        %v4333 = vshrl.u32 %v4332, 23
        %v4334 = vsub.s32 %v4333, 127
        %v4335 = vand.u32 2147483647, %v153
        %v4336 = vand.u32 %v4335, 8388607
        %v4337 = vor.u32 %v4336, 8388608
        %v4338 = vsub.s32 0, %v4337
        %v4339 = vadd.s32 %v4334, 1
        %vm4340 = vcmp.gt.s32.totalorder %v4339, 0
        %v4341 = vsel %vm4340, %v4339, 0
        %v4342 = vshrl.u32 %v4341, 5
        %v4343 = vand.u32 %v4341, 31
        %v4344 = vsub.s32 32, %v4343
        %v4345 = vshrl.u32 683565275, %v4344
        %v4346 = vshll.u32 683565275, %v4343
        %v4347 = vshrl.u32 2475754826, %v4344
        %v4348 = vor.u32 %v4346, %v4347
        %v4349 = vshll.u32 2475754826, %v4343
        %v4350 = vshrl.u32 2131351028, %v4344
        %v4351 = vor.u32 %v4349, %v4350
        %v4352 = vshll.u32 2131351028, %v4343
        %v4353 = vshrl.u32 2102212464, %v4344
        %v4354 = vor.u32 %v4352, %v4353
        %v4355 = vshll.u32 2102212464, %v4343
        %v4356 = vshrl.u32 920167782, %v4344
        %v4357 = vor.u32 %v4355, %v4356
        %v4358 = vshll.u32 920167782, %v4343
        %v4359 = vshrl.u32 1326507024, %v4344
        %v4360 = vor.u32 %v4358, %v4359
        %vm4361 = vcmp.lt.s32.totalorder %v4342, 1
        %vm4362 = vcmp.lt.s32.totalorder %v4342, 2
        %vm4363 = vcmp.lt.s32.totalorder %v4342, 3
        %vm4364 = vcmp.lt.s32.totalorder %v4342, 4
        %v4365 = vsel %vm4361, %v4345, %v4348
        %v4366 = vsel %vm4364, %v4354, 2102212464
        %v4367 = vsel %vm4363, %v4351, %v4366
        %v4368 = vsel %vm4362, %v4365, %v4367
        %v4369 = vsel %vm4361, %v4348, %v4351
        %v4370 = vsel %vm4364, %v4357, 920167782
        %v4371 = vsel %vm4363, %v4354, %v4370
        %v4372 = vsel %vm4362, %v4369, %v4371
        %v4373 = vsel %vm4361, %v4351, %v4354
        %v4374 = vsel %vm4364, %v4360, 1326507024
        %v4375 = vsel %vm4363, %v4357, %v4374
        %v4376 = vsel %vm4362, %v4373, %v4375
        %v4377 = vshll.u32 %v4337, 8
        %v4378 = vmul.u32.u64.compose %v4377, %v4376
        %v4379 = vextract.low.u32 %v4378
        %v4380 = vextract.high.u32 %v4378
        %v4381 = vmul.u32.u64.compose %v4377, %v4372
        %v4382 = vextract.low.u32 %v4381
        %v4383 = vextract.high.u32 %v4381
        %v4384 = vmul.u32 %v4377, %v4368
        %v4385 = vadd.s32 %v4380, %v4382
        %vm4386 = vc.u32 %v4380, %v4382
        %v4387 = vadd.s32 %v4383, 1
        %v4388 = vsel %vm4386, %v4387, %v4383
        %v4389 = vadd.s32 %v4384, %v4388
        %v4390 = vadd.s32 %v4389, 536870912
        %v4391 = vshrl.u32 %v4390, 30
        %v4392 = vshll.u32 %v4391, 30
        %v4393 = vsub.s32 %v4389, %v4392
        %vm4394 = vcmp.lt.s32.totalorder %v4393, 0
        %v4395 = vsub.s32 0, %v4393
        %v4396 = vsel %vm4394, %v4395, %v4393
        %v4397 = vclz %v4396
        %v4398 = vsub.s32 %v4397, 2
        %vm4399 = vcmp.gt.s32.totalorder 0, %v4398
        %v4400 = vsel %vm4399, 0, %v4398
        %v4401 = vsub.s32 32, %v4400
        %v4402 = vshll.u32 %v4393, %v4400
        %v4403 = vshrl.u32 %v4385, %v4401
        %v4404 = vor.u32 %v4402, %v4403
        %v4405 = vsub.s32 4294967266, %v4400
        %v4406 = vadd.s32 %v4405, 127
        %v4407 = vshll.u32 %v4406, 23
        %v4408 = vor.u32 4788187, %v4407
        %v4409 = vand.u32 2147483647, %v4408
        %v4411 = vcvt.s32.f32 %v4404
        %v4412 = vmul.f32 %v4411, %v4409
        %v4413 = vxor.u32 %v4412, 2147483648
        %v4414 = vsel %vm4331, %v4413, %v4412
        %v4415 = vsub.s32 4, %v4391
        %v4416 = vsel %vm4331, %v4415, %v4391
        %v4417 = vsel %vm4330, %v153, %v4414
        %v4418 = vsel %vm4330, 0, %v4416
        %v4419 = vcosq.f32.pop %v4417
        %v4420 = vsinq.f32.pop %v4417
        %vm4421 = vweird.f32 %v153
        %v4422 = vand.u32 %v4418, 3
        %vm4423 = vcmp.lt.s32.totalorder %v4422, 2
        %vm4424 = vcmp.eq.s32.totalorder %v4422, 0
        %v4425 = vxor.u32 %v4420, 2147483648
        %v4426 = vsel %vm4424, %v4419, %v4425
        %vm4427 = vcmp.eq.s32.totalorder %v4422, 2
        %v4428 = vxor.u32 %v4419, 2147483648
        %v4429 = vsel %vm4427, %v4428, %v4420
        %v4430 = vsel %vm4423, %v4426, %v4429
        %v4431 = vsel %vm4421, nan, %v4430
        %v4432 = vand.u32 2147483647, %v154
        %vm4433 = vcmp.le.f32.partialorder %v4432, 0.7853982
        %vm4434 = vcmp.lt.s32.totalorder %v154, 0
        %v4435 = vand.u32 %v154, 2139095040
        %v4436 = vshrl.u32 %v4435, 23
        %v4437 = vsub.s32 %v4436, 127
        %v4438 = vand.u32 2147483647, %v154
        %v4439 = vand.u32 %v4438, 8388607
        %v4440 = vor.u32 %v4439, 8388608
        %v4441 = vsub.s32 0, %v4440
        %v4442 = vadd.s32 %v4437, 1
        %vm4443 = vcmp.gt.s32.totalorder %v4442, 0
        %v4444 = vsel %vm4443, %v4442, 0
        %v4445 = vshrl.u32 %v4444, 5
        %v4446 = vand.u32 %v4444, 31
        %v4447 = vsub.s32 32, %v4446
        %v4448 = vshrl.u32 683565275, %v4447
        %v4449 = vshll.u32 683565275, %v4446
        %v4450 = vshrl.u32 2475754826, %v4447
        %v4451 = vor.u32 %v4449, %v4450
        %v4452 = vshll.u32 2475754826, %v4446
        %v4453 = vshrl.u32 2131351028, %v4447
        %v4454 = vor.u32 %v4452, %v4453
        %v4455 = vshll.u32 2131351028, %v4446
        %v4456 = vshrl.u32 2102212464, %v4447
        %v4457 = vor.u32 %v4455, %v4456
        %v4458 = vshll.u32 2102212464, %v4446
        %v4459 = vshrl.u32 920167782, %v4447
        %v4460 = vor.u32 %v4458, %v4459
        %v4461 = vshll.u32 920167782, %v4446
        %v4462 = vshrl.u32 1326507024, %v4447
        %v4463 = vor.u32 %v4461, %v4462
        %vm4464 = vcmp.lt.s32.totalorder %v4445, 1
        %vm4465 = vcmp.lt.s32.totalorder %v4445, 2
        %vm4466 = vcmp.lt.s32.totalorder %v4445, 3
        %vm4467 = vcmp.lt.s32.totalorder %v4445, 4
        %v4468 = vsel %vm4464, %v4448, %v4451
        %v4469 = vsel %vm4467, %v4457, 2102212464
        %v4470 = vsel %vm4466, %v4454, %v4469
        %v4471 = vsel %vm4465, %v4468, %v4470
        %v4472 = vsel %vm4464, %v4451, %v4454
        %v4473 = vsel %vm4467, %v4460, 920167782
        %v4474 = vsel %vm4466, %v4457, %v4473
        %v4475 = vsel %vm4465, %v4472, %v4474
        %v4476 = vsel %vm4464, %v4454, %v4457
        %v4477 = vsel %vm4467, %v4463, 1326507024
        %v4478 = vsel %vm4466, %v4460, %v4477
        %v4479 = vsel %vm4465, %v4476, %v4478
        %v4480 = vshll.u32 %v4440, 8
        %v4481 = vmul.u32.u64.compose %v4480, %v4479
        %v4482 = vextract.low.u32 %v4481
        %v4483 = vextract.high.u32 %v4481
        %v4484 = vmul.u32.u64.compose %v4480, %v4475
        %v4485 = vextract.low.u32 %v4484
        %v4486 = vextract.high.u32 %v4484
        %v4487 = vmul.u32 %v4480, %v4471
        %v4488 = vadd.s32 %v4483, %v4485
        %vm4489 = vc.u32 %v4483, %v4485
        %v4490 = vadd.s32 %v4486, 1
        %v4491 = vsel %vm4489, %v4490, %v4486
        %v4492 = vadd.s32 %v4487, %v4491
        %v4493 = vadd.s32 %v4492, 536870912
        %v4494 = vshrl.u32 %v4493, 30
        %v4495 = vshll.u32 %v4494, 30
        %v4496 = vsub.s32 %v4492, %v4495
        %vm4497 = vcmp.lt.s32.totalorder %v4496, 0
        %v4498 = vsub.s32 0, %v4496
        %v4499 = vsel %vm4497, %v4498, %v4496
        %v4500 = vclz %v4499
        %v4501 = vsub.s32 %v4500, 2
        %vm4502 = vcmp.gt.s32.totalorder 0, %v4501
        %v4503 = vsel %vm4502, 0, %v4501
        %v4504 = vsub.s32 32, %v4503
        %v4505 = vshll.u32 %v4496, %v4503
        %v4506 = vshrl.u32 %v4488, %v4504
        %v4507 = vor.u32 %v4505, %v4506
        %v4508 = vsub.s32 4294967266, %v4503
        %v4509 = vadd.s32 %v4508, 127
        %v4510 = vshll.u32 %v4509, 23
        %v4511 = vor.u32 4788187, %v4510
        %v4512 = vand.u32 2147483647, %v4511
        %v4514 = vcvt.s32.f32 %v4507
        %v4515 = vmul.f32 %v4514, %v4512
        %v4516 = vxor.u32 %v4515, 2147483648
        %v4517 = vsel %vm4434, %v4516, %v4515
        %v4518 = vsub.s32 4, %v4494
        %v4519 = vsel %vm4434, %v4518, %v4494
        %v4520 = vsel %vm4433, %v154, %v4517
        %v4521 = vsel %vm4433, 0, %v4519
        %v4522 = vcosq.f32.pop %v4520
        %v4523 = vsinq.f32.pop %v4520
        %vm4524 = vweird.f32 %v154
        %v4525 = vand.u32 %v4521, 3
        %vm4526 = vcmp.lt.s32.totalorder %v4525, 2
        %vm4527 = vcmp.eq.s32.totalorder %v4525, 0
        %v4528 = vxor.u32 %v4523, 2147483648
        %v4529 = vsel %vm4527, %v4522, %v4528
        %vm4530 = vcmp.eq.s32.totalorder %v4525, 2
        %v4531 = vxor.u32 %v4522, 2147483648
        %v4532 = vsel %vm4530, %v4531, %v4523
        %v4533 = vsel %vm4526, %v4529, %v4532
        %v4534 = vsel %vm4524, nan, %v4533
        %v4535 = vand.u32 2147483647, %v155
        %vm4536 = vcmp.le.f32.partialorder %v4535, 0.7853982
        %vm4537 = vcmp.lt.s32.totalorder %v155, 0
        %v4538 = vand.u32 %v155, 2139095040
        %v4539 = vshrl.u32 %v4538, 23
        %v4540 = vsub.s32 %v4539, 127
        %v4541 = vand.u32 2147483647, %v155
        %v4542 = vand.u32 %v4541, 8388607
        %v4543 = vor.u32 %v4542, 8388608
        %v4544 = vsub.s32 0, %v4543
        %v4545 = vadd.s32 %v4540, 1
        %vm4546 = vcmp.gt.s32.totalorder %v4545, 0
        %v4547 = vsel %vm4546, %v4545, 0
        %v4548 = vshrl.u32 %v4547, 5
        %v4549 = vand.u32 %v4547, 31
        %v4550 = vsub.s32 32, %v4549
        %v4551 = vshrl.u32 683565275, %v4550
        %v4552 = vshll.u32 683565275, %v4549
        %v4553 = vshrl.u32 2475754826, %v4550
        %v4554 = vor.u32 %v4552, %v4553
        %v4555 = vshll.u32 2475754826, %v4549
        %v4556 = vshrl.u32 2131351028, %v4550
        %v4557 = vor.u32 %v4555, %v4556
        %v4558 = vshll.u32 2131351028, %v4549
        %v4559 = vshrl.u32 2102212464, %v4550
        %v4560 = vor.u32 %v4558, %v4559
        %v4561 = vshll.u32 2102212464, %v4549
        %v4562 = vshrl.u32 920167782, %v4550
        %v4563 = vor.u32 %v4561, %v4562
        %v4564 = vshll.u32 920167782, %v4549
        %v4565 = vshrl.u32 1326507024, %v4550
        %v4566 = vor.u32 %v4564, %v4565
        %vm4567 = vcmp.lt.s32.totalorder %v4548, 1
        %vm4568 = vcmp.lt.s32.totalorder %v4548, 2
        %vm4569 = vcmp.lt.s32.totalorder %v4548, 3
        %vm4570 = vcmp.lt.s32.totalorder %v4548, 4
        %v4571 = vsel %vm4567, %v4551, %v4554
        %v4572 = vsel %vm4570, %v4560, 2102212464
        %v4573 = vsel %vm4569, %v4557, %v4572
        %v4574 = vsel %vm4568, %v4571, %v4573
        %v4575 = vsel %vm4567, %v4554, %v4557
        %v4576 = vsel %vm4570, %v4563, 920167782
        %v4577 = vsel %vm4569, %v4560, %v4576
        %v4578 = vsel %vm4568, %v4575, %v4577
        %v4579 = vsel %vm4567, %v4557, %v4560
        %v4580 = vsel %vm4570, %v4566, 1326507024
        %v4581 = vsel %vm4569, %v4563, %v4580
        %v4582 = vsel %vm4568, %v4579, %v4581
        %v4583 = vshll.u32 %v4543, 8
        %v4584 = vmul.u32.u64.compose %v4583, %v4582
        %v4585 = vextract.low.u32 %v4584
        %v4586 = vextract.high.u32 %v4584
        %v4587 = vmul.u32.u64.compose %v4583, %v4578
        %v4588 = vextract.low.u32 %v4587
        %v4589 = vextract.high.u32 %v4587
        %v4590 = vmul.u32 %v4583, %v4574
        %v4591 = vadd.s32 %v4586, %v4588
        %vm4592 = vc.u32 %v4586, %v4588
        %v4593 = vadd.s32 %v4589, 1
        %v4594 = vsel %vm4592, %v4593, %v4589
        %v4595 = vadd.s32 %v4590, %v4594
        %v4596 = vadd.s32 %v4595, 536870912
        %v4597 = vshrl.u32 %v4596, 30
        %v4598 = vshll.u32 %v4597, 30
        %v4599 = vsub.s32 %v4595, %v4598
        %vm4600 = vcmp.lt.s32.totalorder %v4599, 0
        %v4601 = vsub.s32 0, %v4599
        %v4602 = vsel %vm4600, %v4601, %v4599
        %v4603 = vclz %v4602
        %v4604 = vsub.s32 %v4603, 2
        %vm4605 = vcmp.gt.s32.totalorder 0, %v4604
        %v4606 = vsel %vm4605, 0, %v4604
        %v4607 = vsub.s32 32, %v4606
        %v4608 = vshll.u32 %v4599, %v4606
        %v4609 = vshrl.u32 %v4591, %v4607
        %v4610 = vor.u32 %v4608, %v4609
        %v4611 = vsub.s32 4294967266, %v4606
        %v4612 = vadd.s32 %v4611, 127
        %v4613 = vshll.u32 %v4612, 23
        %v4614 = vor.u32 4788187, %v4613
        %v4615 = vand.u32 2147483647, %v4614
        %v4617 = vcvt.s32.f32 %v4610
        %v4618 = vmul.f32 %v4617, %v4615
        %v4619 = vxor.u32 %v4618, 2147483648
        %v4620 = vsel %vm4537, %v4619, %v4618
        %v4621 = vsub.s32 4, %v4597
        %v4622 = vsel %vm4537, %v4621, %v4597
        %v4623 = vsel %vm4536, %v155, %v4620
        %v4624 = vsel %vm4536, 0, %v4622
        %v4625 = vcosq.f32.pop %v4623
        %v4626 = vsinq.f32.pop %v4623
        %vm4627 = vweird.f32 %v155
        %v4628 = vand.u32 %v4624, 3
        %vm4629 = vcmp.lt.s32.totalorder %v4628, 2
        %vm4630 = vcmp.eq.s32.totalorder %v4628, 0
        %v4631 = vxor.u32 %v4626, 2147483648
        %v4632 = vsel %vm4630, %v4625, %v4631
        %vm4633 = vcmp.eq.s32.totalorder %v4628, 2
        %v4634 = vxor.u32 %v4625, 2147483648
        %v4635 = vsel %vm4633, %v4634, %v4626
        %v4636 = vsel %vm4629, %v4632, %v4635
        %v4637 = vsel %vm4627, nan, %v4636
        %v4638 = vand.u32 2147483647, %v156
        %vm4639 = vcmp.le.f32.partialorder %v4638, 0.7853982
        %vm4640 = vcmp.lt.s32.totalorder %v156, 0
        %v4641 = vand.u32 %v156, 2139095040
        %v4642 = vshrl.u32 %v4641, 23
        %v4643 = vsub.s32 %v4642, 127
        %v4644 = vand.u32 2147483647, %v156
        %v4645 = vand.u32 %v4644, 8388607
        %v4646 = vor.u32 %v4645, 8388608
        %v4647 = vsub.s32 0, %v4646
        %v4648 = vadd.s32 %v4643, 1
        %vm4649 = vcmp.gt.s32.totalorder %v4648, 0
        %v4650 = vsel %vm4649, %v4648, 0
        %v4651 = vshrl.u32 %v4650, 5
        %v4652 = vand.u32 %v4650, 31
        %v4653 = vsub.s32 32, %v4652
        %v4654 = vshrl.u32 683565275, %v4653
        %v4655 = vshll.u32 683565275, %v4652
        %v4656 = vshrl.u32 2475754826, %v4653
        %v4657 = vor.u32 %v4655, %v4656
        %v4658 = vshll.u32 2475754826, %v4652
        %v4659 = vshrl.u32 2131351028, %v4653
        %v4660 = vor.u32 %v4658, %v4659
        %v4661 = vshll.u32 2131351028, %v4652
        %v4662 = vshrl.u32 2102212464, %v4653
        %v4663 = vor.u32 %v4661, %v4662
        %v4664 = vshll.u32 2102212464, %v4652
        %v4665 = vshrl.u32 920167782, %v4653
        %v4666 = vor.u32 %v4664, %v4665
        %v4667 = vshll.u32 920167782, %v4652
        %v4668 = vshrl.u32 1326507024, %v4653
        %v4669 = vor.u32 %v4667, %v4668
        %vm4670 = vcmp.lt.s32.totalorder %v4651, 1
        %vm4671 = vcmp.lt.s32.totalorder %v4651, 2
        %vm4672 = vcmp.lt.s32.totalorder %v4651, 3
        %vm4673 = vcmp.lt.s32.totalorder %v4651, 4
        %v4674 = vsel %vm4670, %v4654, %v4657
        %v4675 = vsel %vm4673, %v4663, 2102212464
        %v4676 = vsel %vm4672, %v4660, %v4675
        %v4677 = vsel %vm4671, %v4674, %v4676
        %v4678 = vsel %vm4670, %v4657, %v4660
        %v4679 = vsel %vm4673, %v4666, 920167782
        %v4680 = vsel %vm4672, %v4663, %v4679
        %v4681 = vsel %vm4671, %v4678, %v4680
        %v4682 = vsel %vm4670, %v4660, %v4663
        %v4683 = vsel %vm4673, %v4669, 1326507024
        %v4684 = vsel %vm4672, %v4666, %v4683
        %v4685 = vsel %vm4671, %v4682, %v4684
        %v4686 = vshll.u32 %v4646, 8
        %v4687 = vmul.u32.u64.compose %v4686, %v4685
        %v4688 = vextract.low.u32 %v4687
        %v4689 = vextract.high.u32 %v4687
        %v4690 = vmul.u32.u64.compose %v4686, %v4681
        %v4691 = vextract.low.u32 %v4690
        %v4692 = vextract.high.u32 %v4690
        %v4693 = vmul.u32 %v4686, %v4677
        %v4694 = vadd.s32 %v4689, %v4691
        %vm4695 = vc.u32 %v4689, %v4691
        %v4696 = vadd.s32 %v4692, 1
        %v4697 = vsel %vm4695, %v4696, %v4692
        %v4698 = vadd.s32 %v4693, %v4697
        %v4699 = vadd.s32 %v4698, 536870912
        %v4700 = vshrl.u32 %v4699, 30
        %v4701 = vshll.u32 %v4700, 30
        %v4702 = vsub.s32 %v4698, %v4701
        %vm4703 = vcmp.lt.s32.totalorder %v4702, 0
        %v4704 = vsub.s32 0, %v4702
        %v4705 = vsel %vm4703, %v4704, %v4702
        %v4706 = vclz %v4705
        %v4707 = vsub.s32 %v4706, 2
        %vm4708 = vcmp.gt.s32.totalorder 0, %v4707
        %v4709 = vsel %vm4708, 0, %v4707
        %v4710 = vsub.s32 32, %v4709
        %v4711 = vshll.u32 %v4702, %v4709
        %v4712 = vshrl.u32 %v4694, %v4710
        %v4713 = vor.u32 %v4711, %v4712
        %v4714 = vsub.s32 4294967266, %v4709
        %v4715 = vadd.s32 %v4714, 127
        %v4716 = vshll.u32 %v4715, 23
        %v4717 = vor.u32 4788187, %v4716
        %v4718 = vand.u32 2147483647, %v4717
        %v4720 = vcvt.s32.f32 %v4713
        %v4721 = vmul.f32 %v4720, %v4718
        %v4722 = vxor.u32 %v4721, 2147483648
        %v4723 = vsel %vm4640, %v4722, %v4721
        %v4724 = vsub.s32 4, %v4700
        %v4725 = vsel %vm4640, %v4724, %v4700
        %v4726 = vsel %vm4639, %v156, %v4723
        %v4727 = vsel %vm4639, 0, %v4725
        %v4728 = vcosq.f32.pop %v4726
        %v4729 = vsinq.f32.pop %v4726
        %vm4730 = vweird.f32 %v156
        %v4731 = vand.u32 %v4727, 3
        %vm4732 = vcmp.lt.s32.totalorder %v4731, 2
        %vm4733 = vcmp.eq.s32.totalorder %v4731, 0
        %v4734 = vxor.u32 %v4729, 2147483648
        %v4735 = vsel %vm4733, %v4728, %v4734
        %vm4736 = vcmp.eq.s32.totalorder %v4731, 2
        %v4737 = vxor.u32 %v4728, 2147483648
        %v4738 = vsel %vm4736, %v4737, %v4729
        %v4739 = vsel %vm4732, %v4735, %v4738
        %v4740 = vsel %vm4730, nan, %v4739
        %v4741 = vand.u32 2147483647, %v157
        %vm4742 = vcmp.le.f32.partialorder %v4741, 0.7853982
        %vm4743 = vcmp.lt.s32.totalorder %v157, 0
        %v4744 = vand.u32 %v157, 2139095040
        %v4745 = vshrl.u32 %v4744, 23
        %v4746 = vsub.s32 %v4745, 127
        %v4747 = vand.u32 2147483647, %v157
        %v4748 = vand.u32 %v4747, 8388607
        %v4749 = vor.u32 %v4748, 8388608
        %v4750 = vsub.s32 0, %v4749
        %v4751 = vadd.s32 %v4746, 1
        %vm4752 = vcmp.gt.s32.totalorder %v4751, 0
        %v4753 = vsel %vm4752, %v4751, 0
        %v4754 = vshrl.u32 %v4753, 5
        %v4755 = vand.u32 %v4753, 31
        %v4756 = vsub.s32 32, %v4755
        %v4757 = vshrl.u32 683565275, %v4756
        %v4758 = vshll.u32 683565275, %v4755
        %v4759 = vshrl.u32 2475754826, %v4756
        %v4760 = vor.u32 %v4758, %v4759
        %v4761 = vshll.u32 2475754826, %v4755
        %v4762 = vshrl.u32 2131351028, %v4756
        %v4763 = vor.u32 %v4761, %v4762
        %v4764 = vshll.u32 2131351028, %v4755
        %v4765 = vshrl.u32 2102212464, %v4756
        %v4766 = vor.u32 %v4764, %v4765
        %v4767 = vshll.u32 2102212464, %v4755
        %v4768 = vshrl.u32 920167782, %v4756
        %v4769 = vor.u32 %v4767, %v4768
        %v4770 = vshll.u32 920167782, %v4755
        %v4771 = vshrl.u32 1326507024, %v4756
        %v4772 = vor.u32 %v4770, %v4771
        %vm4773 = vcmp.lt.s32.totalorder %v4754, 1
        %vm4774 = vcmp.lt.s32.totalorder %v4754, 2
        %vm4775 = vcmp.lt.s32.totalorder %v4754, 3
        %vm4776 = vcmp.lt.s32.totalorder %v4754, 4
        %v4777 = vsel %vm4773, %v4757, %v4760
        %v4778 = vsel %vm4776, %v4766, 2102212464
        %v4779 = vsel %vm4775, %v4763, %v4778
        %v4780 = vsel %vm4774, %v4777, %v4779
        %v4781 = vsel %vm4773, %v4760, %v4763
        %v4782 = vsel %vm4776, %v4769, 920167782
        %v4783 = vsel %vm4775, %v4766, %v4782
        %v4784 = vsel %vm4774, %v4781, %v4783
        %v4785 = vsel %vm4773, %v4763, %v4766
        %v4786 = vsel %vm4776, %v4772, 1326507024
        %v4787 = vsel %vm4775, %v4769, %v4786
        %v4788 = vsel %vm4774, %v4785, %v4787
        %v4789 = vshll.u32 %v4749, 8
        %v4790 = vmul.u32.u64.compose %v4789, %v4788
        %v4791 = vextract.low.u32 %v4790
        %v4792 = vextract.high.u32 %v4790
        %v4793 = vmul.u32.u64.compose %v4789, %v4784
        %v4794 = vextract.low.u32 %v4793
        %v4795 = vextract.high.u32 %v4793
        %v4796 = vmul.u32 %v4789, %v4780
        %v4797 = vadd.s32 %v4792, %v4794
        %vm4798 = vc.u32 %v4792, %v4794
        %v4799 = vadd.s32 %v4795, 1
        %v4800 = vsel %vm4798, %v4799, %v4795
        %v4801 = vadd.s32 %v4796, %v4800
        %v4802 = vadd.s32 %v4801, 536870912
        %v4803 = vshrl.u32 %v4802, 30
        %v4804 = vshll.u32 %v4803, 30
        %v4805 = vsub.s32 %v4801, %v4804
        %vm4806 = vcmp.lt.s32.totalorder %v4805, 0
        %v4807 = vsub.s32 0, %v4805
        %v4808 = vsel %vm4806, %v4807, %v4805
        %v4809 = vclz %v4808
        %v4810 = vsub.s32 %v4809, 2
        %vm4811 = vcmp.gt.s32.totalorder 0, %v4810
        %v4812 = vsel %vm4811, 0, %v4810
        %v4813 = vsub.s32 32, %v4812
        %v4814 = vshll.u32 %v4805, %v4812
        %v4815 = vshrl.u32 %v4797, %v4813
        %v4816 = vor.u32 %v4814, %v4815
        %v4817 = vsub.s32 4294967266, %v4812
        %v4818 = vadd.s32 %v4817, 127
        %v4819 = vshll.u32 %v4818, 23
        %v4820 = vor.u32 4788187, %v4819
        %v4821 = vand.u32 2147483647, %v4820
        %v4823 = vcvt.s32.f32 %v4816
        %v4824 = vmul.f32 %v4823, %v4821
        %v4825 = vxor.u32 %v4824, 2147483648
        %v4826 = vsel %vm4743, %v4825, %v4824
        %v4827 = vsub.s32 4, %v4803
        %v4828 = vsel %vm4743, %v4827, %v4803
        %v4829 = vsel %vm4742, %v157, %v4826
        %v4830 = vsel %vm4742, 0, %v4828
        %v4831 = vcosq.f32.pop %v4829
        %v4832 = vsinq.f32.pop %v4829
        %vm4833 = vweird.f32 %v157
        %v4834 = vand.u32 %v4830, 3
        %vm4835 = vcmp.lt.s32.totalorder %v4834, 2
        %vm4836 = vcmp.eq.s32.totalorder %v4834, 0
        %v4837 = vxor.u32 %v4832, 2147483648
        %v4838 = vsel %vm4836, %v4831, %v4837
        %vm4839 = vcmp.eq.s32.totalorder %v4834, 2
        %v4840 = vxor.u32 %v4831, 2147483648
        %v4841 = vsel %vm4839, %v4840, %v4832
        %v4842 = vsel %vm4835, %v4838, %v4841
        %v4843 = vsel %vm4833, nan, %v4842
        %v4844 = vand.u32 2147483647, %v158
        %vm4845 = vcmp.le.f32.partialorder %v4844, 0.7853982
        %vm4846 = vcmp.lt.s32.totalorder %v158, 0
        %v4847 = vand.u32 %v158, 2139095040
        %v4848 = vshrl.u32 %v4847, 23
        %v4849 = vsub.s32 %v4848, 127
        %v4850 = vand.u32 2147483647, %v158
        %v4851 = vand.u32 %v4850, 8388607
        %v4852 = vor.u32 %v4851, 8388608
        %v4853 = vsub.s32 0, %v4852
        %v4854 = vadd.s32 %v4849, 1
        %vm4855 = vcmp.gt.s32.totalorder %v4854, 0
        %v4856 = vsel %vm4855, %v4854, 0
        %v4857 = vshrl.u32 %v4856, 5
        %v4858 = vand.u32 %v4856, 31
        %v4859 = vsub.s32 32, %v4858
        %v4860 = vshrl.u32 683565275, %v4859
        %v4861 = vshll.u32 683565275, %v4858
        %v4862 = vshrl.u32 2475754826, %v4859
        %v4863 = vor.u32 %v4861, %v4862
        %v4864 = vshll.u32 2475754826, %v4858
        %v4865 = vshrl.u32 2131351028, %v4859
        %v4866 = vor.u32 %v4864, %v4865
        %v4867 = vshll.u32 2131351028, %v4858
        %v4868 = vshrl.u32 2102212464, %v4859
        %v4869 = vor.u32 %v4867, %v4868
        %v4870 = vshll.u32 2102212464, %v4858
        %v4871 = vshrl.u32 920167782, %v4859
        %v4872 = vor.u32 %v4870, %v4871
        %v4873 = vshll.u32 920167782, %v4858
        %v4874 = vshrl.u32 1326507024, %v4859
        %v4875 = vor.u32 %v4873, %v4874
        %vm4876 = vcmp.lt.s32.totalorder %v4857, 1
        %vm4877 = vcmp.lt.s32.totalorder %v4857, 2
        %vm4878 = vcmp.lt.s32.totalorder %v4857, 3
        %vm4879 = vcmp.lt.s32.totalorder %v4857, 4
        %v4880 = vsel %vm4876, %v4860, %v4863
        %v4881 = vsel %vm4879, %v4869, 2102212464
        %v4882 = vsel %vm4878, %v4866, %v4881
        %v4883 = vsel %vm4877, %v4880, %v4882
        %v4884 = vsel %vm4876, %v4863, %v4866
        %v4885 = vsel %vm4879, %v4872, 920167782
        %v4886 = vsel %vm4878, %v4869, %v4885
        %v4887 = vsel %vm4877, %v4884, %v4886
        %v4888 = vsel %vm4876, %v4866, %v4869
        %v4889 = vsel %vm4879, %v4875, 1326507024
        %v4890 = vsel %vm4878, %v4872, %v4889
        %v4891 = vsel %vm4877, %v4888, %v4890
        %v4892 = vshll.u32 %v4852, 8
        %v4893 = vmul.u32.u64.compose %v4892, %v4891
        %v4894 = vextract.low.u32 %v4893
        %v4895 = vextract.high.u32 %v4893
        %v4896 = vmul.u32.u64.compose %v4892, %v4887
        %v4897 = vextract.low.u32 %v4896
        %v4898 = vextract.high.u32 %v4896
        %v4899 = vmul.u32 %v4892, %v4883
        %v4900 = vadd.s32 %v4895, %v4897
        %vm4901 = vc.u32 %v4895, %v4897
        %v4902 = vadd.s32 %v4898, 1
        %v4903 = vsel %vm4901, %v4902, %v4898
        %v4904 = vadd.s32 %v4899, %v4903
        %v4905 = vadd.s32 %v4904, 536870912
        %v4906 = vshrl.u32 %v4905, 30
        %v4907 = vshll.u32 %v4906, 30
        %v4908 = vsub.s32 %v4904, %v4907
        %vm4909 = vcmp.lt.s32.totalorder %v4908, 0
        %v4910 = vsub.s32 0, %v4908
        %v4911 = vsel %vm4909, %v4910, %v4908
        %v4912 = vclz %v4911
        %v4913 = vsub.s32 %v4912, 2
        %vm4914 = vcmp.gt.s32.totalorder 0, %v4913
        %v4915 = vsel %vm4914, 0, %v4913
        %v4916 = vsub.s32 32, %v4915
        %v4917 = vshll.u32 %v4908, %v4915
        %v4918 = vshrl.u32 %v4900, %v4916
        %v4919 = vor.u32 %v4917, %v4918
        %v4920 = vsub.s32 4294967266, %v4915
        %v4921 = vadd.s32 %v4920, 127
        %v4922 = vshll.u32 %v4921, 23
        %v4923 = vor.u32 4788187, %v4922
        %v4924 = vand.u32 2147483647, %v4923
        %v4926 = vcvt.s32.f32 %v4919
        %v4927 = vmul.f32 %v4926, %v4924
        %v4928 = vxor.u32 %v4927, 2147483648
        %v4929 = vsel %vm4846, %v4928, %v4927
        %v4930 = vsub.s32 4, %v4906
        %v4931 = vsel %vm4846, %v4930, %v4906
        %v4932 = vsel %vm4845, %v158, %v4929
        %v4933 = vsel %vm4845, 0, %v4931
        %v4934 = vcosq.f32.pop %v4932
        %v4935 = vsinq.f32.pop %v4932
        %vm4936 = vweird.f32 %v158
        %v4937 = vand.u32 %v4933, 3
        %vm4938 = vcmp.lt.s32.totalorder %v4937, 2
        %vm4939 = vcmp.eq.s32.totalorder %v4937, 0
        %v4940 = vxor.u32 %v4935, 2147483648
        %v4941 = vsel %vm4939, %v4934, %v4940
        %vm4942 = vcmp.eq.s32.totalorder %v4937, 2
        %v4943 = vxor.u32 %v4934, 2147483648
        %v4944 = vsel %vm4942, %v4943, %v4935
        %v4945 = vsel %vm4938, %v4941, %v4944
        %v4946 = vsel %vm4936, nan, %v4945
        %v4947 = vand.u32 2147483647, %v159
        %vm4948 = vcmp.le.f32.partialorder %v4947, 0.7853982
        %vm4949 = vcmp.lt.s32.totalorder %v159, 0
        %v4950 = vand.u32 %v159, 2139095040
        %v4951 = vshrl.u32 %v4950, 23
        %v4952 = vsub.s32 %v4951, 127
        %v4953 = vand.u32 2147483647, %v159
        %v4954 = vand.u32 %v4953, 8388607
        %v4955 = vor.u32 %v4954, 8388608
        %v4956 = vsub.s32 0, %v4955
        %v4957 = vadd.s32 %v4952, 1
        %vm4958 = vcmp.gt.s32.totalorder %v4957, 0
        %v4959 = vsel %vm4958, %v4957, 0
        %v4960 = vshrl.u32 %v4959, 5
        %v4961 = vand.u32 %v4959, 31
        %v4962 = vsub.s32 32, %v4961
        %v4963 = vshrl.u32 683565275, %v4962
        %v4964 = vshll.u32 683565275, %v4961
        %v4965 = vshrl.u32 2475754826, %v4962
        %v4966 = vor.u32 %v4964, %v4965
        %v4967 = vshll.u32 2475754826, %v4961
        %v4968 = vshrl.u32 2131351028, %v4962
        %v4969 = vor.u32 %v4967, %v4968
        %v4970 = vshll.u32 2131351028, %v4961
        %v4971 = vshrl.u32 2102212464, %v4962
        %v4972 = vor.u32 %v4970, %v4971
        %v4973 = vshll.u32 2102212464, %v4961
        %v4974 = vshrl.u32 920167782, %v4962
        %v4975 = vor.u32 %v4973, %v4974
        %v4976 = vshll.u32 920167782, %v4961
        %v4977 = vshrl.u32 1326507024, %v4962
        %v4978 = vor.u32 %v4976, %v4977
        %vm4979 = vcmp.lt.s32.totalorder %v4960, 1
        %vm4980 = vcmp.lt.s32.totalorder %v4960, 2
        %vm4981 = vcmp.lt.s32.totalorder %v4960, 3
        %vm4982 = vcmp.lt.s32.totalorder %v4960, 4
        %v4983 = vsel %vm4979, %v4963, %v4966
        %v4984 = vsel %vm4982, %v4972, 2102212464
        %v4985 = vsel %vm4981, %v4969, %v4984
        %v4986 = vsel %vm4980, %v4983, %v4985
        %v4987 = vsel %vm4979, %v4966, %v4969
        %v4988 = vsel %vm4982, %v4975, 920167782
        %v4989 = vsel %vm4981, %v4972, %v4988
        %v4990 = vsel %vm4980, %v4987, %v4989
        %v4991 = vsel %vm4979, %v4969, %v4972
        %v4992 = vsel %vm4982, %v4978, 1326507024
        %v4993 = vsel %vm4981, %v4975, %v4992
        %v4994 = vsel %vm4980, %v4991, %v4993
        %v4995 = vshll.u32 %v4955, 8
        %v4996 = vmul.u32.u64.compose %v4995, %v4994
        %v4997 = vextract.low.u32 %v4996
        %v4998 = vextract.high.u32 %v4996
        %v4999 = vmul.u32.u64.compose %v4995, %v4990
        %v5000 = vextract.low.u32 %v4999
        %v5001 = vextract.high.u32 %v4999
        %v5002 = vmul.u32 %v4995, %v4986
        %v5003 = vadd.s32 %v4998, %v5000
        %vm5004 = vc.u32 %v4998, %v5000
        %v5005 = vadd.s32 %v5001, 1
        %v5006 = vsel %vm5004, %v5005, %v5001
        %v5007 = vadd.s32 %v5002, %v5006
        %v5008 = vadd.s32 %v5007, 536870912
        %v5009 = vshrl.u32 %v5008, 30
        %v5010 = vshll.u32 %v5009, 30
        %v5011 = vsub.s32 %v5007, %v5010
        %vm5012 = vcmp.lt.s32.totalorder %v5011, 0
        %v5013 = vsub.s32 0, %v5011
        %v5014 = vsel %vm5012, %v5013, %v5011
        %v5015 = vclz %v5014
        %v5016 = vsub.s32 %v5015, 2
        %vm5017 = vcmp.gt.s32.totalorder 0, %v5016
        %v5018 = vsel %vm5017, 0, %v5016
        %v5019 = vsub.s32 32, %v5018
        %v5020 = vshll.u32 %v5011, %v5018
        %v5021 = vshrl.u32 %v5003, %v5019
        %v5022 = vor.u32 %v5020, %v5021
        %v5023 = vsub.s32 4294967266, %v5018
        %v5024 = vadd.s32 %v5023, 127
        %v5025 = vshll.u32 %v5024, 23
        %v5026 = vor.u32 4788187, %v5025
        %v5027 = vand.u32 2147483647, %v5026
        %v5029 = vcvt.s32.f32 %v5022
        %v5030 = vmul.f32 %v5029, %v5027
        %v5031 = vxor.u32 %v5030, 2147483648
        %v5032 = vsel %vm4949, %v5031, %v5030
        %v5033 = vsub.s32 4, %v5009
        %v5034 = vsel %vm4949, %v5033, %v5009
        %v5035 = vsel %vm4948, %v159, %v5032
        %v5036 = vsel %vm4948, 0, %v5034
        %v5037 = vcosq.f32.pop %v5035
        %v5038 = vsinq.f32.pop %v5035
        %vm5039 = vweird.f32 %v159
        %v5040 = vand.u32 %v5036, 3
        %vm5041 = vcmp.lt.s32.totalorder %v5040, 2
        %vm5042 = vcmp.eq.s32.totalorder %v5040, 0
        %v5043 = vxor.u32 %v5038, 2147483648
        %v5044 = vsel %vm5042, %v5037, %v5043
        %vm5045 = vcmp.eq.s32.totalorder %v5040, 2
        %v5046 = vxor.u32 %v5037, 2147483648
        %v5047 = vsel %vm5045, %v5046, %v5038
        %v5048 = vsel %vm5041, %v5044, %v5047
        %v5049 = vsel %vm5039, nan, %v5048
        %v5050 = vand.u32 2147483647, %v160
        %vm5051 = vcmp.le.f32.partialorder %v5050, 0.7853982
        %vm5052 = vcmp.lt.s32.totalorder %v160, 0
        %v5053 = vand.u32 %v160, 2139095040
        %v5054 = vshrl.u32 %v5053, 23
        %v5055 = vsub.s32 %v5054, 127
        %v5056 = vand.u32 2147483647, %v160
        %v5057 = vand.u32 %v5056, 8388607
        %v5058 = vor.u32 %v5057, 8388608
        %v5059 = vsub.s32 0, %v5058
        %v5060 = vadd.s32 %v5055, 1
        %vm5061 = vcmp.gt.s32.totalorder %v5060, 0
        %v5062 = vsel %vm5061, %v5060, 0
        %v5063 = vshrl.u32 %v5062, 5
        %v5064 = vand.u32 %v5062, 31
        %v5065 = vsub.s32 32, %v5064
        %v5066 = vshrl.u32 683565275, %v5065
        %v5067 = vshll.u32 683565275, %v5064
        %v5068 = vshrl.u32 2475754826, %v5065
        %v5069 = vor.u32 %v5067, %v5068
        %v5070 = vshll.u32 2475754826, %v5064
        %v5071 = vshrl.u32 2131351028, %v5065
        %v5072 = vor.u32 %v5070, %v5071
        %v5073 = vshll.u32 2131351028, %v5064
        %v5074 = vshrl.u32 2102212464, %v5065
        %v5075 = vor.u32 %v5073, %v5074
        %v5076 = vshll.u32 2102212464, %v5064
        %v5077 = vshrl.u32 920167782, %v5065
        %v5078 = vor.u32 %v5076, %v5077
        %v5079 = vshll.u32 920167782, %v5064
        %v5080 = vshrl.u32 1326507024, %v5065
        %v5081 = vor.u32 %v5079, %v5080
        %vm5082 = vcmp.lt.s32.totalorder %v5063, 1
        %vm5083 = vcmp.lt.s32.totalorder %v5063, 2
        %vm5084 = vcmp.lt.s32.totalorder %v5063, 3
        %vm5085 = vcmp.lt.s32.totalorder %v5063, 4
        %v5086 = vsel %vm5082, %v5066, %v5069
        %v5087 = vsel %vm5085, %v5075, 2102212464
        %v5088 = vsel %vm5084, %v5072, %v5087
        %v5089 = vsel %vm5083, %v5086, %v5088
        %v5090 = vsel %vm5082, %v5069, %v5072
        %v5091 = vsel %vm5085, %v5078, 920167782
        %v5092 = vsel %vm5084, %v5075, %v5091
        %v5093 = vsel %vm5083, %v5090, %v5092
        %v5094 = vsel %vm5082, %v5072, %v5075
        %v5095 = vsel %vm5085, %v5081, 1326507024
        %v5096 = vsel %vm5084, %v5078, %v5095
        %v5097 = vsel %vm5083, %v5094, %v5096
        %v5098 = vshll.u32 %v5058, 8
        %v5099 = vmul.u32.u64.compose %v5098, %v5097
        %v5100 = vextract.low.u32 %v5099
        %v5101 = vextract.high.u32 %v5099
        %v5102 = vmul.u32.u64.compose %v5098, %v5093
        %v5103 = vextract.low.u32 %v5102
        %v5104 = vextract.high.u32 %v5102
        %v5105 = vmul.u32 %v5098, %v5089
        %v5106 = vadd.s32 %v5101, %v5103
        %vm5107 = vc.u32 %v5101, %v5103
        %v5108 = vadd.s32 %v5104, 1
        %v5109 = vsel %vm5107, %v5108, %v5104
        %v5110 = vadd.s32 %v5105, %v5109
        %v5111 = vadd.s32 %v5110, 536870912
        %v5112 = vshrl.u32 %v5111, 30
        %v5113 = vshll.u32 %v5112, 30
        %v5114 = vsub.s32 %v5110, %v5113
        %vm5115 = vcmp.lt.s32.totalorder %v5114, 0
        %v5116 = vsub.s32 0, %v5114
        %v5117 = vsel %vm5115, %v5116, %v5114
        %v5118 = vclz %v5117
        %v5119 = vsub.s32 %v5118, 2
        %vm5120 = vcmp.gt.s32.totalorder 0, %v5119
        %v5121 = vsel %vm5120, 0, %v5119
        %v5122 = vsub.s32 32, %v5121
        %v5123 = vshll.u32 %v5114, %v5121
        %v5124 = vshrl.u32 %v5106, %v5122
        %v5125 = vor.u32 %v5123, %v5124
        %v5126 = vsub.s32 4294967266, %v5121
        %v5127 = vadd.s32 %v5126, 127
        %v5128 = vshll.u32 %v5127, 23
        %v5129 = vor.u32 4788187, %v5128
        %v5130 = vand.u32 2147483647, %v5129
        %v5132 = vcvt.s32.f32 %v5125
        %v5133 = vmul.f32 %v5132, %v5130
        %v5134 = vxor.u32 %v5133, 2147483648
        %v5135 = vsel %vm5052, %v5134, %v5133
        %v5136 = vsub.s32 4, %v5112
        %v5137 = vsel %vm5052, %v5136, %v5112
        %v5138 = vsel %vm5051, %v160, %v5135
        %v5139 = vsel %vm5051, 0, %v5137
        %v5140 = vcosq.f32.pop %v5138
        %v5141 = vsinq.f32.pop %v5138
        %vm5142 = vweird.f32 %v160
        %v5143 = vand.u32 %v5139, 3
        %vm5144 = vcmp.lt.s32.totalorder %v5143, 2
        %vm5145 = vcmp.eq.s32.totalorder %v5143, 0
        %v5146 = vxor.u32 %v5141, 2147483648
        %v5147 = vsel %vm5145, %v5140, %v5146
        %vm5148 = vcmp.eq.s32.totalorder %v5143, 2
        %v5149 = vxor.u32 %v5140, 2147483648
        %v5150 = vsel %vm5148, %v5149, %v5141
        %v5151 = vsel %vm5144, %v5147, %v5150
        %v5152 = vsel %vm5142, nan, %v5151
        %v5153 = vand.u32 2147483647, %v161
        %vm5154 = vcmp.le.f32.partialorder %v5153, 0.7853982
        %vm5155 = vcmp.lt.s32.totalorder %v161, 0
        %v5156 = vand.u32 %v161, 2139095040
        %v5157 = vshrl.u32 %v5156, 23
        %v5158 = vsub.s32 %v5157, 127
        %v5159 = vand.u32 2147483647, %v161
        %v5160 = vand.u32 %v5159, 8388607
        %v5161 = vor.u32 %v5160, 8388608
        %v5162 = vsub.s32 0, %v5161
        %v5163 = vadd.s32 %v5158, 1
        %vm5164 = vcmp.gt.s32.totalorder %v5163, 0
        %v5165 = vsel %vm5164, %v5163, 0
        %v5166 = vshrl.u32 %v5165, 5
        %v5167 = vand.u32 %v5165, 31
        %v5168 = vsub.s32 32, %v5167
        %v5169 = vshrl.u32 683565275, %v5168
        %v5170 = vshll.u32 683565275, %v5167
        %v5171 = vshrl.u32 2475754826, %v5168
        %v5172 = vor.u32 %v5170, %v5171
        %v5173 = vshll.u32 2475754826, %v5167
        %v5174 = vshrl.u32 2131351028, %v5168
        %v5175 = vor.u32 %v5173, %v5174
        %v5176 = vshll.u32 2131351028, %v5167
        %v5177 = vshrl.u32 2102212464, %v5168
        %v5178 = vor.u32 %v5176, %v5177
        %v5179 = vshll.u32 2102212464, %v5167
        %v5180 = vshrl.u32 920167782, %v5168
        %v5181 = vor.u32 %v5179, %v5180
        %v5182 = vshll.u32 920167782, %v5167
        %v5183 = vshrl.u32 1326507024, %v5168
        %v5184 = vor.u32 %v5182, %v5183
        %vm5185 = vcmp.lt.s32.totalorder %v5166, 1
        %vm5186 = vcmp.lt.s32.totalorder %v5166, 2
        %vm5187 = vcmp.lt.s32.totalorder %v5166, 3
        %vm5188 = vcmp.lt.s32.totalorder %v5166, 4
        %v5189 = vsel %vm5185, %v5169, %v5172
        %v5190 = vsel %vm5188, %v5178, 2102212464
        %v5191 = vsel %vm5187, %v5175, %v5190
        %v5192 = vsel %vm5186, %v5189, %v5191
        %v5193 = vsel %vm5185, %v5172, %v5175
        %v5194 = vsel %vm5188, %v5181, 920167782
        %v5195 = vsel %vm5187, %v5178, %v5194
        %v5196 = vsel %vm5186, %v5193, %v5195
        %v5197 = vsel %vm5185, %v5175, %v5178
        %v5198 = vsel %vm5188, %v5184, 1326507024
        %v5199 = vsel %vm5187, %v5181, %v5198
        %v5200 = vsel %vm5186, %v5197, %v5199
        %v5201 = vshll.u32 %v5161, 8
        %v5202 = vmul.u32.u64.compose %v5201, %v5200
        %v5203 = vextract.low.u32 %v5202
        %v5204 = vextract.high.u32 %v5202
        %v5205 = vmul.u32.u64.compose %v5201, %v5196
        %v5206 = vextract.low.u32 %v5205
        %v5207 = vextract.high.u32 %v5205
        %v5208 = vmul.u32 %v5201, %v5192
        %v5209 = vadd.s32 %v5204, %v5206
        %vm5210 = vc.u32 %v5204, %v5206
        %v5211 = vadd.s32 %v5207, 1
        %v5212 = vsel %vm5210, %v5211, %v5207
        %v5213 = vadd.s32 %v5208, %v5212
        %v5214 = vadd.s32 %v5213, 536870912
        %v5215 = vshrl.u32 %v5214, 30
        %v5216 = vshll.u32 %v5215, 30
        %v5217 = vsub.s32 %v5213, %v5216
        %vm5218 = vcmp.lt.s32.totalorder %v5217, 0
        %v5219 = vsub.s32 0, %v5217
        %v5220 = vsel %vm5218, %v5219, %v5217
        %v5221 = vclz %v5220
        %v5222 = vsub.s32 %v5221, 2
        %vm5223 = vcmp.gt.s32.totalorder 0, %v5222
        %v5224 = vsel %vm5223, 0, %v5222
        %v5225 = vsub.s32 32, %v5224
        %v5226 = vshll.u32 %v5217, %v5224
        %v5227 = vshrl.u32 %v5209, %v5225
        %v5228 = vor.u32 %v5226, %v5227
        %v5229 = vsub.s32 4294967266, %v5224
        %v5230 = vadd.s32 %v5229, 127
        %v5231 = vshll.u32 %v5230, 23
        %v5232 = vor.u32 4788187, %v5231
        %v5233 = vand.u32 2147483647, %v5232
        %v5235 = vcvt.s32.f32 %v5228
        %v5236 = vmul.f32 %v5235, %v5233
        %v5237 = vxor.u32 %v5236, 2147483648
        %v5238 = vsel %vm5155, %v5237, %v5236
        %v5239 = vsub.s32 4, %v5215
        %v5240 = vsel %vm5155, %v5239, %v5215
        %v5241 = vsel %vm5154, %v161, %v5238
        %v5242 = vsel %vm5154, 0, %v5240
        %v5243 = vcosq.f32.pop %v5241
        %v5244 = vsinq.f32.pop %v5241
        %vm5245 = vweird.f32 %v161
        %v5246 = vand.u32 %v5242, 3
        %vm5247 = vcmp.lt.s32.totalorder %v5246, 2
        %vm5248 = vcmp.eq.s32.totalorder %v5246, 0
        %v5249 = vxor.u32 %v5244, 2147483648
        %v5250 = vsel %vm5248, %v5243, %v5249
        %vm5251 = vcmp.eq.s32.totalorder %v5246, 2
        %v5252 = vxor.u32 %v5243, 2147483648
        %v5253 = vsel %vm5251, %v5252, %v5244
        %v5254 = vsel %vm5247, %v5250, %v5253
        %v5255 = vsel %vm5245, nan, %v5254
        %v5256 = vand.u32 2147483647, %v162
        %vm5257 = vcmp.le.f32.partialorder %v5256, 0.7853982
        %vm5258 = vcmp.lt.s32.totalorder %v162, 0
        %v5259 = vand.u32 %v162, 2139095040
        %v5260 = vshrl.u32 %v5259, 23
        %v5261 = vsub.s32 %v5260, 127
        %v5262 = vand.u32 2147483647, %v162
        %v5263 = vand.u32 %v5262, 8388607
        %v5264 = vor.u32 %v5263, 8388608
        %v5265 = vsub.s32 0, %v5264
        %v5266 = vadd.s32 %v5261, 1
        %vm5267 = vcmp.gt.s32.totalorder %v5266, 0
        %v5268 = vsel %vm5267, %v5266, 0
        %v5269 = vshrl.u32 %v5268, 5
        %v5270 = vand.u32 %v5268, 31
        %v5271 = vsub.s32 32, %v5270
        %v5272 = vshrl.u32 683565275, %v5271
        %v5273 = vshll.u32 683565275, %v5270
        %v5274 = vshrl.u32 2475754826, %v5271
        %v5275 = vor.u32 %v5273, %v5274
        %v5276 = vshll.u32 2475754826, %v5270
        %v5277 = vshrl.u32 2131351028, %v5271
        %v5278 = vor.u32 %v5276, %v5277
        %v5279 = vshll.u32 2131351028, %v5270
        %v5280 = vshrl.u32 2102212464, %v5271
        %v5281 = vor.u32 %v5279, %v5280
        %v5282 = vshll.u32 2102212464, %v5270
        %v5283 = vshrl.u32 920167782, %v5271
        %v5284 = vor.u32 %v5282, %v5283
        %v5285 = vshll.u32 920167782, %v5270
        %v5286 = vshrl.u32 1326507024, %v5271
        %v5287 = vor.u32 %v5285, %v5286
        %vm5288 = vcmp.lt.s32.totalorder %v5269, 1
        %vm5289 = vcmp.lt.s32.totalorder %v5269, 2
        %vm5290 = vcmp.lt.s32.totalorder %v5269, 3
        %vm5291 = vcmp.lt.s32.totalorder %v5269, 4
        %v5292 = vsel %vm5288, %v5272, %v5275
        %v5293 = vsel %vm5291, %v5281, 2102212464
        %v5294 = vsel %vm5290, %v5278, %v5293
        %v5295 = vsel %vm5289, %v5292, %v5294
        %v5296 = vsel %vm5288, %v5275, %v5278
        %v5297 = vsel %vm5291, %v5284, 920167782
        %v5298 = vsel %vm5290, %v5281, %v5297
        %v5299 = vsel %vm5289, %v5296, %v5298
        %v5300 = vsel %vm5288, %v5278, %v5281
        %v5301 = vsel %vm5291, %v5287, 1326507024
        %v5302 = vsel %vm5290, %v5284, %v5301
        %v5303 = vsel %vm5289, %v5300, %v5302
        %v5304 = vshll.u32 %v5264, 8
        %v5305 = vmul.u32.u64.compose %v5304, %v5303
        %v5306 = vextract.low.u32 %v5305
        %v5307 = vextract.high.u32 %v5305
        %v5308 = vmul.u32.u64.compose %v5304, %v5299
        %v5309 = vextract.low.u32 %v5308
        %v5310 = vextract.high.u32 %v5308
        %v5311 = vmul.u32 %v5304, %v5295
        %v5312 = vadd.s32 %v5307, %v5309
        %vm5313 = vc.u32 %v5307, %v5309
        %v5314 = vadd.s32 %v5310, 1
        %v5315 = vsel %vm5313, %v5314, %v5310
        %v5316 = vadd.s32 %v5311, %v5315
        %v5317 = vadd.s32 %v5316, 536870912
        %v5318 = vshrl.u32 %v5317, 30
        %v5319 = vshll.u32 %v5318, 30
        %v5320 = vsub.s32 %v5316, %v5319
        %vm5321 = vcmp.lt.s32.totalorder %v5320, 0
        %v5322 = vsub.s32 0, %v5320
        %v5323 = vsel %vm5321, %v5322, %v5320
        %v5324 = vclz %v5323
        %v5325 = vsub.s32 %v5324, 2
        %vm5326 = vcmp.gt.s32.totalorder 0, %v5325
        %v5327 = vsel %vm5326, 0, %v5325
        %v5328 = vsub.s32 32, %v5327
        %v5329 = vshll.u32 %v5320, %v5327
        %v5330 = vshrl.u32 %v5312, %v5328
        %v5331 = vor.u32 %v5329, %v5330
        %v5332 = vsub.s32 4294967266, %v5327
        %v5333 = vadd.s32 %v5332, 127
        %v5334 = vshll.u32 %v5333, 23
        %v5335 = vor.u32 4788187, %v5334
        %v5336 = vand.u32 2147483647, %v5335
        %v5338 = vcvt.s32.f32 %v5331
        %v5339 = vmul.f32 %v5338, %v5336
        %v5340 = vxor.u32 %v5339, 2147483648
        %v5341 = vsel %vm5258, %v5340, %v5339
        %v5342 = vsub.s32 4, %v5318
        %v5343 = vsel %vm5258, %v5342, %v5318
        %v5344 = vsel %vm5257, %v162, %v5341
        %v5345 = vsel %vm5257, 0, %v5343
        %v5346 = vcosq.f32.pop %v5344
        %v5347 = vsinq.f32.pop %v5344
        %vm5348 = vweird.f32 %v162
        %v5349 = vand.u32 %v5345, 3
        %vm5350 = vcmp.lt.s32.totalorder %v5349, 2
        %vm5351 = vcmp.eq.s32.totalorder %v5349, 0
        %v5352 = vxor.u32 %v5347, 2147483648
        %v5353 = vsel %vm5351, %v5346, %v5352
        %vm5354 = vcmp.eq.s32.totalorder %v5349, 2
        %v5355 = vxor.u32 %v5346, 2147483648
        %v5356 = vsel %vm5354, %v5355, %v5347
        %v5357 = vsel %vm5350, %v5353, %v5356
        %v5358 = vsel %vm5348, nan, %v5357
        %v5359 = vand.u32 2147483647, %v163
        %vm5360 = vcmp.le.f32.partialorder %v5359, 0.7853982
        %vm5361 = vcmp.lt.s32.totalorder %v163, 0
        %v5362 = vand.u32 %v163, 2139095040
        %v5363 = vshrl.u32 %v5362, 23
        %v5364 = vsub.s32 %v5363, 127
        %v5365 = vand.u32 2147483647, %v163
        %v5366 = vand.u32 %v5365, 8388607
        %v5367 = vor.u32 %v5366, 8388608
        %v5368 = vsub.s32 0, %v5367
        %v5369 = vadd.s32 %v5364, 1
        %vm5370 = vcmp.gt.s32.totalorder %v5369, 0
        %v5371 = vsel %vm5370, %v5369, 0
        %v5372 = vshrl.u32 %v5371, 5
        %v5373 = vand.u32 %v5371, 31
        %v5374 = vsub.s32 32, %v5373
        %v5375 = vshrl.u32 683565275, %v5374
        %v5376 = vshll.u32 683565275, %v5373
        %v5377 = vshrl.u32 2475754826, %v5374
        %v5378 = vor.u32 %v5376, %v5377
        %v5379 = vshll.u32 2475754826, %v5373
        %v5380 = vshrl.u32 2131351028, %v5374
        %v5381 = vor.u32 %v5379, %v5380
        %v5382 = vshll.u32 2131351028, %v5373
        %v5383 = vshrl.u32 2102212464, %v5374
        %v5384 = vor.u32 %v5382, %v5383
        %v5385 = vshll.u32 2102212464, %v5373
        %v5386 = vshrl.u32 920167782, %v5374
        %v5387 = vor.u32 %v5385, %v5386
        %v5388 = vshll.u32 920167782, %v5373
        %v5389 = vshrl.u32 1326507024, %v5374
        %v5390 = vor.u32 %v5388, %v5389
        %vm5391 = vcmp.lt.s32.totalorder %v5372, 1
        %vm5392 = vcmp.lt.s32.totalorder %v5372, 2
        %vm5393 = vcmp.lt.s32.totalorder %v5372, 3
        %vm5394 = vcmp.lt.s32.totalorder %v5372, 4
        %v5395 = vsel %vm5391, %v5375, %v5378
        %v5396 = vsel %vm5394, %v5384, 2102212464
        %v5397 = vsel %vm5393, %v5381, %v5396
        %v5398 = vsel %vm5392, %v5395, %v5397
        %v5399 = vsel %vm5391, %v5378, %v5381
        %v5400 = vsel %vm5394, %v5387, 920167782
        %v5401 = vsel %vm5393, %v5384, %v5400
        %v5402 = vsel %vm5392, %v5399, %v5401
        %v5403 = vsel %vm5391, %v5381, %v5384
        %v5404 = vsel %vm5394, %v5390, 1326507024
        %v5405 = vsel %vm5393, %v5387, %v5404
        %v5406 = vsel %vm5392, %v5403, %v5405
        %v5407 = vshll.u32 %v5367, 8
        %v5408 = vmul.u32.u64.compose %v5407, %v5406
        %v5409 = vextract.low.u32 %v5408
        %v5410 = vextract.high.u32 %v5408
        %v5411 = vmul.u32.u64.compose %v5407, %v5402
        %v5412 = vextract.low.u32 %v5411
        %v5413 = vextract.high.u32 %v5411
        %v5414 = vmul.u32 %v5407, %v5398
        %v5415 = vadd.s32 %v5410, %v5412
        %vm5416 = vc.u32 %v5410, %v5412
        %v5417 = vadd.s32 %v5413, 1
        %v5418 = vsel %vm5416, %v5417, %v5413
        %v5419 = vadd.s32 %v5414, %v5418
        %v5420 = vadd.s32 %v5419, 536870912
        %v5421 = vshrl.u32 %v5420, 30
        %v5422 = vshll.u32 %v5421, 30
        %v5423 = vsub.s32 %v5419, %v5422
        %vm5424 = vcmp.lt.s32.totalorder %v5423, 0
        %v5425 = vsub.s32 0, %v5423
        %v5426 = vsel %vm5424, %v5425, %v5423
        %v5427 = vclz %v5426
        %v5428 = vsub.s32 %v5427, 2
        %vm5429 = vcmp.gt.s32.totalorder 0, %v5428
        %v5430 = vsel %vm5429, 0, %v5428
        %v5431 = vsub.s32 32, %v5430
        %v5432 = vshll.u32 %v5423, %v5430
        %v5433 = vshrl.u32 %v5415, %v5431
        %v5434 = vor.u32 %v5432, %v5433
        %v5435 = vsub.s32 4294967266, %v5430
        %v5436 = vadd.s32 %v5435, 127
        %v5437 = vshll.u32 %v5436, 23
        %v5438 = vor.u32 4788187, %v5437
        %v5439 = vand.u32 2147483647, %v5438
        %v5441 = vcvt.s32.f32 %v5434
        %v5442 = vmul.f32 %v5441, %v5439
        %v5443 = vxor.u32 %v5442, 2147483648
        %v5444 = vsel %vm5361, %v5443, %v5442
        %v5445 = vsub.s32 4, %v5421
        %v5446 = vsel %vm5361, %v5445, %v5421
        %v5447 = vsel %vm5360, %v163, %v5444
        %v5448 = vsel %vm5360, 0, %v5446
        %v5449 = vcosq.f32.pop %v5447
        %v5450 = vsinq.f32.pop %v5447
        %vm5451 = vweird.f32 %v163
        %v5452 = vand.u32 %v5448, 3
        %vm5453 = vcmp.lt.s32.totalorder %v5452, 2
        %vm5454 = vcmp.eq.s32.totalorder %v5452, 0
        %v5455 = vxor.u32 %v5450, 2147483648
        %v5456 = vsel %vm5454, %v5449, %v5455
        %vm5457 = vcmp.eq.s32.totalorder %v5452, 2
        %v5458 = vxor.u32 %v5449, 2147483648
        %v5459 = vsel %vm5457, %v5458, %v5450
        %v5460 = vsel %vm5453, %v5456, %v5459
        %v5461 = vsel %vm5451, nan, %v5460
        %v5462 = vand.u32 2147483647, %v164
        %vm5463 = vcmp.le.f32.partialorder %v5462, 0.7853982
        %vm5464 = vcmp.lt.s32.totalorder %v164, 0
        %v5465 = vand.u32 %v164, 2139095040
        %v5466 = vshrl.u32 %v5465, 23
        %v5467 = vsub.s32 %v5466, 127
        %v5468 = vand.u32 2147483647, %v164
        %v5469 = vand.u32 %v5468, 8388607
        %v5470 = vor.u32 %v5469, 8388608
        %v5471 = vsub.s32 0, %v5470
        %v5472 = vadd.s32 %v5467, 1
        %vm5473 = vcmp.gt.s32.totalorder %v5472, 0
        %v5474 = vsel %vm5473, %v5472, 0
        %v5475 = vshrl.u32 %v5474, 5
        %v5476 = vand.u32 %v5474, 31
        %v5477 = vsub.s32 32, %v5476
        %v5478 = vshrl.u32 683565275, %v5477
        %v5479 = vshll.u32 683565275, %v5476
        %v5480 = vshrl.u32 2475754826, %v5477
        %v5481 = vor.u32 %v5479, %v5480
        %v5482 = vshll.u32 2475754826, %v5476
        %v5483 = vshrl.u32 2131351028, %v5477
        %v5484 = vor.u32 %v5482, %v5483
        %v5485 = vshll.u32 2131351028, %v5476
        %v5486 = vshrl.u32 2102212464, %v5477
        %v5487 = vor.u32 %v5485, %v5486
        %v5488 = vshll.u32 2102212464, %v5476
        %v5489 = vshrl.u32 920167782, %v5477
        %v5490 = vor.u32 %v5488, %v5489
        %v5491 = vshll.u32 920167782, %v5476
        %v5492 = vshrl.u32 1326507024, %v5477
        %v5493 = vor.u32 %v5491, %v5492
        %vm5494 = vcmp.lt.s32.totalorder %v5475, 1
        %vm5495 = vcmp.lt.s32.totalorder %v5475, 2
        %vm5496 = vcmp.lt.s32.totalorder %v5475, 3
        %vm5497 = vcmp.lt.s32.totalorder %v5475, 4
        %v5498 = vsel %vm5494, %v5478, %v5481
        %v5499 = vsel %vm5497, %v5487, 2102212464
        %v5500 = vsel %vm5496, %v5484, %v5499
        %v5501 = vsel %vm5495, %v5498, %v5500
        %v5502 = vsel %vm5494, %v5481, %v5484
        %v5503 = vsel %vm5497, %v5490, 920167782
        %v5504 = vsel %vm5496, %v5487, %v5503
        %v5505 = vsel %vm5495, %v5502, %v5504
        %v5506 = vsel %vm5494, %v5484, %v5487
        %v5507 = vsel %vm5497, %v5493, 1326507024
        %v5508 = vsel %vm5496, %v5490, %v5507
        %v5509 = vsel %vm5495, %v5506, %v5508
        %v5510 = vshll.u32 %v5470, 8
        %v5511 = vmul.u32.u64.compose %v5510, %v5509
        %v5512 = vextract.low.u32 %v5511
        %v5513 = vextract.high.u32 %v5511
        %v5514 = vmul.u32.u64.compose %v5510, %v5505
        %v5515 = vextract.low.u32 %v5514
        %v5516 = vextract.high.u32 %v5514
        %v5517 = vmul.u32 %v5510, %v5501
        %v5518 = vadd.s32 %v5513, %v5515
        %vm5519 = vc.u32 %v5513, %v5515
        %v5520 = vadd.s32 %v5516, 1
        %v5521 = vsel %vm5519, %v5520, %v5516
        %v5522 = vadd.s32 %v5517, %v5521
        %v5523 = vadd.s32 %v5522, 536870912
        %v5524 = vshrl.u32 %v5523, 30
        %v5525 = vshll.u32 %v5524, 30
        %v5526 = vsub.s32 %v5522, %v5525
        %vm5527 = vcmp.lt.s32.totalorder %v5526, 0
        %v5528 = vsub.s32 0, %v5526
        %v5529 = vsel %vm5527, %v5528, %v5526
        %v5530 = vclz %v5529
        %v5531 = vsub.s32 %v5530, 2
        %vm5532 = vcmp.gt.s32.totalorder 0, %v5531
        %v5533 = vsel %vm5532, 0, %v5531
        %v5534 = vsub.s32 32, %v5533
        %v5535 = vshll.u32 %v5526, %v5533
        %v5536 = vshrl.u32 %v5518, %v5534
        %v5537 = vor.u32 %v5535, %v5536
        %v5538 = vsub.s32 4294967266, %v5533
        %v5539 = vadd.s32 %v5538, 127
        %v5540 = vshll.u32 %v5539, 23
        %v5541 = vor.u32 4788187, %v5540
        %v5542 = vand.u32 2147483647, %v5541
        %v5544 = vcvt.s32.f32 %v5537
        %v5545 = vmul.f32 %v5544, %v5542
        %v5546 = vxor.u32 %v5545, 2147483648
        %v5547 = vsel %vm5464, %v5546, %v5545
        %v5548 = vsub.s32 4, %v5524
        %v5549 = vsel %vm5464, %v5548, %v5524
        %v5550 = vsel %vm5463, %v164, %v5547
        %v5551 = vsel %vm5463, 0, %v5549
        %v5552 = vcosq.f32.pop %v5550
        %v5553 = vsinq.f32.pop %v5550
        %vm5554 = vweird.f32 %v164
        %v5555 = vand.u32 %v5551, 3
        %vm5556 = vcmp.lt.s32.totalorder %v5555, 2
        %vm5557 = vcmp.eq.s32.totalorder %v5555, 0
        %v5558 = vxor.u32 %v5553, 2147483648
        %v5559 = vsel %vm5557, %v5552, %v5558
        %vm5560 = vcmp.eq.s32.totalorder %v5555, 2
        %v5561 = vxor.u32 %v5552, 2147483648
        %v5562 = vsel %vm5560, %v5561, %v5553
        %v5563 = vsel %vm5556, %v5559, %v5562
        %v5564 = vsel %vm5554, nan, %v5563
        %v5565 = vand.u32 2147483647, %v165
        %vm5566 = vcmp.le.f32.partialorder %v5565, 0.7853982
        %vm5567 = vcmp.lt.s32.totalorder %v165, 0
        %v5568 = vand.u32 %v165, 2139095040
        %v5569 = vshrl.u32 %v5568, 23
        %v5570 = vsub.s32 %v5569, 127
        %v5571 = vand.u32 2147483647, %v165
        %v5572 = vand.u32 %v5571, 8388607
        %v5573 = vor.u32 %v5572, 8388608
        %v5574 = vsub.s32 0, %v5573
        %v5575 = vadd.s32 %v5570, 1
        %vm5576 = vcmp.gt.s32.totalorder %v5575, 0
        %v5577 = vsel %vm5576, %v5575, 0
        %v5578 = vshrl.u32 %v5577, 5
        %v5579 = vand.u32 %v5577, 31
        %v5580 = vsub.s32 32, %v5579
        %v5581 = vshrl.u32 683565275, %v5580
        %v5582 = vshll.u32 683565275, %v5579
        %v5583 = vshrl.u32 2475754826, %v5580
        %v5584 = vor.u32 %v5582, %v5583
        %v5585 = vshll.u32 2475754826, %v5579
        %v5586 = vshrl.u32 2131351028, %v5580
        %v5587 = vor.u32 %v5585, %v5586
        %v5588 = vshll.u32 2131351028, %v5579
        %v5589 = vshrl.u32 2102212464, %v5580
        %v5590 = vor.u32 %v5588, %v5589
        %v5591 = vshll.u32 2102212464, %v5579
        %v5592 = vshrl.u32 920167782, %v5580
        %v5593 = vor.u32 %v5591, %v5592
        %v5594 = vshll.u32 920167782, %v5579
        %v5595 = vshrl.u32 1326507024, %v5580
        %v5596 = vor.u32 %v5594, %v5595
        %vm5597 = vcmp.lt.s32.totalorder %v5578, 1
        %vm5598 = vcmp.lt.s32.totalorder %v5578, 2
        %vm5599 = vcmp.lt.s32.totalorder %v5578, 3
        %vm5600 = vcmp.lt.s32.totalorder %v5578, 4
        %v5601 = vsel %vm5597, %v5581, %v5584
        %v5602 = vsel %vm5600, %v5590, 2102212464
        %v5603 = vsel %vm5599, %v5587, %v5602
        %v5604 = vsel %vm5598, %v5601, %v5603
        %v5605 = vsel %vm5597, %v5584, %v5587
        %v5606 = vsel %vm5600, %v5593, 920167782
        %v5607 = vsel %vm5599, %v5590, %v5606
        %v5608 = vsel %vm5598, %v5605, %v5607
        %v5609 = vsel %vm5597, %v5587, %v5590
        %v5610 = vsel %vm5600, %v5596, 1326507024
        %v5611 = vsel %vm5599, %v5593, %v5610
        %v5612 = vsel %vm5598, %v5609, %v5611
        %v5613 = vshll.u32 %v5573, 8
        %v5614 = vmul.u32.u64.compose %v5613, %v5612
        %v5615 = vextract.low.u32 %v5614
        %v5616 = vextract.high.u32 %v5614
        %v5617 = vmul.u32.u64.compose %v5613, %v5608
        %v5618 = vextract.low.u32 %v5617
        %v5619 = vextract.high.u32 %v5617
        %v5620 = vmul.u32 %v5613, %v5604
        %v5621 = vadd.s32 %v5616, %v5618
        %vm5622 = vc.u32 %v5616, %v5618
        %v5623 = vadd.s32 %v5619, 1
        %v5624 = vsel %vm5622, %v5623, %v5619
        %v5625 = vadd.s32 %v5620, %v5624
        %v5626 = vadd.s32 %v5625, 536870912
        %v5627 = vshrl.u32 %v5626, 30
        %v5628 = vshll.u32 %v5627, 30
        %v5629 = vsub.s32 %v5625, %v5628
        %vm5630 = vcmp.lt.s32.totalorder %v5629, 0
        %v5631 = vsub.s32 0, %v5629
        %v5632 = vsel %vm5630, %v5631, %v5629
        %v5633 = vclz %v5632
        %v5634 = vsub.s32 %v5633, 2
        %vm5635 = vcmp.gt.s32.totalorder 0, %v5634
        %v5636 = vsel %vm5635, 0, %v5634
        %v5637 = vsub.s32 32, %v5636
        %v5638 = vshll.u32 %v5629, %v5636
        %v5639 = vshrl.u32 %v5621, %v5637
        %v5640 = vor.u32 %v5638, %v5639
        %v5641 = vsub.s32 4294967266, %v5636
        %v5642 = vadd.s32 %v5641, 127
        %v5643 = vshll.u32 %v5642, 23
        %v5644 = vor.u32 4788187, %v5643
        %v5645 = vand.u32 2147483647, %v5644
        %v5647 = vcvt.s32.f32 %v5640
        %v5648 = vmul.f32 %v5647, %v5645
        %v5649 = vxor.u32 %v5648, 2147483648
        %v5650 = vsel %vm5567, %v5649, %v5648
        %v5651 = vsub.s32 4, %v5627
        %v5652 = vsel %vm5567, %v5651, %v5627
        %v5653 = vsel %vm5566, %v165, %v5650
        %v5654 = vsel %vm5566, 0, %v5652
        %v5655 = vcosq.f32.pop %v5653
        %v5656 = vsinq.f32.pop %v5653
        %vm5657 = vweird.f32 %v165
        %v5658 = vand.u32 %v5654, 3
        %vm5659 = vcmp.lt.s32.totalorder %v5658, 2
        %vm5660 = vcmp.eq.s32.totalorder %v5658, 0
        %v5661 = vxor.u32 %v5656, 2147483648
        %v5662 = vsel %vm5660, %v5655, %v5661
        %vm5663 = vcmp.eq.s32.totalorder %v5658, 2
        %v5664 = vxor.u32 %v5655, 2147483648
        %v5665 = vsel %vm5663, %v5664, %v5656
        %v5666 = vsel %vm5659, %v5662, %v5665
        %v5667 = vsel %vm5657, nan, %v5666
        %v5668 = vand.u32 2147483647, %v166
        %vm5669 = vcmp.le.f32.partialorder %v5668, 0.7853982
        %vm5670 = vcmp.lt.s32.totalorder %v166, 0
        %v5671 = vand.u32 %v166, 2139095040
        %v5672 = vshrl.u32 %v5671, 23
        %v5673 = vsub.s32 %v5672, 127
        %v5674 = vand.u32 2147483647, %v166
        %v5675 = vand.u32 %v5674, 8388607
        %v5676 = vor.u32 %v5675, 8388608
        %v5677 = vsub.s32 0, %v5676
        %v5678 = vadd.s32 %v5673, 1
        %vm5679 = vcmp.gt.s32.totalorder %v5678, 0
        %v5680 = vsel %vm5679, %v5678, 0
        %v5681 = vshrl.u32 %v5680, 5
        %v5682 = vand.u32 %v5680, 31
        %v5683 = vsub.s32 32, %v5682
        %v5684 = vshrl.u32 683565275, %v5683
        %v5685 = vshll.u32 683565275, %v5682
        %v5686 = vshrl.u32 2475754826, %v5683
        %v5687 = vor.u32 %v5685, %v5686
        %v5688 = vshll.u32 2475754826, %v5682
        %v5689 = vshrl.u32 2131351028, %v5683
        %v5690 = vor.u32 %v5688, %v5689
        %v5691 = vshll.u32 2131351028, %v5682
        %v5692 = vshrl.u32 2102212464, %v5683
        %v5693 = vor.u32 %v5691, %v5692
        %v5694 = vshll.u32 2102212464, %v5682
        %v5695 = vshrl.u32 920167782, %v5683
        %v5696 = vor.u32 %v5694, %v5695
        %v5697 = vshll.u32 920167782, %v5682
        %v5698 = vshrl.u32 1326507024, %v5683
        %v5699 = vor.u32 %v5697, %v5698
        %vm5700 = vcmp.lt.s32.totalorder %v5681, 1
        %vm5701 = vcmp.lt.s32.totalorder %v5681, 2
        %vm5702 = vcmp.lt.s32.totalorder %v5681, 3
        %vm5703 = vcmp.lt.s32.totalorder %v5681, 4
        %v5704 = vsel %vm5700, %v5684, %v5687
        %v5705 = vsel %vm5703, %v5693, 2102212464
        %v5706 = vsel %vm5702, %v5690, %v5705
        %v5707 = vsel %vm5701, %v5704, %v5706
        %v5708 = vsel %vm5700, %v5687, %v5690
        %v5709 = vsel %vm5703, %v5696, 920167782
        %v5710 = vsel %vm5702, %v5693, %v5709
        %v5711 = vsel %vm5701, %v5708, %v5710
        %v5712 = vsel %vm5700, %v5690, %v5693
        %v5713 = vsel %vm5703, %v5699, 1326507024
        %v5714 = vsel %vm5702, %v5696, %v5713
        %v5715 = vsel %vm5701, %v5712, %v5714
        %v5716 = vshll.u32 %v5676, 8
        %v5717 = vmul.u32.u64.compose %v5716, %v5715
        %v5718 = vextract.low.u32 %v5717
        %v5719 = vextract.high.u32 %v5717
        %v5720 = vmul.u32.u64.compose %v5716, %v5711
        %v5721 = vextract.low.u32 %v5720
        %v5722 = vextract.high.u32 %v5720
        %v5723 = vmul.u32 %v5716, %v5707
        %v5724 = vadd.s32 %v5719, %v5721
        %vm5725 = vc.u32 %v5719, %v5721
        %v5726 = vadd.s32 %v5722, 1
        %v5727 = vsel %vm5725, %v5726, %v5722
        %v5728 = vadd.s32 %v5723, %v5727
        %v5729 = vadd.s32 %v5728, 536870912
        %v5730 = vshrl.u32 %v5729, 30
        %v5731 = vshll.u32 %v5730, 30
        %v5732 = vsub.s32 %v5728, %v5731
        %vm5733 = vcmp.lt.s32.totalorder %v5732, 0
        %v5734 = vsub.s32 0, %v5732
        %v5735 = vsel %vm5733, %v5734, %v5732
        %v5736 = vclz %v5735
        %v5737 = vsub.s32 %v5736, 2
        %vm5738 = vcmp.gt.s32.totalorder 0, %v5737
        %v5739 = vsel %vm5738, 0, %v5737
        %v5740 = vsub.s32 32, %v5739
        %v5741 = vshll.u32 %v5732, %v5739
        %v5742 = vshrl.u32 %v5724, %v5740
        %v5743 = vor.u32 %v5741, %v5742
        %v5744 = vsub.s32 4294967266, %v5739
        %v5745 = vadd.s32 %v5744, 127
        %v5746 = vshll.u32 %v5745, 23
        %v5747 = vor.u32 4788187, %v5746
        %v5748 = vand.u32 2147483647, %v5747
        %v5750 = vcvt.s32.f32 %v5743
        %v5751 = vmul.f32 %v5750, %v5748
        %v5752 = vxor.u32 %v5751, 2147483648
        %v5753 = vsel %vm5670, %v5752, %v5751
        %v5754 = vsub.s32 4, %v5730
        %v5755 = vsel %vm5670, %v5754, %v5730
        %v5756 = vsel %vm5669, %v166, %v5753
        %v5757 = vsel %vm5669, 0, %v5755
        %v5758 = vcosq.f32.pop %v5756
        %v5759 = vsinq.f32.pop %v5756
        %vm5760 = vweird.f32 %v166
        %v5761 = vand.u32 %v5757, 3
        %vm5762 = vcmp.lt.s32.totalorder %v5761, 2
        %vm5763 = vcmp.eq.s32.totalorder %v5761, 0
        %v5764 = vxor.u32 %v5759, 2147483648
        %v5765 = vsel %vm5763, %v5758, %v5764
        %vm5766 = vcmp.eq.s32.totalorder %v5761, 2
        %v5767 = vxor.u32 %v5758, 2147483648
        %v5768 = vsel %vm5766, %v5767, %v5759
        %v5769 = vsel %vm5762, %v5765, %v5768
        %v5770 = vsel %vm5760, nan, %v5769
        %v5771 = vand.u32 2147483647, %v167
        %vm5772 = vcmp.le.f32.partialorder %v5771, 0.7853982
        %vm5773 = vcmp.lt.s32.totalorder %v167, 0
        %v5774 = vand.u32 %v167, 2139095040
        %v5775 = vshrl.u32 %v5774, 23
        %v5776 = vsub.s32 %v5775, 127
        %v5777 = vand.u32 2147483647, %v167
        %v5778 = vand.u32 %v5777, 8388607
        %v5779 = vor.u32 %v5778, 8388608
        %v5780 = vsub.s32 0, %v5779
        %v5781 = vadd.s32 %v5776, 1
        %vm5782 = vcmp.gt.s32.totalorder %v5781, 0
        %v5783 = vsel %vm5782, %v5781, 0
        %v5784 = vshrl.u32 %v5783, 5
        %v5785 = vand.u32 %v5783, 31
        %v5786 = vsub.s32 32, %v5785
        %v5787 = vshrl.u32 683565275, %v5786
        %v5788 = vshll.u32 683565275, %v5785
        %v5789 = vshrl.u32 2475754826, %v5786
        %v5790 = vor.u32 %v5788, %v5789
        %v5791 = vshll.u32 2475754826, %v5785
        %v5792 = vshrl.u32 2131351028, %v5786
        %v5793 = vor.u32 %v5791, %v5792
        %v5794 = vshll.u32 2131351028, %v5785
        %v5795 = vshrl.u32 2102212464, %v5786
        %v5796 = vor.u32 %v5794, %v5795
        %v5797 = vshll.u32 2102212464, %v5785
        %v5798 = vshrl.u32 920167782, %v5786
        %v5799 = vor.u32 %v5797, %v5798
        %v5800 = vshll.u32 920167782, %v5785
        %v5801 = vshrl.u32 1326507024, %v5786
        %v5802 = vor.u32 %v5800, %v5801
        %vm5803 = vcmp.lt.s32.totalorder %v5784, 1
        %vm5804 = vcmp.lt.s32.totalorder %v5784, 2
        %vm5805 = vcmp.lt.s32.totalorder %v5784, 3
        %vm5806 = vcmp.lt.s32.totalorder %v5784, 4
        %v5807 = vsel %vm5803, %v5787, %v5790
        %v5808 = vsel %vm5806, %v5796, 2102212464
        %v5809 = vsel %vm5805, %v5793, %v5808
        %v5810 = vsel %vm5804, %v5807, %v5809
        %v5811 = vsel %vm5803, %v5790, %v5793
        %v5812 = vsel %vm5806, %v5799, 920167782
        %v5813 = vsel %vm5805, %v5796, %v5812
        %v5814 = vsel %vm5804, %v5811, %v5813
        %v5815 = vsel %vm5803, %v5793, %v5796
        %v5816 = vsel %vm5806, %v5802, 1326507024
        %v5817 = vsel %vm5805, %v5799, %v5816
        %v5818 = vsel %vm5804, %v5815, %v5817
        %v5819 = vshll.u32 %v5779, 8
        %v5820 = vmul.u32.u64.compose %v5819, %v5818
        %v5821 = vextract.low.u32 %v5820
        %v5822 = vextract.high.u32 %v5820
        %v5823 = vmul.u32.u64.compose %v5819, %v5814
        %v5824 = vextract.low.u32 %v5823
        %v5825 = vextract.high.u32 %v5823
        %v5826 = vmul.u32 %v5819, %v5810
        %v5827 = vadd.s32 %v5822, %v5824
        %vm5828 = vc.u32 %v5822, %v5824
        %v5829 = vadd.s32 %v5825, 1
        %v5830 = vsel %vm5828, %v5829, %v5825
        %v5831 = vadd.s32 %v5826, %v5830
        %v5832 = vadd.s32 %v5831, 536870912
        %v5833 = vshrl.u32 %v5832, 30
        %v5834 = vshll.u32 %v5833, 30
        %v5835 = vsub.s32 %v5831, %v5834
        %vm5836 = vcmp.lt.s32.totalorder %v5835, 0
        %v5837 = vsub.s32 0, %v5835
        %v5838 = vsel %vm5836, %v5837, %v5835
        %v5839 = vclz %v5838
        %v5840 = vsub.s32 %v5839, 2
        %vm5841 = vcmp.gt.s32.totalorder 0, %v5840
        %v5842 = vsel %vm5841, 0, %v5840
        %v5843 = vsub.s32 32, %v5842
        %v5844 = vshll.u32 %v5835, %v5842
        %v5845 = vshrl.u32 %v5827, %v5843
        %v5846 = vor.u32 %v5844, %v5845
        %v5847 = vsub.s32 4294967266, %v5842
        %v5848 = vadd.s32 %v5847, 127
        %v5849 = vshll.u32 %v5848, 23
        %v5850 = vor.u32 4788187, %v5849
        %v5851 = vand.u32 2147483647, %v5850
        %v5853 = vcvt.s32.f32 %v5846
        %v5854 = vmul.f32 %v5853, %v5851
        %v5855 = vxor.u32 %v5854, 2147483648
        %v5856 = vsel %vm5773, %v5855, %v5854
        %v5857 = vsub.s32 4, %v5833
        %v5858 = vsel %vm5773, %v5857, %v5833
        %v5859 = vsel %vm5772, %v167, %v5856
        %v5860 = vsel %vm5772, 0, %v5858
        %v5861 = vcosq.f32.pop %v5859
        %v5862 = vsinq.f32.pop %v5859
        %vm5863 = vweird.f32 %v167
        %v5864 = vand.u32 %v5860, 3
        %vm5865 = vcmp.lt.s32.totalorder %v5864, 2
        %vm5866 = vcmp.eq.s32.totalorder %v5864, 0
        %v5867 = vxor.u32 %v5862, 2147483648
        %v5868 = vsel %vm5866, %v5861, %v5867
        %vm5869 = vcmp.eq.s32.totalorder %v5864, 2
        %v5870 = vxor.u32 %v5861, 2147483648
        %v5871 = vsel %vm5869, %v5870, %v5862
        %v5872 = vsel %vm5865, %v5868, %v5871
        %v5873 = vsel %vm5863, nan, %v5872
        %v5874 = vand.u32 2147483647, %v168
        %vm5875 = vcmp.le.f32.partialorder %v5874, 0.7853982
        %vm5876 = vcmp.lt.s32.totalorder %v168, 0
        %v5877 = vand.u32 %v168, 2139095040
        %v5878 = vshrl.u32 %v5877, 23
        %v5879 = vsub.s32 %v5878, 127
        %v5880 = vand.u32 2147483647, %v168
        %v5881 = vand.u32 %v5880, 8388607
        %v5882 = vor.u32 %v5881, 8388608
        %v5883 = vsub.s32 0, %v5882
        %v5884 = vadd.s32 %v5879, 1
        %vm5885 = vcmp.gt.s32.totalorder %v5884, 0
        %v5886 = vsel %vm5885, %v5884, 0
        %v5887 = vshrl.u32 %v5886, 5
        %v5888 = vand.u32 %v5886, 31
        %v5889 = vsub.s32 32, %v5888
        %v5890 = vshrl.u32 683565275, %v5889
        %v5891 = vshll.u32 683565275, %v5888
        %v5892 = vshrl.u32 2475754826, %v5889
        %v5893 = vor.u32 %v5891, %v5892
        %v5894 = vshll.u32 2475754826, %v5888
        %v5895 = vshrl.u32 2131351028, %v5889
        %v5896 = vor.u32 %v5894, %v5895
        %v5897 = vshll.u32 2131351028, %v5888
        %v5898 = vshrl.u32 2102212464, %v5889
        %v5899 = vor.u32 %v5897, %v5898
        %v5900 = vshll.u32 2102212464, %v5888
        %v5901 = vshrl.u32 920167782, %v5889
        %v5902 = vor.u32 %v5900, %v5901
        %v5903 = vshll.u32 920167782, %v5888
        %v5904 = vshrl.u32 1326507024, %v5889
        %v5905 = vor.u32 %v5903, %v5904
        %vm5906 = vcmp.lt.s32.totalorder %v5887, 1
        %vm5907 = vcmp.lt.s32.totalorder %v5887, 2
        %vm5908 = vcmp.lt.s32.totalorder %v5887, 3
        %vm5909 = vcmp.lt.s32.totalorder %v5887, 4
        %v5910 = vsel %vm5906, %v5890, %v5893
        %v5911 = vsel %vm5909, %v5899, 2102212464
        %v5912 = vsel %vm5908, %v5896, %v5911
        %v5913 = vsel %vm5907, %v5910, %v5912
        %v5914 = vsel %vm5906, %v5893, %v5896
        %v5915 = vsel %vm5909, %v5902, 920167782
        %v5916 = vsel %vm5908, %v5899, %v5915
        %v5917 = vsel %vm5907, %v5914, %v5916
        %v5918 = vsel %vm5906, %v5896, %v5899
        %v5919 = vsel %vm5909, %v5905, 1326507024
        %v5920 = vsel %vm5908, %v5902, %v5919
        %v5921 = vsel %vm5907, %v5918, %v5920
        %v5922 = vshll.u32 %v5882, 8
        %v5923 = vmul.u32.u64.compose %v5922, %v5921
        %v5924 = vextract.low.u32 %v5923
        %v5925 = vextract.high.u32 %v5923
        %v5926 = vmul.u32.u64.compose %v5922, %v5917
        %v5927 = vextract.low.u32 %v5926
        %v5928 = vextract.high.u32 %v5926
        %v5929 = vmul.u32 %v5922, %v5913
        %v5930 = vadd.s32 %v5925, %v5927
        %vm5931 = vc.u32 %v5925, %v5927
        %v5932 = vadd.s32 %v5928, 1
        %v5933 = vsel %vm5931, %v5932, %v5928
        %v5934 = vadd.s32 %v5929, %v5933
        %v5935 = vadd.s32 %v5934, 536870912
        %v5936 = vshrl.u32 %v5935, 30
        %v5937 = vshll.u32 %v5936, 30
        %v5938 = vsub.s32 %v5934, %v5937
        %vm5939 = vcmp.lt.s32.totalorder %v5938, 0
        %v5940 = vsub.s32 0, %v5938
        %v5941 = vsel %vm5939, %v5940, %v5938
        %v5942 = vclz %v5941
        %v5943 = vsub.s32 %v5942, 2
        %vm5944 = vcmp.gt.s32.totalorder 0, %v5943
        %v5945 = vsel %vm5944, 0, %v5943
        %v5946 = vsub.s32 32, %v5945
        %v5947 = vshll.u32 %v5938, %v5945
        %v5948 = vshrl.u32 %v5930, %v5946
        %v5949 = vor.u32 %v5947, %v5948
        %v5950 = vsub.s32 4294967266, %v5945
        %v5951 = vadd.s32 %v5950, 127
        %v5952 = vshll.u32 %v5951, 23
        %v5953 = vor.u32 4788187, %v5952
        %v5954 = vand.u32 2147483647, %v5953
        %v5956 = vcvt.s32.f32 %v5949
        %v5957 = vmul.f32 %v5956, %v5954
        %v5958 = vxor.u32 %v5957, 2147483648
        %v5959 = vsel %vm5876, %v5958, %v5957
        %v5960 = vsub.s32 4, %v5936
        %v5961 = vsel %vm5876, %v5960, %v5936
        %v5962 = vsel %vm5875, %v168, %v5959
        %v5963 = vsel %vm5875, 0, %v5961
        %v5964 = vcosq.f32.pop %v5962
        %v5965 = vsinq.f32.pop %v5962
        %vm5966 = vweird.f32 %v168
        %v5967 = vand.u32 %v5963, 3
        %vm5968 = vcmp.lt.s32.totalorder %v5967, 2
        %vm5969 = vcmp.eq.s32.totalorder %v5967, 0
        %v5970 = vxor.u32 %v5965, 2147483648
        %v5971 = vsel %vm5969, %v5964, %v5970
        %vm5972 = vcmp.eq.s32.totalorder %v5967, 2
        %v5973 = vxor.u32 %v5964, 2147483648
        %v5974 = vsel %vm5972, %v5973, %v5965
        %v5975 = vsel %vm5968, %v5971, %v5974
        %v5976 = vsel %vm5966, nan, %v5975
        %v5977 = vand.u32 2147483647, %v169
        %vm5978 = vcmp.le.f32.partialorder %v5977, 0.7853982
        %vm5979 = vcmp.lt.s32.totalorder %v169, 0
        %v5980 = vand.u32 %v169, 2139095040
        %v5981 = vshrl.u32 %v5980, 23
        %v5982 = vsub.s32 %v5981, 127
        %v5983 = vand.u32 2147483647, %v169
        %v5984 = vand.u32 %v5983, 8388607
        %v5985 = vor.u32 %v5984, 8388608
        %v5986 = vsub.s32 0, %v5985
        %v5987 = vadd.s32 %v5982, 1
        %vm5988 = vcmp.gt.s32.totalorder %v5987, 0
        %v5989 = vsel %vm5988, %v5987, 0
        %v5990 = vshrl.u32 %v5989, 5
        %v5991 = vand.u32 %v5989, 31
        %v5992 = vsub.s32 32, %v5991
        %v5993 = vshrl.u32 683565275, %v5992
        %v5994 = vshll.u32 683565275, %v5991
        %v5995 = vshrl.u32 2475754826, %v5992
        %v5996 = vor.u32 %v5994, %v5995
        %v5997 = vshll.u32 2475754826, %v5991
        %v5998 = vshrl.u32 2131351028, %v5992
        %v5999 = vor.u32 %v5997, %v5998
        %v6000 = vshll.u32 2131351028, %v5991
        %v6001 = vshrl.u32 2102212464, %v5992
        %v6002 = vor.u32 %v6000, %v6001
        %v6003 = vshll.u32 2102212464, %v5991
        %v6004 = vshrl.u32 920167782, %v5992
        %v6005 = vor.u32 %v6003, %v6004
        %v6006 = vshll.u32 920167782, %v5991
        %v6007 = vshrl.u32 1326507024, %v5992
        %v6008 = vor.u32 %v6006, %v6007
        %vm6009 = vcmp.lt.s32.totalorder %v5990, 1
        %vm6010 = vcmp.lt.s32.totalorder %v5990, 2
        %vm6011 = vcmp.lt.s32.totalorder %v5990, 3
        %vm6012 = vcmp.lt.s32.totalorder %v5990, 4
        %v6013 = vsel %vm6009, %v5993, %v5996
        %v6014 = vsel %vm6012, %v6002, 2102212464
        %v6015 = vsel %vm6011, %v5999, %v6014
        %v6016 = vsel %vm6010, %v6013, %v6015
        %v6017 = vsel %vm6009, %v5996, %v5999
        %v6018 = vsel %vm6012, %v6005, 920167782
        %v6019 = vsel %vm6011, %v6002, %v6018
        %v6020 = vsel %vm6010, %v6017, %v6019
        %v6021 = vsel %vm6009, %v5999, %v6002
        %v6022 = vsel %vm6012, %v6008, 1326507024
        %v6023 = vsel %vm6011, %v6005, %v6022
        %v6024 = vsel %vm6010, %v6021, %v6023
        %v6025 = vshll.u32 %v5985, 8
        %v6026 = vmul.u32.u64.compose %v6025, %v6024
        %v6027 = vextract.low.u32 %v6026
        %v6028 = vextract.high.u32 %v6026
        %v6029 = vmul.u32.u64.compose %v6025, %v6020
        %v6030 = vextract.low.u32 %v6029
        %v6031 = vextract.high.u32 %v6029
        %v6032 = vmul.u32 %v6025, %v6016
        %v6033 = vadd.s32 %v6028, %v6030
        %vm6034 = vc.u32 %v6028, %v6030
        %v6035 = vadd.s32 %v6031, 1
        %v6036 = vsel %vm6034, %v6035, %v6031
        %v6037 = vadd.s32 %v6032, %v6036
        %v6038 = vadd.s32 %v6037, 536870912
        %v6039 = vshrl.u32 %v6038, 30
        %v6040 = vshll.u32 %v6039, 30
        %v6041 = vsub.s32 %v6037, %v6040
        %vm6042 = vcmp.lt.s32.totalorder %v6041, 0
        %v6043 = vsub.s32 0, %v6041
        %v6044 = vsel %vm6042, %v6043, %v6041
        %v6045 = vclz %v6044
        %v6046 = vsub.s32 %v6045, 2
        %vm6047 = vcmp.gt.s32.totalorder 0, %v6046
        %v6048 = vsel %vm6047, 0, %v6046
        %v6049 = vsub.s32 32, %v6048
        %v6050 = vshll.u32 %v6041, %v6048
        %v6051 = vshrl.u32 %v6033, %v6049
        %v6052 = vor.u32 %v6050, %v6051
        %v6053 = vsub.s32 4294967266, %v6048
        %v6054 = vadd.s32 %v6053, 127
        %v6055 = vshll.u32 %v6054, 23
        %v6056 = vor.u32 4788187, %v6055
        %v6057 = vand.u32 2147483647, %v6056
        %v6059 = vcvt.s32.f32 %v6052
        %v6060 = vmul.f32 %v6059, %v6057
        %v6061 = vxor.u32 %v6060, 2147483648
        %v6062 = vsel %vm5979, %v6061, %v6060
        %v6063 = vsub.s32 4, %v6039
        %v6064 = vsel %vm5979, %v6063, %v6039
        %v6065 = vsel %vm5978, %v169, %v6062
        %v6066 = vsel %vm5978, 0, %v6064
        %v6067 = vcosq.f32.pop %v6065
        %v6068 = vsinq.f32.pop %v6065
        %vm6069 = vweird.f32 %v169
        %v6070 = vand.u32 %v6066, 3
        %vm6071 = vcmp.lt.s32.totalorder %v6070, 2
        %vm6072 = vcmp.eq.s32.totalorder %v6070, 0
        %v6073 = vxor.u32 %v6068, 2147483648
        %v6074 = vsel %vm6072, %v6067, %v6073
        %vm6075 = vcmp.eq.s32.totalorder %v6070, 2
        %v6076 = vxor.u32 %v6067, 2147483648
        %v6077 = vsel %vm6075, %v6076, %v6068
        %v6078 = vsel %vm6071, %v6074, %v6077
        %v6079 = vsel %vm6069, nan, %v6078
        %v6080 = vand.u32 2147483647, %v170
        %vm6081 = vcmp.le.f32.partialorder %v6080, 0.7853982
        %vm6082 = vcmp.lt.s32.totalorder %v170, 0
        %v6083 = vand.u32 %v170, 2139095040
        %v6084 = vshrl.u32 %v6083, 23
        %v6085 = vsub.s32 %v6084, 127
        %v6086 = vand.u32 2147483647, %v170
        %v6087 = vand.u32 %v6086, 8388607
        %v6088 = vor.u32 %v6087, 8388608
        %v6089 = vsub.s32 0, %v6088
        %v6090 = vadd.s32 %v6085, 1
        %vm6091 = vcmp.gt.s32.totalorder %v6090, 0
        %v6092 = vsel %vm6091, %v6090, 0
        %v6093 = vshrl.u32 %v6092, 5
        %v6094 = vand.u32 %v6092, 31
        %v6095 = vsub.s32 32, %v6094
        %v6096 = vshrl.u32 683565275, %v6095
        %v6097 = vshll.u32 683565275, %v6094
        %v6098 = vshrl.u32 2475754826, %v6095
        %v6099 = vor.u32 %v6097, %v6098
        %v6100 = vshll.u32 2475754826, %v6094
        %v6101 = vshrl.u32 2131351028, %v6095
        %v6102 = vor.u32 %v6100, %v6101
        %v6103 = vshll.u32 2131351028, %v6094
        %v6104 = vshrl.u32 2102212464, %v6095
        %v6105 = vor.u32 %v6103, %v6104
        %v6106 = vshll.u32 2102212464, %v6094
        %v6107 = vshrl.u32 920167782, %v6095
        %v6108 = vor.u32 %v6106, %v6107
        %v6109 = vshll.u32 920167782, %v6094
        %v6110 = vshrl.u32 1326507024, %v6095
        %v6111 = vor.u32 %v6109, %v6110
        %vm6112 = vcmp.lt.s32.totalorder %v6093, 1
        %vm6113 = vcmp.lt.s32.totalorder %v6093, 2
        %vm6114 = vcmp.lt.s32.totalorder %v6093, 3
        %vm6115 = vcmp.lt.s32.totalorder %v6093, 4
        %v6116 = vsel %vm6112, %v6096, %v6099
        %v6117 = vsel %vm6115, %v6105, 2102212464
        %v6118 = vsel %vm6114, %v6102, %v6117
        %v6119 = vsel %vm6113, %v6116, %v6118
        %v6120 = vsel %vm6112, %v6099, %v6102
        %v6121 = vsel %vm6115, %v6108, 920167782
        %v6122 = vsel %vm6114, %v6105, %v6121
        %v6123 = vsel %vm6113, %v6120, %v6122
        %v6124 = vsel %vm6112, %v6102, %v6105
        %v6125 = vsel %vm6115, %v6111, 1326507024
        %v6126 = vsel %vm6114, %v6108, %v6125
        %v6127 = vsel %vm6113, %v6124, %v6126
        %v6128 = vshll.u32 %v6088, 8
        %v6129 = vmul.u32.u64.compose %v6128, %v6127
        %v6130 = vextract.low.u32 %v6129
        %v6131 = vextract.high.u32 %v6129
        %v6132 = vmul.u32.u64.compose %v6128, %v6123
        %v6133 = vextract.low.u32 %v6132
        %v6134 = vextract.high.u32 %v6132
        %v6135 = vmul.u32 %v6128, %v6119
        %v6136 = vadd.s32 %v6131, %v6133
        %vm6137 = vc.u32 %v6131, %v6133
        %v6138 = vadd.s32 %v6134, 1
        %v6139 = vsel %vm6137, %v6138, %v6134
        %v6140 = vadd.s32 %v6135, %v6139
        %v6141 = vadd.s32 %v6140, 536870912
        %v6142 = vshrl.u32 %v6141, 30
        %v6143 = vshll.u32 %v6142, 30
        %v6144 = vsub.s32 %v6140, %v6143
        %vm6145 = vcmp.lt.s32.totalorder %v6144, 0
        %v6146 = vsub.s32 0, %v6144
        %v6147 = vsel %vm6145, %v6146, %v6144
        %v6148 = vclz %v6147
        %v6149 = vsub.s32 %v6148, 2
        %vm6150 = vcmp.gt.s32.totalorder 0, %v6149
        %v6151 = vsel %vm6150, 0, %v6149
        %v6152 = vsub.s32 32, %v6151
        %v6153 = vshll.u32 %v6144, %v6151
        %v6154 = vshrl.u32 %v6136, %v6152
        %v6155 = vor.u32 %v6153, %v6154
        %v6156 = vsub.s32 4294967266, %v6151
        %v6157 = vadd.s32 %v6156, 127
        %v6158 = vshll.u32 %v6157, 23
        %v6159 = vor.u32 4788187, %v6158
        %v6160 = vand.u32 2147483647, %v6159
        %v6162 = vcvt.s32.f32 %v6155
        %v6163 = vmul.f32 %v6162, %v6160
        %v6164 = vxor.u32 %v6163, 2147483648
        %v6165 = vsel %vm6082, %v6164, %v6163
        %v6166 = vsub.s32 4, %v6142
        %v6167 = vsel %vm6082, %v6166, %v6142
        %v6168 = vsel %vm6081, %v170, %v6165
        %v6169 = vsel %vm6081, 0, %v6167
        %v6170 = vcosq.f32.pop %v6168
        %v6171 = vsinq.f32.pop %v6168
        %vm6172 = vweird.f32 %v170
        %v6173 = vand.u32 %v6169, 3
        %vm6174 = vcmp.lt.s32.totalorder %v6173, 2
        %vm6175 = vcmp.eq.s32.totalorder %v6173, 0
        %v6176 = vxor.u32 %v6171, 2147483648
        %v6177 = vsel %vm6175, %v6170, %v6176
        %vm6178 = vcmp.eq.s32.totalorder %v6173, 2
        %v6179 = vxor.u32 %v6170, 2147483648
        %v6180 = vsel %vm6178, %v6179, %v6171
        %v6181 = vsel %vm6174, %v6177, %v6180
        %v6182 = vsel %vm6172, nan, %v6181
        %v6183 = vand.u32 2147483647, %v171
        %vm6184 = vcmp.le.f32.partialorder %v6183, 0.7853982
        %vm6185 = vcmp.lt.s32.totalorder %v171, 0
        %v6186 = vand.u32 %v171, 2139095040
        %v6187 = vshrl.u32 %v6186, 23
        %v6188 = vsub.s32 %v6187, 127
        %v6189 = vand.u32 2147483647, %v171
        %v6190 = vand.u32 %v6189, 8388607
        %v6191 = vor.u32 %v6190, 8388608
        %v6192 = vsub.s32 0, %v6191
        %v6193 = vadd.s32 %v6188, 1
        %vm6194 = vcmp.gt.s32.totalorder %v6193, 0
        %v6195 = vsel %vm6194, %v6193, 0
        %v6196 = vshrl.u32 %v6195, 5
        %v6197 = vand.u32 %v6195, 31
        %v6198 = vsub.s32 32, %v6197
        %v6199 = vshrl.u32 683565275, %v6198
        %v6200 = vshll.u32 683565275, %v6197
        %v6201 = vshrl.u32 2475754826, %v6198
        %v6202 = vor.u32 %v6200, %v6201
        %v6203 = vshll.u32 2475754826, %v6197
        %v6204 = vshrl.u32 2131351028, %v6198
        %v6205 = vor.u32 %v6203, %v6204
        %v6206 = vshll.u32 2131351028, %v6197
        %v6207 = vshrl.u32 2102212464, %v6198
        %v6208 = vor.u32 %v6206, %v6207
        %v6209 = vshll.u32 2102212464, %v6197
        %v6210 = vshrl.u32 920167782, %v6198
        %v6211 = vor.u32 %v6209, %v6210
        %v6212 = vshll.u32 920167782, %v6197
        %v6213 = vshrl.u32 1326507024, %v6198
        %v6214 = vor.u32 %v6212, %v6213
        %vm6215 = vcmp.lt.s32.totalorder %v6196, 1
        %vm6216 = vcmp.lt.s32.totalorder %v6196, 2
        %vm6217 = vcmp.lt.s32.totalorder %v6196, 3
        %vm6218 = vcmp.lt.s32.totalorder %v6196, 4
        %v6219 = vsel %vm6215, %v6199, %v6202
        %v6220 = vsel %vm6218, %v6208, 2102212464
        %v6221 = vsel %vm6217, %v6205, %v6220
        %v6222 = vsel %vm6216, %v6219, %v6221
        %v6223 = vsel %vm6215, %v6202, %v6205
        %v6224 = vsel %vm6218, %v6211, 920167782
        %v6225 = vsel %vm6217, %v6208, %v6224
        %v6226 = vsel %vm6216, %v6223, %v6225
        %v6227 = vsel %vm6215, %v6205, %v6208
        %v6228 = vsel %vm6218, %v6214, 1326507024
        %v6229 = vsel %vm6217, %v6211, %v6228
        %v6230 = vsel %vm6216, %v6227, %v6229
        %v6231 = vshll.u32 %v6191, 8
        %v6232 = vmul.u32.u64.compose %v6231, %v6230
        %v6233 = vextract.low.u32 %v6232
        %v6234 = vextract.high.u32 %v6232
        %v6235 = vmul.u32.u64.compose %v6231, %v6226
        %v6236 = vextract.low.u32 %v6235
        %v6237 = vextract.high.u32 %v6235
        %v6238 = vmul.u32 %v6231, %v6222
        %v6239 = vadd.s32 %v6234, %v6236
        %vm6240 = vc.u32 %v6234, %v6236
        %v6241 = vadd.s32 %v6237, 1
        %v6242 = vsel %vm6240, %v6241, %v6237
        %v6243 = vadd.s32 %v6238, %v6242
        %v6244 = vadd.s32 %v6243, 536870912
        %v6245 = vshrl.u32 %v6244, 30
        %v6246 = vshll.u32 %v6245, 30
        %v6247 = vsub.s32 %v6243, %v6246
        %vm6248 = vcmp.lt.s32.totalorder %v6247, 0
        %v6249 = vsub.s32 0, %v6247
        %v6250 = vsel %vm6248, %v6249, %v6247
        %v6251 = vclz %v6250
        %v6252 = vsub.s32 %v6251, 2
        %vm6253 = vcmp.gt.s32.totalorder 0, %v6252
        %v6254 = vsel %vm6253, 0, %v6252
        %v6255 = vsub.s32 32, %v6254
        %v6256 = vshll.u32 %v6247, %v6254
        %v6257 = vshrl.u32 %v6239, %v6255
        %v6258 = vor.u32 %v6256, %v6257
        %v6259 = vsub.s32 4294967266, %v6254
        %v6260 = vadd.s32 %v6259, 127
        %v6261 = vshll.u32 %v6260, 23
        %v6262 = vor.u32 4788187, %v6261
        %v6263 = vand.u32 2147483647, %v6262
        %v6265 = vcvt.s32.f32 %v6258
        %v6266 = vmul.f32 %v6265, %v6263
        %v6267 = vxor.u32 %v6266, 2147483648
        %v6268 = vsel %vm6185, %v6267, %v6266
        %v6269 = vsub.s32 4, %v6245
        %v6270 = vsel %vm6185, %v6269, %v6245
        %v6271 = vsel %vm6184, %v171, %v6268
        %v6272 = vsel %vm6184, 0, %v6270
        %v6273 = vcosq.f32.pop %v6271
        %v6274 = vsinq.f32.pop %v6271
        %vm6275 = vweird.f32 %v171
        %v6276 = vand.u32 %v6272, 3
        %vm6277 = vcmp.lt.s32.totalorder %v6276, 2
        %vm6278 = vcmp.eq.s32.totalorder %v6276, 0
        %v6279 = vxor.u32 %v6274, 2147483648
        %v6280 = vsel %vm6278, %v6273, %v6279
        %vm6281 = vcmp.eq.s32.totalorder %v6276, 2
        %v6282 = vxor.u32 %v6273, 2147483648
        %v6283 = vsel %vm6281, %v6282, %v6274
        %v6284 = vsel %vm6277, %v6280, %v6283
        %v6285 = vsel %vm6275, nan, %v6284
        %v6286 = vand.u32 2147483647, %v172
        %vm6287 = vcmp.le.f32.partialorder %v6286, 0.7853982
        %vm6288 = vcmp.lt.s32.totalorder %v172, 0
        %v6289 = vand.u32 %v172, 2139095040
        %v6290 = vshrl.u32 %v6289, 23
        %v6291 = vsub.s32 %v6290, 127
        %v6292 = vand.u32 2147483647, %v172
        %v6293 = vand.u32 %v6292, 8388607
        %v6294 = vor.u32 %v6293, 8388608
        %v6295 = vsub.s32 0, %v6294
        %v6296 = vadd.s32 %v6291, 1
        %vm6297 = vcmp.gt.s32.totalorder %v6296, 0
        %v6298 = vsel %vm6297, %v6296, 0
        %v6299 = vshrl.u32 %v6298, 5
        %v6300 = vand.u32 %v6298, 31
        %v6301 = vsub.s32 32, %v6300
        %v6302 = vshrl.u32 683565275, %v6301
        %v6303 = vshll.u32 683565275, %v6300
        %v6304 = vshrl.u32 2475754826, %v6301
        %v6305 = vor.u32 %v6303, %v6304
        %v6306 = vshll.u32 2475754826, %v6300
        %v6307 = vshrl.u32 2131351028, %v6301
        %v6308 = vor.u32 %v6306, %v6307
        %v6309 = vshll.u32 2131351028, %v6300
        %v6310 = vshrl.u32 2102212464, %v6301
        %v6311 = vor.u32 %v6309, %v6310
        %v6312 = vshll.u32 2102212464, %v6300
        %v6313 = vshrl.u32 920167782, %v6301
        %v6314 = vor.u32 %v6312, %v6313
        %v6315 = vshll.u32 920167782, %v6300
        %v6316 = vshrl.u32 1326507024, %v6301
        %v6317 = vor.u32 %v6315, %v6316
        %vm6318 = vcmp.lt.s32.totalorder %v6299, 1
        %vm6319 = vcmp.lt.s32.totalorder %v6299, 2
        %vm6320 = vcmp.lt.s32.totalorder %v6299, 3
        %vm6321 = vcmp.lt.s32.totalorder %v6299, 4
        %v6322 = vsel %vm6318, %v6302, %v6305
        %v6323 = vsel %vm6321, %v6311, 2102212464
        %v6324 = vsel %vm6320, %v6308, %v6323
        %v6325 = vsel %vm6319, %v6322, %v6324
        %v6326 = vsel %vm6318, %v6305, %v6308
        %v6327 = vsel %vm6321, %v6314, 920167782
        %v6328 = vsel %vm6320, %v6311, %v6327
        %v6329 = vsel %vm6319, %v6326, %v6328
        %v6330 = vsel %vm6318, %v6308, %v6311
        %v6331 = vsel %vm6321, %v6317, 1326507024
        %v6332 = vsel %vm6320, %v6314, %v6331
        %v6333 = vsel %vm6319, %v6330, %v6332
        %v6334 = vshll.u32 %v6294, 8
        %v6335 = vmul.u32.u64.compose %v6334, %v6333
        %v6336 = vextract.low.u32 %v6335
        %v6337 = vextract.high.u32 %v6335
        %v6338 = vmul.u32.u64.compose %v6334, %v6329
        %v6339 = vextract.low.u32 %v6338
        %v6340 = vextract.high.u32 %v6338
        %v6341 = vmul.u32 %v6334, %v6325
        %v6342 = vadd.s32 %v6337, %v6339
        %vm6343 = vc.u32 %v6337, %v6339
        %v6344 = vadd.s32 %v6340, 1
        %v6345 = vsel %vm6343, %v6344, %v6340
        %v6346 = vadd.s32 %v6341, %v6345
        %v6347 = vadd.s32 %v6346, 536870912
        %v6348 = vshrl.u32 %v6347, 30
        %v6349 = vshll.u32 %v6348, 30
        %v6350 = vsub.s32 %v6346, %v6349
        %vm6351 = vcmp.lt.s32.totalorder %v6350, 0
        %v6352 = vsub.s32 0, %v6350
        %v6353 = vsel %vm6351, %v6352, %v6350
        %v6354 = vclz %v6353
        %v6355 = vsub.s32 %v6354, 2
        %vm6356 = vcmp.gt.s32.totalorder 0, %v6355
        %v6357 = vsel %vm6356, 0, %v6355
        %v6358 = vsub.s32 32, %v6357
        %v6359 = vshll.u32 %v6350, %v6357
        %v6360 = vshrl.u32 %v6342, %v6358
        %v6361 = vor.u32 %v6359, %v6360
        %v6362 = vsub.s32 4294967266, %v6357
        %v6363 = vadd.s32 %v6362, 127
        %v6364 = vshll.u32 %v6363, 23
        %v6365 = vor.u32 4788187, %v6364
        %v6366 = vand.u32 2147483647, %v6365
        %v6368 = vcvt.s32.f32 %v6361
        %v6369 = vmul.f32 %v6368, %v6366
        %v6370 = vxor.u32 %v6369, 2147483648
        %v6371 = vsel %vm6288, %v6370, %v6369
        %v6372 = vsub.s32 4, %v6348
        %v6373 = vsel %vm6288, %v6372, %v6348
        %v6374 = vsel %vm6287, %v172, %v6371
        %v6375 = vsel %vm6287, 0, %v6373
        %v6376 = vcosq.f32.pop %v6374
        %v6377 = vsinq.f32.pop %v6374
        %vm6378 = vweird.f32 %v172
        %v6379 = vand.u32 %v6375, 3
        %vm6380 = vcmp.lt.s32.totalorder %v6379, 2
        %vm6381 = vcmp.eq.s32.totalorder %v6379, 0
        %v6382 = vxor.u32 %v6377, 2147483648
        %v6383 = vsel %vm6381, %v6376, %v6382
        %vm6384 = vcmp.eq.s32.totalorder %v6379, 2
        %v6385 = vxor.u32 %v6376, 2147483648
        %v6386 = vsel %vm6384, %v6385, %v6377
        %v6387 = vsel %vm6380, %v6383, %v6386
        %v6388 = vsel %vm6378, nan, %v6387
        %v6389 = vand.u32 2147483647, %v173
        %vm6390 = vcmp.le.f32.partialorder %v6389, 0.7853982
        %vm6391 = vcmp.lt.s32.totalorder %v173, 0
        %v6392 = vand.u32 %v173, 2139095040
        %v6393 = vshrl.u32 %v6392, 23
        %v6394 = vsub.s32 %v6393, 127
        %v6395 = vand.u32 2147483647, %v173
        %v6396 = vand.u32 %v6395, 8388607
        %v6397 = vor.u32 %v6396, 8388608
        %v6398 = vsub.s32 0, %v6397
        %v6399 = vadd.s32 %v6394, 1
        %vm6400 = vcmp.gt.s32.totalorder %v6399, 0
        %v6401 = vsel %vm6400, %v6399, 0
        %v6402 = vshrl.u32 %v6401, 5
        %v6403 = vand.u32 %v6401, 31
        %v6404 = vsub.s32 32, %v6403
        %v6405 = vshrl.u32 683565275, %v6404
        %v6406 = vshll.u32 683565275, %v6403
        %v6407 = vshrl.u32 2475754826, %v6404
        %v6408 = vor.u32 %v6406, %v6407
        %v6409 = vshll.u32 2475754826, %v6403
        %v6410 = vshrl.u32 2131351028, %v6404
        %v6411 = vor.u32 %v6409, %v6410
        %v6412 = vshll.u32 2131351028, %v6403
        %v6413 = vshrl.u32 2102212464, %v6404
        %v6414 = vor.u32 %v6412, %v6413
        %v6415 = vshll.u32 2102212464, %v6403
        %v6416 = vshrl.u32 920167782, %v6404
        %v6417 = vor.u32 %v6415, %v6416
        %v6418 = vshll.u32 920167782, %v6403
        %v6419 = vshrl.u32 1326507024, %v6404
        %v6420 = vor.u32 %v6418, %v6419
        %vm6421 = vcmp.lt.s32.totalorder %v6402, 1
        %vm6422 = vcmp.lt.s32.totalorder %v6402, 2
        %vm6423 = vcmp.lt.s32.totalorder %v6402, 3
        %vm6424 = vcmp.lt.s32.totalorder %v6402, 4
        %v6425 = vsel %vm6421, %v6405, %v6408
        %v6426 = vsel %vm6424, %v6414, 2102212464
        %v6427 = vsel %vm6423, %v6411, %v6426
        %v6428 = vsel %vm6422, %v6425, %v6427
        %v6429 = vsel %vm6421, %v6408, %v6411
        %v6430 = vsel %vm6424, %v6417, 920167782
        %v6431 = vsel %vm6423, %v6414, %v6430
        %v6432 = vsel %vm6422, %v6429, %v6431
        %v6433 = vsel %vm6421, %v6411, %v6414
        %v6434 = vsel %vm6424, %v6420, 1326507024
        %v6435 = vsel %vm6423, %v6417, %v6434
        %v6436 = vsel %vm6422, %v6433, %v6435
        %v6437 = vshll.u32 %v6397, 8
        %v6438 = vmul.u32.u64.compose %v6437, %v6436
        %v6439 = vextract.low.u32 %v6438
        %v6440 = vextract.high.u32 %v6438
        %v6441 = vmul.u32.u64.compose %v6437, %v6432
        %v6442 = vextract.low.u32 %v6441
        %v6443 = vextract.high.u32 %v6441
        %v6444 = vmul.u32 %v6437, %v6428
        %v6445 = vadd.s32 %v6440, %v6442
        %vm6446 = vc.u32 %v6440, %v6442
        %v6447 = vadd.s32 %v6443, 1
        %v6448 = vsel %vm6446, %v6447, %v6443
        %v6449 = vadd.s32 %v6444, %v6448
        %v6450 = vadd.s32 %v6449, 536870912
        %v6451 = vshrl.u32 %v6450, 30
        %v6452 = vshll.u32 %v6451, 30
        %v6453 = vsub.s32 %v6449, %v6452
        %vm6454 = vcmp.lt.s32.totalorder %v6453, 0
        %v6455 = vsub.s32 0, %v6453
        %v6456 = vsel %vm6454, %v6455, %v6453
        %v6457 = vclz %v6456
        %v6458 = vsub.s32 %v6457, 2
        %vm6459 = vcmp.gt.s32.totalorder 0, %v6458
        %v6460 = vsel %vm6459, 0, %v6458
        %v6461 = vsub.s32 32, %v6460
        %v6462 = vshll.u32 %v6453, %v6460
        %v6463 = vshrl.u32 %v6445, %v6461
        %v6464 = vor.u32 %v6462, %v6463
        %v6465 = vsub.s32 4294967266, %v6460
        %v6466 = vadd.s32 %v6465, 127
        %v6467 = vshll.u32 %v6466, 23
        %v6468 = vor.u32 4788187, %v6467
        %v6469 = vand.u32 2147483647, %v6468
        %v6471 = vcvt.s32.f32 %v6464
        %v6472 = vmul.f32 %v6471, %v6469
        %v6473 = vxor.u32 %v6472, 2147483648
        %v6474 = vsel %vm6391, %v6473, %v6472
        %v6475 = vsub.s32 4, %v6451
        %v6476 = vsel %vm6391, %v6475, %v6451
        %v6477 = vsel %vm6390, %v173, %v6474
        %v6478 = vsel %vm6390, 0, %v6476
        %v6479 = vcosq.f32.pop %v6477
        %v6480 = vsinq.f32.pop %v6477
        %vm6481 = vweird.f32 %v173
        %v6482 = vand.u32 %v6478, 3
        %vm6483 = vcmp.lt.s32.totalorder %v6482, 2
        %vm6484 = vcmp.eq.s32.totalorder %v6482, 0
        %v6485 = vxor.u32 %v6480, 2147483648
        %v6486 = vsel %vm6484, %v6479, %v6485
        %vm6487 = vcmp.eq.s32.totalorder %v6482, 2
        %v6488 = vxor.u32 %v6479, 2147483648
        %v6489 = vsel %vm6487, %v6488, %v6480
        %v6490 = vsel %vm6483, %v6486, %v6489
        %v6491 = vsel %vm6481, nan, %v6490
        %v6492 = vand.u32 2147483647, %v174
        %vm6493 = vcmp.le.f32.partialorder %v6492, 0.7853982
        %vm6494 = vcmp.lt.s32.totalorder %v174, 0
        %v6495 = vand.u32 %v174, 2139095040
        %v6496 = vshrl.u32 %v6495, 23
        %v6497 = vsub.s32 %v6496, 127
        %v6498 = vand.u32 2147483647, %v174
        %v6499 = vand.u32 %v6498, 8388607
        %v6500 = vor.u32 %v6499, 8388608
        %v6501 = vsub.s32 0, %v6500
        %v6502 = vadd.s32 %v6497, 1
        %vm6503 = vcmp.gt.s32.totalorder %v6502, 0
        %v6504 = vsel %vm6503, %v6502, 0
        %v6505 = vshrl.u32 %v6504, 5
        %v6506 = vand.u32 %v6504, 31
        %v6507 = vsub.s32 32, %v6506
        %v6508 = vshrl.u32 683565275, %v6507
        %v6509 = vshll.u32 683565275, %v6506
        %v6510 = vshrl.u32 2475754826, %v6507
        %v6511 = vor.u32 %v6509, %v6510
        %v6512 = vshll.u32 2475754826, %v6506
        %v6513 = vshrl.u32 2131351028, %v6507
        %v6514 = vor.u32 %v6512, %v6513
        %v6515 = vshll.u32 2131351028, %v6506
        %v6516 = vshrl.u32 2102212464, %v6507
        %v6517 = vor.u32 %v6515, %v6516
        %v6518 = vshll.u32 2102212464, %v6506
        %v6519 = vshrl.u32 920167782, %v6507
        %v6520 = vor.u32 %v6518, %v6519
        %v6521 = vshll.u32 920167782, %v6506
        %v6522 = vshrl.u32 1326507024, %v6507
        %v6523 = vor.u32 %v6521, %v6522
        %vm6524 = vcmp.lt.s32.totalorder %v6505, 1
        %vm6525 = vcmp.lt.s32.totalorder %v6505, 2
        %vm6526 = vcmp.lt.s32.totalorder %v6505, 3
        %vm6527 = vcmp.lt.s32.totalorder %v6505, 4
        %v6528 = vsel %vm6524, %v6508, %v6511
        %v6529 = vsel %vm6527, %v6517, 2102212464
        %v6530 = vsel %vm6526, %v6514, %v6529
        %v6531 = vsel %vm6525, %v6528, %v6530
        %v6532 = vsel %vm6524, %v6511, %v6514
        %v6533 = vsel %vm6527, %v6520, 920167782
        %v6534 = vsel %vm6526, %v6517, %v6533
        %v6535 = vsel %vm6525, %v6532, %v6534
        %v6536 = vsel %vm6524, %v6514, %v6517
        %v6537 = vsel %vm6527, %v6523, 1326507024
        %v6538 = vsel %vm6526, %v6520, %v6537
        %v6539 = vsel %vm6525, %v6536, %v6538
        %v6540 = vshll.u32 %v6500, 8
        %v6541 = vmul.u32.u64.compose %v6540, %v6539
        %v6542 = vextract.low.u32 %v6541
        %v6543 = vextract.high.u32 %v6541
        %v6544 = vmul.u32.u64.compose %v6540, %v6535
        %v6545 = vextract.low.u32 %v6544
        %v6546 = vextract.high.u32 %v6544
        %v6547 = vmul.u32 %v6540, %v6531
        %v6548 = vadd.s32 %v6543, %v6545
        %vm6549 = vc.u32 %v6543, %v6545
        %v6550 = vadd.s32 %v6546, 1
        %v6551 = vsel %vm6549, %v6550, %v6546
        %v6552 = vadd.s32 %v6547, %v6551
        %v6553 = vadd.s32 %v6552, 536870912
        %v6554 = vshrl.u32 %v6553, 30
        %v6555 = vshll.u32 %v6554, 30
        %v6556 = vsub.s32 %v6552, %v6555
        %vm6557 = vcmp.lt.s32.totalorder %v6556, 0
        %v6558 = vsub.s32 0, %v6556
        %v6559 = vsel %vm6557, %v6558, %v6556
        %v6560 = vclz %v6559
        %v6561 = vsub.s32 %v6560, 2
        %vm6562 = vcmp.gt.s32.totalorder 0, %v6561
        %v6563 = vsel %vm6562, 0, %v6561
        %v6564 = vsub.s32 32, %v6563
        %v6565 = vshll.u32 %v6556, %v6563
        %v6566 = vshrl.u32 %v6548, %v6564
        %v6567 = vor.u32 %v6565, %v6566
        %v6568 = vsub.s32 4294967266, %v6563
        %v6569 = vadd.s32 %v6568, 127
        %v6570 = vshll.u32 %v6569, 23
        %v6571 = vor.u32 4788187, %v6570
        %v6572 = vand.u32 2147483647, %v6571
        %v6574 = vcvt.s32.f32 %v6567
        %v6575 = vmul.f32 %v6574, %v6572
        %v6576 = vxor.u32 %v6575, 2147483648
        %v6577 = vsel %vm6494, %v6576, %v6575
        %v6578 = vsub.s32 4, %v6554
        %v6579 = vsel %vm6494, %v6578, %v6554
        %v6580 = vsel %vm6493, %v174, %v6577
        %v6581 = vsel %vm6493, 0, %v6579
        %v6582 = vcosq.f32.pop %v6580
        %v6583 = vsinq.f32.pop %v6580
        %vm6584 = vweird.f32 %v174
        %v6585 = vand.u32 %v6581, 3
        %vm6586 = vcmp.lt.s32.totalorder %v6585, 2
        %vm6587 = vcmp.eq.s32.totalorder %v6585, 0
        %v6588 = vxor.u32 %v6583, 2147483648
        %v6589 = vsel %vm6587, %v6582, %v6588
        %vm6590 = vcmp.eq.s32.totalorder %v6585, 2
        %v6591 = vxor.u32 %v6582, 2147483648
        %v6592 = vsel %vm6590, %v6591, %v6583
        %v6593 = vsel %vm6586, %v6589, %v6592
        %v6594 = vsel %vm6584, nan, %v6593
        %v6595 = vand.u32 2147483647, %v175
        %vm6596 = vcmp.le.f32.partialorder %v6595, 0.7853982
        %vm6597 = vcmp.lt.s32.totalorder %v175, 0
        %v6598 = vand.u32 %v175, 2139095040
        %v6599 = vshrl.u32 %v6598, 23
        %v6600 = vsub.s32 %v6599, 127
        %v6601 = vand.u32 2147483647, %v175
        %v6602 = vand.u32 %v6601, 8388607
        %v6603 = vor.u32 %v6602, 8388608
        %v6604 = vsub.s32 0, %v6603
        %v6605 = vadd.s32 %v6600, 1
        %vm6606 = vcmp.gt.s32.totalorder %v6605, 0
        %v6607 = vsel %vm6606, %v6605, 0
        %v6608 = vshrl.u32 %v6607, 5
        %v6609 = vand.u32 %v6607, 31
        %v6610 = vsub.s32 32, %v6609
        %v6611 = vshrl.u32 683565275, %v6610
        %v6612 = vshll.u32 683565275, %v6609
        %v6613 = vshrl.u32 2475754826, %v6610
        %v6614 = vor.u32 %v6612, %v6613
        %v6615 = vshll.u32 2475754826, %v6609
        %v6616 = vshrl.u32 2131351028, %v6610
        %v6617 = vor.u32 %v6615, %v6616
        %v6618 = vshll.u32 2131351028, %v6609
        %v6619 = vshrl.u32 2102212464, %v6610
        %v6620 = vor.u32 %v6618, %v6619
        %v6621 = vshll.u32 2102212464, %v6609
        %v6622 = vshrl.u32 920167782, %v6610
        %v6623 = vor.u32 %v6621, %v6622
        %v6624 = vshll.u32 920167782, %v6609
        %v6625 = vshrl.u32 1326507024, %v6610
        %v6626 = vor.u32 %v6624, %v6625
        %vm6627 = vcmp.lt.s32.totalorder %v6608, 1
        %vm6628 = vcmp.lt.s32.totalorder %v6608, 2
        %vm6629 = vcmp.lt.s32.totalorder %v6608, 3
        %vm6630 = vcmp.lt.s32.totalorder %v6608, 4
        %v6631 = vsel %vm6627, %v6611, %v6614
        %v6632 = vsel %vm6630, %v6620, 2102212464
        %v6633 = vsel %vm6629, %v6617, %v6632
        %v6634 = vsel %vm6628, %v6631, %v6633
        %v6635 = vsel %vm6627, %v6614, %v6617
        %v6636 = vsel %vm6630, %v6623, 920167782
        %v6637 = vsel %vm6629, %v6620, %v6636
        %v6638 = vsel %vm6628, %v6635, %v6637
        %v6639 = vsel %vm6627, %v6617, %v6620
        %v6640 = vsel %vm6630, %v6626, 1326507024
        %v6641 = vsel %vm6629, %v6623, %v6640
        %v6642 = vsel %vm6628, %v6639, %v6641
        %v6643 = vshll.u32 %v6603, 8
        %v6644 = vmul.u32.u64.compose %v6643, %v6642
        %v6645 = vextract.low.u32 %v6644
        %v6646 = vextract.high.u32 %v6644
        %v6647 = vmul.u32.u64.compose %v6643, %v6638
        %v6648 = vextract.low.u32 %v6647
        %v6649 = vextract.high.u32 %v6647
        %v6650 = vmul.u32 %v6643, %v6634
        %v6651 = vadd.s32 %v6646, %v6648
        %vm6652 = vc.u32 %v6646, %v6648
        %v6653 = vadd.s32 %v6649, 1
        %v6654 = vsel %vm6652, %v6653, %v6649
        %v6655 = vadd.s32 %v6650, %v6654
        %v6656 = vadd.s32 %v6655, 536870912
        %v6657 = vshrl.u32 %v6656, 30
        %v6658 = vshll.u32 %v6657, 30
        %v6659 = vsub.s32 %v6655, %v6658
        %vm6660 = vcmp.lt.s32.totalorder %v6659, 0
        %v6661 = vsub.s32 0, %v6659
        %v6662 = vsel %vm6660, %v6661, %v6659
        %v6663 = vclz %v6662
        %v6664 = vsub.s32 %v6663, 2
        %vm6665 = vcmp.gt.s32.totalorder 0, %v6664
        %v6666 = vsel %vm6665, 0, %v6664
        %v6667 = vsub.s32 32, %v6666
        %v6668 = vshll.u32 %v6659, %v6666
        %v6669 = vshrl.u32 %v6651, %v6667
        %v6670 = vor.u32 %v6668, %v6669
        %v6671 = vsub.s32 4294967266, %v6666
        %v6672 = vadd.s32 %v6671, 127
        %v6673 = vshll.u32 %v6672, 23
        %v6674 = vor.u32 4788187, %v6673
        %v6675 = vand.u32 2147483647, %v6674
        %v6677 = vcvt.s32.f32 %v6670
        %v6678 = vmul.f32 %v6677, %v6675
        %v6679 = vxor.u32 %v6678, 2147483648
        %v6680 = vsel %vm6597, %v6679, %v6678
        %v6681 = vsub.s32 4, %v6657
        %v6682 = vsel %vm6597, %v6681, %v6657
        %v6683 = vsel %vm6596, %v175, %v6680
        %v6684 = vsel %vm6596, 0, %v6682
        %v6685 = vcosq.f32.pop %v6683
        %v6686 = vsinq.f32.pop %v6683
        %vm6687 = vweird.f32 %v175
        %v6688 = vand.u32 %v6684, 3
        %vm6689 = vcmp.lt.s32.totalorder %v6688, 2
        %vm6690 = vcmp.eq.s32.totalorder %v6688, 0
        %v6691 = vxor.u32 %v6686, 2147483648
        %v6692 = vsel %vm6690, %v6685, %v6691
        %vm6693 = vcmp.eq.s32.totalorder %v6688, 2
        %v6694 = vxor.u32 %v6685, 2147483648
        %v6695 = vsel %vm6693, %v6694, %v6686
        %v6696 = vsel %vm6689, %v6692, %v6695
        %v6697 = vsel %vm6687, nan, %v6696
        %v6698 = vand.u32 2147483647, %v176
        %vm6699 = vcmp.le.f32.partialorder %v6698, 0.7853982
        %vm6700 = vcmp.lt.s32.totalorder %v176, 0
        %v6701 = vand.u32 %v176, 2139095040
        %v6702 = vshrl.u32 %v6701, 23
        %v6703 = vsub.s32 %v6702, 127
        %v6704 = vand.u32 2147483647, %v176
        %v6705 = vand.u32 %v6704, 8388607
        %v6706 = vor.u32 %v6705, 8388608
        %v6707 = vsub.s32 0, %v6706
        %v6708 = vadd.s32 %v6703, 1
        %vm6709 = vcmp.gt.s32.totalorder %v6708, 0
        %v6710 = vsel %vm6709, %v6708, 0
        %v6711 = vshrl.u32 %v6710, 5
        %v6712 = vand.u32 %v6710, 31
        %v6713 = vsub.s32 32, %v6712
        %v6714 = vshrl.u32 683565275, %v6713
        %v6715 = vshll.u32 683565275, %v6712
        %v6716 = vshrl.u32 2475754826, %v6713
        %v6717 = vor.u32 %v6715, %v6716
        %v6718 = vshll.u32 2475754826, %v6712
        %v6719 = vshrl.u32 2131351028, %v6713
        %v6720 = vor.u32 %v6718, %v6719
        %v6721 = vshll.u32 2131351028, %v6712
        %v6722 = vshrl.u32 2102212464, %v6713
        %v6723 = vor.u32 %v6721, %v6722
        %v6724 = vshll.u32 2102212464, %v6712
        %v6725 = vshrl.u32 920167782, %v6713
        %v6726 = vor.u32 %v6724, %v6725
        %v6727 = vshll.u32 920167782, %v6712
        %v6728 = vshrl.u32 1326507024, %v6713
        %v6729 = vor.u32 %v6727, %v6728
        %vm6730 = vcmp.lt.s32.totalorder %v6711, 1
        %vm6731 = vcmp.lt.s32.totalorder %v6711, 2
        %vm6732 = vcmp.lt.s32.totalorder %v6711, 3
        %vm6733 = vcmp.lt.s32.totalorder %v6711, 4
        %v6734 = vsel %vm6730, %v6714, %v6717
        %v6735 = vsel %vm6733, %v6723, 2102212464
        %v6736 = vsel %vm6732, %v6720, %v6735
        %v6737 = vsel %vm6731, %v6734, %v6736
        %v6738 = vsel %vm6730, %v6717, %v6720
        %v6739 = vsel %vm6733, %v6726, 920167782
        %v6740 = vsel %vm6732, %v6723, %v6739
        %v6741 = vsel %vm6731, %v6738, %v6740
        %v6742 = vsel %vm6730, %v6720, %v6723
        %v6743 = vsel %vm6733, %v6729, 1326507024
        %v6744 = vsel %vm6732, %v6726, %v6743
        %v6745 = vsel %vm6731, %v6742, %v6744
        %v6746 = vshll.u32 %v6706, 8
        %v6747 = vmul.u32.u64.compose %v6746, %v6745
        %v6748 = vextract.low.u32 %v6747
        %v6749 = vextract.high.u32 %v6747
        %v6750 = vmul.u32.u64.compose %v6746, %v6741
        %v6751 = vextract.low.u32 %v6750
        %v6752 = vextract.high.u32 %v6750
        %v6753 = vmul.u32 %v6746, %v6737
        %v6754 = vadd.s32 %v6749, %v6751
        %vm6755 = vc.u32 %v6749, %v6751
        %v6756 = vadd.s32 %v6752, 1
        %v6757 = vsel %vm6755, %v6756, %v6752
        %v6758 = vadd.s32 %v6753, %v6757
        %v6759 = vadd.s32 %v6758, 536870912
        %v6760 = vshrl.u32 %v6759, 30
        %v6761 = vshll.u32 %v6760, 30
        %v6762 = vsub.s32 %v6758, %v6761
        %vm6763 = vcmp.lt.s32.totalorder %v6762, 0
        %v6764 = vsub.s32 0, %v6762
        %v6765 = vsel %vm6763, %v6764, %v6762
        %v6766 = vclz %v6765
        %v6767 = vsub.s32 %v6766, 2
        %vm6768 = vcmp.gt.s32.totalorder 0, %v6767
        %v6769 = vsel %vm6768, 0, %v6767
        %v6770 = vsub.s32 32, %v6769
        %v6771 = vshll.u32 %v6762, %v6769
        %v6772 = vshrl.u32 %v6754, %v6770
        %v6773 = vor.u32 %v6771, %v6772
        %v6774 = vsub.s32 4294967266, %v6769
        %v6775 = vadd.s32 %v6774, 127
        %v6776 = vshll.u32 %v6775, 23
        %v6777 = vor.u32 4788187, %v6776
        %v6778 = vand.u32 2147483647, %v6777
        %v6780 = vcvt.s32.f32 %v6773
        %v6781 = vmul.f32 %v6780, %v6778
        %v6782 = vxor.u32 %v6781, 2147483648
        %v6783 = vsel %vm6700, %v6782, %v6781
        %v6784 = vsub.s32 4, %v6760
        %v6785 = vsel %vm6700, %v6784, %v6760
        %v6786 = vsel %vm6699, %v176, %v6783
        %v6787 = vsel %vm6699, 0, %v6785
        %v6788 = vcosq.f32.pop %v6786
        %v6789 = vsinq.f32.pop %v6786
        %vm6790 = vweird.f32 %v176
        %v6791 = vand.u32 %v6787, 3
        %vm6792 = vcmp.lt.s32.totalorder %v6791, 2
        %vm6793 = vcmp.eq.s32.totalorder %v6791, 0
        %v6794 = vxor.u32 %v6789, 2147483648
        %v6795 = vsel %vm6793, %v6788, %v6794
        %vm6796 = vcmp.eq.s32.totalorder %v6791, 2
        %v6797 = vxor.u32 %v6788, 2147483648
        %v6798 = vsel %vm6796, %v6797, %v6789
        %v6799 = vsel %vm6792, %v6795, %v6798
        %v6800 = vsel %vm6790, nan, %v6799
        %v6801 = vld [vmem:[%s1 + $0x20] sm:$0xff]
        %v6802 = vld [vmem:[%s1 + $0x28] sm:$0xff]
        %v6803 = vld [vmem:[%s1 + $0x30] sm:$0xff]
        %v6804 = vld [vmem:[%s1 + $0x38] sm:$0xff]
        %v6805 = vld [vmem:[%s1 + $0x40] sm:$0xff]
        %v6806 = vld [vmem:[%s1 + $0x48] sm:$0xff]
        %v6807 = vld [vmem:[%s1 + $0x50] sm:$0xff]
        %v6808 = vld [vmem:[%s1 + $0x58] sm:$0xff]
        %vm6809 = vcmask 261120
        %v6811 = vsel %vm6809, %v6805, 0
        %v6814 = vsel %vm6809, %v6806, 0
        %v6817 = vsel %vm6809, %v6807, 0
        %v6820 = vsel %vm6809, %v6808, 0
        %6822 = vmatprep.subr.mxu0 %v3710
        %6823 = vmatpush1.msra.mxu0 %v3607
        %6824 = vmatprep.subr.mxu0 %v4534
        %6825 = vmatpush1.msra.mxu0 %v4431
        %6826 = vmatprep.subr.mxu0 %v5358
        %6827 = vmatpush1.msra.mxu0 %v5255
        %6828 = vmatprep.subr.mxu0 %v6182
        %6829 = vmatpush1.msra.mxu0 %v6079
        %6830 = vmatprep.subr.mxu0 0.0
        %6831 = vmatpush1.msra.mxu0 0.0
        %6832 = vmatprep.subr.mxu0 0.0
        %6833 = vmatpush1.msra.mxu0 0.0
        %6834 = vmatprep.subr.mxu0 0.0
        %6835 = vmatpush1.msra.mxu0 0.0
        %6836 = vmatprep.subr.mxu0 0.0
        %6837 = vmatpush1.msra.mxu0 0.0
        %6838 = vmatprep.subr.mxu0 0.0
        %6839 = vmatpush1.msra.mxu0 0.0
        %6840 = vmatprep.subr.mxu0 0.0
        %6841 = vmatpush1.msra.mxu0 0.0
        %6842 = vmatprep.subr.mxu0 0.0
        %6843 = vmatpush1.msra.mxu0 0.0
        %6844 = vmatprep.subr.mxu0 0.0
        %6845 = vmatpush1.msra.mxu0 0.0
        %6846 = vmatprep.subr.mxu0 0.0
        %6847 = vmatpush1.msra.mxu0 0.0
        %6848 = vmatprep.subr.mxu0 0.0
        %6849 = vmatpush1.msra.mxu0 0.0
        %6850 = vmatprep.subr.mxu0 0.0
        %6851 = vmatpush1.msra.mxu0 0.0
        %6852 = vmatprep.subr.mxu0 0.0
        %6853 = vmatpush1.msra.mxu0 0.0
        %6854 = vmatprep.subr.mxu0 0.0
        %6855 = vmatpush1.msra.mxu0 0.0
        %6856 = vmatprep.subr.mxu0 0.0
        %6857 = vmatpush1.msra.mxu0 0.0
        %6858 = vmatprep.subr.mxu0 0.0
        %6859 = vmatpush1.msra.mxu0 0.0
        %6860 = vmatprep.subr.mxu0 0.0
        %6861 = vmatpush1.msra.mxu0 0.0
        %6862 = vmatprep.subr.mxu0 0.0
        %6863 = vmatpush1.msra.mxu0 0.0
        %6864 = vmatprep.subr.mxu0 0.0
        %6865 = vmatpush1.msra.mxu0 0.0
        %6866 = vmatprep.subr.mxu0 0.0
        %6867 = vmatpush1.msra.mxu0 0.0
        %6868 = vmatprep.subr.mxu0 0.0
        %6869 = vmatpush1.msra.mxu0 0.0
        %6870 = vmatprep.subr.mxu0 0.0
        %6871 = vmatpush1.msra.mxu0 0.0
        %6872 = vmatprep.subr.mxu0 0.0
        %6873 = vmatpush1.msra.mxu0 0.0
        %6874 = vmatprep.subr.mxu0 0.0
        %6875 = vmatpush1.msra.mxu0 0.0
        %6876 = vmatprep.subr.mxu0 0.0
        %6877 = vmatpush1.msra.mxu0 0.0
        %6878 = vmatprep.subr.mxu0 0.0
        %6879 = vmatpush1.msra.mxu0 0.0
        %6880 = vmatprep.subr.mxu0 0.0
        %6881 = vmatpush1.msra.mxu0 0.0
        %6882 = vmatprep.subr.mxu0 0.0
        %6883 = vmatpush1.msra.mxu0 0.0
        %6884 = vmatprep.subr.mxu0 0.0
        %6885 = vmatpush1.msra.mxu0 0.0
        %6886 = vmatprep.mubr.f32.mxu0 0.0
        %6887 = vmatmul.mubr.f32.gmra.mrb[0].mxu0 %v6811
        %v6888 = vpop.f32.mrb[0].mxu0
        %v6889 = vadd.f32 0.0, %v6888
        %v6890 = vpop.f32.mrb[0].mxu0
        %v6891 = vadd.f32 0.0, %v6890
        %6892 = vmatprep.mubr.f32.mxu0 0.0
        %6893 = vmatmul.mubr.f32.gmra.mrb[0].mxu0 %v6814
        %v6894 = vpop.f32.mrb[0].mxu0
        %v6895 = vadd.f32 0.0, %v6894
        %v6896 = vpop.f32.mrb[0].mxu0
        %v6897 = vadd.f32 0.0, %v6896
        %6898 = vmatprep.mubr.f32.mxu0 0.0
        %6899 = vmatmul.mubr.f32.gmra.mrb[0].mxu0 %v6817
        %v6900 = vpop.f32.mrb[0].mxu0
        %v6901 = vadd.f32 0.0, %v6900
        %v6902 = vpop.f32.mrb[0].mxu0
        %v6903 = vadd.f32 0.0, %v6902
        %6904 = vmatprep.mubr.f32.mxu0 0.0
        %6905 = vmatmul.mubr.f32.gmra.mrb[0].mxu0 %v6820
        %v6906 = vpop.f32.mrb[0].mxu0
        %v6907 = vadd.f32 0.0, %v6906
        %v6908 = vpop.f32.mrb[0].mxu0
        %v6909 = vadd.f32 0.0, %v6908
        %6910 = vdwg.mxu0
        %6911 = vmatprep.subr.mxu0 %v3916
        %6912 = vmatpush1.msra.mxu0 %v3813
        %6913 = vmatprep.subr.mxu0 %v4740
        %6914 = vmatpush1.msra.mxu0 %v4637
        %6915 = vmatprep.subr.mxu0 %v5564
        %6916 = vmatpush1.msra.mxu0 %v5461
        %6917 = vmatprep.subr.mxu0 %v6388
        %6918 = vmatpush1.msra.mxu0 %v6285
        %6919 = vmatprep.subr.mxu0 0.0
        %6920 = vmatpush1.msra.mxu0 0.0
        %6921 = vmatprep.subr.mxu0 0.0
        %6922 = vmatpush1.msra.mxu0 0.0
        %6923 = vmatprep.subr.mxu0 0.0
        %6924 = vmatpush1.msra.mxu0 0.0
        %6925 = vmatprep.subr.mxu0 0.0
        %6926 = vmatpush1.msra.mxu0 0.0
        %6927 = vmatprep.subr.mxu0 0.0
        %6928 = vmatpush1.msra.mxu0 0.0
        %6929 = vmatprep.subr.mxu0 0.0
        %6930 = vmatpush1.msra.mxu0 0.0
        %6931 = vmatprep.subr.mxu0 0.0
        %6932 = vmatpush1.msra.mxu0 0.0
        %6933 = vmatprep.subr.mxu0 0.0
        %6934 = vmatpush1.msra.mxu0 0.0
        %6935 = vmatprep.subr.mxu0 0.0
        %6936 = vmatpush1.msra.mxu0 0.0
        %6937 = vmatprep.subr.mxu0 0.0
        %6938 = vmatpush1.msra.mxu0 0.0
        %6939 = vmatprep.subr.mxu0 0.0
        %6940 = vmatpush1.msra.mxu0 0.0
        %6941 = vmatprep.subr.mxu0 0.0
        %6942 = vmatpush1.msra.mxu0 0.0
        %6943 = vmatprep.subr.mxu0 0.0
        %6944 = vmatpush1.msra.mxu0 0.0
        %6945 = vmatprep.subr.mxu0 0.0
        %6946 = vmatpush1.msra.mxu0 0.0
        %6947 = vmatprep.subr.mxu0 0.0
        %6948 = vmatpush1.msra.mxu0 0.0
        %6949 = vmatprep.subr.mxu0 0.0
        %6950 = vmatpush1.msra.mxu0 0.0
        %6951 = vmatprep.subr.mxu0 0.0
        %6952 = vmatpush1.msra.mxu0 0.0
        %6953 = vmatprep.subr.mxu0 0.0
        %6954 = vmatpush1.msra.mxu0 0.0
        %6955 = vmatprep.subr.mxu0 0.0
        %6956 = vmatpush1.msra.mxu0 0.0
        %6957 = vmatprep.subr.mxu0 0.0
        %6958 = vmatpush1.msra.mxu0 0.0
        %6959 = vmatprep.subr.mxu0 0.0
        %6960 = vmatpush1.msra.mxu0 0.0
        %6961 = vmatprep.subr.mxu0 0.0
        %6962 = vmatpush1.msra.mxu0 0.0
        %6963 = vmatprep.subr.mxu0 0.0
        %6964 = vmatpush1.msra.mxu0 0.0
        %6965 = vmatprep.subr.mxu0 0.0
        %6966 = vmatpush1.msra.mxu0 0.0
        %6967 = vmatprep.subr.mxu0 0.0
        %6968 = vmatpush1.msra.mxu0 0.0
        %6969 = vmatprep.subr.mxu0 0.0
        %6970 = vmatpush1.msra.mxu0 0.0
        %6971 = vmatprep.subr.mxu0 0.0
        %6972 = vmatpush1.msra.mxu0 0.0
        %6973 = vmatprep.subr.mxu0 0.0
        %6974 = vmatpush1.msra.mxu0 0.0
        %6975 = vmatprep.mubr.f32.mxu0 0.0
        %6976 = vmatmul.mubr.f32.gmra.mrb[0].mxu0 %v6811
        %v6977 = vpop.f32.mrb[0].mxu0
        %v6978 = vadd.f32 0.0, %v6977
        %v6979 = vpop.f32.mrb[0].mxu0
        %v6980 = vadd.f32 0.0, %v6979
        %6981 = vmatprep.mubr.f32.mxu0 0.0
        %6982 = vmatmul.mubr.f32.gmra.mrb[0].mxu0 %v6814
        %v6983 = vpop.f32.mrb[0].mxu0
        %v6984 = vadd.f32 0.0, %v6983
        %v6985 = vpop.f32.mrb[0].mxu0
        %v6986 = vadd.f32 0.0, %v6985
        %6987 = vmatprep.mubr.f32.mxu0 0.0
        %6988 = vmatmul.mubr.f32.gmra.mrb[0].mxu0 %v6817
        %v6989 = vpop.f32.mrb[0].mxu0
        %v6990 = vadd.f32 0.0, %v6989
        %v6991 = vpop.f32.mrb[0].mxu0
        %v6992 = vadd.f32 0.0, %v6991
        %6993 = vmatprep.mubr.f32.mxu0 0.0
        %6994 = vmatmul.mubr.f32.gmra.mrb[0].mxu0 %v6820
        %v6995 = vpop.f32.mrb[0].mxu0
        %v6996 = vadd.f32 0.0, %v6995
        %v6997 = vpop.f32.mrb[0].mxu0
        %v6998 = vadd.f32 0.0, %v6997
        %6999 = vdwg.mxu0
        %7000 = vmatprep.subr.mxu0 %v4122
        %7001 = vmatpush1.msra.mxu0 %v4019
        %7002 = vmatprep.subr.mxu0 %v4946
        %7003 = vmatpush1.msra.mxu0 %v4843
        %7004 = vmatprep.subr.mxu0 %v5770
        %7005 = vmatpush1.msra.mxu0 %v5667
        %7006 = vmatprep.subr.mxu0 %v6594
        %7007 = vmatpush1.msra.mxu0 %v6491
        %7008 = vmatprep.subr.mxu0 0.0
        %7009 = vmatpush1.msra.mxu0 0.0
        %7010 = vmatprep.subr.mxu0 0.0
        %7011 = vmatpush1.msra.mxu0 0.0
        %7012 = vmatprep.subr.mxu0 0.0
        %7013 = vmatpush1.msra.mxu0 0.0
        %7014 = vmatprep.subr.mxu0 0.0
        %7015 = vmatpush1.msra.mxu0 0.0
        %7016 = vmatprep.subr.mxu0 0.0
        %7017 = vmatpush1.msra.mxu0 0.0
        %7018 = vmatprep.subr.mxu0 0.0
        %7019 = vmatpush1.msra.mxu0 0.0
        %7020 = vmatprep.subr.mxu0 0.0
        %7021 = vmatpush1.msra.mxu0 0.0
        %7022 = vmatprep.subr.mxu0 0.0
        %7023 = vmatpush1.msra.mxu0 0.0
        %7024 = vmatprep.subr.mxu0 0.0
        %7025 = vmatpush1.msra.mxu0 0.0
        %7026 = vmatprep.subr.mxu0 0.0
        %7027 = vmatpush1.msra.mxu0 0.0
        %7028 = vmatprep.subr.mxu0 0.0
        %7029 = vmatpush1.msra.mxu0 0.0
        %7030 = vmatprep.subr.mxu0 0.0
        %7031 = vmatpush1.msra.mxu0 0.0
        %7032 = vmatprep.subr.mxu0 0.0
        %7033 = vmatpush1.msra.mxu0 0.0
        %7034 = vmatprep.subr.mxu0 0.0
        %7035 = vmatpush1.msra.mxu0 0.0
        %7036 = vmatprep.subr.mxu0 0.0
        %7037 = vmatpush1.msra.mxu0 0.0
        %7038 = vmatprep.subr.mxu0 0.0
        %7039 = vmatpush1.msra.mxu0 0.0
        %7040 = vmatprep.subr.mxu0 0.0
        %7041 = vmatpush1.msra.mxu0 0.0
        %7042 = vmatprep.subr.mxu0 0.0
        %7043 = vmatpush1.msra.mxu0 0.0
        %7044 = vmatprep.subr.mxu0 0.0
        %7045 = vmatpush1.msra.mxu0 0.0
        %7046 = vmatprep.subr.mxu0 0.0
        %7047 = vmatpush1.msra.mxu0 0.0
        %7048 = vmatprep.subr.mxu0 0.0
        %7049 = vmatpush1.msra.mxu0 0.0
        %7050 = vmatprep.subr.mxu0 0.0
        %7051 = vmatpush1.msra.mxu0 0.0
        %7052 = vmatprep.subr.mxu0 0.0
        %7053 = vmatpush1.msra.mxu0 0.0
        %7054 = vmatprep.subr.mxu0 0.0
        %7055 = vmatpush1.msra.mxu0 0.0
        %7056 = vmatprep.subr.mxu0 0.0
        %7057 = vmatpush1.msra.mxu0 0.0
        %7058 = vmatprep.subr.mxu0 0.0
        %7059 = vmatpush1.msra.mxu0 0.0
        %7060 = vmatprep.subr.mxu0 0.0
        %7061 = vmatpush1.msra.mxu0 0.0
        %7062 = vmatprep.subr.mxu0 0.0
        %7063 = vmatpush1.msra.mxu0 0.0
        %7064 = vmatprep.mubr.f32.mxu0 0.0
        %7065 = vmatmul.mubr.f32.gmra.mrb[0].mxu0 %v6811
        %v7066 = vpop.f32.mrb[0].mxu0
        %v7067 = vadd.f32 0.0, %v7066
        %v7068 = vpop.f32.mrb[0].mxu0
        %v7069 = vadd.f32 0.0, %v7068
        %7070 = vmatprep.mubr.f32.mxu0 0.0
        %7071 = vmatmul.mubr.f32.gmra.mrb[0].mxu0 %v6814
        %v7072 = vpop.f32.mrb[0].mxu0
        %v7073 = vadd.f32 0.0, %v7072
        %v7074 = vpop.f32.mrb[0].mxu0
        %v7075 = vadd.f32 0.0, %v7074
        %7076 = vmatprep.mubr.f32.mxu0 0.0
        %7077 = vmatmul.mubr.f32.gmra.mrb[0].mxu0 %v6817
        %v7078 = vpop.f32.mrb[0].mxu0
        %v7079 = vadd.f32 0.0, %v7078
        %v7080 = vpop.f32.mrb[0].mxu0
        %v7081 = vadd.f32 0.0, %v7080
        %7082 = vmatprep.mubr.f32.mxu0 0.0
        %7083 = vmatmul.mubr.f32.gmra.mrb[0].mxu0 %v6820
        %v7084 = vpop.f32.mrb[0].mxu0
        %v7085 = vadd.f32 0.0, %v7084
        %v7086 = vpop.f32.mrb[0].mxu0
        %v7087 = vadd.f32 0.0, %v7086
        %7088 = vdwg.mxu0
        %7089 = vmatprep.subr.mxu0 %v4328
        %7090 = vmatpush1.msra.mxu0 %v4225
        %7091 = vmatprep.subr.mxu0 %v5152
        %7092 = vmatpush1.msra.mxu0 %v5049
        %7093 = vmatprep.subr.mxu0 %v5976
        %7094 = vmatpush1.msra.mxu0 %v5873
        %7095 = vmatprep.subr.mxu0 %v6800
        %7096 = vmatpush1.msra.mxu0 %v6697
        %7097 = vmatprep.subr.mxu0 0.0
        %7098 = vmatpush1.msra.mxu0 0.0
        %7099 = vmatprep.subr.mxu0 0.0
        %7100 = vmatpush1.msra.mxu0 0.0
        %7101 = vmatprep.subr.mxu0 0.0
        %7102 = vmatpush1.msra.mxu0 0.0
        %7103 = vmatprep.subr.mxu0 0.0
        %7104 = vmatpush1.msra.mxu0 0.0
        %7105 = vmatprep.subr.mxu0 0.0
        %7106 = vmatpush1.msra.mxu0 0.0
        %7107 = vmatprep.subr.mxu0 0.0
        %7108 = vmatpush1.msra.mxu0 0.0
        %7109 = vmatprep.subr.mxu0 0.0
        %7110 = vmatpush1.msra.mxu0 0.0
        %7111 = vmatprep.subr.mxu0 0.0
        %7112 = vmatpush1.msra.mxu0 0.0
        %7113 = vmatprep.subr.mxu0 0.0
        %7114 = vmatpush1.msra.mxu0 0.0
        %7115 = vmatprep.subr.mxu0 0.0
        %7116 = vmatpush1.msra.mxu0 0.0
        %7117 = vmatprep.subr.mxu0 0.0
        %7118 = vmatpush1.msra.mxu0 0.0
        %7119 = vmatprep.subr.mxu0 0.0
        %7120 = vmatpush1.msra.mxu0 0.0
        %7121 = vmatprep.subr.mxu0 0.0
        %7122 = vmatpush1.msra.mxu0 0.0
        %7123 = vmatprep.subr.mxu0 0.0
        %7124 = vmatpush1.msra.mxu0 0.0
        %7125 = vmatprep.subr.mxu0 0.0
        %7126 = vmatpush1.msra.mxu0 0.0
        %7127 = vmatprep.subr.mxu0 0.0
        %7128 = vmatpush1.msra.mxu0 0.0
        %7129 = vmatprep.subr.mxu0 0.0
        %7130 = vmatpush1.msra.mxu0 0.0
        %7131 = vmatprep.subr.mxu0 0.0
        %7132 = vmatpush1.msra.mxu0 0.0
        %7133 = vmatprep.subr.mxu0 0.0
        %7134 = vmatpush1.msra.mxu0 0.0
        %7135 = vmatprep.subr.mxu0 0.0
        %7136 = vmatpush1.msra.mxu0 0.0
        %7137 = vmatprep.subr.mxu0 0.0
        %7138 = vmatpush1.msra.mxu0 0.0
        %7139 = vmatprep.subr.mxu0 0.0
        %7140 = vmatpush1.msra.mxu0 0.0
        %7141 = vmatprep.subr.mxu0 0.0
        %7142 = vmatpush1.msra.mxu0 0.0
        %7143 = vmatprep.subr.mxu0 0.0
        %7144 = vmatpush1.msra.mxu0 0.0
        %7145 = vmatprep.subr.mxu0 0.0
        %7146 = vmatpush1.msra.mxu0 0.0
        %7147 = vmatprep.subr.mxu0 0.0
        %7148 = vmatpush1.msra.mxu0 0.0
        %7149 = vmatprep.subr.mxu0 0.0
        %7150 = vmatpush1.msra.mxu0 0.0
        %7151 = vmatprep.subr.mxu0 0.0
        %7152 = vmatpush1.msra.mxu0 0.0
        %7153 = vmatprep.mubr.f32.mxu0 0.0
        %7154 = vmatmul.mubr.f32.gmra.mrb[0].mxu0 %v6811
        %v7155 = vpop.f32.mrb[0].mxu0
        %v7156 = vadd.f32 0.0, %v7155
        %v7157 = vpop.f32.mrb[0].mxu0
        %v7158 = vadd.f32 0.0, %v7157
        %7159 = vmatprep.mubr.f32.mxu0 0.0
        %7160 = vmatmul.mubr.f32.gmra.mrb[0].mxu0 %v6814
        %v7161 = vpop.f32.mrb[0].mxu0
        %v7162 = vadd.f32 0.0, %v7161
        %v7163 = vpop.f32.mrb[0].mxu0
        %v7164 = vadd.f32 0.0, %v7163
        %7165 = vmatprep.mubr.f32.mxu0 0.0
        %7166 = vmatmul.mubr.f32.gmra.mrb[0].mxu0 %v6817
        %v7167 = vpop.f32.mrb[0].mxu0
        %v7168 = vadd.f32 0.0, %v7167
        %v7169 = vpop.f32.mrb[0].mxu0
        %v7170 = vadd.f32 0.0, %v7169
        %7171 = vmatprep.mubr.f32.mxu0 0.0
        %7172 = vmatmul.mubr.f32.gmra.mrb[0].mxu0 %v6820
        %v7173 = vpop.f32.mrb[0].mxu0
        %v7174 = vadd.f32 0.0, %v7173
        %v7175 = vpop.f32.mrb[0].mxu0
        %v7176 = vadd.f32 0.0, %v7175
        %7177 = vdwg.mxu0
        %v7179 = vsel %vm6809, %v6801, 0
        %v7182 = vsel %vm6809, %v6802, 0
        %v7185 = vsel %vm6809, %v6803, 0
        %v7188 = vsel %vm6809, %v6804, 0
        %7190 = vmatprep.subr.mxu0 %v384
        %7191 = vmatpush1.msra.mxu0 %v280
        %7192 = vmatprep.subr.mxu0 %v1216
        %7193 = vmatpush1.msra.mxu0 %v1112
        %7194 = vmatprep.subr.mxu0 %v2048
        %7195 = vmatpush1.msra.mxu0 %v1944
        %7196 = vmatprep.subr.mxu0 %v2880
        %7197 = vmatpush1.msra.mxu0 %v2776
        %7198 = vmatprep.subr.mxu0 0.0
        %7199 = vmatpush1.msra.mxu0 0.0
        %7200 = vmatprep.subr.mxu0 0.0
        %7201 = vmatpush1.msra.mxu0 0.0
        %7202 = vmatprep.subr.mxu0 0.0
        %7203 = vmatpush1.msra.mxu0 0.0
        %7204 = vmatprep.subr.mxu0 0.0
        %7205 = vmatpush1.msra.mxu0 0.0
        %7206 = vmatprep.subr.mxu0 0.0
        %7207 = vmatpush1.msra.mxu0 0.0
        %7208 = vmatprep.subr.mxu0 0.0
        %7209 = vmatpush1.msra.mxu0 0.0
        %7210 = vmatprep.subr.mxu0 0.0
        %7211 = vmatpush1.msra.mxu0 0.0
        %7212 = vmatprep.subr.mxu0 0.0
        %7213 = vmatpush1.msra.mxu0 0.0
        %7214 = vmatprep.subr.mxu0 0.0
        %7215 = vmatpush1.msra.mxu0 0.0
        %7216 = vmatprep.subr.mxu0 0.0
        %7217 = vmatpush1.msra.mxu0 0.0
        %7218 = vmatprep.subr.mxu0 0.0
        %7219 = vmatpush1.msra.mxu0 0.0
        %7220 = vmatprep.subr.mxu0 0.0
        %7221 = vmatpush1.msra.mxu0 0.0
        %7222 = vmatprep.subr.mxu0 0.0
        %7223 = vmatpush1.msra.mxu0 0.0
        %7224 = vmatprep.subr.mxu0 0.0
        %7225 = vmatpush1.msra.mxu0 0.0
        %7226 = vmatprep.subr.mxu0 0.0
        %7227 = vmatpush1.msra.mxu0 0.0
        %7228 = vmatprep.subr.mxu0 0.0
        %7229 = vmatpush1.msra.mxu0 0.0
        %7230 = vmatprep.subr.mxu0 0.0
        %7231 = vmatpush1.msra.mxu0 0.0
        %7232 = vmatprep.subr.mxu0 0.0
        %7233 = vmatpush1.msra.mxu0 0.0
        %7234 = vmatprep.subr.mxu0 0.0
        %7235 = vmatpush1.msra.mxu0 0.0
        %7236 = vmatprep.subr.mxu0 0.0
        %7237 = vmatpush1.msra.mxu0 0.0
        %7238 = vmatprep.subr.mxu0 0.0
        %7239 = vmatpush1.msra.mxu0 0.0
        %7240 = vmatprep.subr.mxu0 0.0
        %7241 = vmatpush1.msra.mxu0 0.0
        %7242 = vmatprep.subr.mxu0 0.0
        %7243 = vmatpush1.msra.mxu0 0.0
        %7244 = vmatprep.subr.mxu0 0.0
        %7245 = vmatpush1.msra.mxu0 0.0
        %7246 = vmatprep.subr.mxu0 0.0
        %7247 = vmatpush1.msra.mxu0 0.0
        %7248 = vmatprep.subr.mxu0 0.0
        %7249 = vmatpush1.msra.mxu0 0.0
        %7250 = vmatprep.subr.mxu0 0.0
        %7251 = vmatpush1.msra.mxu0 0.0
        %7252 = vmatprep.subr.mxu0 0.0
        %7253 = vmatpush1.msra.mxu0 0.0
        %7254 = vmatprep.mubr.f32.mxu0 0.0
        %7255 = vmatmul.mubr.f32.gmra.mrb[0].mxu0 %v7179
        %v7256 = vpop.f32.mrb[0].mxu0
        %v7257 = vadd.f32 %v6889, %v7256
        %v7258 = vpop.f32.mrb[0].mxu0
        %v7259 = vadd.f32 %v6891, %v7258
        %7260 = vmatprep.mubr.f32.mxu0 0.0
        %7261 = vmatmul.mubr.f32.gmra.mrb[0].mxu0 %v7182
        %v7262 = vpop.f32.mrb[0].mxu0
        %v7263 = vadd.f32 %v6895, %v7262
        %v7264 = vpop.f32.mrb[0].mxu0
        %v7265 = vadd.f32 %v6897, %v7264
        %7266 = vmatprep.mubr.f32.mxu0 0.0
        %7267 = vmatmul.mubr.f32.gmra.mrb[0].mxu0 %v7185
        %v7268 = vpop.f32.mrb[0].mxu0
        %v7269 = vadd.f32 %v6901, %v7268
        %v7270 = vpop.f32.mrb[0].mxu0
        %v7271 = vadd.f32 %v6903, %v7270
        %7272 = vmatprep.mubr.f32.mxu0 0.0
        %7273 = vmatmul.mubr.f32.gmra.mrb[0].mxu0 %v7188
        %v7274 = vpop.f32.mrb[0].mxu0
        %v7275 = vadd.f32 %v6907, %v7274
        %v7276 = vpop.f32.mrb[0].mxu0
        %v7277 = vadd.f32 %v6909, %v7276
        %7278 = vdwg.mxu0
        %7279 = vmatprep.subr.mxu0 %v592
        %7280 = vmatpush1.msra.mxu0 %v488
        %7281 = vmatprep.subr.mxu0 %v1424
        %7282 = vmatpush1.msra.mxu0 %v1320
        %7283 = vmatprep.subr.mxu0 %v2256
        %7284 = vmatpush1.msra.mxu0 %v2152
        %7285 = vmatprep.subr.mxu0 %v3088
        %7286 = vmatpush1.msra.mxu0 %v2984
        %7287 = vmatprep.subr.mxu0 0.0
        %7288 = vmatpush1.msra.mxu0 0.0
        %7289 = vmatprep.subr.mxu0 0.0
        %7290 = vmatpush1.msra.mxu0 0.0
        %7291 = vmatprep.subr.mxu0 0.0
        %7292 = vmatpush1.msra.mxu0 0.0
        %7293 = vmatprep.subr.mxu0 0.0
        %7294 = vmatpush1.msra.mxu0 0.0
        %7295 = vmatprep.subr.mxu0 0.0
        %7296 = vmatpush1.msra.mxu0 0.0
        %7297 = vmatprep.subr.mxu0 0.0
        %7298 = vmatpush1.msra.mxu0 0.0
        %7299 = vmatprep.subr.mxu0 0.0
        %7300 = vmatpush1.msra.mxu0 0.0
        %7301 = vmatprep.subr.mxu0 0.0
        %7302 = vmatpush1.msra.mxu0 0.0
        %7303 = vmatprep.subr.mxu0 0.0
        %7304 = vmatpush1.msra.mxu0 0.0
        %7305 = vmatprep.subr.mxu0 0.0
        %7306 = vmatpush1.msra.mxu0 0.0
        %7307 = vmatprep.subr.mxu0 0.0
        %7308 = vmatpush1.msra.mxu0 0.0
        %7309 = vmatprep.subr.mxu0 0.0
        %7310 = vmatpush1.msra.mxu0 0.0
        %7311 = vmatprep.subr.mxu0 0.0
        %7312 = vmatpush1.msra.mxu0 0.0
        %7313 = vmatprep.subr.mxu0 0.0
        %7314 = vmatpush1.msra.mxu0 0.0
        %7315 = vmatprep.subr.mxu0 0.0
        %7316 = vmatpush1.msra.mxu0 0.0
        %7317 = vmatprep.subr.mxu0 0.0
        %7318 = vmatpush1.msra.mxu0 0.0
        %7319 = vmatprep.subr.mxu0 0.0
        %7320 = vmatpush1.msra.mxu0 0.0
        %7321 = vmatprep.subr.mxu0 0.0
        %7322 = vmatpush1.msra.mxu0 0.0
        %7323 = vmatprep.subr.mxu0 0.0
        %7324 = vmatpush1.msra.mxu0 0.0
        %7325 = vmatprep.subr.mxu0 0.0
        %7326 = vmatpush1.msra.mxu0 0.0
        %7327 = vmatprep.subr.mxu0 0.0
        %7328 = vmatpush1.msra.mxu0 0.0
        %7329 = vmatprep.subr.mxu0 0.0
        %7330 = vmatpush1.msra.mxu0 0.0
        %7331 = vmatprep.subr.mxu0 0.0
        %7332 = vmatpush1.msra.mxu0 0.0
        %7333 = vmatprep.subr.mxu0 0.0
        %7334 = vmatpush1.msra.mxu0 0.0
        %7335 = vmatprep.subr.mxu0 0.0
        %7336 = vmatpush1.msra.mxu0 0.0
        %7337 = vmatprep.subr.mxu0 0.0
        %7338 = vmatpush1.msra.mxu0 0.0
        %7339 = vmatprep.subr.mxu0 0.0
        %7340 = vmatpush1.msra.mxu0 0.0
        %7341 = vmatprep.subr.mxu0 0.0
        %7342 = vmatpush1.msra.mxu0 0.0
        %7343 = vmatprep.mubr.f32.mxu0 0.0
        %7344 = vmatmul.mubr.f32.gmra.mrb[0].mxu0 %v7179
        %v7345 = vpop.f32.mrb[0].mxu0
        %v7346 = vadd.f32 %v6978, %v7345
        %v7347 = vpop.f32.mrb[0].mxu0
        %v7348 = vadd.f32 %v6980, %v7347
        %7349 = vmatprep.mubr.f32.mxu0 0.0
        %7350 = vmatmul.mubr.f32.gmra.mrb[0].mxu0 %v7182
        %v7351 = vpop.f32.mrb[0].mxu0
        %v7352 = vadd.f32 %v6984, %v7351
        %v7353 = vpop.f32.mrb[0].mxu0
        %v7354 = vadd.f32 %v6986, %v7353
        %7355 = vmatprep.mubr.f32.mxu0 0.0
        %7356 = vmatmul.mubr.f32.gmra.mrb[0].mxu0 %v7185
        %v7357 = vpop.f32.mrb[0].mxu0
        %v7358 = vadd.f32 %v6990, %v7357
        %v7359 = vpop.f32.mrb[0].mxu0
        %v7360 = vadd.f32 %v6992, %v7359
        %7361 = vmatprep.mubr.f32.mxu0 0.0
        %7362 = vmatmul.mubr.f32.gmra.mrb[0].mxu0 %v7188
        %v7363 = vpop.f32.mrb[0].mxu0
        %v7364 = vadd.f32 %v6996, %v7363
        %v7365 = vpop.f32.mrb[0].mxu0
        %v7366 = vadd.f32 %v6998, %v7365
        %7367 = vdwg.mxu0
        %7368 = vmatprep.subr.mxu0 %v800
        %7369 = vmatpush1.msra.mxu0 %v696
        %7370 = vmatprep.subr.mxu0 %v1632
        %7371 = vmatpush1.msra.mxu0 %v1528
        %7372 = vmatprep.subr.mxu0 %v2464
        %7373 = vmatpush1.msra.mxu0 %v2360
        %7374 = vmatprep.subr.mxu0 %v3296
        %7375 = vmatpush1.msra.mxu0 %v3192
        %7376 = vmatprep.subr.mxu0 0.0
        %7377 = vmatpush1.msra.mxu0 0.0
        %7378 = vmatprep.subr.mxu0 0.0
        %7379 = vmatpush1.msra.mxu0 0.0
        %7380 = vmatprep.subr.mxu0 0.0
        %7381 = vmatpush1.msra.mxu0 0.0
        %7382 = vmatprep.subr.mxu0 0.0
        %7383 = vmatpush1.msra.mxu0 0.0
        %7384 = vmatprep.subr.mxu0 0.0
        %7385 = vmatpush1.msra.mxu0 0.0
        %7386 = vmatprep.subr.mxu0 0.0
        %7387 = vmatpush1.msra.mxu0 0.0
        %7388 = vmatprep.subr.mxu0 0.0
        %7389 = vmatpush1.msra.mxu0 0.0
        %7390 = vmatprep.subr.mxu0 0.0
        %7391 = vmatpush1.msra.mxu0 0.0
        %7392 = vmatprep.subr.mxu0 0.0
        %7393 = vmatpush1.msra.mxu0 0.0
        %7394 = vmatprep.subr.mxu0 0.0
        %7395 = vmatpush1.msra.mxu0 0.0
        %7396 = vmatprep.subr.mxu0 0.0
        %7397 = vmatpush1.msra.mxu0 0.0
        %7398 = vmatprep.subr.mxu0 0.0
        %7399 = vmatpush1.msra.mxu0 0.0
        %7400 = vmatprep.subr.mxu0 0.0
        %7401 = vmatpush1.msra.mxu0 0.0
        %7402 = vmatprep.subr.mxu0 0.0
        %7403 = vmatpush1.msra.mxu0 0.0
        %7404 = vmatprep.subr.mxu0 0.0
        %7405 = vmatpush1.msra.mxu0 0.0
        %7406 = vmatprep.subr.mxu0 0.0
        %7407 = vmatpush1.msra.mxu0 0.0
        %7408 = vmatprep.subr.mxu0 0.0
        %7409 = vmatpush1.msra.mxu0 0.0
        %7410 = vmatprep.subr.mxu0 0.0
        %7411 = vmatpush1.msra.mxu0 0.0
        %7412 = vmatprep.subr.mxu0 0.0
        %7413 = vmatpush1.msra.mxu0 0.0
        %7414 = vmatprep.subr.mxu0 0.0
        %7415 = vmatpush1.msra.mxu0 0.0
        %7416 = vmatprep.subr.mxu0 0.0
        %7417 = vmatpush1.msra.mxu0 0.0
        %7418 = vmatprep.subr.mxu0 0.0
        %7419 = vmatpush1.msra.mxu0 0.0
        %7420 = vmatprep.subr.mxu0 0.0
        %7421 = vmatpush1.msra.mxu0 0.0
        %7422 = vmatprep.subr.mxu0 0.0
        %7423 = vmatpush1.msra.mxu0 0.0
        %7424 = vmatprep.subr.mxu0 0.0
        %7425 = vmatpush1.msra.mxu0 0.0
        %7426 = vmatprep.subr.mxu0 0.0
        %7427 = vmatpush1.msra.mxu0 0.0
        %7428 = vmatprep.subr.mxu0 0.0
        %7429 = vmatpush1.msra.mxu0 0.0
        %7430 = vmatprep.subr.mxu0 0.0
        %7431 = vmatpush1.msra.mxu0 0.0
        %7432 = vmatprep.mubr.f32.mxu0 0.0
        %7433 = vmatmul.mubr.f32.gmra.mrb[0].mxu0 %v7179
        %v7434 = vpop.f32.mrb[0].mxu0
        %v7435 = vadd.f32 %v7067, %v7434
        %v7436 = vpop.f32.mrb[0].mxu0
        %v7437 = vadd.f32 %v7069, %v7436
        %7438 = vmatprep.mubr.f32.mxu0 0.0
        %7439 = vmatmul.mubr.f32.gmra.mrb[0].mxu0 %v7182
        %v7440 = vpop.f32.mrb[0].mxu0
        %v7441 = vadd.f32 %v7073, %v7440
        %v7442 = vpop.f32.mrb[0].mxu0
        %v7443 = vadd.f32 %v7075, %v7442
        %7444 = vmatprep.mubr.f32.mxu0 0.0
        %7445 = vmatmul.mubr.f32.gmra.mrb[0].mxu0 %v7185
        %v7446 = vpop.f32.mrb[0].mxu0
        %v7447 = vadd.f32 %v7079, %v7446
        %v7448 = vpop.f32.mrb[0].mxu0
        %v7449 = vadd.f32 %v7081, %v7448
        %7450 = vmatprep.mubr.f32.mxu0 0.0
        %7451 = vmatmul.mubr.f32.gmra.mrb[0].mxu0 %v7188
        %v7452 = vpop.f32.mrb[0].mxu0
        %v7453 = vadd.f32 %v7085, %v7452
        %v7454 = vpop.f32.mrb[0].mxu0
        %v7455 = vadd.f32 %v7087, %v7454
        %7456 = vdwg.mxu0
        %7457 = vmatprep.subr.mxu0 %v1008
        %7458 = vmatpush1.msra.mxu0 %v904
        %7459 = vmatprep.subr.mxu0 %v1840
        %7460 = vmatpush1.msra.mxu0 %v1736
        %7461 = vmatprep.subr.mxu0 %v2672
        %7462 = vmatpush1.msra.mxu0 %v2568
        %7463 = vmatprep.subr.mxu0 %v3504
        %7464 = vmatpush1.msra.mxu0 %v3400
        %7465 = vmatprep.subr.mxu0 0.0
        %7466 = vmatpush1.msra.mxu0 0.0
        %7467 = vmatprep.subr.mxu0 0.0
        %7468 = vmatpush1.msra.mxu0 0.0
        %7469 = vmatprep.subr.mxu0 0.0
        %7470 = vmatpush1.msra.mxu0 0.0
        %7471 = vmatprep.subr.mxu0 0.0
        %7472 = vmatpush1.msra.mxu0 0.0
        %7473 = vmatprep.subr.mxu0 0.0
        %7474 = vmatpush1.msra.mxu0 0.0
        %7475 = vmatprep.subr.mxu0 0.0
        %7476 = vmatpush1.msra.mxu0 0.0
        %7477 = vmatprep.subr.mxu0 0.0
        %7478 = vmatpush1.msra.mxu0 0.0
        %7479 = vmatprep.subr.mxu0 0.0
        %7480 = vmatpush1.msra.mxu0 0.0
        %7481 = vmatprep.subr.mxu0 0.0
        %7482 = vmatpush1.msra.mxu0 0.0
        %7483 = vmatprep.subr.mxu0 0.0
        %7484 = vmatpush1.msra.mxu0 0.0
        %7485 = vmatprep.subr.mxu0 0.0
        %7486 = vmatpush1.msra.mxu0 0.0
        %7487 = vmatprep.subr.mxu0 0.0
        %7488 = vmatpush1.msra.mxu0 0.0
        %7489 = vmatprep.subr.mxu0 0.0
        %7490 = vmatpush1.msra.mxu0 0.0
        %7491 = vmatprep.subr.mxu0 0.0
        %7492 = vmatpush1.msra.mxu0 0.0
        %7493 = vmatprep.subr.mxu0 0.0
        %7494 = vmatpush1.msra.mxu0 0.0
        %7495 = vmatprep.subr.mxu0 0.0
        %7496 = vmatpush1.msra.mxu0 0.0
        %7497 = vmatprep.subr.mxu0 0.0
        %7498 = vmatpush1.msra.mxu0 0.0
        %7499 = vmatprep.subr.mxu0 0.0
        %7500 = vmatpush1.msra.mxu0 0.0
        %7501 = vmatprep.subr.mxu0 0.0
        %7502 = vmatpush1.msra.mxu0 0.0
        %7503 = vmatprep.subr.mxu0 0.0
        %7504 = vmatpush1.msra.mxu0 0.0
        %7505 = vmatprep.subr.mxu0 0.0
        %7506 = vmatpush1.msra.mxu0 0.0
        %7507 = vmatprep.subr.mxu0 0.0
        %7508 = vmatpush1.msra.mxu0 0.0
        %7509 = vmatprep.subr.mxu0 0.0
        %7510 = vmatpush1.msra.mxu0 0.0
        %7511 = vmatprep.subr.mxu0 0.0
        %7512 = vmatpush1.msra.mxu0 0.0
        %7513 = vmatprep.subr.mxu0 0.0
        %7514 = vmatpush1.msra.mxu0 0.0
        %7515 = vmatprep.subr.mxu0 0.0
        %7516 = vmatpush1.msra.mxu0 0.0
        %7517 = vmatprep.subr.mxu0 0.0
        %7518 = vmatpush1.msra.mxu0 0.0
        %7519 = vmatprep.subr.mxu0 0.0
        %7520 = vmatpush1.msra.mxu0 0.0
        %7521 = vmatprep.mubr.f32.mxu0 0.0
        %7522 = vmatmul.mubr.f32.gmra.mrb[0].mxu0 %v7179
        %v7523 = vpop.f32.mrb[0].mxu0
        %v7524 = vadd.f32 %v7156, %v7523
        %v7525 = vpop.f32.mrb[0].mxu0
        %v7526 = vadd.f32 %v7158, %v7525
        %7527 = vmatprep.mubr.f32.mxu0 0.0
        %7528 = vmatmul.mubr.f32.gmra.mrb[0].mxu0 %v7182
        %v7529 = vpop.f32.mrb[0].mxu0
        %v7530 = vadd.f32 %v7162, %v7529
        %v7531 = vpop.f32.mrb[0].mxu0
        %v7532 = vadd.f32 %v7164, %v7531
        %7533 = vmatprep.mubr.f32.mxu0 0.0
        %7534 = vmatmul.mubr.f32.gmra.mrb[0].mxu0 %v7185
        %v7535 = vpop.f32.mrb[0].mxu0
        %v7536 = vadd.f32 %v7168, %v7535
        %v7537 = vpop.f32.mrb[0].mxu0
        %v7538 = vadd.f32 %v7170, %v7537
        %7539 = vmatprep.mubr.f32.mxu0 0.0
        %7540 = vmatmul.mubr.f32.gmra.mrb[0].mxu0 %v7188
        %v7541 = vpop.f32.mrb[0].mxu0
        %v7542 = vadd.f32 %v7174, %v7541
        %v7543 = vpop.f32.mrb[0].mxu0
        %v7544 = vadd.f32 %v7176, %v7543
        %7545 = vdwg.mxu0
        %v7546 = vld [vmem:[%s1] sm:$0xff]
        %v7547 = vld [vmem:[%s1 + $0x8] sm:$0xff]
        %v7548 = vld [vmem:[%s1 + $0x10] sm:$0xff]
        %v7549 = vld [vmem:[%s1 + $0x18] sm:$0xff]
        %7551 = vset.pattern.permute.xlu0 0
        %7552 = vperm.xlu0 %7551, %v7546
        %v7553 = vpop.permute.xlu0 %7552
        %7556 = vset.pattern.permute.xlu0 0
        %7557 = vperm.xlu0 %7556, %v7547
        %v7558 = vpop.permute.xlu0 %7557
        %7561 = vset.pattern.permute.xlu0 0
        %7562 = vperm.xlu0 %7561, %v7548
        %v7563 = vpop.permute.xlu0 %7562
        %7566 = vset.pattern.permute.xlu0 0
        %7567 = vperm.xlu0 %7566, %v7549
        %v7568 = vpop.permute.xlu0 %7567
        %v7570 = vlaneseq
        %v7571 = vshrl.u32 %v7570, 7
        %v7572 = vsub.s32 0, %v7571
        %v7573 = vrot.slane %v145, %v7572
        %v7574 = vlaneseq
        %v7575 = vshrl.u32 %v7574, 7
        %v7576 = vsub.s32 0, %v7575
        %v7577 = vrot.slane %v146, %v7576
        %v7578 = vlaneseq
        %v7579 = vshrl.u32 %v7578, 7
        %v7580 = vsub.s32 0, %v7579
        %v7581 = vrot.slane %v147, %v7580
        %v7582 = vlaneseq
        %v7583 = vshrl.u32 %v7582, 7
        %v7584 = vsub.s32 0, %v7583
        %v7585 = vrot.slane %v148, %v7584
        %v7586 = vlaneseq
        %v7587 = vshrl.u32 %v7586, 7
        %v7588 = vsub.s32 0, %v7587
        %v7589 = vrot.slane %v149, %v7588
        %v7590 = vlaneseq
        %v7591 = vshrl.u32 %v7590, 7
        %v7592 = vsub.s32 0, %v7591
        %v7593 = vrot.slane %v150, %v7592
        %v7594 = vlaneseq
        %v7595 = vshrl.u32 %v7594, 7
        %v7596 = vsub.s32 0, %v7595
        %v7597 = vrot.slane %v151, %v7596
        %v7598 = vlaneseq
        %v7599 = vshrl.u32 %v7598, 7
        %v7600 = vsub.s32 0, %v7599
        %v7601 = vrot.slane %v152, %v7600
        %v7602 = vmul.f32 %v7553, %v7573
        %v7603 = vmul.f32 %v7553, %v7577
        %v7604 = vmul.f32 %v7553, %v7581
        %v7605 = vmul.f32 %v7553, %v7585
        %v7606 = vmul.f32 %v7553, %v7589
        %v7607 = vmul.f32 %v7553, %v7593
        %v7608 = vmul.f32 %v7553, %v7597
        %v7609 = vmul.f32 %v7553, %v7601
        %v7610 = vmul.f32 %v7558, %v7573
        %v7611 = vmul.f32 %v7558, %v7577
        %v7612 = vmul.f32 %v7558, %v7581
        %v7613 = vmul.f32 %v7558, %v7585
        %v7614 = vmul.f32 %v7558, %v7589
        %v7615 = vmul.f32 %v7558, %v7593
        %v7616 = vmul.f32 %v7558, %v7597
        %v7617 = vmul.f32 %v7558, %v7601
        %v7618 = vmul.f32 %v7563, %v7573
        %v7619 = vmul.f32 %v7563, %v7577
        %v7620 = vmul.f32 %v7563, %v7581
        %v7621 = vmul.f32 %v7563, %v7585
        %v7622 = vmul.f32 %v7563, %v7589
        %v7623 = vmul.f32 %v7563, %v7593
        %v7624 = vmul.f32 %v7563, %v7597
        %v7625 = vmul.f32 %v7563, %v7601
        %v7626 = vmul.f32 %v7568, %v7573
        %v7627 = vmul.f32 %v7568, %v7577
        %v7628 = vmul.f32 %v7568, %v7581
        %v7629 = vmul.f32 %v7568, %v7585
        %v7630 = vmul.f32 %v7568, %v7589
        %v7631 = vmul.f32 %v7568, %v7593
        %v7632 = vmul.f32 %v7568, %v7597
        %v7633 = vmul.f32 %v7568, %v7601
        %v7634 = vadd.f32 %v7257, %v7602
        %v7635 = vadd.f32 %v7259, %v7603
        %v7636 = vadd.f32 %v7346, %v7604
        %v7637 = vadd.f32 %v7348, %v7605
        %v7638 = vadd.f32 %v7435, %v7606
        %v7639 = vadd.f32 %v7437, %v7607
        %v7640 = vadd.f32 %v7524, %v7608
        %v7641 = vadd.f32 %v7526, %v7609
        %v7642 = vadd.f32 %v7263, %v7610
        %v7643 = vadd.f32 %v7265, %v7611
        %v7644 = vadd.f32 %v7352, %v7612
        %v7645 = vadd.f32 %v7354, %v7613
        %v7646 = vadd.f32 %v7441, %v7614
        %v7647 = vadd.f32 %v7443, %v7615
        %v7648 = vadd.f32 %v7530, %v7616
        %v7649 = vadd.f32 %v7532, %v7617
        %v7650 = vadd.f32 %v7269, %v7618
        %v7651 = vadd.f32 %v7271, %v7619
        %v7652 = vadd.f32 %v7358, %v7620
        %v7653 = vadd.f32 %v7360, %v7621
        %v7654 = vadd.f32 %v7447, %v7622
        %v7655 = vadd.f32 %v7449, %v7623
        %v7656 = vadd.f32 %v7536, %v7624
        %v7657 = vadd.f32 %v7538, %v7625
        %v7658 = vadd.f32 %v7275, %v7626
        %v7659 = vadd.f32 %v7277, %v7627
        %v7660 = vadd.f32 %v7364, %v7628
        %v7661 = vadd.f32 %v7366, %v7629
        %v7662 = vadd.f32 %v7453, %v7630
        %v7663 = vadd.f32 %v7455, %v7631
        %v7664 = vadd.f32 %v7542, %v7632
        %v7665 = vadd.f32 %v7544, %v7633
        %7666 = vset.pattern.permute.xlu0 1
        %7667 = vperm.xlu0 %7666, %v7546
        %v7668 = vpop.permute.xlu0 %7667
        %7670 = vset.pattern.permute.xlu0 1
        %7671 = vperm.xlu0 %7670, %v7547
        %v7672 = vpop.permute.xlu0 %7671
        %7674 = vset.pattern.permute.xlu0 1
        %7675 = vperm.xlu0 %7674, %v7548
        %v7676 = vpop.permute.xlu0 %7675
        %7678 = vset.pattern.permute.xlu0 1
        %7679 = vperm.xlu0 %7678, %v7549
        %v7680 = vpop.permute.xlu0 %7679
        %v7682 = vlaneseq
        %v7683 = vshrl.u32 %v7682, 7
        %v7684 = vsub.s32 1, %v7683
        %v7685 = vrot.slane %v145, %v7684
        %v7686 = vlaneseq
        %v7687 = vshrl.u32 %v7686, 7
        %v7688 = vsub.s32 1, %v7687
        %v7689 = vrot.slane %v146, %v7688
        %v7690 = vlaneseq
        %v7691 = vshrl.u32 %v7690, 7
        %v7692 = vsub.s32 1, %v7691
        %v7693 = vrot.slane %v147, %v7692
        %v7694 = vlaneseq
        %v7695 = vshrl.u32 %v7694, 7
        %v7696 = vsub.s32 1, %v7695
        %v7697 = vrot.slane %v148, %v7696
        %v7698 = vlaneseq
        %v7699 = vshrl.u32 %v7698, 7
        %v7700 = vsub.s32 1, %v7699
        %v7701 = vrot.slane %v149, %v7700
        %v7702 = vlaneseq
        %v7703 = vshrl.u32 %v7702, 7
        %v7704 = vsub.s32 1, %v7703
        %v7705 = vrot.slane %v150, %v7704
        %v7706 = vlaneseq
        %v7707 = vshrl.u32 %v7706, 7
        %v7708 = vsub.s32 1, %v7707
        %v7709 = vrot.slane %v151, %v7708
        %v7710 = vlaneseq
        %v7711 = vshrl.u32 %v7710, 7
        %v7712 = vsub.s32 1, %v7711
        %v7713 = vrot.slane %v152, %v7712
        %v7714 = vmul.f32 %v7668, %v7685
        %v7715 = vmul.f32 %v7668, %v7689
        %v7716 = vmul.f32 %v7668, %v7693
        %v7717 = vmul.f32 %v7668, %v7697
        %v7718 = vmul.f32 %v7668, %v7701
        %v7719 = vmul.f32 %v7668, %v7705
        %v7720 = vmul.f32 %v7668, %v7709
        %v7721 = vmul.f32 %v7668, %v7713
        %v7722 = vmul.f32 %v7672, %v7685
        %v7723 = vmul.f32 %v7672, %v7689
        %v7724 = vmul.f32 %v7672, %v7693
        %v7725 = vmul.f32 %v7672, %v7697
        %v7726 = vmul.f32 %v7672, %v7701
        %v7727 = vmul.f32 %v7672, %v7705
        %v7728 = vmul.f32 %v7672, %v7709
        %v7729 = vmul.f32 %v7672, %v7713
        %v7730 = vmul.f32 %v7676, %v7685
        %v7731 = vmul.f32 %v7676, %v7689
        %v7732 = vmul.f32 %v7676, %v7693
        %v7733 = vmul.f32 %v7676, %v7697
        %v7734 = vmul.f32 %v7676, %v7701
        %v7735 = vmul.f32 %v7676, %v7705
        %v7736 = vmul.f32 %v7676, %v7709
        %v7737 = vmul.f32 %v7676, %v7713
        %v7738 = vmul.f32 %v7680, %v7685
        %v7739 = vmul.f32 %v7680, %v7689
        %v7740 = vmul.f32 %v7680, %v7693
        %v7741 = vmul.f32 %v7680, %v7697
        %v7742 = vmul.f32 %v7680, %v7701
        %v7743 = vmul.f32 %v7680, %v7705
        %v7744 = vmul.f32 %v7680, %v7709
        %v7745 = vmul.f32 %v7680, %v7713
        %v7746 = vadd.f32 %v7634, %v7714
        %v7747 = vadd.f32 %v7635, %v7715
        %v7748 = vadd.f32 %v7636, %v7716
        %v7749 = vadd.f32 %v7637, %v7717
        %v7750 = vadd.f32 %v7638, %v7718
        %v7751 = vadd.f32 %v7639, %v7719
        %v7752 = vadd.f32 %v7640, %v7720
        %v7753 = vadd.f32 %v7641, %v7721
        %v7754 = vadd.f32 %v7642, %v7722
        %v7755 = vadd.f32 %v7643, %v7723
        %v7756 = vadd.f32 %v7644, %v7724
        %v7757 = vadd.f32 %v7645, %v7725
        %v7758 = vadd.f32 %v7646, %v7726
        %v7759 = vadd.f32 %v7647, %v7727
        %v7760 = vadd.f32 %v7648, %v7728
        %v7761 = vadd.f32 %v7649, %v7729
        %v7762 = vadd.f32 %v7650, %v7730
        %v7763 = vadd.f32 %v7651, %v7731
        %v7764 = vadd.f32 %v7652, %v7732
        %v7765 = vadd.f32 %v7653, %v7733
        %v7766 = vadd.f32 %v7654, %v7734
        %v7767 = vadd.f32 %v7655, %v7735
        %v7768 = vadd.f32 %v7656, %v7736
        %v7769 = vadd.f32 %v7657, %v7737
        %v7770 = vadd.f32 %v7658, %v7738
        %v7771 = vadd.f32 %v7659, %v7739
        %v7772 = vadd.f32 %v7660, %v7740
        %v7773 = vadd.f32 %v7661, %v7741
        %v7774 = vadd.f32 %v7662, %v7742
        %v7775 = vadd.f32 %v7663, %v7743
        %v7776 = vadd.f32 %v7664, %v7744
        %v7777 = vadd.f32 %v7665, %v7745
        %7778 = vset.pattern.permute.xlu0 2
        %7779 = vperm.xlu0 %7778, %v7546
        %v7780 = vpop.permute.xlu0 %7779
        %7782 = vset.pattern.permute.xlu0 2
        %7783 = vperm.xlu0 %7782, %v7547
        %v7784 = vpop.permute.xlu0 %7783
        %7786 = vset.pattern.permute.xlu0 2
        %7787 = vperm.xlu0 %7786, %v7548
        %v7788 = vpop.permute.xlu0 %7787
        %7790 = vset.pattern.permute.xlu0 2
        %7791 = vperm.xlu0 %7790, %v7549
        %v7792 = vpop.permute.xlu0 %7791
        %v7794 = vlaneseq
        %v7795 = vshrl.u32 %v7794, 7
        %v7796 = vsub.s32 2, %v7795
        %v7797 = vrot.slane %v145, %v7796
        %v7798 = vlaneseq
        %v7799 = vshrl.u32 %v7798, 7
        %v7800 = vsub.s32 2, %v7799
        %v7801 = vrot.slane %v146, %v7800
        %v7802 = vlaneseq
        %v7803 = vshrl.u32 %v7802, 7
        %v7804 = vsub.s32 2, %v7803
        %v7805 = vrot.slane %v147, %v7804
        %v7806 = vlaneseq
        %v7807 = vshrl.u32 %v7806, 7
        %v7808 = vsub.s32 2, %v7807
        %v7809 = vrot.slane %v148, %v7808
        %v7810 = vlaneseq
        %v7811 = vshrl.u32 %v7810, 7
        %v7812 = vsub.s32 2, %v7811
        %v7813 = vrot.slane %v149, %v7812
        %v7814 = vlaneseq
        %v7815 = vshrl.u32 %v7814, 7
        %v7816 = vsub.s32 2, %v7815
        %v7817 = vrot.slane %v150, %v7816
        %v7818 = vlaneseq
        %v7819 = vshrl.u32 %v7818, 7
        %v7820 = vsub.s32 2, %v7819
        %v7821 = vrot.slane %v151, %v7820
        %v7822 = vlaneseq
        %v7823 = vshrl.u32 %v7822, 7
        %v7824 = vsub.s32 2, %v7823
        %v7825 = vrot.slane %v152, %v7824
        %v7826 = vmul.f32 %v7780, %v7797
        %v7827 = vmul.f32 %v7780, %v7801
        %v7828 = vmul.f32 %v7780, %v7805
        %v7829 = vmul.f32 %v7780, %v7809
        %v7830 = vmul.f32 %v7780, %v7813
        %v7831 = vmul.f32 %v7780, %v7817
        %v7832 = vmul.f32 %v7780, %v7821
        %v7833 = vmul.f32 %v7780, %v7825
        %v7834 = vmul.f32 %v7784, %v7797
        %v7835 = vmul.f32 %v7784, %v7801
        %v7836 = vmul.f32 %v7784, %v7805
        %v7837 = vmul.f32 %v7784, %v7809
        %v7838 = vmul.f32 %v7784, %v7813
        %v7839 = vmul.f32 %v7784, %v7817
        %v7840 = vmul.f32 %v7784, %v7821
        %v7841 = vmul.f32 %v7784, %v7825
        %v7842 = vmul.f32 %v7788, %v7797
        %v7843 = vmul.f32 %v7788, %v7801
        %v7844 = vmul.f32 %v7788, %v7805
        %v7845 = vmul.f32 %v7788, %v7809
        %v7846 = vmul.f32 %v7788, %v7813
        %v7847 = vmul.f32 %v7788, %v7817
        %v7848 = vmul.f32 %v7788, %v7821
        %v7849 = vmul.f32 %v7788, %v7825
        %v7850 = vmul.f32 %v7792, %v7797
        %v7851 = vmul.f32 %v7792, %v7801
        %v7852 = vmul.f32 %v7792, %v7805
        %v7853 = vmul.f32 %v7792, %v7809
        %v7854 = vmul.f32 %v7792, %v7813
        %v7855 = vmul.f32 %v7792, %v7817
        %v7856 = vmul.f32 %v7792, %v7821
        %v7857 = vmul.f32 %v7792, %v7825
        %v7858 = vadd.f32 %v7746, %v7826
        %v7859 = vadd.f32 %v7747, %v7827
        %v7860 = vadd.f32 %v7748, %v7828
        %v7861 = vadd.f32 %v7749, %v7829
        %v7862 = vadd.f32 %v7750, %v7830
        %v7863 = vadd.f32 %v7751, %v7831
        %v7864 = vadd.f32 %v7752, %v7832
        %v7865 = vadd.f32 %v7753, %v7833
        %v7866 = vadd.f32 %v7754, %v7834
        %v7867 = vadd.f32 %v7755, %v7835
        %v7868 = vadd.f32 %v7756, %v7836
        %v7869 = vadd.f32 %v7757, %v7837
        %v7870 = vadd.f32 %v7758, %v7838
        %v7871 = vadd.f32 %v7759, %v7839
        %v7872 = vadd.f32 %v7760, %v7840
        %v7873 = vadd.f32 %v7761, %v7841
        %v7874 = vadd.f32 %v7762, %v7842
        %v7875 = vadd.f32 %v7763, %v7843
        %v7876 = vadd.f32 %v7764, %v7844
        %v7877 = vadd.f32 %v7765, %v7845
        %v7878 = vadd.f32 %v7766, %v7846
        %v7879 = vadd.f32 %v7767, %v7847
        %v7880 = vadd.f32 %v7768, %v7848
        %v7881 = vadd.f32 %v7769, %v7849
        %v7882 = vadd.f32 %v7770, %v7850
        %v7883 = vadd.f32 %v7771, %v7851
        %v7884 = vadd.f32 %v7772, %v7852
        %v7885 = vadd.f32 %v7773, %v7853
        %v7886 = vadd.f32 %v7774, %v7854
        %v7887 = vadd.f32 %v7775, %v7855
        %v7888 = vadd.f32 %v7776, %v7856
        %v7889 = vadd.f32 %v7777, %v7857
        %7890 = vset.pattern.permute.xlu0 3
        %7891 = vperm.xlu0 %7890, %v7546
        %v7892 = vpop.permute.xlu0 %7891
        %7894 = vset.pattern.permute.xlu0 3
        %7895 = vperm.xlu0 %7894, %v7547
        %v7896 = vpop.permute.xlu0 %7895
        %7898 = vset.pattern.permute.xlu0 3
        %7899 = vperm.xlu0 %7898, %v7548
        %v7900 = vpop.permute.xlu0 %7899
        %7902 = vset.pattern.permute.xlu0 3
        %7903 = vperm.xlu0 %7902, %v7549
        %v7904 = vpop.permute.xlu0 %7903
        %v7906 = vlaneseq
        %v7907 = vshrl.u32 %v7906, 7
        %v7908 = vsub.s32 3, %v7907
        %v7909 = vrot.slane %v145, %v7908
        %v7910 = vlaneseq
        %v7911 = vshrl.u32 %v7910, 7
        %v7912 = vsub.s32 3, %v7911
        %v7913 = vrot.slane %v146, %v7912
        %v7914 = vlaneseq
        %v7915 = vshrl.u32 %v7914, 7
        %v7916 = vsub.s32 3, %v7915
        %v7917 = vrot.slane %v147, %v7916
        %v7918 = vlaneseq
        %v7919 = vshrl.u32 %v7918, 7
        %v7920 = vsub.s32 3, %v7919
        %v7921 = vrot.slane %v148, %v7920
        %v7922 = vlaneseq
        %v7923 = vshrl.u32 %v7922, 7
        %v7924 = vsub.s32 3, %v7923
        %v7925 = vrot.slane %v149, %v7924
        %v7926 = vlaneseq
        %v7927 = vshrl.u32 %v7926, 7
        %v7928 = vsub.s32 3, %v7927
        %v7929 = vrot.slane %v150, %v7928
        %v7930 = vlaneseq
        %v7931 = vshrl.u32 %v7930, 7
        %v7932 = vsub.s32 3, %v7931
        %v7933 = vrot.slane %v151, %v7932
        %v7934 = vlaneseq
        %v7935 = vshrl.u32 %v7934, 7
        %v7936 = vsub.s32 3, %v7935
        %v7937 = vrot.slane %v152, %v7936
        %v7938 = vmul.f32 %v7892, %v7909
        %v7939 = vmul.f32 %v7892, %v7913
        %v7940 = vmul.f32 %v7892, %v7917
        %v7941 = vmul.f32 %v7892, %v7921
        %v7942 = vmul.f32 %v7892, %v7925
        %v7943 = vmul.f32 %v7892, %v7929
        %v7944 = vmul.f32 %v7892, %v7933
        %v7945 = vmul.f32 %v7892, %v7937
        %v7946 = vmul.f32 %v7896, %v7909
        %v7947 = vmul.f32 %v7896, %v7913
        %v7948 = vmul.f32 %v7896, %v7917
        %v7949 = vmul.f32 %v7896, %v7921
        %v7950 = vmul.f32 %v7896, %v7925
        %v7951 = vmul.f32 %v7896, %v7929
        %v7952 = vmul.f32 %v7896, %v7933
        %v7953 = vmul.f32 %v7896, %v7937
        %v7954 = vmul.f32 %v7900, %v7909
        %v7955 = vmul.f32 %v7900, %v7913
        %v7956 = vmul.f32 %v7900, %v7917
        %v7957 = vmul.f32 %v7900, %v7921
        %v7958 = vmul.f32 %v7900, %v7925
        %v7959 = vmul.f32 %v7900, %v7929
        %v7960 = vmul.f32 %v7900, %v7933
        %v7961 = vmul.f32 %v7900, %v7937
        %v7962 = vmul.f32 %v7904, %v7909
        %v7963 = vmul.f32 %v7904, %v7913
        %v7964 = vmul.f32 %v7904, %v7917
        %v7965 = vmul.f32 %v7904, %v7921
        %v7966 = vmul.f32 %v7904, %v7925
        %v7967 = vmul.f32 %v7904, %v7929
        %v7968 = vmul.f32 %v7904, %v7933
        %v7969 = vmul.f32 %v7904, %v7937
        %v7970 = vadd.f32 %v7858, %v7938
        %v7971 = vadd.f32 %v7859, %v7939
        %v7972 = vadd.f32 %v7860, %v7940
        %v7973 = vadd.f32 %v7861, %v7941
        %v7974 = vadd.f32 %v7862, %v7942
        %v7975 = vadd.f32 %v7863, %v7943
        %v7976 = vadd.f32 %v7864, %v7944
        %v7977 = vadd.f32 %v7865, %v7945
        %v7978 = vadd.f32 %v7866, %v7946
        %v7979 = vadd.f32 %v7867, %v7947
        %v7980 = vadd.f32 %v7868, %v7948
        %v7981 = vadd.f32 %v7869, %v7949
        %v7982 = vadd.f32 %v7870, %v7950
        %v7983 = vadd.f32 %v7871, %v7951
        %v7984 = vadd.f32 %v7872, %v7952
        %v7985 = vadd.f32 %v7873, %v7953
        %v7986 = vadd.f32 %v7874, %v7954
        %v7987 = vadd.f32 %v7875, %v7955
        %v7988 = vadd.f32 %v7876, %v7956
        %v7989 = vadd.f32 %v7877, %v7957
        %v7990 = vadd.f32 %v7878, %v7958
        %v7991 = vadd.f32 %v7879, %v7959
        %v7992 = vadd.f32 %v7880, %v7960
        %v7993 = vadd.f32 %v7881, %v7961
        %v7994 = vadd.f32 %v7882, %v7962
        %v7995 = vadd.f32 %v7883, %v7963
        %v7996 = vadd.f32 %v7884, %v7964
        %v7997 = vadd.f32 %v7885, %v7965
        %v7998 = vadd.f32 %v7886, %v7966
        %v7999 = vadd.f32 %v7887, %v7967
        %v8000 = vadd.f32 %v7888, %v7968
        %v8001 = vadd.f32 %v7889, %v7969
        %8002 = vset.pattern.permute.xlu0 4
        %8003 = vperm.xlu0 %8002, %v7546
        %v8004 = vpop.permute.xlu0 %8003
        %8006 = vset.pattern.permute.xlu0 4
        %8007 = vperm.xlu0 %8006, %v7547
        %v8008 = vpop.permute.xlu0 %8007
        %8010 = vset.pattern.permute.xlu0 4
        %8011 = vperm.xlu0 %8010, %v7548
        %v8012 = vpop.permute.xlu0 %8011
        %8014 = vset.pattern.permute.xlu0 4
        %8015 = vperm.xlu0 %8014, %v7549
        %v8016 = vpop.permute.xlu0 %8015
        %v8018 = vlaneseq
        %v8019 = vshrl.u32 %v8018, 7
        %v8020 = vsub.s32 4, %v8019
        %v8021 = vrot.slane %v145, %v8020
        %v8022 = vlaneseq
        %v8023 = vshrl.u32 %v8022, 7
        %v8024 = vsub.s32 4, %v8023
        %v8025 = vrot.slane %v146, %v8024
        %v8026 = vlaneseq
        %v8027 = vshrl.u32 %v8026, 7
        %v8028 = vsub.s32 4, %v8027
        %v8029 = vrot.slane %v147, %v8028
        %v8030 = vlaneseq
        %v8031 = vshrl.u32 %v8030, 7
        %v8032 = vsub.s32 4, %v8031
        %v8033 = vrot.slane %v148, %v8032
        %v8034 = vlaneseq
        %v8035 = vshrl.u32 %v8034, 7
        %v8036 = vsub.s32 4, %v8035
        %v8037 = vrot.slane %v149, %v8036
        %v8038 = vlaneseq
        %v8039 = vshrl.u32 %v8038, 7
        %v8040 = vsub.s32 4, %v8039
        %v8041 = vrot.slane %v150, %v8040
        %v8042 = vlaneseq
        %v8043 = vshrl.u32 %v8042, 7
        %v8044 = vsub.s32 4, %v8043
        %v8045 = vrot.slane %v151, %v8044
        %v8046 = vlaneseq
        %v8047 = vshrl.u32 %v8046, 7
        %v8048 = vsub.s32 4, %v8047
        %v8049 = vrot.slane %v152, %v8048
        %v8050 = vmul.f32 %v8004, %v8021
        %v8051 = vmul.f32 %v8004, %v8025
        %v8052 = vmul.f32 %v8004, %v8029
        %v8053 = vmul.f32 %v8004, %v8033
        %v8054 = vmul.f32 %v8004, %v8037
        %v8055 = vmul.f32 %v8004, %v8041
        %v8056 = vmul.f32 %v8004, %v8045
        %v8057 = vmul.f32 %v8004, %v8049
        %v8058 = vmul.f32 %v8008, %v8021
        %v8059 = vmul.f32 %v8008, %v8025
        %v8060 = vmul.f32 %v8008, %v8029
        %v8061 = vmul.f32 %v8008, %v8033
        %v8062 = vmul.f32 %v8008, %v8037
        %v8063 = vmul.f32 %v8008, %v8041
        %v8064 = vmul.f32 %v8008, %v8045
        %v8065 = vmul.f32 %v8008, %v8049
        %v8066 = vmul.f32 %v8012, %v8021
        %v8067 = vmul.f32 %v8012, %v8025
        %v8068 = vmul.f32 %v8012, %v8029
        %v8069 = vmul.f32 %v8012, %v8033
        %v8070 = vmul.f32 %v8012, %v8037
        %v8071 = vmul.f32 %v8012, %v8041
        %v8072 = vmul.f32 %v8012, %v8045
        %v8073 = vmul.f32 %v8012, %v8049
        %v8074 = vmul.f32 %v8016, %v8021
        %v8075 = vmul.f32 %v8016, %v8025
        %v8076 = vmul.f32 %v8016, %v8029
        %v8077 = vmul.f32 %v8016, %v8033
        %v8078 = vmul.f32 %v8016, %v8037
        %v8079 = vmul.f32 %v8016, %v8041
        %v8080 = vmul.f32 %v8016, %v8045
        %v8081 = vmul.f32 %v8016, %v8049
        %v8082 = vadd.f32 %v7970, %v8050
        %v8083 = vadd.f32 %v7971, %v8051
        %v8084 = vadd.f32 %v7972, %v8052
        %v8085 = vadd.f32 %v7973, %v8053
        %v8086 = vadd.f32 %v7974, %v8054
        %v8087 = vadd.f32 %v7975, %v8055
        %v8088 = vadd.f32 %v7976, %v8056
        %v8089 = vadd.f32 %v7977, %v8057
        %v8090 = vadd.f32 %v7978, %v8058
        %v8091 = vadd.f32 %v7979, %v8059
        %v8092 = vadd.f32 %v7980, %v8060
        %v8093 = vadd.f32 %v7981, %v8061
        %v8094 = vadd.f32 %v7982, %v8062
        %v8095 = vadd.f32 %v7983, %v8063
        %v8096 = vadd.f32 %v7984, %v8064
        %v8097 = vadd.f32 %v7985, %v8065
        %v8098 = vadd.f32 %v7986, %v8066
        %v8099 = vadd.f32 %v7987, %v8067
        %v8100 = vadd.f32 %v7988, %v8068
        %v8101 = vadd.f32 %v7989, %v8069
        %v8102 = vadd.f32 %v7990, %v8070
        %v8103 = vadd.f32 %v7991, %v8071
        %v8104 = vadd.f32 %v7992, %v8072
        %v8105 = vadd.f32 %v7993, %v8073
        %v8106 = vadd.f32 %v7994, %v8074
        %v8107 = vadd.f32 %v7995, %v8075
        %v8108 = vadd.f32 %v7996, %v8076
        %v8109 = vadd.f32 %v7997, %v8077
        %v8110 = vadd.f32 %v7998, %v8078
        %v8111 = vadd.f32 %v7999, %v8079
        %v8112 = vadd.f32 %v8000, %v8080
        %v8113 = vadd.f32 %v8001, %v8081
        %8114 = vset.pattern.permute.xlu0 5
        %8115 = vperm.xlu0 %8114, %v7546
        %v8116 = vpop.permute.xlu0 %8115
        %8118 = vset.pattern.permute.xlu0 5
        %8119 = vperm.xlu0 %8118, %v7547
        %v8120 = vpop.permute.xlu0 %8119
        %8122 = vset.pattern.permute.xlu0 5
        %8123 = vperm.xlu0 %8122, %v7548
        %v8124 = vpop.permute.xlu0 %8123
        %8126 = vset.pattern.permute.xlu0 5
        %8127 = vperm.xlu0 %8126, %v7549
        %v8128 = vpop.permute.xlu0 %8127
        %v8130 = vlaneseq
        %v8131 = vshrl.u32 %v8130, 7
        %v8132 = vsub.s32 5, %v8131
        %v8133 = vrot.slane %v145, %v8132
        %v8134 = vlaneseq
        %v8135 = vshrl.u32 %v8134, 7
        %v8136 = vsub.s32 5, %v8135
        %v8137 = vrot.slane %v146, %v8136
        %v8138 = vlaneseq
        %v8139 = vshrl.u32 %v8138, 7
        %v8140 = vsub.s32 5, %v8139
        %v8141 = vrot.slane %v147, %v8140
        %v8142 = vlaneseq
        %v8143 = vshrl.u32 %v8142, 7
        %v8144 = vsub.s32 5, %v8143
        %v8145 = vrot.slane %v148, %v8144
        %v8146 = vlaneseq
        %v8147 = vshrl.u32 %v8146, 7
        %v8148 = vsub.s32 5, %v8147
        %v8149 = vrot.slane %v149, %v8148
        %v8150 = vlaneseq
        %v8151 = vshrl.u32 %v8150, 7
        %v8152 = vsub.s32 5, %v8151
        %v8153 = vrot.slane %v150, %v8152
        %v8154 = vlaneseq
        %v8155 = vshrl.u32 %v8154, 7
        %v8156 = vsub.s32 5, %v8155
        %v8157 = vrot.slane %v151, %v8156
        %v8158 = vlaneseq
        %v8159 = vshrl.u32 %v8158, 7
        %v8160 = vsub.s32 5, %v8159
        %v8161 = vrot.slane %v152, %v8160
        %v8162 = vmul.f32 %v8116, %v8133
        %v8163 = vmul.f32 %v8116, %v8137
        %v8164 = vmul.f32 %v8116, %v8141
        %v8165 = vmul.f32 %v8116, %v8145
        %v8166 = vmul.f32 %v8116, %v8149
        %v8167 = vmul.f32 %v8116, %v8153
        %v8168 = vmul.f32 %v8116, %v8157
        %v8169 = vmul.f32 %v8116, %v8161
        %v8170 = vmul.f32 %v8120, %v8133
        %v8171 = vmul.f32 %v8120, %v8137
        %v8172 = vmul.f32 %v8120, %v8141
        %v8173 = vmul.f32 %v8120, %v8145
        %v8174 = vmul.f32 %v8120, %v8149
        %v8175 = vmul.f32 %v8120, %v8153
        %v8176 = vmul.f32 %v8120, %v8157
        %v8177 = vmul.f32 %v8120, %v8161
        %v8178 = vmul.f32 %v8124, %v8133
        %v8179 = vmul.f32 %v8124, %v8137
        %v8180 = vmul.f32 %v8124, %v8141
        %v8181 = vmul.f32 %v8124, %v8145
        %v8182 = vmul.f32 %v8124, %v8149
        %v8183 = vmul.f32 %v8124, %v8153
        %v8184 = vmul.f32 %v8124, %v8157
        %v8185 = vmul.f32 %v8124, %v8161
        %v8186 = vmul.f32 %v8128, %v8133
        %v8187 = vmul.f32 %v8128, %v8137
        %v8188 = vmul.f32 %v8128, %v8141
        %v8189 = vmul.f32 %v8128, %v8145
        %v8190 = vmul.f32 %v8128, %v8149
        %v8191 = vmul.f32 %v8128, %v8153
        %v8192 = vmul.f32 %v8128, %v8157
        %v8193 = vmul.f32 %v8128, %v8161
        %v8194 = vadd.f32 %v8082, %v8162
        %v8195 = vadd.f32 %v8083, %v8163
        %v8196 = vadd.f32 %v8084, %v8164
        %v8197 = vadd.f32 %v8085, %v8165
        %v8198 = vadd.f32 %v8086, %v8166
        %v8199 = vadd.f32 %v8087, %v8167
        %v8200 = vadd.f32 %v8088, %v8168
        %v8201 = vadd.f32 %v8089, %v8169
        %v8202 = vadd.f32 %v8090, %v8170
        %v8203 = vadd.f32 %v8091, %v8171
        %v8204 = vadd.f32 %v8092, %v8172
        %v8205 = vadd.f32 %v8093, %v8173
        %v8206 = vadd.f32 %v8094, %v8174
        %v8207 = vadd.f32 %v8095, %v8175
        %v8208 = vadd.f32 %v8096, %v8176
        %v8209 = vadd.f32 %v8097, %v8177
        %v8210 = vadd.f32 %v8098, %v8178
        %v8211 = vadd.f32 %v8099, %v8179
        %v8212 = vadd.f32 %v8100, %v8180
        %v8213 = vadd.f32 %v8101, %v8181
        %v8214 = vadd.f32 %v8102, %v8182
        %v8215 = vadd.f32 %v8103, %v8183
        %v8216 = vadd.f32 %v8104, %v8184
        %v8217 = vadd.f32 %v8105, %v8185
        %v8218 = vadd.f32 %v8106, %v8186
        %v8219 = vadd.f32 %v8107, %v8187
        %v8220 = vadd.f32 %v8108, %v8188
        %v8221 = vadd.f32 %v8109, %v8189
        %v8222 = vadd.f32 %v8110, %v8190
        %v8223 = vadd.f32 %v8111, %v8191
        %v8224 = vadd.f32 %v8112, %v8192
        %v8225 = vadd.f32 %v8113, %v8193
        %v8226 = vld [vmem:[%s1 + $0xa8] sm:$0xff]
        %v8227 = vld [vmem:[%s1 + $0xb0] sm:$0xff]
        %v8228 = vld [vmem:[%s1 + $0xb8] sm:$0xff]
        %v8229 = vld [vmem:[%s1 + $0xc0] sm:$0xff]
        %8231 = vset.pattern.permute.xlu0 0
        %8232 = vperm.xlu0 %8231, %v8226
        %v8233 = vpop.permute.xlu0 %8232
        %8236 = vset.pattern.permute.xlu0 0
        %8237 = vperm.xlu0 %8236, %v8227
        %v8238 = vpop.permute.xlu0 %8237
        %8241 = vset.pattern.permute.xlu0 0
        %8242 = vperm.xlu0 %8241, %v8228
        %v8243 = vpop.permute.xlu0 %8242
        %8246 = vset.pattern.permute.xlu0 0
        %8247 = vperm.xlu0 %8246, %v8229
        %v8248 = vpop.permute.xlu0 %8247
        %v8250 = vadd.f32 %v8194, %v8233
        %v8251 = vadd.f32 %v8195, %v8233
        %v8252 = vadd.f32 %v8196, %v8233
        %v8253 = vadd.f32 %v8197, %v8233
        %v8254 = vadd.f32 %v8198, %v8233
        %v8255 = vadd.f32 %v8199, %v8233
        %v8256 = vadd.f32 %v8200, %v8233
        %v8257 = vadd.f32 %v8201, %v8233
        %v8258 = vadd.f32 %v8202, %v8238
        %v8259 = vadd.f32 %v8203, %v8238
        %v8260 = vadd.f32 %v8204, %v8238
        %v8261 = vadd.f32 %v8205, %v8238
        %v8262 = vadd.f32 %v8206, %v8238
        %v8263 = vadd.f32 %v8207, %v8238
        %v8264 = vadd.f32 %v8208, %v8238
        %v8265 = vadd.f32 %v8209, %v8238
        %v8266 = vadd.f32 %v8210, %v8243
        %v8267 = vadd.f32 %v8211, %v8243
        %v8268 = vadd.f32 %v8212, %v8243
        %v8269 = vadd.f32 %v8213, %v8243
        %v8270 = vadd.f32 %v8214, %v8243
        %v8271 = vadd.f32 %v8215, %v8243
        %v8272 = vadd.f32 %v8216, %v8243
        %v8273 = vadd.f32 %v8217, %v8243
        %v8274 = vadd.f32 %v8218, %v8248
        %v8275 = vadd.f32 %v8219, %v8248
        %v8276 = vadd.f32 %v8220, %v8248
        %v8277 = vadd.f32 %v8221, %v8248
        %v8278 = vadd.f32 %v8222, %v8248
        %v8279 = vadd.f32 %v8223, %v8248
        %v8280 = vadd.f32 %v8224, %v8248
        %v8281 = vadd.f32 %v8225, %v8248
        %v8282 = vmax.f32 %v8250, 0.0
        %v8283 = vmax.f32 %v8251, 0.0
        %v8284 = vmax.f32 %v8252, 0.0
        %v8285 = vmax.f32 %v8253, 0.0
        %v8286 = vmax.f32 %v8254, 0.0
        %v8287 = vmax.f32 %v8255, 0.0
        %v8288 = vmax.f32 %v8256, 0.0
        %v8289 = vmax.f32 %v8257, 0.0
        %v8290 = vmax.f32 %v8258, 0.0
        %v8291 = vmax.f32 %v8259, 0.0
        %v8292 = vmax.f32 %v8260, 0.0
        %v8293 = vmax.f32 %v8261, 0.0
        %v8294 = vmax.f32 %v8262, 0.0
        %v8295 = vmax.f32 %v8263, 0.0
        %v8296 = vmax.f32 %v8264, 0.0
        %v8297 = vmax.f32 %v8265, 0.0
        %v8298 = vmax.f32 %v8266, 0.0
        %v8299 = vmax.f32 %v8267, 0.0
        %v8300 = vmax.f32 %v8268, 0.0
        %v8301 = vmax.f32 %v8269, 0.0
        %v8302 = vmax.f32 %v8270, 0.0
        %v8303 = vmax.f32 %v8271, 0.0
        %v8304 = vmax.f32 %v8272, 0.0
        %v8305 = vmax.f32 %v8273, 0.0
        %v8306 = vmax.f32 %v8274, 0.0
        %v8307 = vmax.f32 %v8275, 0.0
        %v8308 = vmax.f32 %v8276, 0.0
        %v8309 = vmax.f32 %v8277, 0.0
        %v8310 = vmax.f32 %v8278, 0.0
        %v8311 = vmax.f32 %v8279, 0.0
        %v8312 = vmax.f32 %v8280, 0.0
        %v8313 = vmax.f32 %v8281, 0.0
        %v8314 = vld [vmem:[%s1 + $0x60] sm:$0xff]
        %v8315 = vld [vmem:[%s1 + $0x68] sm:$0xff]
        %v8316 = vld [vmem:[%s1 + $0x70] sm:$0xff]
        %v8317 = vld [vmem:[%s1 + $0x78] sm:$0xff]
        %8318 = vset.pattern.permute.xlu0 1
        %8319 = vperm.xlu0 %8318, %v8226
        %v8320 = vpop.permute.xlu0 %8319
        %8322 = vset.pattern.permute.xlu0 1
        %8323 = vperm.xlu0 %8322, %v8227
        %v8324 = vpop.permute.xlu0 %8323
        %8326 = vset.pattern.permute.xlu0 1
        %8327 = vperm.xlu0 %8326, %v8228
        %v8328 = vpop.permute.xlu0 %8327
        %8330 = vset.pattern.permute.xlu0 1
        %8331 = vperm.xlu0 %8330, %v8229
        %v8332 = vpop.permute.xlu0 %8331
        %v8335 = vsel %vm6809, %v8314, 0
        %v8338 = vsel %vm6809, %v8315, 0
        %v8341 = vsel %vm6809, %v8316, 0
        %v8344 = vsel %vm6809, %v8317, 0
        %8346 = vmatprep.subr.mxu0 %v8283
        %8347 = vmatpush1.msra.mxu0 %v8282
        %8348 = vmatprep.subr.mxu0 %v8291
        %8349 = vmatpush1.msra.mxu0 %v8290
        %8350 = vmatprep.subr.mxu0 %v8299
        %8351 = vmatpush1.msra.mxu0 %v8298
        %8352 = vmatprep.subr.mxu0 %v8307
        %8353 = vmatpush1.msra.mxu0 %v8306
        %8354 = vmatprep.subr.mxu0 0.0
        %8355 = vmatpush1.msra.mxu0 0.0
        %8356 = vmatprep.subr.mxu0 0.0
        %8357 = vmatpush1.msra.mxu0 0.0
        %8358 = vmatprep.subr.mxu0 0.0
        %8359 = vmatpush1.msra.mxu0 0.0
        %8360 = vmatprep.subr.mxu0 0.0
        %8361 = vmatpush1.msra.mxu0 0.0
        %8362 = vmatprep.subr.mxu0 0.0
        %8363 = vmatpush1.msra.mxu0 0.0
        %8364 = vmatprep.subr.mxu0 0.0
        %8365 = vmatpush1.msra.mxu0 0.0
        %8366 = vmatprep.subr.mxu0 0.0
        %8367 = vmatpush1.msra.mxu0 0.0
        %8368 = vmatprep.subr.mxu0 0.0
        %8369 = vmatpush1.msra.mxu0 0.0
        %8370 = vmatprep.subr.mxu0 0.0
        %8371 = vmatpush1.msra.mxu0 0.0
        %8372 = vmatprep.subr.mxu0 0.0
        %8373 = vmatpush1.msra.mxu0 0.0
        %8374 = vmatprep.subr.mxu0 0.0
        %8375 = vmatpush1.msra.mxu0 0.0
        %8376 = vmatprep.subr.mxu0 0.0
        %8377 = vmatpush1.msra.mxu0 0.0
        %8378 = vmatprep.subr.mxu0 0.0
        %8379 = vmatpush1.msra.mxu0 0.0
        %8380 = vmatprep.subr.mxu0 0.0
        %8381 = vmatpush1.msra.mxu0 0.0
        %8382 = vmatprep.subr.mxu0 0.0
        %8383 = vmatpush1.msra.mxu0 0.0
        %8384 = vmatprep.subr.mxu0 0.0
        %8385 = vmatpush1.msra.mxu0 0.0
        %8386 = vmatprep.subr.mxu0 0.0
        %8387 = vmatpush1.msra.mxu0 0.0
        %8388 = vmatprep.subr.mxu0 0.0
        %8389 = vmatpush1.msra.mxu0 0.0
        %8390 = vmatprep.subr.mxu0 0.0
        %8391 = vmatpush1.msra.mxu0 0.0
        %8392 = vmatprep.subr.mxu0 0.0
        %8393 = vmatpush1.msra.mxu0 0.0
        %8394 = vmatprep.subr.mxu0 0.0
        %8395 = vmatpush1.msra.mxu0 0.0
        %8396 = vmatprep.subr.mxu0 0.0
        %8397 = vmatpush1.msra.mxu0 0.0
        %8398 = vmatprep.subr.mxu0 0.0
        %8399 = vmatpush1.msra.mxu0 0.0
        %8400 = vmatprep.subr.mxu0 0.0
        %8401 = vmatpush1.msra.mxu0 0.0
        %8402 = vmatprep.subr.mxu0 0.0
        %8403 = vmatpush1.msra.mxu0 0.0
        %8404 = vmatprep.subr.mxu0 0.0
        %8405 = vmatpush1.msra.mxu0 0.0
        %8406 = vmatprep.subr.mxu0 0.0
        %8407 = vmatpush1.msra.mxu0 0.0
        %8408 = vmatprep.subr.mxu0 0.0
        %8409 = vmatpush1.msra.mxu0 0.0
        %8410 = vmatprep.mubr.f32.mxu0 0.0
        %8411 = vmatmul.mubr.f32.gmra.mrb[0].mxu0 %v8335
        %v8412 = vpop.f32.mrb[0].mxu0
        %v8413 = vadd.f32 %v8320, %v8412
        %v8414 = vpop.f32.mrb[0].mxu0
        %v8415 = vadd.f32 %v8320, %v8414
        %8416 = vmatprep.mubr.f32.mxu0 0.0
        %8417 = vmatmul.mubr.f32.gmra.mrb[0].mxu0 %v8338
        %v8418 = vpop.f32.mrb[0].mxu0
        %v8419 = vadd.f32 %v8324, %v8418
        %v8420 = vpop.f32.mrb[0].mxu0
        %v8421 = vadd.f32 %v8324, %v8420
        %8422 = vmatprep.mubr.f32.mxu0 0.0
        %8423 = vmatmul.mubr.f32.gmra.mrb[0].mxu0 %v8341
        %v8424 = vpop.f32.mrb[0].mxu0
        %v8425 = vadd.f32 %v8328, %v8424
        %v8426 = vpop.f32.mrb[0].mxu0
        %v8427 = vadd.f32 %v8328, %v8426
        %8428 = vmatprep.mubr.f32.mxu0 0.0
        %8429 = vmatmul.mubr.f32.gmra.mrb[0].mxu0 %v8344
        %v8430 = vpop.f32.mrb[0].mxu0
        %v8431 = vadd.f32 %v8332, %v8430
        %v8432 = vpop.f32.mrb[0].mxu0
        %v8433 = vadd.f32 %v8332, %v8432
        %8434 = vdwg.mxu0
        %8435 = vmatprep.subr.mxu0 %v8285
        %8436 = vmatpush1.msra.mxu0 %v8284
        %8437 = vmatprep.subr.mxu0 %v8293
        %8438 = vmatpush1.msra.mxu0 %v8292
        %8439 = vmatprep.subr.mxu0 %v8301
        %8440 = vmatpush1.msra.mxu0 %v8300
        %8441 = vmatprep.subr.mxu0 %v8309
        %8442 = vmatpush1.msra.mxu0 %v8308
        %8443 = vmatprep.subr.mxu0 0.0
        %8444 = vmatpush1.msra.mxu0 0.0
        %8445 = vmatprep.subr.mxu0 0.0
        %8446 = vmatpush1.msra.mxu0 0.0
        %8447 = vmatprep.subr.mxu0 0.0
        %8448 = vmatpush1.msra.mxu0 0.0
        %8449 = vmatprep.subr.mxu0 0.0
        %8450 = vmatpush1.msra.mxu0 0.0
        %8451 = vmatprep.subr.mxu0 0.0
        %8452 = vmatpush1.msra.mxu0 0.0
        %8453 = vmatprep.subr.mxu0 0.0
        %8454 = vmatpush1.msra.mxu0 0.0
        %8455 = vmatprep.subr.mxu0 0.0
        %8456 = vmatpush1.msra.mxu0 0.0
        %8457 = vmatprep.subr.mxu0 0.0
        %8458 = vmatpush1.msra.mxu0 0.0
        %8459 = vmatprep.subr.mxu0 0.0
        %8460 = vmatpush1.msra.mxu0 0.0
        %8461 = vmatprep.subr.mxu0 0.0
        %8462 = vmatpush1.msra.mxu0 0.0
        %8463 = vmatprep.subr.mxu0 0.0
        %8464 = vmatpush1.msra.mxu0 0.0
        %8465 = vmatprep.subr.mxu0 0.0
        %8466 = vmatpush1.msra.mxu0 0.0
        %8467 = vmatprep.subr.mxu0 0.0
        %8468 = vmatpush1.msra.mxu0 0.0
        %8469 = vmatprep.subr.mxu0 0.0
        %8470 = vmatpush1.msra.mxu0 0.0
        %8471 = vmatprep.subr.mxu0 0.0
        %8472 = vmatpush1.msra.mxu0 0.0
        %8473 = vmatprep.subr.mxu0 0.0
        %8474 = vmatpush1.msra.mxu0 0.0
        %8475 = vmatprep.subr.mxu0 0.0
        %8476 = vmatpush1.msra.mxu0 0.0
        %8477 = vmatprep.subr.mxu0 0.0
        %8478 = vmatpush1.msra.mxu0 0.0
        %8479 = vmatprep.subr.mxu0 0.0
        %8480 = vmatpush1.msra.mxu0 0.0
        %8481 = vmatprep.subr.mxu0 0.0
        %8482 = vmatpush1.msra.mxu0 0.0
        %8483 = vmatprep.subr.mxu0 0.0
        %8484 = vmatpush1.msra.mxu0 0.0
        %8485 = vmatprep.subr.mxu0 0.0
        %8486 = vmatpush1.msra.mxu0 0.0
        %8487 = vmatprep.subr.mxu0 0.0
        %8488 = vmatpush1.msra.mxu0 0.0
        %8489 = vmatprep.subr.mxu0 0.0
        %8490 = vmatpush1.msra.mxu0 0.0
        %8491 = vmatprep.subr.mxu0 0.0
        %8492 = vmatpush1.msra.mxu0 0.0
        %8493 = vmatprep.subr.mxu0 0.0
        %8494 = vmatpush1.msra.mxu0 0.0
        %8495 = vmatprep.subr.mxu0 0.0
        %8496 = vmatpush1.msra.mxu0 0.0
        %8497 = vmatprep.subr.mxu0 0.0
        %8498 = vmatpush1.msra.mxu0 0.0
        %8499 = vmatprep.mubr.f32.mxu0 0.0
        %8500 = vmatmul.mubr.f32.gmra.mrb[0].mxu0 %v8335
        %v8501 = vpop.f32.mrb[0].mxu0
        %v8502 = vadd.f32 %v8320, %v8501
        %v8503 = vpop.f32.mrb[0].mxu0
        %v8504 = vadd.f32 %v8320, %v8503
        %8505 = vmatprep.mubr.f32.mxu0 0.0
        %8506 = vmatmul.mubr.f32.gmra.mrb[0].mxu0 %v8338
        %v8507 = vpop.f32.mrb[0].mxu0
        %v8508 = vadd.f32 %v8324, %v8507
        %v8509 = vpop.f32.mrb[0].mxu0
        %v8510 = vadd.f32 %v8324, %v8509
        %8511 = vmatprep.mubr.f32.mxu0 0.0
        %8512 = vmatmul.mubr.f32.gmra.mrb[0].mxu0 %v8341
        %v8513 = vpop.f32.mrb[0].mxu0
        %v8514 = vadd.f32 %v8328, %v8513
        %v8515 = vpop.f32.mrb[0].mxu0
        %v8516 = vadd.f32 %v8328, %v8515
        %8517 = vmatprep.mubr.f32.mxu0 0.0
        %8518 = vmatmul.mubr.f32.gmra.mrb[0].mxu0 %v8344
        %v8519 = vpop.f32.mrb[0].mxu0
        %v8520 = vadd.f32 %v8332, %v8519
        %v8521 = vpop.f32.mrb[0].mxu0
        %v8522 = vadd.f32 %v8332, %v8521
        %8523 = vdwg.mxu0
        %8524 = vmatprep.subr.mxu0 %v8287
        %8525 = vmatpush1.msra.mxu0 %v8286
        %8526 = vmatprep.subr.mxu0 %v8295
        %8527 = vmatpush1.msra.mxu0 %v8294
        %8528 = vmatprep.subr.mxu0 %v8303
        %8529 = vmatpush1.msra.mxu0 %v8302
        %8530 = vmatprep.subr.mxu0 %v8311
        %8531 = vmatpush1.msra.mxu0 %v8310
        %8532 = vmatprep.subr.mxu0 0.0
        %8533 = vmatpush1.msra.mxu0 0.0
        %8534 = vmatprep.subr.mxu0 0.0
        %8535 = vmatpush1.msra.mxu0 0.0
        %8536 = vmatprep.subr.mxu0 0.0
        %8537 = vmatpush1.msra.mxu0 0.0
        %8538 = vmatprep.subr.mxu0 0.0
        %8539 = vmatpush1.msra.mxu0 0.0
        %8540 = vmatprep.subr.mxu0 0.0
        %8541 = vmatpush1.msra.mxu0 0.0
        %8542 = vmatprep.subr.mxu0 0.0
        %8543 = vmatpush1.msra.mxu0 0.0
        %8544 = vmatprep.subr.mxu0 0.0
        %8545 = vmatpush1.msra.mxu0 0.0
        %8546 = vmatprep.subr.mxu0 0.0
        %8547 = vmatpush1.msra.mxu0 0.0
        %8548 = vmatprep.subr.mxu0 0.0
        %8549 = vmatpush1.msra.mxu0 0.0
        %8550 = vmatprep.subr.mxu0 0.0
        %8551 = vmatpush1.msra.mxu0 0.0
        %8552 = vmatprep.subr.mxu0 0.0
        %8553 = vmatpush1.msra.mxu0 0.0
        %8554 = vmatprep.subr.mxu0 0.0
        %8555 = vmatpush1.msra.mxu0 0.0
        %8556 = vmatprep.subr.mxu0 0.0
        %8557 = vmatpush1.msra.mxu0 0.0
        %8558 = vmatprep.subr.mxu0 0.0
        %8559 = vmatpush1.msra.mxu0 0.0
        %8560 = vmatprep.subr.mxu0 0.0
        %8561 = vmatpush1.msra.mxu0 0.0
        %8562 = vmatprep.subr.mxu0 0.0
        %8563 = vmatpush1.msra.mxu0 0.0
        %8564 = vmatprep.subr.mxu0 0.0
        %8565 = vmatpush1.msra.mxu0 0.0
        %8566 = vmatprep.subr.mxu0 0.0
        %8567 = vmatpush1.msra.mxu0 0.0
        %8568 = vmatprep.subr.mxu0 0.0
        %8569 = vmatpush1.msra.mxu0 0.0
        %8570 = vmatprep.subr.mxu0 0.0
        %8571 = vmatpush1.msra.mxu0 0.0
        %8572 = vmatprep.subr.mxu0 0.0
        %8573 = vmatpush1.msra.mxu0 0.0
        %8574 = vmatprep.subr.mxu0 0.0
        %8575 = vmatpush1.msra.mxu0 0.0
        %8576 = vmatprep.subr.mxu0 0.0
        %8577 = vmatpush1.msra.mxu0 0.0
        %8578 = vmatprep.subr.mxu0 0.0
        %8579 = vmatpush1.msra.mxu0 0.0
        %8580 = vmatprep.subr.mxu0 0.0
        %8581 = vmatpush1.msra.mxu0 0.0
        %8582 = vmatprep.subr.mxu0 0.0
        %8583 = vmatpush1.msra.mxu0 0.0
        %8584 = vmatprep.subr.mxu0 0.0
        %8585 = vmatpush1.msra.mxu0 0.0
        %8586 = vmatprep.subr.mxu0 0.0
        %8587 = vmatpush1.msra.mxu0 0.0
        %8588 = vmatprep.mubr.f32.mxu0 0.0
        %8589 = vmatmul.mubr.f32.gmra.mrb[0].mxu0 %v8335
        %v8590 = vpop.f32.mrb[0].mxu0
        %v8591 = vadd.f32 %v8320, %v8590
        %v8592 = vpop.f32.mrb[0].mxu0
        %v8593 = vadd.f32 %v8320, %v8592
        %8594 = vmatprep.mubr.f32.mxu0 0.0
        %8595 = vmatmul.mubr.f32.gmra.mrb[0].mxu0 %v8338
        %v8596 = vpop.f32.mrb[0].mxu0
        %v8597 = vadd.f32 %v8324, %v8596
        %v8598 = vpop.f32.mrb[0].mxu0
        %v8599 = vadd.f32 %v8324, %v8598
        %8600 = vmatprep.mubr.f32.mxu0 0.0
        %8601 = vmatmul.mubr.f32.gmra.mrb[0].mxu0 %v8341
        %v8602 = vpop.f32.mrb[0].mxu0
        %v8603 = vadd.f32 %v8328, %v8602
        %v8604 = vpop.f32.mrb[0].mxu0
        %v8605 = vadd.f32 %v8328, %v8604
        %8606 = vmatprep.mubr.f32.mxu0 0.0
        %8607 = vmatmul.mubr.f32.gmra.mrb[0].mxu0 %v8344
        %v8608 = vpop.f32.mrb[0].mxu0
        %v8609 = vadd.f32 %v8332, %v8608
        %v8610 = vpop.f32.mrb[0].mxu0
        %v8611 = vadd.f32 %v8332, %v8610
        %8612 = vdwg.mxu0
        %8613 = vmatprep.subr.mxu0 %v8289
        %8614 = vmatpush1.msra.mxu0 %v8288
        %8615 = vmatprep.subr.mxu0 %v8297
        %8616 = vmatpush1.msra.mxu0 %v8296
        %8617 = vmatprep.subr.mxu0 %v8305
        %8618 = vmatpush1.msra.mxu0 %v8304
        %8619 = vmatprep.subr.mxu0 %v8313
        %8620 = vmatpush1.msra.mxu0 %v8312
        %8621 = vmatprep.subr.mxu0 0.0
        %8622 = vmatpush1.msra.mxu0 0.0
        %8623 = vmatprep.subr.mxu0 0.0
        %8624 = vmatpush1.msra.mxu0 0.0
        %8625 = vmatprep.subr.mxu0 0.0
        %8626 = vmatpush1.msra.mxu0 0.0
        %8627 = vmatprep.subr.mxu0 0.0
        %8628 = vmatpush1.msra.mxu0 0.0
        %8629 = vmatprep.subr.mxu0 0.0
        %8630 = vmatpush1.msra.mxu0 0.0
        %8631 = vmatprep.subr.mxu0 0.0
        %8632 = vmatpush1.msra.mxu0 0.0
        %8633 = vmatprep.subr.mxu0 0.0
        %8634 = vmatpush1.msra.mxu0 0.0
        %8635 = vmatprep.subr.mxu0 0.0
        %8636 = vmatpush1.msra.mxu0 0.0
        %8637 = vmatprep.subr.mxu0 0.0
        %8638 = vmatpush1.msra.mxu0 0.0
        %8639 = vmatprep.subr.mxu0 0.0
        %8640 = vmatpush1.msra.mxu0 0.0
        %8641 = vmatprep.subr.mxu0 0.0
        %8642 = vmatpush1.msra.mxu0 0.0
        %8643 = vmatprep.subr.mxu0 0.0
        %8644 = vmatpush1.msra.mxu0 0.0
        %8645 = vmatprep.subr.mxu0 0.0
        %8646 = vmatpush1.msra.mxu0 0.0
        %8647 = vmatprep.subr.mxu0 0.0
        %8648 = vmatpush1.msra.mxu0 0.0
        %8649 = vmatprep.subr.mxu0 0.0
        %8650 = vmatpush1.msra.mxu0 0.0
        %8651 = vmatprep.subr.mxu0 0.0
        %8652 = vmatpush1.msra.mxu0 0.0
        %8653 = vmatprep.subr.mxu0 0.0
        %8654 = vmatpush1.msra.mxu0 0.0
        %8655 = vmatprep.subr.mxu0 0.0
        %8656 = vmatpush1.msra.mxu0 0.0
        %8657 = vmatprep.subr.mxu0 0.0
        %8658 = vmatpush1.msra.mxu0 0.0
        %8659 = vmatprep.subr.mxu0 0.0
        %8660 = vmatpush1.msra.mxu0 0.0
        %8661 = vmatprep.subr.mxu0 0.0
        %8662 = vmatpush1.msra.mxu0 0.0
        %8663 = vmatprep.subr.mxu0 0.0
        %8664 = vmatpush1.msra.mxu0 0.0
        %8665 = vmatprep.subr.mxu0 0.0
        %8666 = vmatpush1.msra.mxu0 0.0
        %8667 = vmatprep.subr.mxu0 0.0
        %8668 = vmatpush1.msra.mxu0 0.0
        %8669 = vmatprep.subr.mxu0 0.0
        %8670 = vmatpush1.msra.mxu0 0.0
        %8671 = vmatprep.subr.mxu0 0.0
        %8672 = vmatpush1.msra.mxu0 0.0
        %8673 = vmatprep.subr.mxu0 0.0
        %8674 = vmatpush1.msra.mxu0 0.0
        %8675 = vmatprep.subr.mxu0 0.0
        %8676 = vmatpush1.msra.mxu0 0.0
        %8677 = vmatprep.mubr.f32.mxu0 0.0
        %8678 = vmatmul.mubr.f32.gmra.mrb[0].mxu0 %v8335
        %v8679 = vpop.f32.mrb[0].mxu0
        %v8680 = vadd.f32 %v8320, %v8679
        %v8681 = vpop.f32.mrb[0].mxu0
        %v8682 = vadd.f32 %v8320, %v8681
        %8683 = vmatprep.mubr.f32.mxu0 0.0
        %8684 = vmatmul.mubr.f32.gmra.mrb[0].mxu0 %v8338
        %v8685 = vpop.f32.mrb[0].mxu0
        %v8686 = vadd.f32 %v8324, %v8685
        %v8687 = vpop.f32.mrb[0].mxu0
        %v8688 = vadd.f32 %v8324, %v8687
        %8689 = vmatprep.mubr.f32.mxu0 0.0
        %8690 = vmatmul.mubr.f32.gmra.mrb[0].mxu0 %v8341
        %v8691 = vpop.f32.mrb[0].mxu0
        %v8692 = vadd.f32 %v8328, %v8691
        %v8693 = vpop.f32.mrb[0].mxu0
        %v8694 = vadd.f32 %v8328, %v8693
        %8695 = vmatprep.mubr.f32.mxu0 0.0
        %8696 = vmatmul.mubr.f32.gmra.mrb[0].mxu0 %v8344
        %v8697 = vpop.f32.mrb[0].mxu0
        %v8698 = vadd.f32 %v8332, %v8697
        %v8699 = vpop.f32.mrb[0].mxu0
        %v8700 = vadd.f32 %v8332, %v8699
        %8701 = vdwg.mxu0
        %v8702 = vmax.f32 %v8413, 0.0
        %v8703 = vmax.f32 %v8415, 0.0
        %v8704 = vmax.f32 %v8502, 0.0
        %v8705 = vmax.f32 %v8504, 0.0
        %v8706 = vmax.f32 %v8591, 0.0
        %v8707 = vmax.f32 %v8593, 0.0
        %v8708 = vmax.f32 %v8680, 0.0
        %v8709 = vmax.f32 %v8682, 0.0
        %v8710 = vmax.f32 %v8419, 0.0
        %v8711 = vmax.f32 %v8421, 0.0
        %v8712 = vmax.f32 %v8508, 0.0
        %v8713 = vmax.f32 %v8510, 0.0
        %v8714 = vmax.f32 %v8597, 0.0
        %v8715 = vmax.f32 %v8599, 0.0
        %v8716 = vmax.f32 %v8686, 0.0
        %v8717 = vmax.f32 %v8688, 0.0
        %v8718 = vmax.f32 %v8425, 0.0
        %v8719 = vmax.f32 %v8427, 0.0
        %v8720 = vmax.f32 %v8514, 0.0
        %v8721 = vmax.f32 %v8516, 0.0
        %v8722 = vmax.f32 %v8603, 0.0
        %v8723 = vmax.f32 %v8605, 0.0
        %v8724 = vmax.f32 %v8692, 0.0
        %v8725 = vmax.f32 %v8694, 0.0
        %v8726 = vmax.f32 %v8431, 0.0
        %v8727 = vmax.f32 %v8433, 0.0
        %v8728 = vmax.f32 %v8520, 0.0
        %v8729 = vmax.f32 %v8522, 0.0
        %v8730 = vmax.f32 %v8609, 0.0
        %v8731 = vmax.f32 %v8611, 0.0
        %v8732 = vmax.f32 %v8698, 0.0
        %v8733 = vmax.f32 %v8700, 0.0
        %v8734 = vld [vmem:[%s1 + $0x80] sm:$0xff]
        %v8735 = vld [vmem:[%s1 + $0x88] sm:$0xff]
        %v8736 = vld [vmem:[%s1 + $0x90] sm:$0xff]
        %v8737 = vld [vmem:[%s1 + $0x98] sm:$0xff]
        %8738 = vset.pattern.permute.xlu0 2
        %8739 = vperm.xlu0 %8738, %v8226
        %v8740 = vpop.permute.xlu0 %8739
        %8742 = vset.pattern.permute.xlu0 2
        %8743 = vperm.xlu0 %8742, %v8227
        %v8744 = vpop.permute.xlu0 %8743
        %8746 = vset.pattern.permute.xlu0 2
        %8747 = vperm.xlu0 %8746, %v8228
        %v8748 = vpop.permute.xlu0 %8747
        %8750 = vset.pattern.permute.xlu0 2
        %8751 = vperm.xlu0 %8750, %v8229
        %v8752 = vpop.permute.xlu0 %8751
        %v8755 = vsel %vm6809, %v8734, 0
        %v8758 = vsel %vm6809, %v8735, 0
        %v8761 = vsel %vm6809, %v8736, 0
        %v8764 = vsel %vm6809, %v8737, 0
        %8766 = vmatprep.subr.mxu0 %v8703
        %8767 = vmatpush1.msra.mxu0 %v8702
        %8768 = vmatprep.subr.mxu0 %v8711
        %8769 = vmatpush1.msra.mxu0 %v8710
        %8770 = vmatprep.subr.mxu0 %v8719
        %8771 = vmatpush1.msra.mxu0 %v8718
        %8772 = vmatprep.subr.mxu0 %v8727
        %8773 = vmatpush1.msra.mxu0 %v8726
        %8774 = vmatprep.subr.mxu0 0.0
        %8775 = vmatpush1.msra.mxu0 0.0
        %8776 = vmatprep.subr.mxu0 0.0
        %8777 = vmatpush1.msra.mxu0 0.0
        %8778 = vmatprep.subr.mxu0 0.0
        %8779 = vmatpush1.msra.mxu0 0.0
        %8780 = vmatprep.subr.mxu0 0.0
        %8781 = vmatpush1.msra.mxu0 0.0
        %8782 = vmatprep.subr.mxu0 0.0
        %8783 = vmatpush1.msra.mxu0 0.0
        %8784 = vmatprep.subr.mxu0 0.0
        %8785 = vmatpush1.msra.mxu0 0.0
        %8786 = vmatprep.subr.mxu0 0.0
        %8787 = vmatpush1.msra.mxu0 0.0
        %8788 = vmatprep.subr.mxu0 0.0
        %8789 = vmatpush1.msra.mxu0 0.0
        %8790 = vmatprep.subr.mxu0 0.0
        %8791 = vmatpush1.msra.mxu0 0.0
        %8792 = vmatprep.subr.mxu0 0.0
        %8793 = vmatpush1.msra.mxu0 0.0
        %8794 = vmatprep.subr.mxu0 0.0
        %8795 = vmatpush1.msra.mxu0 0.0
        %8796 = vmatprep.subr.mxu0 0.0
        %8797 = vmatpush1.msra.mxu0 0.0
        %8798 = vmatprep.subr.mxu0 0.0
        %8799 = vmatpush1.msra.mxu0 0.0
        %8800 = vmatprep.subr.mxu0 0.0
        %8801 = vmatpush1.msra.mxu0 0.0
        %8802 = vmatprep.subr.mxu0 0.0
        %8803 = vmatpush1.msra.mxu0 0.0
        %8804 = vmatprep.subr.mxu0 0.0
        %8805 = vmatpush1.msra.mxu0 0.0
        %8806 = vmatprep.subr.mxu0 0.0
        %8807 = vmatpush1.msra.mxu0 0.0
        %8808 = vmatprep.subr.mxu0 0.0
        %8809 = vmatpush1.msra.mxu0 0.0
        %8810 = vmatprep.subr.mxu0 0.0
        %8811 = vmatpush1.msra.mxu0 0.0
        %8812 = vmatprep.subr.mxu0 0.0
        %8813 = vmatpush1.msra.mxu0 0.0
        %8814 = vmatprep.subr.mxu0 0.0
        %8815 = vmatpush1.msra.mxu0 0.0
        %8816 = vmatprep.subr.mxu0 0.0
        %8817 = vmatpush1.msra.mxu0 0.0
        %8818 = vmatprep.subr.mxu0 0.0
        %8819 = vmatpush1.msra.mxu0 0.0
        %8820 = vmatprep.subr.mxu0 0.0
        %8821 = vmatpush1.msra.mxu0 0.0
        %8822 = vmatprep.subr.mxu0 0.0
        %8823 = vmatpush1.msra.mxu0 0.0
        %8824 = vmatprep.subr.mxu0 0.0
        %8825 = vmatpush1.msra.mxu0 0.0
        %8826 = vmatprep.subr.mxu0 0.0
        %8827 = vmatpush1.msra.mxu0 0.0
        %8828 = vmatprep.subr.mxu0 0.0
        %8829 = vmatpush1.msra.mxu0 0.0
        %8830 = vmatprep.mubr.f32.mxu0 0.0
        %8831 = vmatmul.mubr.f32.gmra.mrb[0].mxu0 %v8755
        %v8832 = vpop.f32.mrb[0].mxu0
        %v8833 = vadd.f32 %v8740, %v8832
        %v8834 = vpop.f32.mrb[0].mxu0
        %v8835 = vadd.f32 %v8740, %v8834
        %8836 = vmatprep.mubr.f32.mxu0 0.0
        %8837 = vmatmul.mubr.f32.gmra.mrb[0].mxu0 %v8758
        %v8838 = vpop.f32.mrb[0].mxu0
        %v8839 = vadd.f32 %v8744, %v8838
        %v8840 = vpop.f32.mrb[0].mxu0
        %v8841 = vadd.f32 %v8744, %v8840
        %8842 = vmatprep.mubr.f32.mxu0 0.0
        %8843 = vmatmul.mubr.f32.gmra.mrb[0].mxu0 %v8761
        %v8844 = vpop.f32.mrb[0].mxu0
        %v8845 = vadd.f32 %v8748, %v8844
        %v8846 = vpop.f32.mrb[0].mxu0
        %v8847 = vadd.f32 %v8748, %v8846
        %8848 = vmatprep.mubr.f32.mxu0 0.0
        %8849 = vmatmul.mubr.f32.gmra.mrb[0].mxu0 %v8764
        %v8850 = vpop.f32.mrb[0].mxu0
        %v8851 = vadd.f32 %v8752, %v8850
        %v8852 = vpop.f32.mrb[0].mxu0
        %v8853 = vadd.f32 %v8752, %v8852
        %8854 = vdwg.mxu0
        %8855 = vmatprep.subr.mxu0 %v8705
        %8856 = vmatpush1.msra.mxu0 %v8704
        %8857 = vmatprep.subr.mxu0 %v8713
        %8858 = vmatpush1.msra.mxu0 %v8712
        %8859 = vmatprep.subr.mxu0 %v8721
        %8860 = vmatpush1.msra.mxu0 %v8720
        %8861 = vmatprep.subr.mxu0 %v8729
        %8862 = vmatpush1.msra.mxu0 %v8728
        %8863 = vmatprep.subr.mxu0 0.0
        %8864 = vmatpush1.msra.mxu0 0.0
        %8865 = vmatprep.subr.mxu0 0.0
        %8866 = vmatpush1.msra.mxu0 0.0
        %8867 = vmatprep.subr.mxu0 0.0
        %8868 = vmatpush1.msra.mxu0 0.0
        %8869 = vmatprep.subr.mxu0 0.0
        %8870 = vmatpush1.msra.mxu0 0.0
        %8871 = vmatprep.subr.mxu0 0.0
        %8872 = vmatpush1.msra.mxu0 0.0
        %8873 = vmatprep.subr.mxu0 0.0
        %8874 = vmatpush1.msra.mxu0 0.0
        %8875 = vmatprep.subr.mxu0 0.0
        %8876 = vmatpush1.msra.mxu0 0.0
        %8877 = vmatprep.subr.mxu0 0.0
        %8878 = vmatpush1.msra.mxu0 0.0
        %8879 = vmatprep.subr.mxu0 0.0
        %8880 = vmatpush1.msra.mxu0 0.0
        %8881 = vmatprep.subr.mxu0 0.0
        %8882 = vmatpush1.msra.mxu0 0.0
        %8883 = vmatprep.subr.mxu0 0.0
        %8884 = vmatpush1.msra.mxu0 0.0
        %8885 = vmatprep.subr.mxu0 0.0
        %8886 = vmatpush1.msra.mxu0 0.0
        %8887 = vmatprep.subr.mxu0 0.0
        %8888 = vmatpush1.msra.mxu0 0.0
        %8889 = vmatprep.subr.mxu0 0.0
        %8890 = vmatpush1.msra.mxu0 0.0
        %8891 = vmatprep.subr.mxu0 0.0
        %8892 = vmatpush1.msra.mxu0 0.0
        %8893 = vmatprep.subr.mxu0 0.0
        %8894 = vmatpush1.msra.mxu0 0.0
        %8895 = vmatprep.subr.mxu0 0.0
        %8896 = vmatpush1.msra.mxu0 0.0
        %8897 = vmatprep.subr.mxu0 0.0
        %8898 = vmatpush1.msra.mxu0 0.0
        %8899 = vmatprep.subr.mxu0 0.0
        %8900 = vmatpush1.msra.mxu0 0.0
        %8901 = vmatprep.subr.mxu0 0.0
        %8902 = vmatpush1.msra.mxu0 0.0
        %8903 = vmatprep.subr.mxu0 0.0
        %8904 = vmatpush1.msra.mxu0 0.0
        %8905 = vmatprep.subr.mxu0 0.0
        %8906 = vmatpush1.msra.mxu0 0.0
        %8907 = vmatprep.subr.mxu0 0.0
        %8908 = vmatpush1.msra.mxu0 0.0
        %8909 = vmatprep.subr.mxu0 0.0
        %8910 = vmatpush1.msra.mxu0 0.0
        %8911 = vmatprep.subr.mxu0 0.0
        %8912 = vmatpush1.msra.mxu0 0.0
        %8913 = vmatprep.subr.mxu0 0.0
        %8914 = vmatpush1.msra.mxu0 0.0
        %8915 = vmatprep.subr.mxu0 0.0
        %8916 = vmatpush1.msra.mxu0 0.0
        %8917 = vmatprep.subr.mxu0 0.0
        %8918 = vmatpush1.msra.mxu0 0.0
        %8919 = vmatprep.mubr.f32.mxu0 0.0
        %8920 = vmatmul.mubr.f32.gmra.mrb[0].mxu0 %v8755
        %v8921 = vpop.f32.mrb[0].mxu0
        %v8922 = vadd.f32 %v8740, %v8921
        %v8923 = vpop.f32.mrb[0].mxu0
        %v8924 = vadd.f32 %v8740, %v8923
        %8925 = vmatprep.mubr.f32.mxu0 0.0
        %8926 = vmatmul.mubr.f32.gmra.mrb[0].mxu0 %v8758
        %v8927 = vpop.f32.mrb[0].mxu0
        %v8928 = vadd.f32 %v8744, %v8927
        %v8929 = vpop.f32.mrb[0].mxu0
        %v8930 = vadd.f32 %v8744, %v8929
        %8931 = vmatprep.mubr.f32.mxu0 0.0
        %8932 = vmatmul.mubr.f32.gmra.mrb[0].mxu0 %v8761
        %v8933 = vpop.f32.mrb[0].mxu0
        %v8934 = vadd.f32 %v8748, %v8933
        %v8935 = vpop.f32.mrb[0].mxu0
        %v8936 = vadd.f32 %v8748, %v8935
        %8937 = vmatprep.mubr.f32.mxu0 0.0
        %8938 = vmatmul.mubr.f32.gmra.mrb[0].mxu0 %v8764
        %v8939 = vpop.f32.mrb[0].mxu0
        %v8940 = vadd.f32 %v8752, %v8939
        %v8941 = vpop.f32.mrb[0].mxu0
        %v8942 = vadd.f32 %v8752, %v8941
        %8943 = vdwg.mxu0
        %8944 = vmatprep.subr.mxu0 %v8707
        %8945 = vmatpush1.msra.mxu0 %v8706
        %8946 = vmatprep.subr.mxu0 %v8715
        %8947 = vmatpush1.msra.mxu0 %v8714
        %8948 = vmatprep.subr.mxu0 %v8723
        %8949 = vmatpush1.msra.mxu0 %v8722
        %8950 = vmatprep.subr.mxu0 %v8731
        %8951 = vmatpush1.msra.mxu0 %v8730
        %8952 = vmatprep.subr.mxu0 0.0
        %8953 = vmatpush1.msra.mxu0 0.0
        %8954 = vmatprep.subr.mxu0 0.0
        %8955 = vmatpush1.msra.mxu0 0.0
        %8956 = vmatprep.subr.mxu0 0.0
        %8957 = vmatpush1.msra.mxu0 0.0
        %8958 = vmatprep.subr.mxu0 0.0
        %8959 = vmatpush1.msra.mxu0 0.0
        %8960 = vmatprep.subr.mxu0 0.0
        %8961 = vmatpush1.msra.mxu0 0.0
        %8962 = vmatprep.subr.mxu0 0.0
        %8963 = vmatpush1.msra.mxu0 0.0
        %8964 = vmatprep.subr.mxu0 0.0
        %8965 = vmatpush1.msra.mxu0 0.0
        %8966 = vmatprep.subr.mxu0 0.0
        %8967 = vmatpush1.msra.mxu0 0.0
        %8968 = vmatprep.subr.mxu0 0.0
        %8969 = vmatpush1.msra.mxu0 0.0
        %8970 = vmatprep.subr.mxu0 0.0
        %8971 = vmatpush1.msra.mxu0 0.0
        %8972 = vmatprep.subr.mxu0 0.0
        %8973 = vmatpush1.msra.mxu0 0.0
        %8974 = vmatprep.subr.mxu0 0.0
        %8975 = vmatpush1.msra.mxu0 0.0
        %8976 = vmatprep.subr.mxu0 0.0
        %8977 = vmatpush1.msra.mxu0 0.0
        %8978 = vmatprep.subr.mxu0 0.0
        %8979 = vmatpush1.msra.mxu0 0.0
        %8980 = vmatprep.subr.mxu0 0.0
        %8981 = vmatpush1.msra.mxu0 0.0
        %8982 = vmatprep.subr.mxu0 0.0
        %8983 = vmatpush1.msra.mxu0 0.0
        %8984 = vmatprep.subr.mxu0 0.0
        %8985 = vmatpush1.msra.mxu0 0.0
        %8986 = vmatprep.subr.mxu0 0.0
        %8987 = vmatpush1.msra.mxu0 0.0
        %8988 = vmatprep.subr.mxu0 0.0
        %8989 = vmatpush1.msra.mxu0 0.0
        %8990 = vmatprep.subr.mxu0 0.0
        %8991 = vmatpush1.msra.mxu0 0.0
        %8992 = vmatprep.subr.mxu0 0.0
        %8993 = vmatpush1.msra.mxu0 0.0
        %8994 = vmatprep.subr.mxu0 0.0
        %8995 = vmatpush1.msra.mxu0 0.0
        %8996 = vmatprep.subr.mxu0 0.0
        %8997 = vmatpush1.msra.mxu0 0.0
        %8998 = vmatprep.subr.mxu0 0.0
        %8999 = vmatpush1.msra.mxu0 0.0
        %9000 = vmatprep.subr.mxu0 0.0
        %9001 = vmatpush1.msra.mxu0 0.0
        %9002 = vmatprep.subr.mxu0 0.0
        %9003 = vmatpush1.msra.mxu0 0.0
        %9004 = vmatprep.subr.mxu0 0.0
        %9005 = vmatpush1.msra.mxu0 0.0
        %9006 = vmatprep.subr.mxu0 0.0
        %9007 = vmatpush1.msra.mxu0 0.0
        %9008 = vmatprep.mubr.f32.mxu0 0.0
        %9009 = vmatmul.mubr.f32.gmra.mrb[0].mxu0 %v8755
        %v9010 = vpop.f32.mrb[0].mxu0
        %v9011 = vadd.f32 %v8740, %v9010
        %v9012 = vpop.f32.mrb[0].mxu0
        %v9013 = vadd.f32 %v8740, %v9012
        %9014 = vmatprep.mubr.f32.mxu0 0.0
        %9015 = vmatmul.mubr.f32.gmra.mrb[0].mxu0 %v8758
        %v9016 = vpop.f32.mrb[0].mxu0
        %v9017 = vadd.f32 %v8744, %v9016
        %v9018 = vpop.f32.mrb[0].mxu0
        %v9019 = vadd.f32 %v8744, %v9018
        %9020 = vmatprep.mubr.f32.mxu0 0.0
        %9021 = vmatmul.mubr.f32.gmra.mrb[0].mxu0 %v8761
        %v9022 = vpop.f32.mrb[0].mxu0
        %v9023 = vadd.f32 %v8748, %v9022
        %v9024 = vpop.f32.mrb[0].mxu0
        %v9025 = vadd.f32 %v8748, %v9024
        %9026 = vmatprep.mubr.f32.mxu0 0.0
        %9027 = vmatmul.mubr.f32.gmra.mrb[0].mxu0 %v8764
        %v9028 = vpop.f32.mrb[0].mxu0
        %v9029 = vadd.f32 %v8752, %v9028
        %v9030 = vpop.f32.mrb[0].mxu0
        %v9031 = vadd.f32 %v8752, %v9030
        %9032 = vdwg.mxu0
        %9033 = vmatprep.subr.mxu0 %v8709
        %9034 = vmatpush1.msra.mxu0 %v8708
        %9035 = vmatprep.subr.mxu0 %v8717
        %9036 = vmatpush1.msra.mxu0 %v8716
        %9037 = vmatprep.subr.mxu0 %v8725
        %9038 = vmatpush1.msra.mxu0 %v8724
        %9039 = vmatprep.subr.mxu0 %v8733
        %9040 = vmatpush1.msra.mxu0 %v8732
        %9041 = vmatprep.subr.mxu0 0.0
        %9042 = vmatpush1.msra.mxu0 0.0
        %9043 = vmatprep.subr.mxu0 0.0
        %9044 = vmatpush1.msra.mxu0 0.0
        %9045 = vmatprep.subr.mxu0 0.0
        %9046 = vmatpush1.msra.mxu0 0.0
        %9047 = vmatprep.subr.mxu0 0.0
        %9048 = vmatpush1.msra.mxu0 0.0
        %9049 = vmatprep.subr.mxu0 0.0
        %9050 = vmatpush1.msra.mxu0 0.0
        %9051 = vmatprep.subr.mxu0 0.0
        %9052 = vmatpush1.msra.mxu0 0.0
        %9053 = vmatprep.subr.mxu0 0.0
        %9054 = vmatpush1.msra.mxu0 0.0
        %9055 = vmatprep.subr.mxu0 0.0
        %9056 = vmatpush1.msra.mxu0 0.0
        %9057 = vmatprep.subr.mxu0 0.0
        %9058 = vmatpush1.msra.mxu0 0.0
        %9059 = vmatprep.subr.mxu0 0.0
        %9060 = vmatpush1.msra.mxu0 0.0
        %9061 = vmatprep.subr.mxu0 0.0
        %9062 = vmatpush1.msra.mxu0 0.0
        %9063 = vmatprep.subr.mxu0 0.0
        %9064 = vmatpush1.msra.mxu0 0.0
        %9065 = vmatprep.subr.mxu0 0.0
        %9066 = vmatpush1.msra.mxu0 0.0
        %9067 = vmatprep.subr.mxu0 0.0
        %9068 = vmatpush1.msra.mxu0 0.0
        %9069 = vmatprep.subr.mxu0 0.0
        %9070 = vmatpush1.msra.mxu0 0.0
        %9071 = vmatprep.subr.mxu0 0.0
        %9072 = vmatpush1.msra.mxu0 0.0
        %9073 = vmatprep.subr.mxu0 0.0
        %9074 = vmatpush1.msra.mxu0 0.0
        %9075 = vmatprep.subr.mxu0 0.0
        %9076 = vmatpush1.msra.mxu0 0.0
        %9077 = vmatprep.subr.mxu0 0.0
        %9078 = vmatpush1.msra.mxu0 0.0
        %9079 = vmatprep.subr.mxu0 0.0
        %9080 = vmatpush1.msra.mxu0 0.0
        %9081 = vmatprep.subr.mxu0 0.0
        %9082 = vmatpush1.msra.mxu0 0.0
        %9083 = vmatprep.subr.mxu0 0.0
        %9084 = vmatpush1.msra.mxu0 0.0
        %9085 = vmatprep.subr.mxu0 0.0
        %9086 = vmatpush1.msra.mxu0 0.0
        %9087 = vmatprep.subr.mxu0 0.0
        %9088 = vmatpush1.msra.mxu0 0.0
        %9089 = vmatprep.subr.mxu0 0.0
        %9090 = vmatpush1.msra.mxu0 0.0
        %9091 = vmatprep.subr.mxu0 0.0
        %9092 = vmatpush1.msra.mxu0 0.0
        %9093 = vmatprep.subr.mxu0 0.0
        %9094 = vmatpush1.msra.mxu0 0.0
        %9095 = vmatprep.subr.mxu0 0.0
        %9096 = vmatpush1.msra.mxu0 0.0
        %9097 = vmatprep.mubr.f32.mxu0 0.0
        %9098 = vmatmul.mubr.f32.gmra.mrb[0].mxu0 %v8755
        %v9099 = vpop.f32.mrb[0].mxu0
        %v9100 = vadd.f32 %v8740, %v9099
        %v9101 = vpop.f32.mrb[0].mxu0
        %v9102 = vadd.f32 %v8740, %v9101
        %9103 = vmatprep.mubr.f32.mxu0 0.0
        %9104 = vmatmul.mubr.f32.gmra.mrb[0].mxu0 %v8758
        %v9105 = vpop.f32.mrb[0].mxu0
        %v9106 = vadd.f32 %v8744, %v9105
        %v9107 = vpop.f32.mrb[0].mxu0
        %v9108 = vadd.f32 %v8744, %v9107
        %9109 = vmatprep.mubr.f32.mxu0 0.0
        %9110 = vmatmul.mubr.f32.gmra.mrb[0].mxu0 %v8761
        %v9111 = vpop.f32.mrb[0].mxu0
        %v9112 = vadd.f32 %v8748, %v9111
        %v9113 = vpop.f32.mrb[0].mxu0
        %v9114 = vadd.f32 %v8748, %v9113
        %9115 = vmatprep.mubr.f32.mxu0 0.0
        %9116 = vmatmul.mubr.f32.gmra.mrb[0].mxu0 %v8764
        %v9117 = vpop.f32.mrb[0].mxu0
        %v9118 = vadd.f32 %v8752, %v9117
        %v9119 = vpop.f32.mrb[0].mxu0
        %v9120 = vadd.f32 %v8752, %v9119
        %9121 = vdwg.mxu0
        %v9122 = vmax.f32 %v8833, 0.0
        %v9123 = vmax.f32 %v8835, 0.0
        %v9124 = vmax.f32 %v8922, 0.0
        %v9125 = vmax.f32 %v8924, 0.0
        %v9126 = vmax.f32 %v9011, 0.0
        %v9127 = vmax.f32 %v9013, 0.0
        %v9128 = vmax.f32 %v9100, 0.0
        %v9129 = vmax.f32 %v9102, 0.0
        %v9130 = vmax.f32 %v8839, 0.0
        %v9131 = vmax.f32 %v8841, 0.0
        %v9132 = vmax.f32 %v8928, 0.0
        %v9133 = vmax.f32 %v8930, 0.0
        %v9134 = vmax.f32 %v9017, 0.0
        %v9135 = vmax.f32 %v9019, 0.0
        %v9136 = vmax.f32 %v9106, 0.0
        %v9137 = vmax.f32 %v9108, 0.0
        %v9138 = vmax.f32 %v8845, 0.0
        %v9139 = vmax.f32 %v8847, 0.0
        %v9140 = vmax.f32 %v8934, 0.0
        %v9141 = vmax.f32 %v8936, 0.0
        %v9142 = vmax.f32 %v9023, 0.0
        %v9143 = vmax.f32 %v9025, 0.0
        %v9144 = vmax.f32 %v9112, 0.0
        %v9145 = vmax.f32 %v9114, 0.0
        %v9146 = vmax.f32 %v8851, 0.0
        %v9147 = vmax.f32 %v8853, 0.0
        %v9148 = vmax.f32 %v8940, 0.0
        %v9149 = vmax.f32 %v8942, 0.0
        %v9150 = vmax.f32 %v9029, 0.0
        %v9151 = vmax.f32 %v9031, 0.0
        %v9152 = vmax.f32 %v9118, 0.0
        %v9153 = vmax.f32 %v9120, 0.0
        %v9154 = vld [vmem:[%s1 + $0xa0] sm:$0x1]
        %v9155 = vld [vmem:[%s1 + $0xa8] sm:$0x1]
        %9157 = vset.pattern.permute.xlu0 3
        %9158 = vperm.xlu0 %9157, %v9155
        %v9159 = vpop.permute.xlu0 %9158
        %v9162 = vsel %vm6809, %v9154, 0
        %9164 = vmatprep.subr.mxu0 %v9123
        %9165 = vmatpush1.msra.mxu0 %v9122
        %9166 = vmatprep.subr.mxu0 %v9131
        %9167 = vmatpush1.msra.mxu0 %v9130
        %9168 = vmatprep.subr.mxu0 %v9139
        %9169 = vmatpush1.msra.mxu0 %v9138
        %9170 = vmatprep.subr.mxu0 %v9147
        %9171 = vmatpush1.msra.mxu0 %v9146
        %9172 = vmatprep.subr.mxu0 0.0
        %9173 = vmatpush1.msra.mxu0 0.0
        %9174 = vmatprep.subr.mxu0 0.0
        %9175 = vmatpush1.msra.mxu0 0.0
        %9176 = vmatprep.subr.mxu0 0.0
        %9177 = vmatpush1.msra.mxu0 0.0
        %9178 = vmatprep.subr.mxu0 0.0
        %9179 = vmatpush1.msra.mxu0 0.0
        %9180 = vmatprep.subr.mxu0 0.0
        %9181 = vmatpush1.msra.mxu0 0.0
        %9182 = vmatprep.subr.mxu0 0.0
        %9183 = vmatpush1.msra.mxu0 0.0
        %9184 = vmatprep.subr.mxu0 0.0
        %9185 = vmatpush1.msra.mxu0 0.0
        %9186 = vmatprep.subr.mxu0 0.0
        %9187 = vmatpush1.msra.mxu0 0.0
        %9188 = vmatprep.subr.mxu0 0.0
        %9189 = vmatpush1.msra.mxu0 0.0
        %9190 = vmatprep.subr.mxu0 0.0
        %9191 = vmatpush1.msra.mxu0 0.0
        %9192 = vmatprep.subr.mxu0 0.0
        %9193 = vmatpush1.msra.mxu0 0.0
        %9194 = vmatprep.subr.mxu0 0.0
        %9195 = vmatpush1.msra.mxu0 0.0
        %9196 = vmatprep.subr.mxu0 0.0
        %9197 = vmatpush1.msra.mxu0 0.0
        %9198 = vmatprep.subr.mxu0 0.0
        %9199 = vmatpush1.msra.mxu0 0.0
        %9200 = vmatprep.subr.mxu0 0.0
        %9201 = vmatpush1.msra.mxu0 0.0
        %9202 = vmatprep.subr.mxu0 0.0
        %9203 = vmatpush1.msra.mxu0 0.0
        %9204 = vmatprep.subr.mxu0 0.0
        %9205 = vmatpush1.msra.mxu0 0.0
        %9206 = vmatprep.subr.mxu0 0.0
        %9207 = vmatpush1.msra.mxu0 0.0
        %9208 = vmatprep.subr.mxu0 0.0
        %9209 = vmatpush1.msra.mxu0 0.0
        %9210 = vmatprep.subr.mxu0 0.0
        %9211 = vmatpush1.msra.mxu0 0.0
        %9212 = vmatprep.subr.mxu0 0.0
        %9213 = vmatpush1.msra.mxu0 0.0
        %9214 = vmatprep.subr.mxu0 0.0
        %9215 = vmatpush1.msra.mxu0 0.0
        %9216 = vmatprep.subr.mxu0 0.0
        %9217 = vmatpush1.msra.mxu0 0.0
        %9218 = vmatprep.subr.mxu0 0.0
        %9219 = vmatpush1.msra.mxu0 0.0
        %9220 = vmatprep.subr.mxu0 0.0
        %9221 = vmatpush1.msra.mxu0 0.0
        %9222 = vmatprep.subr.mxu0 0.0
        %9223 = vmatpush1.msra.mxu0 0.0
        %9224 = vmatprep.subr.mxu0 0.0
        %9225 = vmatpush1.msra.mxu0 0.0
        %9226 = vmatprep.subr.mxu0 0.0
        %9227 = vmatpush1.msra.mxu0 0.0
        %9228 = vmatprep.mubr.f32.mxu0 0.0
        %9229 = vmatmul.mubr.f32.gmra.mrb[0].mxu0 %v9162
        %v9230 = vpop.f32.mrb[0].mxu0
        %v9231 = vadd.f32 %v9159, %v9230
        %v9232 = vpop.f32.mrb[0].mxu0
        %v9233 = vadd.f32 %v9159, %v9232
        %9234 = vdwg.mxu0
        %9235 = vmatprep.subr.mxu0 %v9125
        %9236 = vmatpush1.msra.mxu0 %v9124
        %9237 = vmatprep.subr.mxu0 %v9133
        %9238 = vmatpush1.msra.mxu0 %v9132
        %9239 = vmatprep.subr.mxu0 %v9141
        %9240 = vmatpush1.msra.mxu0 %v9140
        %9241 = vmatprep.subr.mxu0 %v9149
        %9242 = vmatpush1.msra.mxu0 %v9148
        %9243 = vmatprep.subr.mxu0 0.0
        %9244 = vmatpush1.msra.mxu0 0.0
        %9245 = vmatprep.subr.mxu0 0.0
        %9246 = vmatpush1.msra.mxu0 0.0
        %9247 = vmatprep.subr.mxu0 0.0
        %9248 = vmatpush1.msra.mxu0 0.0
        %9249 = vmatprep.subr.mxu0 0.0
        %9250 = vmatpush1.msra.mxu0 0.0
        %9251 = vmatprep.subr.mxu0 0.0
        %9252 = vmatpush1.msra.mxu0 0.0
        %9253 = vmatprep.subr.mxu0 0.0
        %9254 = vmatpush1.msra.mxu0 0.0
        %9255 = vmatprep.subr.mxu0 0.0
        %9256 = vmatpush1.msra.mxu0 0.0
        %9257 = vmatprep.subr.mxu0 0.0
        %9258 = vmatpush1.msra.mxu0 0.0
        %9259 = vmatprep.subr.mxu0 0.0
        %9260 = vmatpush1.msra.mxu0 0.0
        %9261 = vmatprep.subr.mxu0 0.0
        %9262 = vmatpush1.msra.mxu0 0.0
        %9263 = vmatprep.subr.mxu0 0.0
        %9264 = vmatpush1.msra.mxu0 0.0
        %9265 = vmatprep.subr.mxu0 0.0
        %9266 = vmatpush1.msra.mxu0 0.0
        %9267 = vmatprep.subr.mxu0 0.0
        %9268 = vmatpush1.msra.mxu0 0.0
        %9269 = vmatprep.subr.mxu0 0.0
        %9270 = vmatpush1.msra.mxu0 0.0
        %9271 = vmatprep.subr.mxu0 0.0
        %9272 = vmatpush1.msra.mxu0 0.0
        %9273 = vmatprep.subr.mxu0 0.0
        %9274 = vmatpush1.msra.mxu0 0.0
        %9275 = vmatprep.subr.mxu0 0.0
        %9276 = vmatpush1.msra.mxu0 0.0
        %9277 = vmatprep.subr.mxu0 0.0
        %9278 = vmatpush1.msra.mxu0 0.0
        %9279 = vmatprep.subr.mxu0 0.0
        %9280 = vmatpush1.msra.mxu0 0.0
        %9281 = vmatprep.subr.mxu0 0.0
        %9282 = vmatpush1.msra.mxu0 0.0
        %9283 = vmatprep.subr.mxu0 0.0
        %9284 = vmatpush1.msra.mxu0 0.0
        %9285 = vmatprep.subr.mxu0 0.0
        %9286 = vmatpush1.msra.mxu0 0.0
        %9287 = vmatprep.subr.mxu0 0.0
        %9288 = vmatpush1.msra.mxu0 0.0
        %9289 = vmatprep.subr.mxu0 0.0
        %9290 = vmatpush1.msra.mxu0 0.0
        %9291 = vmatprep.subr.mxu0 0.0
        %9292 = vmatpush1.msra.mxu0 0.0
        %9293 = vmatprep.subr.mxu0 0.0
        %9294 = vmatpush1.msra.mxu0 0.0
        %9295 = vmatprep.subr.mxu0 0.0
        %9296 = vmatpush1.msra.mxu0 0.0
        %9297 = vmatprep.subr.mxu0 0.0
        %9298 = vmatpush1.msra.mxu0 0.0
        %9299 = vmatprep.mubr.f32.mxu0 0.0
        %9300 = vmatmul.mubr.f32.gmra.mrb[0].mxu0 %v9162
        %v9301 = vpop.f32.mrb[0].mxu0
        %v9302 = vadd.f32 %v9159, %v9301
        %v9303 = vpop.f32.mrb[0].mxu0
        %v9304 = vadd.f32 %v9159, %v9303
        %9305 = vdwg.mxu0
        %9306 = vmatprep.subr.mxu0 %v9127
        %9307 = vmatpush1.msra.mxu0 %v9126
        %9308 = vmatprep.subr.mxu0 %v9135
        %9309 = vmatpush1.msra.mxu0 %v9134
        %9310 = vmatprep.subr.mxu0 %v9143
        %9311 = vmatpush1.msra.mxu0 %v9142
        %9312 = vmatprep.subr.mxu0 %v9151
        %9313 = vmatpush1.msra.mxu0 %v9150
        %9314 = vmatprep.subr.mxu0 0.0
        %9315 = vmatpush1.msra.mxu0 0.0
        %9316 = vmatprep.subr.mxu0 0.0
        %9317 = vmatpush1.msra.mxu0 0.0
        %9318 = vmatprep.subr.mxu0 0.0
        %9319 = vmatpush1.msra.mxu0 0.0
        %9320 = vmatprep.subr.mxu0 0.0
        %9321 = vmatpush1.msra.mxu0 0.0
        %9322 = vmatprep.subr.mxu0 0.0
        %9323 = vmatpush1.msra.mxu0 0.0
        %9324 = vmatprep.subr.mxu0 0.0
        %9325 = vmatpush1.msra.mxu0 0.0
        %9326 = vmatprep.subr.mxu0 0.0
        %9327 = vmatpush1.msra.mxu0 0.0
        %9328 = vmatprep.subr.mxu0 0.0
        %9329 = vmatpush1.msra.mxu0 0.0
        %9330 = vmatprep.subr.mxu0 0.0
        %9331 = vmatpush1.msra.mxu0 0.0
        %9332 = vmatprep.subr.mxu0 0.0
        %9333 = vmatpush1.msra.mxu0 0.0
        %9334 = vmatprep.subr.mxu0 0.0
        %9335 = vmatpush1.msra.mxu0 0.0
        %9336 = vmatprep.subr.mxu0 0.0
        %9337 = vmatpush1.msra.mxu0 0.0
        %9338 = vmatprep.subr.mxu0 0.0
        %9339 = vmatpush1.msra.mxu0 0.0
        %9340 = vmatprep.subr.mxu0 0.0
        %9341 = vmatpush1.msra.mxu0 0.0
        %9342 = vmatprep.subr.mxu0 0.0
        %9343 = vmatpush1.msra.mxu0 0.0
        %9344 = vmatprep.subr.mxu0 0.0
        %9345 = vmatpush1.msra.mxu0 0.0
        %9346 = vmatprep.subr.mxu0 0.0
        %9347 = vmatpush1.msra.mxu0 0.0
        %9348 = vmatprep.subr.mxu0 0.0
        %9349 = vmatpush1.msra.mxu0 0.0
        %9350 = vmatprep.subr.mxu0 0.0
        %9351 = vmatpush1.msra.mxu0 0.0
        %9352 = vmatprep.subr.mxu0 0.0
        %9353 = vmatpush1.msra.mxu0 0.0
        %9354 = vmatprep.subr.mxu0 0.0
        %9355 = vmatpush1.msra.mxu0 0.0
        %9356 = vmatprep.subr.mxu0 0.0
        %9357 = vmatpush1.msra.mxu0 0.0
        %9358 = vmatprep.subr.mxu0 0.0
        %9359 = vmatpush1.msra.mxu0 0.0
        %9360 = vmatprep.subr.mxu0 0.0
        %9361 = vmatpush1.msra.mxu0 0.0
        %9362 = vmatprep.subr.mxu0 0.0
        %9363 = vmatpush1.msra.mxu0 0.0
        %9364 = vmatprep.subr.mxu0 0.0
        %9365 = vmatpush1.msra.mxu0 0.0
        %9366 = vmatprep.subr.mxu0 0.0
        %9367 = vmatpush1.msra.mxu0 0.0
        %9368 = vmatprep.subr.mxu0 0.0
        %9369 = vmatpush1.msra.mxu0 0.0
        %9370 = vmatprep.mubr.f32.mxu0 0.0
        %9371 = vmatmul.mubr.f32.gmra.mrb[0].mxu0 %v9162
        %v9372 = vpop.f32.mrb[0].mxu0
        %v9373 = vadd.f32 %v9159, %v9372
        %v9374 = vpop.f32.mrb[0].mxu0
        %v9375 = vadd.f32 %v9159, %v9374
        %9376 = vdwg.mxu0
        %9377 = vmatprep.subr.mxu0 %v9129
        %9378 = vmatpush1.msra.mxu0 %v9128
        %9379 = vmatprep.subr.mxu0 %v9137
        %9380 = vmatpush1.msra.mxu0 %v9136
        %9381 = vmatprep.subr.mxu0 %v9145
        %9382 = vmatpush1.msra.mxu0 %v9144
        %9383 = vmatprep.subr.mxu0 %v9153
        %9384 = vmatpush1.msra.mxu0 %v9152
        %9385 = vmatprep.subr.mxu0 0.0
        %9386 = vmatpush1.msra.mxu0 0.0
        %9387 = vmatprep.subr.mxu0 0.0
        %9388 = vmatpush1.msra.mxu0 0.0
        %9389 = vmatprep.subr.mxu0 0.0
        %9390 = vmatpush1.msra.mxu0 0.0
        %9391 = vmatprep.subr.mxu0 0.0
        %9392 = vmatpush1.msra.mxu0 0.0
        %9393 = vmatprep.subr.mxu0 0.0
        %9394 = vmatpush1.msra.mxu0 0.0
        %9395 = vmatprep.subr.mxu0 0.0
        %9396 = vmatpush1.msra.mxu0 0.0
        %9397 = vmatprep.subr.mxu0 0.0
        %9398 = vmatpush1.msra.mxu0 0.0
        %9399 = vmatprep.subr.mxu0 0.0
        %9400 = vmatpush1.msra.mxu0 0.0
        %9401 = vmatprep.subr.mxu0 0.0
        %9402 = vmatpush1.msra.mxu0 0.0
        %9403 = vmatprep.subr.mxu0 0.0
        %9404 = vmatpush1.msra.mxu0 0.0
        %9405 = vmatprep.subr.mxu0 0.0
        %9406 = vmatpush1.msra.mxu0 0.0
        %9407 = vmatprep.subr.mxu0 0.0
        %9408 = vmatpush1.msra.mxu0 0.0
        %9409 = vmatprep.subr.mxu0 0.0
        %9410 = vmatpush1.msra.mxu0 0.0
        %9411 = vmatprep.subr.mxu0 0.0
        %9412 = vmatpush1.msra.mxu0 0.0
        %9413 = vmatprep.subr.mxu0 0.0
        %9414 = vmatpush1.msra.mxu0 0.0
        %9415 = vmatprep.subr.mxu0 0.0
        %9416 = vmatpush1.msra.mxu0 0.0
        %9417 = vmatprep.subr.mxu0 0.0
        %9418 = vmatpush1.msra.mxu0 0.0
        %9419 = vmatprep.subr.mxu0 0.0
        %9420 = vmatpush1.msra.mxu0 0.0
        %9421 = vmatprep.subr.mxu0 0.0
        %9422 = vmatpush1.msra.mxu0 0.0
        %9423 = vmatprep.subr.mxu0 0.0
        %9424 = vmatpush1.msra.mxu0 0.0
        %9425 = vmatprep.subr.mxu0 0.0
        %9426 = vmatpush1.msra.mxu0 0.0
        %9427 = vmatprep.subr.mxu0 0.0
        %9428 = vmatpush1.msra.mxu0 0.0
        %9429 = vmatprep.subr.mxu0 0.0
        %9430 = vmatpush1.msra.mxu0 0.0
        %9431 = vmatprep.subr.mxu0 0.0
        %9432 = vmatpush1.msra.mxu0 0.0
        %9433 = vmatprep.subr.mxu0 0.0
        %9434 = vmatpush1.msra.mxu0 0.0
        %9435 = vmatprep.subr.mxu0 0.0
        %9436 = vmatpush1.msra.mxu0 0.0
        %9437 = vmatprep.subr.mxu0 0.0
        %9438 = vmatpush1.msra.mxu0 0.0
        %9439 = vmatprep.subr.mxu0 0.0
        %9440 = vmatpush1.msra.mxu0 0.0
        %9441 = vmatprep.mubr.f32.mxu0 0.0
        %9442 = vmatmul.mubr.f32.gmra.mrb[0].mxu0 %v9162
        %v9443 = vpop.f32.mrb[0].mxu0
        %v9444 = vadd.f32 %v9159, %v9443
        %v9445 = vpop.f32.mrb[0].mxu0
        %v9446 = vadd.f32 %v9159, %v9445
        %9447 = vdwg.mxu0
        %v9448 = vmax.f32 %v145, 0.0
        %v9449 = vmax.f32 %v146, 0.0
        %v9450 = vmax.f32 %v147, 0.0
        %v9451 = vmax.f32 %v148, 0.0
        %v9452 = vmax.f32 %v149, 0.0
        %v9453 = vmax.f32 %v150, 0.0
        %v9454 = vmax.f32 %v151, 0.0
        %v9455 = vmax.f32 %v152, 0.0
        %v9464 = vrot.slane %v9231, 2
        %v9465 = vrot.slane %v9233, 2
        %v9466 = vrot.slane %v9302, 2
        %v9467 = vrot.slane %v9304, 2
        %v9468 = vrot.slane %v9373, 2
        %v9469 = vrot.slane %v9375, 2
        %v9470 = vrot.slane %v9444, 2
        %v9471 = vrot.slane %v9446, 2
        %v9480 = vmul.f32 %v9448, %v9464
        %v9481 = vmul.f32 %v9449, %v9465
        %v9482 = vmul.f32 %v9450, %v9466
        %v9483 = vmul.f32 %v9451, %v9467
        %v9484 = vmul.f32 %v9452, %v9468
        %v9485 = vmul.f32 %v9453, %v9469
        %v9486 = vmul.f32 %v9454, %v9470
        %v9487 = vmul.f32 %v9455, %v9471
        %v9496 = vrot.slane %v9480, 4
        %v9497 = vrot.slane %v9481, 4
        %v9498 = vrot.slane %v9482, 4
        %v9499 = vrot.slane %v9483, 4
        %v9500 = vrot.slane %v9484, 4
        %v9501 = vrot.slane %v9485, 4
        %v9502 = vrot.slane %v9486, 4
        %v9503 = vrot.slane %v9487, 4
        %v9512 = vadd.f32 %v145, %v9496
        %v9513 = vadd.f32 %v146, %v9497
        %v9514 = vadd.f32 %v147, %v9498
        %v9515 = vadd.f32 %v148, %v9499
        %v9516 = vadd.f32 %v149, %v9500
        %v9517 = vadd.f32 %v150, %v9501
        %v9518 = vadd.f32 %v151, %v9502
        %v9519 = vadd.f32 %v152, %v9503
        %v9520 = vmax.f32 %v9512, 0.05
        %v9521 = vmax.f32 %v9513, 0.05
        %v9522 = vmax.f32 %v9514, 0.05
        %v9523 = vmax.f32 %v9515, 0.05
        %v9524 = vmax.f32 %v9516, 0.05
        %v9525 = vmax.f32 %v9517, 0.05
        %v9526 = vmax.f32 %v9518, 0.05
        %v9527 = vmax.f32 %v9519, 0.05
        %v9536 = vcombine.low %v9520, %v9521
        %v9537 = vcombine.low %v9522, %v9523
        %v9538 = vcombine.low %v9524, %v9525
        %v9539 = vcombine.low %v9526, %v9527
        %v9541 = vunpack.c.l.s4 1966171168
        %v9542 = vunpack.c.0.s8 %v9541
        %v9543 = vlaneseq
        %v9544 = vshrl.u32 %v9543, 7
        %v9545 = vsub.s32 %v9542, %v9544
        %v9546 = vrot.slane %v9536, %v9545
        %v9548 = vunpack.c.l.s4 1966171168
        %v9549 = vunpack.c.0.s8 %v9548
        %v9550 = vlaneseq
        %v9551 = vshrl.u32 %v9550, 7
        %v9552 = vsub.s32 %v9549, %v9551
        %v9553 = vrot.slane %v9537, %v9552
        %v9555 = vunpack.c.l.s4 1966171168
        %v9556 = vunpack.c.0.s8 %v9555
        %v9557 = vlaneseq
        %v9558 = vshrl.u32 %v9557, 7
        %v9559 = vsub.s32 %v9556, %v9558
        %v9560 = vrot.slane %v9538, %v9559
        %v9562 = vunpack.c.l.s4 1966171168
        %v9563 = vunpack.c.0.s8 %v9562
        %v9564 = vlaneseq
        %v9565 = vshrl.u32 %v9564, 7
        %v9566 = vsub.s32 %v9563, %v9565
        %v9567 = vrot.slane %v9539, %v9566
        %v9568 = vcombine.low %v9546, %v9553
        %v9569 = vcombine.low %v9560, %v9567
        %v9571 = vunpack.c.l.s4 1966171168
        %v9572 = vunpack.c.0.s8 %v9571
        %v9573 = vlaneseq
        %v9574 = vshrl.u32 %v9573, 7
        %v9575 = vsub.s32 %v9572, %v9574
        %v9576 = vrot.slane %v9568, %v9575
        %v9578 = vunpack.c.l.s4 1966171168
        %v9579 = vunpack.c.0.s8 %v9578
        %v9580 = vlaneseq
        %v9581 = vshrl.u32 %v9580, 7
        %v9582 = vsub.s32 %v9579, %v9581
        %v9583 = vrot.slane %v9569, %v9582
        %v9584 = vcombine.high %v9576, %v9583
        %9586 = vst [vmem:[%s137] sm:$0xff] %v9584
        %s9587 = sand.u32 %s71, 1
        %s9588 = scalar_lea.sflag [#allocation3], %s9587
        %s9589 = sand.u32 %s71, 1
        %s9590 = smul.addr %s9589, 8
        %s9591 = scalar_lea.vmem [#allocation2], %s9590
        // Predicated region
        $region29: #{tpu_custom_call.1} parent=27 // pred_check
          %p9592 = pneg %p81
        $region30: #{tpu_custom_call.1} parent=27 // pred_check_branch
          %9594 = sbr.rel (%p9592) target = $region32
        $region31: #{tpu_custom_call.1} parent=27 // pred_region
          %s9595 = smul.u32 8, %s16
          %s9597 = ssub.s32 128, 128
          %9598 = vsyncadd %s9588, %s9597
          %s9599 = smul.addr %s9595, 16
          %s9600 = scalar_lea.hbm %s2, %s9599
          %s9602 = sshll.u32 %s9591, 4
          %s9603 = int_to_ptr.vmem [resolvable:$true] %s9602
          %9605 = dma.vmem_to_hbm [thread:$0]  %s9603, 128, %s9600, %s9588
        $region32: #{tpu_custom_call.1} parent=27 // pred_fallthru
          _
      $region28: #{tpu_custom_call.1} parent=5 // pred_fallthru
        _
      %p9606 = scmp.le.s32.totalorder 2, %s11
      // Predicated region
      $region33: #{tpu_custom_call.1} parent=5 // pred_check
        %p9607 = pneg %p9606
      $region34: #{tpu_custom_call.1} parent=5 // pred_check_branch
        %9609 = sbr.rel (%p9607) target = $region36
      $region35: #{tpu_custom_call.1} parent=5 // pred_region
        %s9610 = ssub.s32 %s11, 2
        // Predicated region
        $region37: #{tpu_custom_call.1} parent=35 // pred_check
          %p9611 = pneg %p87
        $region38: #{tpu_custom_call.1} parent=35 // pred_check_branch
          %9613 = sbr.rel (%p9611) target = $region40
        $region39: #{tpu_custom_call.1} parent=35 // pred_region
          %s9614 = sand.u32 %s72, 1
          %s9615 = scalar_lea.sflag [#allocation3], %s9614
          %s9616 = sand.u32 %s72, 1
          %s9617 = smul.addr %s9616, 8
          %s9618 = scalar_lea.vmem [#allocation2], %s9617
          %9619 = dma.done %s9615, 128
        $region40: #{tpu_custom_call.1} parent=35 // pred_fallthru
          _
      $region36: #{tpu_custom_call.1} parent=5 // pred_fallthru
        _
    $region6: #{tpu_custom_call.1} parent=1 // loop_footer
      %s15 = sadd.s32 1, %s11
    $region7: #{tpu_custom_call.1} parent=1 // loop_footer_branch
      %10 = sbr.rel target = $region3
    $region8: #{tpu_custom_call.1} parent=1 // loop_exit
      _
    %9620 = vsyncpa [#allocation3], 1
    %s9621 = scalar_lea.sflag [#allocation3], 1
    %9622 = vsyncpa %s9621, 1

</llo_original>
